<compile_context>
chip_gen: v6e
topology: v6e:2x2x1
jax: 0.10.0
libtpu: 0.0.40
codegen_flags: <defaults>
</compile_context>

<pallas_src>
import numpy as np
import jax
import jax.numpy as jnp
from jax import lax
from jax.experimental import pallas as pl
from jax.experimental.pallas import tpu as pltpu

EPS = 1e-5
N_CLASSES = 3


# ----------------------------------------------------------------------------
# The fused Pallas kernel (one batch block per grid step)
# ----------------------------------------------------------------------------
def _resnet_kernel(p1_ref, w1_ref, b1_ref,
                   w211_ref, b211_ref, w212_ref, b212_ref,
                   w221_ref, b221_ref, w222_ref, b222_ref,
                   fcw_ref, fcb_ref,
                   o_ref, ypad_ref):
    """Whole ResNetModel forward (eval mode) for one batch block.

    Activation layout everywhere: (R, 512), R = BN*16 rows (one row per (n, h)),
    lanes = w*32 + c  -> fully lane-dense.

    p1_ref   : (4, R, 144) bf16  conv1 im2col patches, corner-major rows,
                                 lanes = w_out*9 + tap
    w1_ref   : (144, 512)  bf16  conv1 weight, block-diagonal over w_out, BN folded
    w2xx_ref : (1536, 512) bf16  block conv weights, block-Toeplitz over W,
                                 K = kh*512 + w_in*32 + ci, BN folded
    b*_ref   : (1, 512)    f32   folded biases tiled over the 16 w positions
    fcw_ref  : (512, 128)  f32   fc weight with AvgPool(16,16) folded in
    fcb_ref  : (1, 128)    f32
    ypad_ref : (BN, 32, 512) f32 H-padded activation scratch (interior rows 8:24,
                                 halo rows 7 / 24 live inside the zeroed bands)
    """
    f32 = jnp.float32
    BN = ypad_ref.shape[0]
    R = BN * 16

    # Zero only the halo bands (aligned 8-row stores).  Rows 7 and 24 are the H
    # halo actually read below; rows 8:24 are fully overwritten by every conv.
    ypad_ref[:, 0:8, :] = jnp.zeros((BN, 8, 512), f32)
    ypad_ref[:, 24:32, :] = jnp.zeros((BN, 8, 512), f32)

    # ---- conv1 (+folded BN) + ReLU + MaxPool2d(2,2): ONE matmul ---------------
    # The 4 pooling-window corners are stacked along M; the max over corners
    # commutes with the monotone, corner-shared bias + ReLU epilogue.
    m = jnp.dot(p1_ref[...].reshape(4 * R, 144), w1_ref[...],
                preferred_element_type=f32).reshape(4, R, 512)
    m = jnp.maximum(jnp.maximum(m[0], m[1]), jnp.maximum(m[2], m[3]))
    op1 = jnp.maximum(m + b1_ref[...], 0.0)                      # (R, 512) f32

    def conv3x3(y, w_ref, b_ref, *, relu, residual=None):
        """3x3 / stride-1 / pad-1 conv as ONE (R,1536)x(1536,512) bf16 MXU matmul."""
        y3 = y.reshape(BN, 16, 512)
        ypad_ref[:, 8:24, :] = y3                 # aligned interior store
        # K slab = [rows h-1 | rows h | rows h+1] (lane concat at 512 boundaries);
        # the three W taps are absorbed by the block-Toeplitz weight.
        slab = jnp.concatenate(
            [ypad_ref[:, 7:23, :], y3, ypad_ref[:, 9:25, :]], axis=2)
        acc = jnp.dot(slab.reshape(R, 1536).astype(jnp.bfloat16), w_ref[...],
                      preferred_element_type=f32)                # (R, 512)
        acc = acc + b_ref[...]
        if residual is not None:
            acc = acc + residual
        return jnp.maximum(acc, 0.0) if relu else acc

    # ---- residual block (dropout layers are identity in eval mode) ------------
    y = conv3x3(op1, w211_ref, b211_ref, relu=True)
    y = conv3x3(y, w212_ref, b212_ref, relu=False)           # dropout2_1: identity
    y = conv3x3(y, w221_ref, b221_ref, relu=True)
    op2 = conv3x3(y, w222_ref, b222_ref, relu=True, residual=op1)  # dropout2_2: id.

    # ---- AvgPool2d(16,16) + flatten + Linear (pool folded into fc weight) -----
    logits = jnp.dot(op2, fcw_ref[...], preferred_element_type=f32)   # (R, 128)
    o_ref[...] = logits.reshape(BN, 16, 128).sum(axis=1) + fcb_ref[...]


# ----------------------------------------------------------------------------
# Wrapper glue: conv1 patch prep (tiny, done once in XLA) + pallas_call
# ----------------------------------------------------------------------------
def _conv1_pool_patches(x_nhw):
    """conv1 (3x3/stride-2/pad-1) im2col patches, one slab per 2x2-maxpool corner.

    Returns (4, N*16, 144) bf16: corner q=(di,dj), row = n*16 + h_out,
    lane = w_out*9 + (kh*3+kw),
    value = x_pad[n, 4*h_out + 2*di + kh, 4*w_out + 2*dj + kw].
    """
    N = x_nhw.shape[0]
    xp = jnp.pad(x_nhw, ((0, 0), (1, 1), (1, 1)))                  # (N, 66, 66)
    corners = []
    for di in range(2):
        for dj in range(2):
            taps = [xp[:, 2 * di + kh:2 * di + kh + 61:4,
                       2 * dj + kw:2 * dj + kw + 61:4]              # (N, 16, 16)
                    for kh in range(3) for kw in range(3)]
            c = jnp.stack(taps, axis=-1)                            # (N, 16, 16, 9)
            corners.append(c.reshape(N * 16, 144))
    return jnp.stack(corners, axis=0).astype(jnp.bfloat16)         # (4, N*16, 144)


@jax.jit
def resnet_forward(x_nchw, params):
    x = x_nchw[:, 0, :, :].astype(jnp.float32)                     # (N, 64, 64)
    N = x.shape[0]
    assert x.shape[1:] == (64, 64), x.shape
    n_classes = params["fc_w"].shape[1]

    # Batch block per grid step: parallel axis (megacore on v7x) and bounded
    # per-block VMEM footprint for large N.
    BN = 8 if N % 8 == 0 else N
    R = BN * 16
    p1 = _conv1_pool_patches(x)                                    # (4, N*16, 144)

    flops = N * (2 * 4 * 16 * 144 * 512            # conv1 (4 corners in M)
                 + 4 * 2 * 16 * 1536 * 512         # four block convs
                 + 2 * 16 * 512 * 128)             # fc (avgpool folded)
    bytes_accessed = (4 * N * 16 * 144 * 2                         # p1 (bf16)
                      + (144 * 512 + 4 * 1536 * 512) * 2           # conv weights
                      + 512 * 128 * 4 + 5 * 512 * 4 + 128 * 4      # fc weight/biases
                      + N * 128 * 4)                               # output

    w_spec = pl.BlockSpec((1536, 512), lambda i: (0, 0))
    b_spec = pl.BlockSpec((1, 512), lambda i: (0, 0))

    out = pl.pallas_call(
        _resnet_kernel,
        out_shape=jax.ShapeDtypeStruct((N, 128), jnp.float32),
        grid_spec=pltpu.PrefetchScalarGridSpec(
            num_scalar_prefetch=0,
            grid=(N // BN,),
            in_specs=[
                pl.BlockSpec((4, R, 144), lambda i: (0, i, 0)),    # conv1 patches
                pl.BlockSpec((144, 512), lambda i: (0, 0)),        # conv1 weight
                b_spec,                                            # conv1 bias
                w_spec, b_spec,                                    # conv2_1_1
                w_spec, b_spec,                                    # conv2_1_2
                w_spec, b_spec,                                    # conv2_2_1
                w_spec, b_spec,                                    # conv2_2_2
                pl.BlockSpec((512, 128), lambda i: (0, 0)),        # fc weight (+pool)
                pl.BlockSpec((1, 128), lambda i: (0, 0)),          # fc bias
            ],
            out_specs=pl.BlockSpec((BN, 128), lambda i: (i, 0)),
            scratch_shapes=[pltpu.VMEM((BN, 32, 512), jnp.float32)],
        ),
        compiler_params=pltpu.CompilerParams(
            dimension_semantics=("parallel",),
            vmem_limit_bytes=32 * 1024 * 1024),
        cost_estimate=pl.CostEstimate(flops=flops, transcendentals=0,
                                      bytes_accessed=bytes_accessed),
    )(p1,
      params["conv1_wbig"], params["conv1_bias_tiled"],
      params["conv2_1_1_wbig"], params["conv2_1_1_bias_tiled"],
      params["conv2_1_2_wbig"], params["conv2_1_2_bias_tiled"],
      params["conv2_2_1_wbig"], params["conv2_2_1_bias_tiled"],
      params["conv2_2_2_wbig"], params["conv2_2_2_bias_tiled"],
      params["fc_wbig"], params["fc_b_pad"])
    return out[:, :n_classes]


# ----------------------------------------------------------------------------
# Parameter init (deterministic, shapes per the PyTorch __init__, BN folded,
# conv weights pre-packed into lane-dense / block-Toeplitz form, bf16 MXU inputs)
# ----------------------------------------------------------------------------
def init_params(key, n_classes=N_CLASSES):
    assert n_classes <= 128
    ks = jax.random.split(key, 11)
    inv_std = 1.0 / np.sqrt(1.0 + EPS)   # eval BN: gamma=1, beta=0, mean=0, var=1

    def conv_w(k, cin):
        std = np.sqrt(2.0 / (32 * 3 * 3))            # kaiming_normal_, fan_out, relu
        return std * jax.random.normal(k, (3, 3, cin, 32), jnp.float32)

    def conv_b(k, cin):
        bound = 1.0 / np.sqrt(cin * 3 * 3)           # PyTorch default conv bias init
        return jax.random.uniform(k, (32,), jnp.float32, -bound, bound)

    # W-Toeplitz selector: shift[kw, w_in, w_out] = 1 iff w_in == w_out + kw - 1
    shift = np.zeros((3, 16, 16), np.float32)
    for kw in range(3):
        for w_out in range(16):
            w_in = w_out + kw - 1
            if 0 <= w_in < 16:
                shift[kw, w_in, w_out] = 1.0
    shift = jnp.asarray(shift)
    eye16 = jnp.eye(16, dtype=jnp.float32)

    p = {}
    names = ["conv1", "conv2_1_1", "conv2_1_2", "conv2_2_1", "conv2_2_2"]
    cins = [1, 32, 32, 32, 32]
    for idx, (name, cin) in enumerate(zip(names, cins)):
        # Fold eval-mode BN:  BN(conv(x, W) + b) = conv(x, inv_std*W) + inv_std*b.
        w = conv_w(ks[2 * idx], cin) * inv_std        # (3, 3, cin, 32) HWIO
        b = conv_b(ks[2 * idx + 1], cin) * inv_std    # (32,)
        p[name + "_w_hwio"] = w                       # f32, for the reference
        p[name + "_b"] = b
        p[name + "_bias_tiled"] = jnp.tile(b, 16).reshape(1, 512)   # lanes w*32+c
        if cin == 1:
            # conv1: block-diagonal over w_out -> (16*9, 16*32) = (144, 512)
            wbig = jnp.einsum("uv,tc->utvc", eye16, w.reshape(9, 32))
            p[name + "_wbig"] = wbig.reshape(144, 512).astype(jnp.bfloat16)
        else:
            # block conv: block-Toeplitz over W -> (3*16*32, 16*32) = (1536, 512)
            wbig = jnp.einsum("kuv,akio->auivo", shift, w)
            p[name + "_wbig"] = wbig.reshape(1536, 512).astype(jnp.bfloat16)

    fc_w = 0.001 * jax.random.normal(ks[10], (32, n_classes), jnp.float32)
    fc_b = jnp.zeros((n_classes,), jnp.float32)
    p["fc_w"], p["fc_b"] = fc_w, fc_b
    # Fold AvgPool2d(16,16) into the fc weight: replicate over the 16 w positions,
    # pre-scale by 1/256 (the kernel sums the 16 h rows), pad classes to 128 lanes.
    fcw_pad = jnp.zeros((32, 128), jnp.float32).at[:, :n_classes].set(fc_w)
    p["fc_wbig"] = jnp.tile(fcw_pad, (16, 1)) / 256.0
    p["fc_b_pad"] = jnp.zeros((1, 128), jnp.float32).at[0, :n_classes].set(fc_b)
    return p


# ----------------------------------------------------------------------------
# Pure-JAX reference (correctness check only; f32 HIGHEST precision)
# ----------------------------------------------------------------------------
def resnet_reference(x_nchw, params):
    x = jnp.transpose(x_nchw, (0, 2, 3, 1)).astype(jnp.float32)
    dn = ("NHWC", "HWIO", "NHWC")

    def conv(h, name, stride):
        y = lax.conv_general_dilated(
            h, params[name + "_w_hwio"],
            window_strides=(stride, stride), padding=((1, 1), (1, 1)),
            dimension_numbers=dn, precision=lax.Precision.HIGHEST)
        return y + params[name + "_b"].reshape(1, 1, 1, -1)

    y = jax.nn.relu(conv(x, "conv1", 2))
    N, H, W, C = y.shape
    op1 = y.reshape(N, H // 2, 2, W // 2, 2, C).max(axis=(2, 4))
    y = jax.nn.relu(conv(op1, "conv2_1_1", 1))
    y = conv(y, "conv2_1_2", 1)
    y = jax.nn.relu(conv(y, "conv2_2_1", 1))
    y = conv(y, "conv2_2_2", 1)
    op2 = jax.nn.relu(y + op1)
    pooled = op2.mean(axis=(1, 2))
    return pooled @ params["fc_w"] + params["fc_b"]


# ----------------------------------------------------------------------------
if __name__ == "__main__":
    key = jax.random.PRNGKey(0)
    k_x, k_p = jax.random.split(key)

    # (B=2, C=1, H=64, W=64): 64 -> conv1/2 -> 32 -> maxpool/2 -> 16, matching
    # AvgPool2d(16,16) and Linear(32, n_classes).
    x = jax.random.normal(k_x, (2, 1, 64, 64), jnp.float32)
    params = init_params(k_p, n_classes=N_CLASSES)

    out = jax.block_until_ready(resnet_forward(x, params))
    assert out.shape == (2, N_CLASSES), out.shape

    ref = jax.block_until_ready(resnet_reference(x, params))
    # bf16 MXU inputs (f32 accumulation) vs an f32 HIGHEST-precision reference:
    # tolerance loosened deliberately; structural bugs would be orders larger.
    np.testing.assert_allclose(np.asarray(out), np.asarray(ref),
                               rtol=2e-2, atol=2e-4)
    print("KERNEL_OK")
</pallas_src>

<mosaic_0001>
module attributes {stable_mosaic.version = 11 : i64} {
  func.func @_resnet_kernel(%arg0: i32, %arg1: memref<4x32x144xbf16, #tpu.memory_space<vmem>>, %arg2: memref<144x512xbf16, #tpu.memory_space<vmem>>, %arg3: memref<1x512xf32, #tpu.memory_space<vmem>>, %arg4: memref<1536x512xbf16, #tpu.memory_space<vmem>>, %arg5: memref<1x512xf32, #tpu.memory_space<vmem>>, %arg6: memref<1536x512xbf16, #tpu.memory_space<vmem>>, %arg7: memref<1x512xf32, #tpu.memory_space<vmem>>, %arg8: memref<1536x512xbf16, #tpu.memory_space<vmem>>, %arg9: memref<1x512xf32, #tpu.memory_space<vmem>>, %arg10: memref<1536x512xbf16, #tpu.memory_space<vmem>>, %arg11: memref<1x512xf32, #tpu.memory_space<vmem>>, %arg12: memref<512x128xf32, #tpu.memory_space<vmem>>, %arg13: memref<1x128xf32, #tpu.memory_space<vmem>>, %arg14: memref<2x128xf32, #tpu.memory_space<vmem>>, %arg15: memref<2x32x512xf32, #tpu.memory_space<vmem>>) attributes {dimension_semantics = [#tpu.dimension_semantics<parallel>], iteration_bounds = array<i64: 1>, scalar_prefetch = 0 : i64, scratch_operands = 1 : i64, tpu.core_type = #tpu.core_type<tc>, window_params = [{transform_indices = @transform_0, window_bounds = array<i64: 4, 32, 144>}, {pipeline_mode = #tpu.pipeline_mode<synchronous>, transform_indices = @transform_1, window_bounds = array<i64: 144, 512>}, {pipeline_mode = #tpu.pipeline_mode<synchronous>, transform_indices = @transform_2, window_bounds = array<i64: 1, 512>}, {pipeline_mode = #tpu.pipeline_mode<synchronous>, transform_indices = @transform_3, window_bounds = array<i64: 1536, 512>}, {pipeline_mode = #tpu.pipeline_mode<synchronous>, transform_indices = @transform_4, window_bounds = array<i64: 1, 512>}, {pipeline_mode = #tpu.pipeline_mode<synchronous>, transform_indices = @transform_5, window_bounds = array<i64: 1536, 512>}, {pipeline_mode = #tpu.pipeline_mode<synchronous>, transform_indices = @transform_6, window_bounds = array<i64: 1, 512>}, {pipeline_mode = #tpu.pipeline_mode<synchronous>, transform_indices = @transform_7, window_bounds = array<i64: 1536, 512>}, {pipeline_mode = #tpu.pipeline_mode<synchronous>, transform_indices = @transform_8, window_bounds = array<i64: 1, 512>}, {pipeline_mode = #tpu.pipeline_mode<synchronous>, transform_indices = @transform_9, window_bounds = array<i64: 1536, 512>}, {pipeline_mode = #tpu.pipeline_mode<synchronous>, transform_indices = @transform_10, window_bounds = array<i64: 1, 512>}, {pipeline_mode = #tpu.pipeline_mode<synchronous>, transform_indices = @transform_11, window_bounds = array<i64: 512, 128>}, {pipeline_mode = #tpu.pipeline_mode<synchronous>, transform_indices = @transform_12, window_bounds = array<i64: 1, 128>}, {transform_indices = @transform_13, window_bounds = array<i64: 2, 128>}]} {
    %cst = arith.constant 0.000000e+00 : f32
    %0 = vector.broadcast %cst : f32 to vector<2x8x512xf32>
    %c0 = arith.constant 0 : index
    %c0_0 = arith.constant 0 : index
    %c0_1 = arith.constant 0 : index
    %1 = vector.load %arg15[%c0, %c0_0, %c0_1] : memref<2x32x512xf32, #tpu.memory_space<vmem>>, vector<2x8x512xf32>
    tpu.vector_store %arg15[%c0, %c0_0, %c0_1], %0 {strides = array<i32>} : memref<2x32x512xf32, #tpu.memory_space<vmem>>, vector<2x8x512xf32>,
    %cst_2 = arith.constant 0.000000e+00 : f32
    %2 = vector.broadcast %cst_2 : f32 to vector<2x8x512xf32>
    %c0_3 = arith.constant 0 : index
    %c24 = arith.constant 24 : index
    %c0_4 = arith.constant 0 : index
    %3 = vector.load %arg15[%c0_3, %c24, %c0_4] : memref<2x32x512xf32, #tpu.memory_space<vmem>>, vector<2x8x512xf32>
    tpu.vector_store %arg15[%c0_3, %c24, %c0_4], %2 {strides = array<i32>} : memref<2x32x512xf32, #tpu.memory_space<vmem>>, vector<2x8x512xf32>,
    %c0_5 = arith.constant 0 : index
    %c0_6 = arith.constant 0 : index
    %c0_7 = arith.constant 0 : index
    %4 = vector.load %arg1[%c0_5, %c0_6, %c0_7] : memref<4x32x144xbf16, #tpu.memory_space<vmem>>, vector<4x32x144xbf16>
    %5 = vector.shape_cast %4 : vector<4x32x144xbf16> to vector<128x144xbf16>
    %c0_8 = arith.constant 0 : index
    %c0_9 = arith.constant 0 : index
    %6 = vector.load %arg2[%c0_8, %c0_9] : memref<144x512xbf16, #tpu.memory_space<vmem>>, vector<144x512xbf16>
    %cst_10 = arith.constant dense<0.000000e+00> : vector<128x512xf32>
    %7 = tpu.matmul %5, %6, %cst_10 {dimension_numbers = #tpu.dot_dimension_numbers<[1], [0], [0], [1], [0, 0, 1, 1], [], []>} : vector<128x144xbf16>, vector<144x512xbf16>, vector<128x512xf32> -> vector<128x512xf32>
    %8 = vector.shape_cast %7 : vector<128x512xf32> to vector<4x32x512xf32>
    %9 = vector.extract_strided_slice %8 {offsets = [0, 0, 0], sizes = [1, 32, 512], strides = [1, 1, 1]} : vector<4x32x512xf32> to vector<1x32x512xf32>
    %10 = vector.shape_cast %9 : vector<1x32x512xf32> to vector<32x512xf32>
    %11 = vector.extract_strided_slice %8 {offsets = [1, 0, 0], sizes = [1, 32, 512], strides = [1, 1, 1]} : vector<4x32x512xf32> to vector<1x32x512xf32>
    %12 = vector.shape_cast %11 : vector<1x32x512xf32> to vector<32x512xf32>
    %13 = arith.maximumf %10, %12 : vector<32x512xf32>
    %14 = vector.extract_strided_slice %8 {offsets = [2, 0, 0], sizes = [1, 32, 512], strides = [1, 1, 1]} : vector<4x32x512xf32> to vector<1x32x512xf32>
    %15 = vector.shape_cast %14 : vector<1x32x512xf32> to vector<32x512xf32>
    %16 = vector.extract_strided_slice %8 {offsets = [3, 0, 0], sizes = [1, 32, 512], strides = [1, 1, 1]} : vector<4x32x512xf32> to vector<1x32x512xf32>
    %17 = vector.shape_cast %16 : vector<1x32x512xf32> to vector<32x512xf32>
    %18 = arith.maximumf %15, %17 : vector<32x512xf32>
    %19 = arith.maximumf %13, %18 : vector<32x512xf32>
    %c0_11 = arith.constant 0 : index
    %c0_12 = arith.constant 0 : index
    %20 = vector.load %arg3[%c0_11, %c0_12] : memref<1x512xf32, #tpu.memory_space<vmem>>, vector<1x512xf32>
    %21 = vector.broadcast %20 : vector<1x512xf32> to vector<32x512xf32>
    %22 = arith.addf %19, %21 : vector<32x512xf32>
    %cst_13 = arith.constant 0.000000e+00 : f32
    %23 = vector.broadcast %cst_13 : f32 to vector<32x512xf32>
    %24 = arith.maximumf %22, %23 : vector<32x512xf32>
    %25 = vector.shape_cast %24 : vector<32x512xf32> to vector<2x16x512xf32>
    %c0_14 = arith.constant 0 : index
    %c8 = arith.constant 8 : index
    %c0_15 = arith.constant 0 : index
    %26 = vector.load %arg15[%c0_14, %c8, %c0_15] : memref<2x32x512xf32, #tpu.memory_space<vmem>>, vector<2x16x512xf32>
    tpu.vector_store %arg15[%c0_14, %c8, %c0_15], %25 {strides = array<i32>} : memref<2x32x512xf32, #tpu.memory_space<vmem>>, vector<2x16x512xf32>,
    %c0_16 = arith.constant 0 : index
    %c7 = arith.constant 7 : index
    %c0_17 = arith.constant 0 : index
    %27 = vector.load %arg15[%c0_16, %c7, %c0_17] : memref<2x32x512xf32, #tpu.memory_space<vmem>>, vector<2x16x512xf32>
    %c0_18 = arith.constant 0 : index
    %c9 = arith.constant 9 : index
    %c0_19 = arith.constant 0 : index
    %28 = vector.load %arg15[%c0_18, %c9, %c0_19] : memref<2x32x512xf32, #tpu.memory_space<vmem>>, vector<2x16x512xf32>
    %29 = tpu.concatenate %27, %25, %28 in 2 : vector<2x16x512xf32>, vector<2x16x512xf32>, vector<2x16x512xf32> -> vector<2x16x1536xf32>
    %30 = vector.shape_cast %29 : vector<2x16x1536xf32> to vector<32x1536xf32>
    %31 = arith.truncf %30 : vector<32x1536xf32> to vector<32x1536xbf16>
    %c0_20 = arith.constant 0 : index
    %c0_21 = arith.constant 0 : index
    %32 = vector.load %arg4[%c0_20, %c0_21] : memref<1536x512xbf16, #tpu.memory_space<vmem>>, vector<1536x512xbf16>
    %cst_22 = arith.constant dense<0.000000e+00> : vector<32x512xf32>
    %33 = tpu.matmul %31, %32, %cst_22 {dimension_numbers = #tpu.dot_dimension_numbers<[1], [0], [0], [1], [0, 0, 1, 1], [], []>} : vector<32x1536xbf16>, vector<1536x512xbf16>, vector<32x512xf32> -> vector<32x512xf32>
    %c0_23 = arith.constant 0 : index
    %c0_24 = arith.constant 0 : index
    %34 = vector.load %arg5[%c0_23, %c0_24] : memref<1x512xf32, #tpu.memory_space<vmem>>, vector<1x512xf32>
    %35 = vector.broadcast %34 : vector<1x512xf32> to vector<32x512xf32>
    %36 = arith.addf %33, %35 : vector<32x512xf32>
    %cst_25 = arith.constant 0.000000e+00 : f32
    %37 = vector.broadcast %cst_25 : f32 to vector<32x512xf32>
    %38 = arith.maximumf %36, %37 : vector<32x512xf32>
    %39 = vector.shape_cast %38 : vector<32x512xf32> to vector<2x16x512xf32>
    %c0_26 = arith.constant 0 : index
    %c8_27 = arith.constant 8 : index
    %c0_28 = arith.constant 0 : index
    %40 = vector.load %arg15[%c0_26, %c8_27, %c0_28] : memref<2x32x512xf32, #tpu.memory_space<vmem>>, vector<2x16x512xf32>
    tpu.vector_store %arg15[%c0_26, %c8_27, %c0_28], %39 {strides = array<i32>} : memref<2x32x512xf32, #tpu.memory_space<vmem>>, vector<2x16x512xf32>,
    %c0_29 = arith.constant 0 : index
    %c7_30 = arith.constant 7 : index
    %c0_31 = arith.constant 0 : index
    %41 = vector.load %arg15[%c0_29, %c7_30, %c0_31] : memref<2x32x512xf32, #tpu.memory_space<vmem>>, vector<2x16x512xf32>
    %c0_32 = arith.constant 0 : index
    %c9_33 = arith.constant 9 : index
    %c0_34 = arith.constant 0 : index
    %42 = vector.load %arg15[%c0_32, %c9_33, %c0_34] : memref<2x32x512xf32, #tpu.memory_space<vmem>>, vector<2x16x512xf32>
    %43 = tpu.concatenate %41, %39, %42 in 2 : vector<2x16x512xf32>, vector<2x16x512xf32>, vector<2x16x512xf32> -> vector<2x16x1536xf32>
    %44 = vector.shape_cast %43 : vector<2x16x1536xf32> to vector<32x1536xf32>
    %45 = arith.truncf %44 : vector<32x1536xf32> to vector<32x1536xbf16>
    %c0_35 = arith.constant 0 : index
    %c0_36 = arith.constant 0 : index
    %46 = vector.load %arg6[%c0_35, %c0_36] : memref<1536x512xbf16, #tpu.memory_space<vmem>>, vector<1536x512xbf16>
    %cst_37 = arith.constant dense<0.000000e+00> : vector<32x512xf32>
    %47 = tpu.matmul %45, %46, %cst_37 {dimension_numbers = #tpu.dot_dimension_numbers<[1], [0], [0], [1], [0, 0, 1, 1], [], []>} : vector<32x1536xbf16>, vector<1536x512xbf16>, vector<32x512xf32> -> vector<32x512xf32>
    %c0_38 = arith.constant 0 : index
    %c0_39 = arith.constant 0 : index
    %48 = vector.load %arg7[%c0_38, %c0_39] : memref<1x512xf32, #tpu.memory_space<vmem>>, vector<1x512xf32>
    %49 = vector.broadcast %48 : vector<1x512xf32> to vector<32x512xf32>
    %50 = arith.addf %47, %49 : vector<32x512xf32>
    %51 = vector.shape_cast %50 : vector<32x512xf32> to vector<2x16x512xf32>
    %c0_40 = arith.constant 0 : index
    %c8_41 = arith.constant 8 : index
    %c0_42 = arith.constant 0 : index
    %52 = vector.load %arg15[%c0_40, %c8_41, %c0_42] : memref<2x32x512xf32, #tpu.memory_space<vmem>>, vector<2x16x512xf32>
    tpu.vector_store %arg15[%c0_40, %c8_41, %c0_42], %51 {strides = array<i32>} : memref<2x32x512xf32, #tpu.memory_space<vmem>>, vector<2x16x512xf32>,
    %c0_43 = arith.constant 0 : index
    %c7_44 = arith.constant 7 : index
    %c0_45 = arith.constant 0 : index
    %53 = vector.load %arg15[%c0_43, %c7_44, %c0_45] : memref<2x32x512xf32, #tpu.memory_space<vmem>>, vector<2x16x512xf32>
    %c0_46 = arith.constant 0 : index
    %c9_47 = arith.constant 9 : index
    %c0_48 = arith.constant 0 : index
    %54 = vector.load %arg15[%c0_46, %c9_47, %c0_48] : memref<2x32x512xf32, #tpu.memory_space<vmem>>, vector<2x16x512xf32>
    %55 = tpu.concatenate %53, %51, %54 in 2 : vector<2x16x512xf32>, vector<2x16x512xf32>, vector<2x16x512xf32> -> vector<2x16x1536xf32>
    %56 = vector.shape_cast %55 : vector<2x16x1536xf32> to vector<32x1536xf32>
    %57 = arith.truncf %56 : vector<32x1536xf32> to vector<32x1536xbf16>
    %c0_49 = arith.constant 0 : index
    %c0_50 = arith.constant 0 : index
    %58 = vector.load %arg8[%c0_49, %c0_50] : memref<1536x512xbf16, #tpu.memory_space<vmem>>, vector<1536x512xbf16>
    %cst_51 = arith.constant dense<0.000000e+00> : vector<32x512xf32>
    %59 = tpu.matmul %57, %58, %cst_51 {dimension_numbers = #tpu.dot_dimension_numbers<[1], [0], [0], [1], [0, 0, 1, 1], [], []>} : vector<32x1536xbf16>, vector<1536x512xbf16>, vector<32x512xf32> -> vector<32x512xf32>
    %c0_52 = arith.constant 0 : index
    %c0_53 = arith.constant 0 : index
    %60 = vector.load %arg9[%c0_52, %c0_53] : memref<1x512xf32, #tpu.memory_space<vmem>>, vector<1x512xf32>
    %61 = vector.broadcast %60 : vector<1x512xf32> to vector<32x512xf32>
    %62 = arith.addf %59, %61 : vector<32x512xf32>
    %cst_54 = arith.constant 0.000000e+00 : f32
    %63 = vector.broadcast %cst_54 : f32 to vector<32x512xf32>
    %64 = arith.maximumf %62, %63 : vector<32x512xf32>
    %65 = vector.shape_cast %64 : vector<32x512xf32> to vector<2x16x512xf32>
    %c0_55 = arith.constant 0 : index
    %c8_56 = arith.constant 8 : index
    %c0_57 = arith.constant 0 : index
    %66 = vector.load %arg15[%c0_55, %c8_56, %c0_57] : memref<2x32x512xf32, #tpu.memory_space<vmem>>, vector<2x16x512xf32>
    tpu.vector_store %arg15[%c0_55, %c8_56, %c0_57], %65 {strides = array<i32>} : memref<2x32x512xf32, #tpu.memory_space<vmem>>, vector<2x16x512xf32>,
    %c0_58 = arith.constant 0 : index
    %c7_59 = arith.constant 7 : index
    %c0_60 = arith.constant 0 : index
    %67 = vector.load %arg15[%c0_58, %c7_59, %c0_60] : memref<2x32x512xf32, #tpu.memory_space<vmem>>, vector<2x16x512xf32>
    %c0_61 = arith.constant 0 : index
    %c9_62 = arith.constant 9 : index
    %c0_63 = arith.constant 0 : index
    %68 = vector.load %arg15[%c0_61, %c9_62, %c0_63] : memref<2x32x512xf32, #tpu.memory_space<vmem>>, vector<2x16x512xf32>
    %69 = tpu.concatenate %67, %65, %68 in 2 : vector<2x16x512xf32>, vector<2x16x512xf32>, vector<2x16x512xf32> -> vector<2x16x1536xf32>
    %70 = vector.shape_cast %69 : vector<2x16x1536xf32> to vector<32x1536xf32>
    %71 = arith.truncf %70 : vector<32x1536xf32> to vector<32x1536xbf16>
    %c0_64 = arith.constant 0 : index
    %c0_65 = arith.constant 0 : index
    %72 = vector.load %arg10[%c0_64, %c0_65] : memref<1536x512xbf16, #tpu.memory_space<vmem>>, vector<1536x512xbf16>
    %cst_66 = arith.constant dense<0.000000e+00> : vector<32x512xf32>
    %73 = tpu.matmul %71, %72, %cst_66 {dimension_numbers = #tpu.dot_dimension_numbers<[1], [0], [0], [1], [0, 0, 1, 1], [], []>} : vector<32x1536xbf16>, vector<1536x512xbf16>, vector<32x512xf32> -> vector<32x512xf32>
    %c0_67 = arith.constant 0 : index
    %c0_68 = arith.constant 0 : index
    %74 = vector.load %arg11[%c0_67, %c0_68] : memref<1x512xf32, #tpu.memory_space<vmem>>, vector<1x512xf32>
    %75 = vector.broadcast %74 : vector<1x512xf32> to vector<32x512xf32>
    %76 = arith.addf %73, %75 : vector<32x512xf32>
    %77 = arith.addf %76, %24 : vector<32x512xf32>
    %cst_69 = arith.constant 0.000000e+00 : f32
    %78 = vector.broadcast %cst_69 : f32 to vector<32x512xf32>
    %79 = arith.maximumf %77, %78 : vector<32x512xf32>
    %c0_70 = arith.constant 0 : index
    %c0_71 = arith.constant 0 : index
    %80 = vector.load %arg12[%c0_70, %c0_71] : memref<512x128xf32, #tpu.memory_space<vmem>>, vector<512x128xf32>
    %cst_72 = arith.constant dense<0.000000e+00> : vector<32x128xf32>
    %81 = tpu.matmul %79, %80, %cst_72 {dimension_numbers = #tpu.dot_dimension_numbers<[1], [0], [0], [1], [0, 0, 1, 1], [], []>} : vector<32x512xf32>, vector<512x128xf32>, vector<32x128xf32> -> vector<32x128xf32>
    %82 = vector.shape_cast %81 : vector<32x128xf32> to vector<2x16x128xf32>
    %cst_73 = arith.constant dense<0.000000e+00> : vector<2x128xf32>
    %83 = vector.multi_reduction <add>, %82, %cst_73 [1] : vector<2x16x128xf32> to vector<2x128xf32>
    %c0_74 = arith.constant 0 : index
    %c0_75 = arith.constant 0 : index
    %84 = vector.load %arg13[%c0_74, %c0_75] : memref<1x128xf32, #tpu.memory_space<vmem>>, vector<1x128xf32>
    %85 = vector.broadcast %84 : vector<1x128xf32> to vector<2x128xf32>
    %86 = arith.addf %83, %85 : vector<2x128xf32>
    %c0_76 = arith.constant 0 : index
    %c0_77 = arith.constant 0 : index
    %87 = vector.load %arg14[%c0_76, %c0_77] : memref<2x128xf32, #tpu.memory_space<vmem>>, vector<2x128xf32>
    tpu.vector_store %arg14[%c0_76, %c0_77], %86 {strides = array<i32>} : memref<2x128xf32, #tpu.memory_space<vmem>>, vector<2x128xf32>,
    return
  }
  func.func @transform_0(%arg0: i32) -> (i32, i32, i32) {
    %c0_i32 = arith.constant 0 : i32
    %c0_i32_0 = arith.constant 0 : i32
    %c0_i32_1 = arith.constant 0 : i32
    return %c0_i32, %arg0, %c0_i32_0 : i32, i32, i32
  }
  func.func @transform_1(%arg0: i32) -> (i32, i32) {
    %c0_i32 = arith.constant 0 : i32
    %c0_i32_0 = arith.constant 0 : i32
    %c0_i32_1 = arith.constant 0 : i32
    return %c0_i32, %c0_i32_0 : i32, i32
  }
  func.func @transform_2(%arg0: i32) -> (i32, i32) {
    %c0_i32 = arith.constant 0 : i32
    %c0_i32_0 = arith.constant 0 : i32
    %c0_i32_1 = arith.constant 0 : i32
    return %c0_i32, %c0_i32_0 : i32, i32
  }
  func.func @transform_3(%arg0: i32) -> (i32, i32) {
    %c0_i32 = arith.constant 0 : i32
    %c0_i32_0 = arith.constant 0 : i32
    %c0_i32_1 = arith.constant 0 : i32
    return %c0_i32, %c0_i32_0 : i32, i32
  }
  func.func @transform_4(%arg0: i32) -> (i32, i32) {
    %c0_i32 = arith.constant 0 : i32
    %c0_i32_0 = arith.constant 0 : i32
    %c0_i32_1 = arith.constant 0 : i32
    return %c0_i32, %c0_i32_0 : i32, i32
  }
  func.func @transform_5(%arg0: i32) -> (i32, i32) {
    %c0_i32 = arith.constant 0 : i32
    %c0_i32_0 = arith.constant 0 : i32
    %c0_i32_1 = arith.constant 0 : i32
    return %c0_i32, %c0_i32_0 : i32, i32
  }
  func.func @transform_6(%arg0: i32) -> (i32, i32) {
    %c0_i32 = arith.constant 0 : i32
    %c0_i32_0 = arith.constant 0 : i32
    %c0_i32_1 = arith.constant 0 : i32
    return %c0_i32, %c0_i32_0 : i32, i32
  }
  func.func @transform_7(%arg0: i32) -> (i32, i32) {
    %c0_i32 = arith.constant 0 : i32
    %c0_i32_0 = arith.constant 0 : i32
    %c0_i32_1 = arith.constant 0 : i32
    return %c0_i32, %c0_i32_0 : i32, i32
  }
  func.func @transform_8(%arg0: i32) -> (i32, i32) {
    %c0_i32 = arith.constant 0 : i32
    %c0_i32_0 = arith.constant 0 : i32
    %c0_i32_1 = arith.constant 0 : i32
    return %c0_i32, %c0_i32_0 : i32, i32
  }
  func.func @transform_9(%arg0: i32) -> (i32, i32) {
    %c0_i32 = arith.constant 0 : i32
    %c0_i32_0 = arith.constant 0 : i32
    %c0_i32_1 = arith.constant 0 : i32
    return %c0_i32, %c0_i32_0 : i32, i32
  }
  func.func @transform_10(%arg0: i32) -> (i32, i32) {
    %c0_i32 = arith.constant 0 : i32
    %c0_i32_0 = arith.constant 0 : i32
    %c0_i32_1 = arith.constant 0 : i32
    return %c0_i32, %c0_i32_0 : i32, i32
  }
  func.func @transform_11(%arg0: i32) -> (i32, i32) {
    %c0_i32 = arith.constant 0 : i32
    %c0_i32_0 = arith.constant 0 : i32
    %c0_i32_1 = arith.constant 0 : i32
    return %c0_i32, %c0_i32_0 : i32, i32
  }
  func.func @transform_12(%arg0: i32) -> (i32, i32) {
    %c0_i32 = arith.constant 0 : i32
    %c0_i32_0 = arith.constant 0 : i32
    %c0_i32_1 = arith.constant 0 : i32
    return %c0_i32, %c0_i32_0 : i32, i32
  }
  func.func @transform_13(%arg0: i32) -> (i32, i32) {
    %c0_i32 = arith.constant 0 : i32
    %c0_i32_0 = arith.constant 0 : i32
    return %arg0, %c0_i32 : i32, i32
  }
}

</mosaic_0001>

<llo_original>
// kernel: resnet_forward.1
$region0: #{resnet_forward.1}
  #allocation0 [shape = 'u32[]', space=smem, size = 0x4, offset = 0x4, fixed_abs, tag = 'smem constant byte address 0x4 - core index']
  #allocation1 [shape = 'u32[144,128]{1,0:T(1,128)}', space=vmem, size = 0x12000, scoped, tag = 'internal scratch']
  #allocation2 [shape = 'f32[2,32,512]{2,1,0:T(8,128)}', space=vmem, size = 0x20000, scoped, tag = 'scratch operand']
  %s0 = inlined_call_operand.vmem [shape: bf16[4,32,144], index: 0, kind: input, shape index: {}]
  %s1 = inlined_call_operand.vmem [shape: bf16[144,512], index: 1, kind: input, shape index: {}]
  %s2 = inlined_call_operand.vmem [shape: f32[1,512], index: 2, kind: input, shape index: {}]
  %s3 = inlined_call_operand.vmem [shape: bf16[1536,512], index: 3, kind: input, shape index: {}]
  %s4 = inlined_call_operand.vmem [shape: f32[1,512], index: 4, kind: input, shape index: {}]
  %s5 = inlined_call_operand.hbm [shape: bf16[1536,512], index: 5, kind: input, shape index: {}]
  %s6 = inlined_call_operand.vmem [shape: f32[1,512], index: 6, kind: input, shape index: {}]
  %s7 = inlined_call_operand.hbm [shape: bf16[1536,512], index: 7, kind: input, shape index: {}]
  %s8 = inlined_call_operand.vmem [shape: f32[1,512], index: 8, kind: input, shape index: {}]
  %s9 = inlined_call_operand.hbm [shape: bf16[1536,512], index: 9, kind: input, shape index: {}]
  %s10 = inlined_call_operand.vmem [shape: f32[1,512], index: 10, kind: input, shape index: {}]
  %s11 = inlined_call_operand.vmem [shape: f32[512,128], index: 11, kind: input, shape index: {}]
  %s12 = inlined_call_operand.vmem [shape: f32[1,128], index: 12, kind: input, shape index: {}]
  %s13 = inlined_call_operand.hbm [shape: f32[2,128], index: 13, kind: output, shape index: {}]
  %s14 = sld [smem:[#allocation0]]
  $region74: #{resnet_forward.1} parent=0
    _
  %s16 = ssub.s32 1, %s14
  %s17 = scalar_select 0, %s16, %s14
  $region1: #{resnet_forward.1} parent=0
    #allocation3 [shape = 'u8[1572864]{0}', space=vmem, size = 0x180000, scoped, tag = 'input window, operand 5, single buffered']
    #allocation4 [shape = 's32[1]{0}', space=sflag, size = 0x4, scoped, tag = 'scoped memory for resnet_forward.1']
    #allocation5 [shape = 's32[1]{0}', space=sflag, size = 0x4, scoped, tag = 'scoped memory for resnet_forward.1']
    #allocation6 [shape = 'u8[1572864]{0}', space=vmem, size = 0x180000, scoped, tag = 'input window, operand 7, single buffered']
    #allocation7 [shape = 's32[1]{0}', space=sflag, size = 0x4, scoped, tag = 'scoped memory for resnet_forward.1']
    #allocation8 [shape = 'u8[1572864]{0}', space=vmem, size = 0x180000, scoped, tag = 'input window, operand 9, single buffered']
    #allocation9 [shape = 'u8[1024]{0}', space=vmem, size = 0x400, scoped, tag = 'output window, operand 0, single buffered']
    %18 = vsyncpa [#allocation4], 0
    %19 = vsyncpa [#allocation7], 0
    %20 = vsyncpa [#allocation5], 0
    // Predicated region
    $region2: #{resnet_forward.1} parent=1 // pred_check
      _
    $region3: #{resnet_forward.1} parent=1 // pred_check_branch
      %22 = sbr.rel (0) target = $region5
    $region4: #{resnet_forward.1} parent=1 // pred_region
      _
    $region5: #{resnet_forward.1} parent=1 // pred_fallthru
      _
    // Predicated region
    $region6: #{resnet_forward.1} parent=1 // pred_check
      _
    $region7: #{resnet_forward.1} parent=1 // pred_check_branch
      %24 = sbr.rel (0) target = $region9
    $region8: #{resnet_forward.1} parent=1 // pred_region
      _
    $region9: #{resnet_forward.1} parent=1 // pred_fallthru
      _
    // Predicated region
    $region10: #{resnet_forward.1} parent=1 // pred_check
      _
    $region11: #{resnet_forward.1} parent=1 // pred_check_branch
      %26 = sbr.rel (0) target = $region13
    $region12: #{resnet_forward.1} parent=1 // pred_region
      _
    $region13: #{resnet_forward.1} parent=1 // pred_fallthru
      _
    // Predicated region
    $region14: #{resnet_forward.1} parent=1 // pred_check
      _
    $region15: #{resnet_forward.1} parent=1 // pred_check_branch
      %28 = sbr.rel (0) target = $region17
    $region16: #{resnet_forward.1} parent=1 // pred_region
      _
    $region17: #{resnet_forward.1} parent=1 // pred_fallthru
      _
    // Predicated region
    $region18: #{resnet_forward.1} parent=1 // pred_check
      _
    $region19: #{resnet_forward.1} parent=1 // pred_check_branch
      %30 = sbr.rel (0) target = $region21
    $region20: #{resnet_forward.1} parent=1 // pred_region
      _
    $region21: #{resnet_forward.1} parent=1 // pred_fallthru
      _
    // Predicated region
    $region22: #{resnet_forward.1} parent=1 // pred_check
      _
    $region23: #{resnet_forward.1} parent=1 // pred_check_branch
      %32 = sbr.rel (0) target = $region25
    $region24: #{resnet_forward.1} parent=1 // pred_region
      %s34 = ssub.s32 49152, 49152
      %35 = vsyncadd [#allocation4], %s34
      %s36 = sshll.u32 [#allocation3], 4
      %s37 = int_to_ptr.vmem [resolvable:$true] %s36
      %42 = dma.hbm_to_vmem [thread:$0]  %s5, 49152, %s37, [#allocation4], 256, 256, 16
    $region25: #{resnet_forward.1} parent=1 // pred_fallthru
      _
    // Predicated region
    $region26: #{resnet_forward.1} parent=1 // pred_check
      _
    $region27: #{resnet_forward.1} parent=1 // pred_check_branch
      %44 = sbr.rel (0) target = $region29
    $region28: #{resnet_forward.1} parent=1 // pred_region
      _
    $region29: #{resnet_forward.1} parent=1 // pred_fallthru
      _
    // Predicated region
    $region30: #{resnet_forward.1} parent=1 // pred_check
      _
    $region31: #{resnet_forward.1} parent=1 // pred_check_branch
      %46 = sbr.rel (0) target = $region33
    $region32: #{resnet_forward.1} parent=1 // pred_region
      %s48 = ssub.s32 49152, 49152
      %49 = vsyncadd [#allocation7], %s48
      %s50 = sshll.u32 [#allocation6], 4
      %s51 = int_to_ptr.vmem [resolvable:$true] %s50
      %56 = dma.hbm_to_vmem [thread:$0]  %s7, 49152, %s51, [#allocation7], 256, 256, 16
    $region33: #{resnet_forward.1} parent=1 // pred_fallthru
      _
    // Predicated region
    $region34: #{resnet_forward.1} parent=1 // pred_check
      _
    $region35: #{resnet_forward.1} parent=1 // pred_check_branch
      %58 = sbr.rel (0) target = $region37
    $region36: #{resnet_forward.1} parent=1 // pred_region
      _
    $region37: #{resnet_forward.1} parent=1 // pred_fallthru
      _
    // Predicated region
    $region38: #{resnet_forward.1} parent=1 // pred_check
      _
    $region39: #{resnet_forward.1} parent=1 // pred_check_branch
      %60 = sbr.rel (0) target = $region41
    $region40: #{resnet_forward.1} parent=1 // pred_region
      %s62 = ssub.s32 49152, 49152
      %63 = vsyncadd [#allocation7], %s62
      %s64 = sshll.u32 [#allocation8], 4
      %s65 = int_to_ptr.vmem [resolvable:$true] %s64
      %70 = dma.hbm_to_vmem [thread:$0]  %s9, 49152, %s65, [#allocation7], 256, 256, 16
    $region41: #{resnet_forward.1} parent=1 // pred_fallthru
      _
    // Predicated region
    $region42: #{resnet_forward.1} parent=1 // pred_check
      _
    $region43: #{resnet_forward.1} parent=1 // pred_check_branch
      %72 = sbr.rel (0) target = $region45
    $region44: #{resnet_forward.1} parent=1 // pred_region
      _
    $region45: #{resnet_forward.1} parent=1 // pred_fallthru
      _
    // Predicated region
    $region46: #{resnet_forward.1} parent=1 // pred_check
      _
    $region47: #{resnet_forward.1} parent=1 // pred_check_branch
      %74 = sbr.rel (0) target = $region49
    $region48: #{resnet_forward.1} parent=1 // pred_region
      _
    $region49: #{resnet_forward.1} parent=1 // pred_fallthru
      _
    // Predicated region
    $region50: #{resnet_forward.1} parent=1 // pred_check
      _
    $region51: #{resnet_forward.1} parent=1 // pred_check_branch
      %76 = sbr.rel (0) target = $region53
    $region52: #{resnet_forward.1} parent=1 // pred_region
      _
    $region53: #{resnet_forward.1} parent=1 // pred_fallthru
      _
    // Predicated region
    $region54: #{resnet_forward.1} parent=1 // pred_check
      _
    $region55: #{resnet_forward.1} parent=1 // pred_check_branch
      %78 = sbr.rel (0) target = $region57
    $region56: #{resnet_forward.1} parent=1 // pred_region
      %79 = dma.done [#allocation4], 49152
    $region57: #{resnet_forward.1} parent=1 // pred_fallthru
      _
    // Predicated region
    $region58: #{resnet_forward.1} parent=1 // pred_check
      _
    $region59: #{resnet_forward.1} parent=1 // pred_check_branch
      %81 = sbr.rel (0) target = $region61
    $region60: #{resnet_forward.1} parent=1 // pred_region
      %82 = dma.done [#allocation7], 49152
    $region61: #{resnet_forward.1} parent=1 // pred_fallthru
      _
    // Predicated region
    $region62: #{resnet_forward.1} parent=1 // pred_check
      _
    $region63: #{resnet_forward.1} parent=1 // pred_check_branch
      %84 = sbr.rel (0) target = $region65
    $region64: #{resnet_forward.1} parent=1 // pred_region
      %85 = dma.done [#allocation7], 49152
    $region65: #{resnet_forward.1} parent=1 // pred_fallthru
      _
    %87 = vst [vmem:[#allocation2] sm:$0xff] 0.0
    %88 = vst [vmem:[#allocation2 + $0x8] sm:$0xff] 0.0
    %89 = vst [vmem:[#allocation2 + $0x10] sm:$0xff] 0.0
    %90 = vst [vmem:[#allocation2 + $0x18] sm:$0xff] 0.0
    %91 = vst [vmem:[#allocation2 + $0x80] sm:$0xff] 0.0
    %92 = vst [vmem:[#allocation2 + $0x88] sm:$0xff] 0.0
    %93 = vst [vmem:[#allocation2 + $0x90] sm:$0xff] 0.0
    %94 = vst [vmem:[#allocation2 + $0x98] sm:$0xff] 0.0
    %95 = vst [vmem:[#allocation2 + $0x60] sm:$0xff] 0.0
    %96 = vst [vmem:[#allocation2 + $0x68] sm:$0xff] 0.0
    %97 = vst [vmem:[#allocation2 + $0x70] sm:$0xff] 0.0
    %98 = vst [vmem:[#allocation2 + $0x78] sm:$0xff] 0.0
    %99 = vst [vmem:[#allocation2 + $0xe0] sm:$0xff] 0.0
    %100 = vst [vmem:[#allocation2 + $0xe8] sm:$0xff] 0.0
    %101 = vst [vmem:[#allocation2 + $0xf0] sm:$0xff] 0.0
    %102 = vst [vmem:[#allocation2 + $0xf8] sm:$0xff] 0.0
    %v103 = vld [vmem:[%s0] sm:$0xff]
    %v104 = vld [vmem:[%s0 + $0x8] sm:$0xff]
    %v105 = vld [vmem:[%s0 + $0x10] sm:$0xff]
    %v106 = vld [vmem:[%s0 + $0x18] sm:$0xff]
    %v107 = vld [vmem:[%s0 + $0x20] sm:$0xff]
    %v108 = vld [vmem:[%s0 + $0x28] sm:$0xff]
    %v109 = vld [vmem:[%s0 + $0x30] sm:$0xff]
    %v110 = vld [vmem:[%s0 + $0x38] sm:$0xff]
    %v111 = vld [vmem:[%s0 + $0x40] sm:$0xff]
    %v112 = vld [vmem:[%s0 + $0x48] sm:$0xff]
    %v113 = vld [vmem:[%s0 + $0x50] sm:$0xff]
    %v114 = vld [vmem:[%s0 + $0x58] sm:$0xff]
    %v115 = vld [vmem:[%s0 + $0x60] sm:$0xff]
    %v116 = vld [vmem:[%s0 + $0x68] sm:$0xff]
    %v117 = vld [vmem:[%s0 + $0x70] sm:$0xff]
    %v118 = vld [vmem:[%s0 + $0x78] sm:$0xff]
    %v119 = vld [vmem:[%s1] sm:$0xff]
    %v120 = vld [vmem:[%s1 + $0x8] sm:$0xff]
    %v121 = vld [vmem:[%s1 + $0x10] sm:$0xff]
    %v122 = vld [vmem:[%s1 + $0x18] sm:$0xff]
    %v123 = vld [vmem:[%s1 + $0x20] sm:$0xff]
    %v124 = vld [vmem:[%s1 + $0x28] sm:$0xff]
    %v125 = vld [vmem:[%s1 + $0x30] sm:$0xff]
    %v126 = vld [vmem:[%s1 + $0x38] sm:$0xff]
    %v127 = vld [vmem:[%s1 + $0x40] sm:$0xff]
    %v128 = vld [vmem:[%s1 + $0x48] sm:$0xff]
    %v129 = vld [vmem:[%s1 + $0x50] sm:$0xff]
    %v130 = vld [vmem:[%s1 + $0x58] sm:$0xff]
    %v131 = vld [vmem:[%s1 + $0x60] sm:$0xff]
    %v132 = vld [vmem:[%s1 + $0x68] sm:$0xff]
    %v133 = vld [vmem:[%s1 + $0x70] sm:$0xff]
    %v134 = vld [vmem:[%s1 + $0x78] sm:$0xff]
    %v135 = vld [vmem:[%s1 + $0x80] sm:$0xff]
    %v136 = vld [vmem:[%s1 + $0x88] sm:$0xff]
    %v137 = vld [vmem:[%s1 + $0x90] sm:$0xff]
    %v138 = vld [vmem:[%s1 + $0x98] sm:$0xff]
    %v139 = vld [vmem:[%s1 + $0xa0] sm:$0xff]
    %v140 = vld [vmem:[%s1 + $0xa8] sm:$0xff]
    %v141 = vld [vmem:[%s1 + $0xb0] sm:$0xff]
    %v142 = vld [vmem:[%s1 + $0xb8] sm:$0xff]
    %v143 = vld [vmem:[%s1 + $0xc0] sm:$0xff]
    %v144 = vld [vmem:[%s1 + $0xc8] sm:$0xff]
    %v145 = vld [vmem:[%s1 + $0xd0] sm:$0xff]
    %v146 = vld [vmem:[%s1 + $0xd8] sm:$0xff]
    %v147 = vld [vmem:[%s1 + $0xe0] sm:$0xff]
    %v148 = vld [vmem:[%s1 + $0xe8] sm:$0xff]
    %v149 = vld [vmem:[%s1 + $0xf0] sm:$0xff]
    %v150 = vld [vmem:[%s1 + $0xf8] sm:$0xff]
    %v151 = vld [vmem:[%s1 + $0x100] sm:$0xff]
    %v152 = vld [vmem:[%s1 + $0x108] sm:$0xff]
    %v153 = vld [vmem:[%s1 + $0x110] sm:$0xff]
    %v154 = vld [vmem:[%s1 + $0x118] sm:$0xff]
    %v171 = vunpack.c.l.b16 %v103
    %v172 = vunpack.c.h.b16 %v103
    %v173 = vunpack.c.l.b16 %v104
    %v174 = vunpack.c.h.b16 %v104
    %v175 = vunpack.c.l.b16 %v105
    %v176 = vunpack.c.h.b16 %v105
    %v177 = vunpack.c.l.b16 %v106
    %v178 = vunpack.c.h.b16 %v106
    %v179 = vunpack.c.l.b16 %v107
    %v180 = vunpack.c.h.b16 %v107
    %v181 = vunpack.c.l.b16 %v108
    %v182 = vunpack.c.h.b16 %v108
    %v183 = vunpack.c.l.b16 %v109
    %v184 = vunpack.c.h.b16 %v109
    %v185 = vunpack.c.l.b16 %v110
    %v186 = vunpack.c.h.b16 %v110
    %v187 = vunpack.c.l.b16 %v111
    %v188 = vunpack.c.h.b16 %v111
    %v189 = vunpack.c.l.b16 %v112
    %v190 = vunpack.c.h.b16 %v112
    %v191 = vunpack.c.l.b16 %v113
    %v192 = vunpack.c.h.b16 %v113
    %v193 = vunpack.c.l.b16 %v114
    %v194 = vunpack.c.h.b16 %v114
    %v195 = vunpack.c.l.b16 %v115
    %v196 = vunpack.c.h.b16 %v115
    %v197 = vunpack.c.l.b16 %v116
    %v198 = vunpack.c.h.b16 %v116
    %v199 = vunpack.c.l.b16 %v117
    %v200 = vunpack.c.h.b16 %v117
    %v201 = vunpack.c.l.b16 %v118
    %v202 = vunpack.c.h.b16 %v118
    %v203 = vpack.c.b16 %v173, %v171
    %v204 = vpack.c.b16 %v174, %v172
    %v205 = vpack.c.b16 %v177, %v175
    %v206 = vpack.c.b16 %v178, %v176
    %v207 = vpack.c.b16 %v181, %v179
    %v208 = vpack.c.b16 %v182, %v180
    %v209 = vpack.c.b16 %v185, %v183
    %v210 = vpack.c.b16 %v186, %v184
    %v211 = vpack.c.b16 %v189, %v187
    %v212 = vpack.c.b16 %v190, %v188
    %v213 = vpack.c.b16 %v193, %v191
    %v214 = vpack.c.b16 %v194, %v192
    %v215 = vpack.c.b16 %v197, %v195
    %v216 = vpack.c.b16 %v198, %v196
    %v217 = vpack.c.b16 %v201, %v199
    %v218 = vpack.c.b16 %v202, %v200
    %v263 = vunpack.c.l.b16 %v119
    %v264 = vunpack.c.h.b16 %v119
    %v265 = vunpack.c.l.b16 %v120
    %v266 = vunpack.c.h.b16 %v120
    %v267 = vunpack.c.l.b16 %v121
    %v268 = vunpack.c.h.b16 %v121
    %v269 = vunpack.c.l.b16 %v122
    %v270 = vunpack.c.h.b16 %v122
    %v271 = vunpack.c.l.b16 %v123
    %v272 = vunpack.c.h.b16 %v123
    %v273 = vunpack.c.l.b16 %v124
    %v274 = vunpack.c.h.b16 %v124
    %v275 = vunpack.c.l.b16 %v125
    %v276 = vunpack.c.h.b16 %v125
    %v277 = vunpack.c.l.b16 %v126
    %v278 = vunpack.c.h.b16 %v126
    %v279 = vunpack.c.l.b16 %v127
    %v280 = vunpack.c.h.b16 %v127
    %v281 = vunpack.c.l.b16 %v128
    %v282 = vunpack.c.h.b16 %v128
    %v283 = vunpack.c.l.b16 %v129
    %v284 = vunpack.c.h.b16 %v129
    %v285 = vunpack.c.l.b16 %v130
    %v286 = vunpack.c.h.b16 %v130
    %v287 = vunpack.c.l.b16 %v131
    %v288 = vunpack.c.h.b16 %v131
    %v289 = vunpack.c.l.b16 %v132
    %v290 = vunpack.c.h.b16 %v132
    %v291 = vunpack.c.l.b16 %v133
    %v292 = vunpack.c.h.b16 %v133
    %v293 = vunpack.c.l.b16 %v134
    %v294 = vunpack.c.h.b16 %v134
    %v295 = vunpack.c.l.b16 %v135
    %v296 = vunpack.c.h.b16 %v135
    %v297 = vunpack.c.l.b16 %v136
    %v298 = vunpack.c.h.b16 %v136
    %v299 = vunpack.c.l.b16 %v137
    %v300 = vunpack.c.h.b16 %v137
    %v301 = vunpack.c.l.b16 %v138
    %v302 = vunpack.c.h.b16 %v138
    %v303 = vunpack.c.l.b16 %v139
    %v304 = vunpack.c.h.b16 %v139
    %v305 = vunpack.c.l.b16 %v140
    %v306 = vunpack.c.h.b16 %v140
    %v307 = vunpack.c.l.b16 %v141
    %v308 = vunpack.c.h.b16 %v141
    %v309 = vunpack.c.l.b16 %v142
    %v310 = vunpack.c.h.b16 %v142
    %v311 = vunpack.c.l.b16 %v143
    %v312 = vunpack.c.h.b16 %v143
    %v313 = vunpack.c.l.b16 %v144
    %v314 = vunpack.c.h.b16 %v144
    %v315 = vunpack.c.l.b16 %v145
    %v316 = vunpack.c.h.b16 %v145
    %v317 = vunpack.c.l.b16 %v146
    %v318 = vunpack.c.h.b16 %v146
    %v319 = vunpack.c.l.b16 %v147
    %v320 = vunpack.c.h.b16 %v147
    %v321 = vunpack.c.l.b16 %v148
    %v322 = vunpack.c.h.b16 %v148
    %v323 = vunpack.c.l.b16 %v149
    %v324 = vunpack.c.h.b16 %v149
    %v325 = vunpack.c.l.b16 %v150
    %v326 = vunpack.c.h.b16 %v150
    %v327 = vunpack.c.l.b16 %v151
    %v328 = vunpack.c.h.b16 %v151
    %v329 = vunpack.c.l.b16 %v152
    %v330 = vunpack.c.h.b16 %v152
    %v331 = vunpack.c.l.b16 %v153
    %v332 = vunpack.c.h.b16 %v153
    %v333 = vunpack.c.l.b16 %v154
    %v334 = vunpack.c.h.b16 %v154
    %v335 = vpack.c.b16 %v267, %v263
    %v336 = vpack.c.b16 %v268, %v264
    %v337 = vpack.c.b16 %v269, %v265
    %v338 = vpack.c.b16 %v270, %v266
    %v339 = vpack.c.b16 %v275, %v271
    %v340 = vpack.c.b16 %v276, %v272
    %v341 = vpack.c.b16 %v277, %v273
    %v342 = vpack.c.b16 %v278, %v274
    %v343 = vpack.c.b16 %v283, %v279
    %v344 = vpack.c.b16 %v284, %v280
    %v345 = vpack.c.b16 %v285, %v281
    %v346 = vpack.c.b16 %v286, %v282
    %v347 = vpack.c.b16 %v291, %v287
    %v348 = vpack.c.b16 %v292, %v288
    %v349 = vpack.c.b16 %v293, %v289
    %v350 = vpack.c.b16 %v294, %v290
    %v351 = vpack.c.b16 %v299, %v295
    %v352 = vpack.c.b16 %v300, %v296
    %v353 = vpack.c.b16 %v301, %v297
    %v354 = vpack.c.b16 %v302, %v298
    %v355 = vpack.c.b16 %v307, %v303
    %v356 = vpack.c.b16 %v308, %v304
    %v357 = vpack.c.b16 %v309, %v305
    %v358 = vpack.c.b16 %v310, %v306
    %v359 = vpack.c.b16 %v315, %v311
    %v360 = vpack.c.b16 %v316, %v312
    %v361 = vpack.c.b16 %v317, %v313
    %v362 = vpack.c.b16 %v318, %v314
    %v363 = vpack.c.b16 %v323, %v319
    %v364 = vpack.c.b16 %v324, %v320
    %v365 = vpack.c.b16 %v325, %v321
    %v366 = vpack.c.b16 %v326, %v322
    %v367 = vpack.c.b16 %v331, %v327
    %v368 = vpack.c.b16 %v332, %v328
    %v369 = vpack.c.b16 %v333, %v329
    %v370 = vpack.c.b16 %v334, %v330
    %vm407 = vcmask 130048
    %v409 = vsel %vm407, %v204, 0
    %v412 = vsel %vm407, %v206, 0
    %v415 = vsel %vm407, %v208, 0
    %v418 = vsel %vm407, %v210, 0
    %v421 = vsel %vm407, %v212, 0
    %v424 = vsel %vm407, %v214, 0
    %v427 = vsel %vm407, %v216, 0
    %v430 = vsel %vm407, %v218, 0
    %432 = vmatprep.subr.bf16.mxu0 %v364
    %433 = vmatpush1.bf16.msra.mxu0 %v363
    %434 = vmatprep.subr.bf16.mxu0 %v360
    %435 = vmatpush1.bf16.msra.mxu0 %v359
    %436 = vmatprep.subr.bf16.mxu0 %v356
    %437 = vmatpush1.bf16.msra.mxu0 %v355
    %438 = vmatprep.subr.bf16.mxu0 %v352
    %439 = vmatpush1.bf16.msra.mxu0 %v351
    %440 = vmatprep.subr.bf16.mxu0 %v348
    %441 = vmatpush1.bf16.msra.mxu0 %v347
    %442 = vmatprep.subr.bf16.mxu0 %v344
    %443 = vmatpush1.bf16.msra.mxu0 %v343
    %444 = vmatprep.subr.bf16.mxu0 %v340
    %445 = vmatpush1.bf16.msra.mxu0 %v339
    %446 = vmatprep.subr.bf16.mxu0 %v336
    %447 = vmatpush1.bf16.msra.mxu0 %v335
    %448 = vmatprep.subr.bf16.mxu0 0
    %449 = vmatpush2.bf16.msra.mxu0 0
    %450 = vmatprep.subr.bf16.mxu0 0
    %451 = vmatpush2.bf16.msra.mxu0 0
    %452 = vmatprep.subr.bf16.mxu0 0
    %453 = vmatpush2.bf16.msra.mxu0 0
    %454 = vmatprep.subr.bf16.mxu0 0
    %455 = vmatpush2.bf16.msra.mxu0 0
    %456 = vmatprep.subr.bf16.mxu0 0
    %457 = vmatpush2.bf16.msra.mxu0 0
    %458 = vmatprep.subr.bf16.mxu0 0
    %459 = vmatpush2.bf16.msra.mxu0 0
    %460 = vmatprep.subr.bf16.mxu0 0
    %461 = vmatpush2.bf16.msra.mxu0 0
    %462 = vmatprep.subr.bf16.mxu0 %v368
    %463 = vmatpush2.bf16.msra.mxu0 %v367
    %464 = vmatprep.mubr.bf16.mxu0 %v409
    %465 = vmatmul.mubr.bf16.gmra.mxu0 %v203
    %v466 = vpop.f32.mrf.mxu0
    %v467 = vadd.f32 0.0, %v466
    %v468 = vpop.f32.mrf.mxu0
    %v469 = vadd.f32 0.0, %v468
    %v470 = vpop.f32.mrf.mxu0
    %v471 = vadd.f32 0.0, %v470
    %v472 = vpop.f32.mrf.mxu0
    %v473 = vadd.f32 0.0, %v472
    %474 = vmatprep.mubr.bf16.mxu0 %v412
    %475 = vmatmul.mubr.bf16.gmra.mxu0 %v205
    %v476 = vpop.f32.mrf.mxu0
    %v477 = vadd.f32 0.0, %v476
    %v478 = vpop.f32.mrf.mxu0
    %v479 = vadd.f32 0.0, %v478
    %v480 = vpop.f32.mrf.mxu0
    %v481 = vadd.f32 0.0, %v480
    %v482 = vpop.f32.mrf.mxu0
    %v483 = vadd.f32 0.0, %v482
    %484 = vmatprep.mubr.bf16.mxu0 %v415
    %485 = vmatmul.mubr.bf16.gmra.mxu0 %v207
    %v486 = vpop.f32.mrf.mxu0
    %v487 = vadd.f32 0.0, %v486
    %v488 = vpop.f32.mrf.mxu0
    %v489 = vadd.f32 0.0, %v488
    %v490 = vpop.f32.mrf.mxu0
    %v491 = vadd.f32 0.0, %v490
    %v492 = vpop.f32.mrf.mxu0
    %v493 = vadd.f32 0.0, %v492
    %494 = vmatprep.mubr.bf16.mxu0 %v418
    %495 = vmatmul.mubr.bf16.gmra.mxu0 %v209
    %v496 = vpop.f32.mrf.mxu0
    %v497 = vadd.f32 0.0, %v496
    %v498 = vpop.f32.mrf.mxu0
    %v499 = vadd.f32 0.0, %v498
    %v500 = vpop.f32.mrf.mxu0
    %v501 = vadd.f32 0.0, %v500
    %v502 = vpop.f32.mrf.mxu0
    %v503 = vadd.f32 0.0, %v502
    %504 = vmatprep.mubr.bf16.mxu0 %v421
    %505 = vmatmul.mubr.bf16.gmra.mxu0 %v211
    %v506 = vpop.f32.mrf.mxu0
    %v507 = vadd.f32 0.0, %v506
    %v508 = vpop.f32.mrf.mxu0
    %v509 = vadd.f32 0.0, %v508
    %v510 = vpop.f32.mrf.mxu0
    %v511 = vadd.f32 0.0, %v510
    %v512 = vpop.f32.mrf.mxu0
    %v513 = vadd.f32 0.0, %v512
    %514 = vmatprep.mubr.bf16.mxu0 %v424
    %515 = vmatmul.mubr.bf16.gmra.mxu0 %v213
    %v516 = vpop.f32.mrf.mxu0
    %v517 = vadd.f32 0.0, %v516
    %v518 = vpop.f32.mrf.mxu0
    %v519 = vadd.f32 0.0, %v518
    %v520 = vpop.f32.mrf.mxu0
    %v521 = vadd.f32 0.0, %v520
    %v522 = vpop.f32.mrf.mxu0
    %v523 = vadd.f32 0.0, %v522
    %524 = vmatprep.mubr.bf16.mxu0 %v427
    %525 = vmatmul.mubr.bf16.gmra.mxu0 %v215
    %v526 = vpop.f32.mrf.mxu0
    %v527 = vadd.f32 0.0, %v526
    %v528 = vpop.f32.mrf.mxu0
    %v529 = vadd.f32 0.0, %v528
    %v530 = vpop.f32.mrf.mxu0
    %v531 = vadd.f32 0.0, %v530
    %v532 = vpop.f32.mrf.mxu0
    %v533 = vadd.f32 0.0, %v532
    %534 = vmatprep.mubr.bf16.mxu0 %v430
    %535 = vmatmul.mubr.bf16.gmra.mxu0 %v217
    %v536 = vpop.f32.mrf.mxu0
    %v537 = vadd.f32 0.0, %v536
    %v538 = vpop.f32.mrf.mxu0
    %v539 = vadd.f32 0.0, %v538
    %v540 = vpop.f32.mrf.mxu0
    %v541 = vadd.f32 0.0, %v540
    %v542 = vpop.f32.mrf.mxu0
    %v543 = vadd.f32 0.0, %v542
    %544 = vdwg.mxu0
    %545 = vmatprep.subr.bf16.mxu0 %v366
    %546 = vmatpush1.bf16.msra.mxu0 %v365
    %547 = vmatprep.subr.bf16.mxu0 %v362
    %548 = vmatpush1.bf16.msra.mxu0 %v361
    %549 = vmatprep.subr.bf16.mxu0 %v358
    %550 = vmatpush1.bf16.msra.mxu0 %v357
    %551 = vmatprep.subr.bf16.mxu0 %v354
    %552 = vmatpush1.bf16.msra.mxu0 %v353
    %553 = vmatprep.subr.bf16.mxu0 %v350
    %554 = vmatpush1.bf16.msra.mxu0 %v349
    %555 = vmatprep.subr.bf16.mxu0 %v346
    %556 = vmatpush1.bf16.msra.mxu0 %v345
    %557 = vmatprep.subr.bf16.mxu0 %v342
    %558 = vmatpush1.bf16.msra.mxu0 %v341
    %559 = vmatprep.subr.bf16.mxu0 %v338
    %560 = vmatpush1.bf16.msra.mxu0 %v337
    %561 = vmatprep.subr.bf16.mxu0 0
    %562 = vmatpush2.bf16.msra.mxu0 0
    %563 = vmatprep.subr.bf16.mxu0 0
    %564 = vmatpush2.bf16.msra.mxu0 0
    %565 = vmatprep.subr.bf16.mxu0 0
    %566 = vmatpush2.bf16.msra.mxu0 0
    %567 = vmatprep.subr.bf16.mxu0 0
    %568 = vmatpush2.bf16.msra.mxu0 0
    %569 = vmatprep.subr.bf16.mxu0 0
    %570 = vmatpush2.bf16.msra.mxu0 0
    %571 = vmatprep.subr.bf16.mxu0 0
    %572 = vmatpush2.bf16.msra.mxu0 0
    %573 = vmatprep.subr.bf16.mxu0 0
    %574 = vmatpush2.bf16.msra.mxu0 0
    %575 = vmatprep.subr.bf16.mxu0 %v370
    %576 = vmatpush2.bf16.msra.mxu0 %v369
    %577 = vmatprep.mubr.bf16.mxu0 %v409
    %578 = vmatmul.mubr.bf16.gmra.mxu0 %v203
    %v579 = vpop.f32.mrf.mxu0
    %v580 = vadd.f32 0.0, %v579
    %v581 = vpop.f32.mrf.mxu0
    %v582 = vadd.f32 0.0, %v581
    %v583 = vpop.f32.mrf.mxu0
    %v584 = vadd.f32 0.0, %v583
    %v585 = vpop.f32.mrf.mxu0
    %v586 = vadd.f32 0.0, %v585
    %587 = vmatprep.mubr.bf16.mxu0 %v412
    %588 = vmatmul.mubr.bf16.gmra.mxu0 %v205
    %v589 = vpop.f32.mrf.mxu0
    %v590 = vadd.f32 0.0, %v589
    %v591 = vpop.f32.mrf.mxu0
    %v592 = vadd.f32 0.0, %v591
    %v593 = vpop.f32.mrf.mxu0
    %v594 = vadd.f32 0.0, %v593
    %v595 = vpop.f32.mrf.mxu0
    %v596 = vadd.f32 0.0, %v595
    %597 = vmatprep.mubr.bf16.mxu0 %v415
    %598 = vmatmul.mubr.bf16.gmra.mxu0 %v207
    %v599 = vpop.f32.mrf.mxu0
    %v600 = vadd.f32 0.0, %v599
    %v601 = vpop.f32.mrf.mxu0
    %v602 = vadd.f32 0.0, %v601
    %v603 = vpop.f32.mrf.mxu0
    %v604 = vadd.f32 0.0, %v603
    %v605 = vpop.f32.mrf.mxu0
    %v606 = vadd.f32 0.0, %v605
    %607 = vmatprep.mubr.bf16.mxu0 %v418
    %608 = vmatmul.mubr.bf16.gmra.mxu0 %v209
    %v609 = vpop.f32.mrf.mxu0
    %v610 = vadd.f32 0.0, %v609
    %v611 = vpop.f32.mrf.mxu0
    %v612 = vadd.f32 0.0, %v611
    %v613 = vpop.f32.mrf.mxu0
    %v614 = vadd.f32 0.0, %v613
    %v615 = vpop.f32.mrf.mxu0
    %v616 = vadd.f32 0.0, %v615
    %617 = vmatprep.mubr.bf16.mxu0 %v421
    %618 = vmatmul.mubr.bf16.gmra.mxu0 %v211
    %v619 = vpop.f32.mrf.mxu0
    %v620 = vadd.f32 0.0, %v619
    %v621 = vpop.f32.mrf.mxu0
    %v622 = vadd.f32 0.0, %v621
    %v623 = vpop.f32.mrf.mxu0
    %v624 = vadd.f32 0.0, %v623
    %v625 = vpop.f32.mrf.mxu0
    %v626 = vadd.f32 0.0, %v625
    %627 = vmatprep.mubr.bf16.mxu0 %v424
    %628 = vmatmul.mubr.bf16.gmra.mxu0 %v213
    %v629 = vpop.f32.mrf.mxu0
    %v630 = vadd.f32 0.0, %v629
    %v631 = vpop.f32.mrf.mxu0
    %v632 = vadd.f32 0.0, %v631
    %v633 = vpop.f32.mrf.mxu0
    %v634 = vadd.f32 0.0, %v633
    %v635 = vpop.f32.mrf.mxu0
    %v636 = vadd.f32 0.0, %v635
    %637 = vmatprep.mubr.bf16.mxu0 %v427
    %638 = vmatmul.mubr.bf16.gmra.mxu0 %v215
    %v639 = vpop.f32.mrf.mxu0
    %v640 = vadd.f32 0.0, %v639
    %v641 = vpop.f32.mrf.mxu0
    %v642 = vadd.f32 0.0, %v641
    %v643 = vpop.f32.mrf.mxu0
    %v644 = vadd.f32 0.0, %v643
    %v645 = vpop.f32.mrf.mxu0
    %v646 = vadd.f32 0.0, %v645
    %647 = vmatprep.mubr.bf16.mxu0 %v430
    %648 = vmatmul.mubr.bf16.gmra.mxu0 %v217
    %v649 = vpop.f32.mrf.mxu0
    %v650 = vadd.f32 0.0, %v649
    %v651 = vpop.f32.mrf.mxu0
    %v652 = vadd.f32 0.0, %v651
    %v653 = vpop.f32.mrf.mxu0
    %v654 = vadd.f32 0.0, %v653
    %v655 = vpop.f32.mrf.mxu0
    %v656 = vadd.f32 0.0, %v655
    %657 = vdwg.mxu0
    %v658 = vmax.f32 %v467, %v487
    %v659 = vmax.f32 %v469, %v489
    %v660 = vmax.f32 %v580, %v600
    %v661 = vmax.f32 %v582, %v602
    %v662 = vmax.f32 %v471, %v491
    %v663 = vmax.f32 %v473, %v493
    %v664 = vmax.f32 %v584, %v604
    %v665 = vmax.f32 %v586, %v606
    %v666 = vmax.f32 %v477, %v497
    %v667 = vmax.f32 %v479, %v499
    %v668 = vmax.f32 %v590, %v610
    %v669 = vmax.f32 %v592, %v612
    %v670 = vmax.f32 %v481, %v501
    %v671 = vmax.f32 %v483, %v503
    %v672 = vmax.f32 %v594, %v614
    %v673 = vmax.f32 %v596, %v616
    %v674 = vmax.f32 %v507, %v527
    %v675 = vmax.f32 %v509, %v529
    %v676 = vmax.f32 %v620, %v640
    %v677 = vmax.f32 %v622, %v642
    %v678 = vmax.f32 %v511, %v531
    %v679 = vmax.f32 %v513, %v533
    %v680 = vmax.f32 %v624, %v644
    %v681 = vmax.f32 %v626, %v646
    %v682 = vmax.f32 %v517, %v537
    %v683 = vmax.f32 %v519, %v539
    %v684 = vmax.f32 %v630, %v650
    %v685 = vmax.f32 %v632, %v652
    %v686 = vmax.f32 %v521, %v541
    %v687 = vmax.f32 %v523, %v543
    %v688 = vmax.f32 %v634, %v654
    %v689 = vmax.f32 %v636, %v656
    %v690 = vmax.f32 %v658, %v674
    %v691 = vmax.f32 %v659, %v675
    %v692 = vmax.f32 %v660, %v676
    %v693 = vmax.f32 %v661, %v677
    %v694 = vmax.f32 %v662, %v678
    %v695 = vmax.f32 %v663, %v679
    %v696 = vmax.f32 %v664, %v680
    %v697 = vmax.f32 %v665, %v681
    %v698 = vmax.f32 %v666, %v682
    %v699 = vmax.f32 %v667, %v683
    %v700 = vmax.f32 %v668, %v684
    %v701 = vmax.f32 %v669, %v685
    %v702 = vmax.f32 %v670, %v686
    %v703 = vmax.f32 %v671, %v687
    %v704 = vmax.f32 %v672, %v688
    %v705 = vmax.f32 %v673, %v689
    %v706 = vld [vmem:[%s2] sm:$0xf]
    %v708 = vlaneseq
    %v709 = vshrl.u32 %v708, 7
    %v710 = vsub.s32 0, %v709
    %v711 = vrot.slane %v706, %v710
    %v712 = vlaneseq
    %v713 = vshrl.u32 %v712, 7
    %v714 = vsub.s32 1, %v713
    %v715 = vrot.slane %v706, %v714
    %v716 = vlaneseq
    %v717 = vshrl.u32 %v716, 7
    %v718 = vsub.s32 2, %v717
    %v719 = vrot.slane %v706, %v718
    %v720 = vlaneseq
    %v721 = vshrl.u32 %v720, 7
    %v722 = vsub.s32 3, %v721
    %v723 = vrot.slane %v706, %v722
    %v728 = vadd.f32 %v690, %v711
    %v729 = vadd.f32 %v691, %v715
    %v730 = vadd.f32 %v692, %v719
    %v731 = vadd.f32 %v693, %v723
    %v732 = vadd.f32 %v694, %v711
    %v733 = vadd.f32 %v695, %v715
    %v734 = vadd.f32 %v696, %v719
    %v735 = vadd.f32 %v697, %v723
    %v736 = vadd.f32 %v698, %v711
    %v737 = vadd.f32 %v699, %v715
    %v738 = vadd.f32 %v700, %v719
    %v739 = vadd.f32 %v701, %v723
    %v740 = vadd.f32 %v702, %v711
    %v741 = vadd.f32 %v703, %v715
    %v742 = vadd.f32 %v704, %v719
    %v743 = vadd.f32 %v705, %v723
    %v744 = vmax.f32 %v728, 0.0
    %v745 = vmax.f32 %v729, 0.0
    %v746 = vmax.f32 %v730, 0.0
    %v747 = vmax.f32 %v731, 0.0
    %v748 = vmax.f32 %v732, 0.0
    %v749 = vmax.f32 %v733, 0.0
    %v750 = vmax.f32 %v734, 0.0
    %v751 = vmax.f32 %v735, 0.0
    %v752 = vmax.f32 %v736, 0.0
    %v753 = vmax.f32 %v737, 0.0
    %v754 = vmax.f32 %v738, 0.0
    %v755 = vmax.f32 %v739, 0.0
    %v756 = vmax.f32 %v740, 0.0
    %v757 = vmax.f32 %v741, 0.0
    %v758 = vmax.f32 %v742, 0.0
    %v759 = vmax.f32 %v743, 0.0
    %760 = vst [vmem:[#allocation2 + $0x20] sm:$0xff] %v744
    %761 = vst [vmem:[#allocation2 + $0x28] sm:$0xff] %v745
    %762 = vst [vmem:[#allocation2 + $0x30] sm:$0xff] %v746
    %763 = vst [vmem:[#allocation2 + $0x38] sm:$0xff] %v747
    %764 = vst [vmem:[#allocation2 + $0x40] sm:$0xff] %v748
    %765 = vst [vmem:[#allocation2 + $0x48] sm:$0xff] %v749
    %766 = vst [vmem:[#allocation2 + $0x50] sm:$0xff] %v750
    %767 = vst [vmem:[#allocation2 + $0x58] sm:$0xff] %v751
    %768 = vst [vmem:[#allocation2 + $0xa0] sm:$0xff] %v752
    %769 = vst [vmem:[#allocation2 + $0xa8] sm:$0xff] %v753
    %770 = vst [vmem:[#allocation2 + $0xb0] sm:$0xff] %v754
    %771 = vst [vmem:[#allocation2 + $0xb8] sm:$0xff] %v755
    %772 = vst [vmem:[#allocation2 + $0xc0] sm:$0xff] %v756
    %773 = vst [vmem:[#allocation2 + $0xc8] sm:$0xff] %v757
    %774 = vst [vmem:[#allocation2 + $0xd0] sm:$0xff] %v758
    %775 = vst [vmem:[#allocation2 + $0xd8] sm:$0xff] %v759
    %v776 = vld [vmem:[#allocation2] sm:$0x80]
    %v777 = vld [vmem:[#allocation2 + $0x8] sm:$0x80]
    %v778 = vld [vmem:[#allocation2 + $0x10] sm:$0x80]
    %v779 = vld [vmem:[#allocation2 + $0x18] sm:$0x80]
    %v780 = vld [vmem:[#allocation2 + $0x20] sm:$0xff]
    %v781 = vld [vmem:[#allocation2 + $0x28] sm:$0xff]
    %v782 = vld [vmem:[#allocation2 + $0x30] sm:$0xff]
    %v783 = vld [vmem:[#allocation2 + $0x38] sm:$0xff]
    %v784 = vld [vmem:[#allocation2 + $0x40] sm:$0x7f]
    %v785 = vld [vmem:[#allocation2 + $0x48] sm:$0x7f]
    %v786 = vld [vmem:[#allocation2 + $0x50] sm:$0x7f]
    %v787 = vld [vmem:[#allocation2 + $0x58] sm:$0x7f]
    %v788 = vld [vmem:[#allocation2 + $0x80] sm:$0x80]
    %v789 = vld [vmem:[#allocation2 + $0x88] sm:$0x80]
    %v790 = vld [vmem:[#allocation2 + $0x90] sm:$0x80]
    %v791 = vld [vmem:[#allocation2 + $0x98] sm:$0x80]
    %v792 = vld [vmem:[#allocation2 + $0xa0] sm:$0xff]
    %v793 = vld [vmem:[#allocation2 + $0xa8] sm:$0xff]
    %v794 = vld [vmem:[#allocation2 + $0xb0] sm:$0xff]
    %v795 = vld [vmem:[#allocation2 + $0xb8] sm:$0xff]
    %v796 = vld [vmem:[#allocation2 + $0xc0] sm:$0x7f]
    %v797 = vld [vmem:[#allocation2 + $0xc8] sm:$0x7f]
    %v798 = vld [vmem:[#allocation2 + $0xd0] sm:$0x7f]
    %v799 = vld [vmem:[#allocation2 + $0xd8] sm:$0x7f]
    %v800 = vld [vmem:[#allocation2 + $0x20] sm:$0xfe]
    %v801 = vld [vmem:[#allocation2 + $0x28] sm:$0xfe]
    %v802 = vld [vmem:[#allocation2 + $0x30] sm:$0xfe]
    %v803 = vld [vmem:[#allocation2 + $0x38] sm:$0xfe]
    %v804 = vld [vmem:[#allocation2 + $0x40] sm:$0xff]
    %v805 = vld [vmem:[#allocation2 + $0x48] sm:$0xff]
    %v806 = vld [vmem:[#allocation2 + $0x50] sm:$0xff]
    %v807 = vld [vmem:[#allocation2 + $0x58] sm:$0xff]
    %v808 = vld [vmem:[#allocation2 + $0x60] sm:$0x1]
    %v809 = vld [vmem:[#allocation2 + $0x68] sm:$0x1]
    %v810 = vld [vmem:[#allocation2 + $0x70] sm:$0x1]
    %v811 = vld [vmem:[#allocation2 + $0x78] sm:$0x1]
    %v812 = vld [vmem:[#allocation2 + $0xa0] sm:$0xfe]
    %v813 = vld [vmem:[#allocation2 + $0xa8] sm:$0xfe]
    %v814 = vld [vmem:[#allocation2 + $0xb0] sm:$0xfe]
    %v815 = vld [vmem:[#allocation2 + $0xb8] sm:$0xfe]
    %v816 = vld [vmem:[#allocation2 + $0xc0] sm:$0xff]
    %v817 = vld [vmem:[#allocation2 + $0xc8] sm:$0xff]
    %v818 = vld [vmem:[#allocation2 + $0xd0] sm:$0xff]
    %v819 = vld [vmem:[#allocation2 + $0xd8] sm:$0xff]
    %v820 = vld [vmem:[#allocation2 + $0xe0] sm:$0x1]
    %v821 = vld [vmem:[#allocation2 + $0xe8] sm:$0x1]
    %v822 = vld [vmem:[#allocation2 + $0xf0] sm:$0x1]
    %v823 = vld [vmem:[#allocation2 + $0xf8] sm:$0x1]
    %vm840 = vcmask 1046528
    %v841 = vrot.slane %v744, 1
    %v842 = vrot.slane %v745, 1
    %v843 = vrot.slane %v746, 1
    %v844 = vrot.slane %v747, 1
    %v845 = vrot.slane %v748, 1
    %v846 = vsel %vm840, %v841, %v845
    %v847 = vrot.slane %v749, 1
    %v848 = vsel %vm840, %v842, %v847
    %v849 = vrot.slane %v750, 1
    %v850 = vsel %vm840, %v843, %v849
    %v851 = vrot.slane %v751, 1
    %v852 = vsel %vm840, %v844, %v851
    %v853 = vrot.slane %v752, 1
    %v854 = vrot.slane %v753, 1
    %v855 = vrot.slane %v754, 1
    %v856 = vrot.slane %v755, 1
    %v857 = vrot.slane %v756, 1
    %v858 = vsel %vm840, %v853, %v857
    %v859 = vrot.slane %v757, 1
    %v860 = vsel %vm840, %v854, %v859
    %v861 = vrot.slane %v758, 1
    %v862 = vsel %vm840, %v855, %v861
    %v863 = vrot.slane %v759, 1
    %v864 = vsel %vm840, %v856, %v863
    %vm889 = vcmask 1045504
    %v890 = vrot.slane %v800, 2
    %v891 = vrot.slane %v801, 2
    %v892 = vrot.slane %v802, 2
    %v893 = vrot.slane %v803, 2
    %v894 = vrot.slane %v804, 2
    %v895 = vsel %vm889, %v890, %v894
    %v896 = vrot.slane %v805, 2
    %v897 = vsel %vm889, %v891, %v896
    %v898 = vrot.slane %v806, 2
    %v899 = vsel %vm889, %v892, %v898
    %v900 = vrot.slane %v807, 2
    %v901 = vsel %vm889, %v893, %v900
    %v902 = vrot.slane %v808, 2
    %v903 = vsel %vm889, %v894, %v902
    %v904 = vrot.slane %v809, 2
    %v905 = vsel %vm889, %v896, %v904
    %v906 = vrot.slane %v810, 2
    %v907 = vsel %vm889, %v898, %v906
    %v908 = vrot.slane %v811, 2
    %v909 = vsel %vm889, %v900, %v908
    %v910 = vrot.slane %v812, 2
    %v911 = vrot.slane %v813, 2
    %v912 = vrot.slane %v814, 2
    %v913 = vrot.slane %v815, 2
    %v914 = vrot.slane %v816, 2
    %v915 = vsel %vm889, %v910, %v914
    %v916 = vrot.slane %v817, 2
    %v917 = vsel %vm889, %v911, %v916
    %v918 = vrot.slane %v818, 2
    %v919 = vsel %vm889, %v912, %v918
    %v920 = vrot.slane %v819, 2
    %v921 = vsel %vm889, %v913, %v920
    %v922 = vrot.slane %v820, 2
    %v923 = vsel %vm889, %v914, %v922
    %v924 = vrot.slane %v821, 2
    %v925 = vsel %vm889, %v916, %v924
    %v926 = vrot.slane %v822, 2
    %v927 = vsel %vm889, %v918, %v926
    %v928 = vrot.slane %v823, 2
    %v929 = vsel %vm889, %v920, %v928
    %vm954 = vcmask 1040384
    %v955 = vrot.slane %v776, 7
    %v956 = vrot.slane %v780, 7
    %v957 = vsel %vm954, %v955, %v956
    %v958 = vrot.slane %v777, 7
    %v959 = vrot.slane %v781, 7
    %v960 = vsel %vm954, %v958, %v959
    %v961 = vrot.slane %v778, 7
    %v962 = vrot.slane %v782, 7
    %v963 = vsel %vm954, %v961, %v962
    %v964 = vrot.slane %v779, 7
    %v965 = vrot.slane %v783, 7
    %v966 = vsel %vm954, %v964, %v965
    %v967 = vrot.slane %v841, 7
    %v968 = vrot.slane %v846, 7
    %v969 = vsel %vm954, %v967, %v968
    %v970 = vrot.slane %v842, 7
    %v971 = vrot.slane %v848, 7
    %v972 = vsel %vm954, %v970, %v971
    %v973 = vrot.slane %v843, 7
    %v974 = vrot.slane %v850, 7
    %v975 = vsel %vm954, %v973, %v974
    %v976 = vrot.slane %v844, 7
    %v977 = vrot.slane %v852, 7
    %v978 = vsel %vm954, %v976, %v977
    %v979 = vrot.slane %v890, 7
    %v980 = vrot.slane %v895, 7
    %v981 = vsel %vm954, %v979, %v980
    %v982 = vrot.slane %v891, 7
    %v983 = vrot.slane %v897, 7
    %v984 = vsel %vm954, %v982, %v983
    %v985 = vrot.slane %v892, 7
    %v986 = vrot.slane %v899, 7
    %v987 = vsel %vm954, %v985, %v986
    %v988 = vrot.slane %v893, 7
    %v989 = vrot.slane %v901, 7
    %v990 = vsel %vm954, %v988, %v989
    %v991 = vrot.slane %v784, 7
    %v992 = vsel %vm954, %v956, %v991
    %v993 = vrot.slane %v785, 7
    %v994 = vsel %vm954, %v959, %v993
    %v995 = vrot.slane %v786, 7
    %v996 = vsel %vm954, %v962, %v995
    %v997 = vrot.slane %v787, 7
    %v998 = vsel %vm954, %v965, %v997
    %v999 = vrot.slane %v845, 7
    %v1000 = vsel %vm954, %v968, %v999
    %v1001 = vrot.slane %v847, 7
    %v1002 = vsel %vm954, %v971, %v1001
    %v1003 = vrot.slane %v849, 7
    %v1004 = vsel %vm954, %v974, %v1003
    %v1005 = vrot.slane %v851, 7
    %v1006 = vsel %vm954, %v977, %v1005
    %v1007 = vrot.slane %v903, 7
    %v1008 = vsel %vm954, %v980, %v1007
    %v1009 = vrot.slane %v905, 7
    %v1010 = vsel %vm954, %v983, %v1009
    %v1011 = vrot.slane %v907, 7
    %v1012 = vsel %vm954, %v986, %v1011
    %v1013 = vrot.slane %v909, 7
    %v1014 = vsel %vm954, %v989, %v1013
    %v1015 = vrot.slane %v788, 7
    %v1016 = vrot.slane %v792, 7
    %v1017 = vsel %vm954, %v1015, %v1016
    %v1018 = vrot.slane %v789, 7
    %v1019 = vrot.slane %v793, 7
    %v1020 = vsel %vm954, %v1018, %v1019
    %v1021 = vrot.slane %v790, 7
    %v1022 = vrot.slane %v794, 7
    %v1023 = vsel %vm954, %v1021, %v1022
    %v1024 = vrot.slane %v791, 7
    %v1025 = vrot.slane %v795, 7
    %v1026 = vsel %vm954, %v1024, %v1025
    %v1027 = vrot.slane %v853, 7
    %v1028 = vrot.slane %v858, 7
    %v1029 = vsel %vm954, %v1027, %v1028
    %v1030 = vrot.slane %v854, 7
    %v1031 = vrot.slane %v860, 7
    %v1032 = vsel %vm954, %v1030, %v1031
    %v1033 = vrot.slane %v855, 7
    %v1034 = vrot.slane %v862, 7
    %v1035 = vsel %vm954, %v1033, %v1034
    %v1036 = vrot.slane %v856, 7
    %v1037 = vrot.slane %v864, 7
    %v1038 = vsel %vm954, %v1036, %v1037
    %v1039 = vrot.slane %v910, 7
    %v1040 = vrot.slane %v915, 7
    %v1041 = vsel %vm954, %v1039, %v1040
    %v1042 = vrot.slane %v911, 7
    %v1043 = vrot.slane %v917, 7
    %v1044 = vsel %vm954, %v1042, %v1043
    %v1045 = vrot.slane %v912, 7
    %v1046 = vrot.slane %v919, 7
    %v1047 = vsel %vm954, %v1045, %v1046
    %v1048 = vrot.slane %v913, 7
    %v1049 = vrot.slane %v921, 7
    %v1050 = vsel %vm954, %v1048, %v1049
    %v1051 = vrot.slane %v796, 7
    %v1052 = vsel %vm954, %v1016, %v1051
    %v1053 = vrot.slane %v797, 7
    %v1054 = vsel %vm954, %v1019, %v1053
    %v1055 = vrot.slane %v798, 7
    %v1056 = vsel %vm954, %v1022, %v1055
    %v1057 = vrot.slane %v799, 7
    %v1058 = vsel %vm954, %v1025, %v1057
    %v1059 = vrot.slane %v857, 7
    %v1060 = vsel %vm954, %v1028, %v1059
    %v1061 = vrot.slane %v859, 7
    %v1062 = vsel %vm954, %v1031, %v1061
    %v1063 = vrot.slane %v861, 7
    %v1064 = vsel %vm954, %v1034, %v1063
    %v1065 = vrot.slane %v863, 7
    %v1066 = vsel %vm954, %v1037, %v1065
    %v1067 = vrot.slane %v923, 7
    %v1068 = vsel %vm954, %v1040, %v1067
    %v1069 = vrot.slane %v925, 7
    %v1070 = vsel %vm954, %v1043, %v1069
    %v1071 = vrot.slane %v927, 7
    %v1072 = vsel %vm954, %v1046, %v1071
    %v1073 = vrot.slane %v929, 7
    %v1074 = vsel %vm954, %v1049, %v1073
    %v1123 = vpack.c.bf16 %v992, %v957
    %v1124 = vpack.c.bf16 %v994, %v960
    %v1125 = vpack.c.bf16 %v996, %v963
    %v1126 = vpack.c.bf16 %v998, %v966
    %v1127 = vpack.c.bf16 %v1000, %v969
    %v1128 = vpack.c.bf16 %v1002, %v972
    %v1129 = vpack.c.bf16 %v1004, %v975
    %v1130 = vpack.c.bf16 %v1006, %v978
    %v1131 = vpack.c.bf16 %v1008, %v981
    %v1132 = vpack.c.bf16 %v1010, %v984
    %v1133 = vpack.c.bf16 %v1012, %v987
    %v1134 = vpack.c.bf16 %v1014, %v990
    %v1135 = vpack.c.bf16 %v1052, %v1017
    %v1136 = vpack.c.bf16 %v1054, %v1020
    %v1137 = vpack.c.bf16 %v1056, %v1023
    %v1138 = vpack.c.bf16 %v1058, %v1026
    %v1139 = vpack.c.bf16 %v1060, %v1029
    %v1140 = vpack.c.bf16 %v1062, %v1032
    %v1141 = vpack.c.bf16 %v1064, %v1035
    %v1142 = vpack.c.bf16 %v1066, %v1038
    %v1143 = vpack.c.bf16 %v1068, %v1041
    %v1144 = vpack.c.bf16 %v1070, %v1044
    %v1145 = vpack.c.bf16 %v1072, %v1047
    %v1146 = vpack.c.bf16 %v1074, %v1050
    %v1147 = vld [vmem:[%s3] sm:$0xff]
    %v1148 = vld [vmem:[%s3 + $0x8] sm:$0xff]
    %v1149 = vld [vmem:[%s3 + $0x10] sm:$0xff]
    %v1150 = vld [vmem:[%s3 + $0x18] sm:$0xff]
    %v1151 = vld [vmem:[%s3 + $0x20] sm:$0xff]
    %v1152 = vld [vmem:[%s3 + $0x28] sm:$0xff]
    %v1153 = vld [vmem:[%s3 + $0x30] sm:$0xff]
    %v1154 = vld [vmem:[%s3 + $0x38] sm:$0xff]
    %v1155 = vld [vmem:[%s3 + $0x40] sm:$0xff]
    %v1156 = vld [vmem:[%s3 + $0x48] sm:$0xff]
    %v1157 = vld [vmem:[%s3 + $0x50] sm:$0xff]
    %v1158 = vld [vmem:[%s3 + $0x58] sm:$0xff]
    %v1159 = vld [vmem:[%s3 + $0x60] sm:$0xff]
    %v1160 = vld [vmem:[%s3 + $0x68] sm:$0xff]
    %v1161 = vld [vmem:[%s3 + $0x70] sm:$0xff]
    %v1162 = vld [vmem:[%s3 + $0x78] sm:$0xff]
    %v1163 = vld [vmem:[%s3 + $0x80] sm:$0xff]
    %v1164 = vld [vmem:[%s3 + $0x88] sm:$0xff]
    %v1165 = vld [vmem:[%s3 + $0x90] sm:$0xff]
    %v1166 = vld [vmem:[%s3 + $0x98] sm:$0xff]
    %v1167 = vld [vmem:[%s3 + $0xa0] sm:$0xff]
    %v1168 = vld [vmem:[%s3 + $0xa8] sm:$0xff]
    %v1169 = vld [vmem:[%s3 + $0xb0] sm:$0xff]
    %v1170 = vld [vmem:[%s3 + $0xb8] sm:$0xff]
    %v1171 = vld [vmem:[%s3 + $0xc0] sm:$0xff]
    %v1172 = vld [vmem:[%s3 + $0xc8] sm:$0xff]
    %v1173 = vld [vmem:[%s3 + $0xd0] sm:$0xff]
    %v1174 = vld [vmem:[%s3 + $0xd8] sm:$0xff]
    %v1175 = vld [vmem:[%s3 + $0xe0] sm:$0xff]
    %v1176 = vld [vmem:[%s3 + $0xe8] sm:$0xff]
    %v1177 = vld [vmem:[%s3 + $0xf0] sm:$0xff]
    %v1178 = vld [vmem:[%s3 + $0xf8] sm:$0xff]
    %v1179 = vld [vmem:[%s3 + $0x100] sm:$0xff]
    %v1180 = vld [vmem:[%s3 + $0x108] sm:$0xff]
    %v1181 = vld [vmem:[%s3 + $0x110] sm:$0xff]
    %v1182 = vld [vmem:[%s3 + $0x118] sm:$0xff]
    %v1183 = vld [vmem:[%s3 + $0x120] sm:$0xff]
    %v1184 = vld [vmem:[%s3 + $0x128] sm:$0xff]
    %v1185 = vld [vmem:[%s3 + $0x130] sm:$0xff]
    %v1186 = vld [vmem:[%s3 + $0x138] sm:$0xff]
    %v1187 = vld [vmem:[%s3 + $0x140] sm:$0xff]
    %v1188 = vld [vmem:[%s3 + $0x148] sm:$0xff]
    %v1189 = vld [vmem:[%s3 + $0x150] sm:$0xff]
    %v1190 = vld [vmem:[%s3 + $0x158] sm:$0xff]
    %v1191 = vld [vmem:[%s3 + $0x160] sm:$0xff]
    %v1192 = vld [vmem:[%s3 + $0x168] sm:$0xff]
    %v1193 = vld [vmem:[%s3 + $0x170] sm:$0xff]
    %v1194 = vld [vmem:[%s3 + $0x178] sm:$0xff]
    %v1195 = vld [vmem:[%s3 + $0x180] sm:$0xff]
    %v1196 = vld [vmem:[%s3 + $0x188] sm:$0xff]
    %v1197 = vld [vmem:[%s3 + $0x190] sm:$0xff]
    %v1198 = vld [vmem:[%s3 + $0x198] sm:$0xff]
    %v1199 = vld [vmem:[%s3 + $0x1a0] sm:$0xff]
    %v1200 = vld [vmem:[%s3 + $0x1a8] sm:$0xff]
    %v1201 = vld [vmem:[%s3 + $0x1b0] sm:$0xff]
    %v1202 = vld [vmem:[%s3 + $0x1b8] sm:$0xff]
    %v1203 = vld [vmem:[%s3 + $0x1c0] sm:$0xff]
    %v1204 = vld [vmem:[%s3 + $0x1c8] sm:$0xff]
    %v1205 = vld [vmem:[%s3 + $0x1d0] sm:$0xff]
    %v1206 = vld [vmem:[%s3 + $0x1d8] sm:$0xff]
    %v1207 = vld [vmem:[%s3 + $0x1e0] sm:$0xff]
    %v1208 = vld [vmem:[%s3 + $0x1e8] sm:$0xff]
    %v1209 = vld [vmem:[%s3 + $0x1f0] sm:$0xff]
    %v1210 = vld [vmem:[%s3 + $0x1f8] sm:$0xff]
    %v1211 = vld [vmem:[%s3 + $0x200] sm:$0xff]
    %v1212 = vld [vmem:[%s3 + $0x208] sm:$0xff]
    %v1213 = vld [vmem:[%s3 + $0x210] sm:$0xff]
    %v1214 = vld [vmem:[%s3 + $0x218] sm:$0xff]
    %v1215 = vld [vmem:[%s3 + $0x220] sm:$0xff]
    %v1216 = vld [vmem:[%s3 + $0x228] sm:$0xff]
    %v1217 = vld [vmem:[%s3 + $0x230] sm:$0xff]
    %v1218 = vld [vmem:[%s3 + $0x238] sm:$0xff]
    %v1219 = vld [vmem:[%s3 + $0x240] sm:$0xff]
    %v1220 = vld [vmem:[%s3 + $0x248] sm:$0xff]
    %v1221 = vld [vmem:[%s3 + $0x250] sm:$0xff]
    %v1222 = vld [vmem:[%s3 + $0x258] sm:$0xff]
    %v1223 = vld [vmem:[%s3 + $0x260] sm:$0xff]
    %v1224 = vld [vmem:[%s3 + $0x268] sm:$0xff]
    %v1225 = vld [vmem:[%s3 + $0x270] sm:$0xff]
    %v1226 = vld [vmem:[%s3 + $0x278] sm:$0xff]
    %v1227 = vld [vmem:[%s3 + $0x280] sm:$0xff]
    %v1228 = vld [vmem:[%s3 + $0x288] sm:$0xff]
    %v1229 = vld [vmem:[%s3 + $0x290] sm:$0xff]
    %v1230 = vld [vmem:[%s3 + $0x298] sm:$0xff]
    %v1231 = vld [vmem:[%s3 + $0x2a0] sm:$0xff]
    %v1232 = vld [vmem:[%s3 + $0x2a8] sm:$0xff]
    %v1233 = vld [vmem:[%s3 + $0x2b0] sm:$0xff]
    %v1234 = vld [vmem:[%s3 + $0x2b8] sm:$0xff]
    %v1235 = vld [vmem:[%s3 + $0x2c0] sm:$0xff]
    %v1236 = vld [vmem:[%s3 + $0x2c8] sm:$0xff]
    %v1237 = vld [vmem:[%s3 + $0x2d0] sm:$0xff]
    %v1238 = vld [vmem:[%s3 + $0x2d8] sm:$0xff]
    %v1239 = vld [vmem:[%s3 + $0x2e0] sm:$0xff]
    %v1240 = vld [vmem:[%s3 + $0x2e8] sm:$0xff]
    %v1241 = vld [vmem:[%s3 + $0x2f0] sm:$0xff]
    %v1242 = vld [vmem:[%s3 + $0x2f8] sm:$0xff]
    %v1243 = vld [vmem:[%s3 + $0x300] sm:$0xff]
    %v1244 = vld [vmem:[%s3 + $0x308] sm:$0xff]
    %v1245 = vld [vmem:[%s3 + $0x310] sm:$0xff]
    %v1246 = vld [vmem:[%s3 + $0x318] sm:$0xff]
    %v1247 = vld [vmem:[%s3 + $0x320] sm:$0xff]
    %v1248 = vld [vmem:[%s3 + $0x328] sm:$0xff]
    %v1249 = vld [vmem:[%s3 + $0x330] sm:$0xff]
    %v1250 = vld [vmem:[%s3 + $0x338] sm:$0xff]
    %v1251 = vld [vmem:[%s3 + $0x340] sm:$0xff]
    %v1252 = vld [vmem:[%s3 + $0x348] sm:$0xff]
    %v1253 = vld [vmem:[%s3 + $0x350] sm:$0xff]
    %v1254 = vld [vmem:[%s3 + $0x358] sm:$0xff]
    %v1255 = vld [vmem:[%s3 + $0x360] sm:$0xff]
    %v1256 = vld [vmem:[%s3 + $0x368] sm:$0xff]
    %v1257 = vld [vmem:[%s3 + $0x370] sm:$0xff]
    %v1258 = vld [vmem:[%s3 + $0x378] sm:$0xff]
    %v1259 = vld [vmem:[%s3 + $0x380] sm:$0xff]
    %v1260 = vld [vmem:[%s3 + $0x388] sm:$0xff]
    %v1261 = vld [vmem:[%s3 + $0x390] sm:$0xff]
    %v1262 = vld [vmem:[%s3 + $0x398] sm:$0xff]
    %v1263 = vld [vmem:[%s3 + $0x3a0] sm:$0xff]
    %v1264 = vld [vmem:[%s3 + $0x3a8] sm:$0xff]
    %v1265 = vld [vmem:[%s3 + $0x3b0] sm:$0xff]
    %v1266 = vld [vmem:[%s3 + $0x3b8] sm:$0xff]
    %v1267 = vld [vmem:[%s3 + $0x3c0] sm:$0xff]
    %v1268 = vld [vmem:[%s3 + $0x3c8] sm:$0xff]
    %v1269 = vld [vmem:[%s3 + $0x3d0] sm:$0xff]
    %v1270 = vld [vmem:[%s3 + $0x3d8] sm:$0xff]
    %v1271 = vld [vmem:[%s3 + $0x3e0] sm:$0xff]
    %v1272 = vld [vmem:[%s3 + $0x3e8] sm:$0xff]
    %v1273 = vld [vmem:[%s3 + $0x3f0] sm:$0xff]
    %v1274 = vld [vmem:[%s3 + $0x3f8] sm:$0xff]
    %v1275 = vld [vmem:[%s3 + $0x400] sm:$0xff]
    %v1276 = vld [vmem:[%s3 + $0x408] sm:$0xff]
    %v1277 = vld [vmem:[%s3 + $0x410] sm:$0xff]
    %v1278 = vld [vmem:[%s3 + $0x418] sm:$0xff]
    %v1279 = vld [vmem:[%s3 + $0x420] sm:$0xff]
    %v1280 = vld [vmem:[%s3 + $0x428] sm:$0xff]
    %v1281 = vld [vmem:[%s3 + $0x430] sm:$0xff]
    %v1282 = vld [vmem:[%s3 + $0x438] sm:$0xff]
    %v1283 = vld [vmem:[%s3 + $0x440] sm:$0xff]
    %v1284 = vld [vmem:[%s3 + $0x448] sm:$0xff]
    %v1285 = vld [vmem:[%s3 + $0x450] sm:$0xff]
    %v1286 = vld [vmem:[%s3 + $0x458] sm:$0xff]
    %v1287 = vld [vmem:[%s3 + $0x460] sm:$0xff]
    %v1288 = vld [vmem:[%s3 + $0x468] sm:$0xff]
    %v1289 = vld [vmem:[%s3 + $0x470] sm:$0xff]
    %v1290 = vld [vmem:[%s3 + $0x478] sm:$0xff]
    %v1291 = vld [vmem:[%s3 + $0x480] sm:$0xff]
    %v1292 = vld [vmem:[%s3 + $0x488] sm:$0xff]
    %v1293 = vld [vmem:[%s3 + $0x490] sm:$0xff]
    %v1294 = vld [vmem:[%s3 + $0x498] sm:$0xff]
    %v1295 = vld [vmem:[%s3 + $0x4a0] sm:$0xff]
    %v1296 = vld [vmem:[%s3 + $0x4a8] sm:$0xff]
    %v1297 = vld [vmem:[%s3 + $0x4b0] sm:$0xff]
    %v1298 = vld [vmem:[%s3 + $0x4b8] sm:$0xff]
    %v1299 = vld [vmem:[%s3 + $0x4c0] sm:$0xff]
    %v1300 = vld [vmem:[%s3 + $0x4c8] sm:$0xff]
    %v1301 = vld [vmem:[%s3 + $0x4d0] sm:$0xff]
    %v1302 = vld [vmem:[%s3 + $0x4d8] sm:$0xff]
    %v1303 = vld [vmem:[%s3 + $0x4e0] sm:$0xff]
    %v1304 = vld [vmem:[%s3 + $0x4e8] sm:$0xff]
    %v1305 = vld [vmem:[%s3 + $0x4f0] sm:$0xff]
    %v1306 = vld [vmem:[%s3 + $0x4f8] sm:$0xff]
    %v1307 = vld [vmem:[%s3 + $0x500] sm:$0xff]
    %v1308 = vld [vmem:[%s3 + $0x508] sm:$0xff]
    %v1309 = vld [vmem:[%s3 + $0x510] sm:$0xff]
    %v1310 = vld [vmem:[%s3 + $0x518] sm:$0xff]
    %v1311 = vld [vmem:[%s3 + $0x520] sm:$0xff]
    %v1312 = vld [vmem:[%s3 + $0x528] sm:$0xff]
    %v1313 = vld [vmem:[%s3 + $0x530] sm:$0xff]
    %v1314 = vld [vmem:[%s3 + $0x538] sm:$0xff]
    %v1315 = vld [vmem:[%s3 + $0x540] sm:$0xff]
    %v1316 = vld [vmem:[%s3 + $0x548] sm:$0xff]
    %v1317 = vld [vmem:[%s3 + $0x550] sm:$0xff]
    %v1318 = vld [vmem:[%s3 + $0x558] sm:$0xff]
    %v1319 = vld [vmem:[%s3 + $0x560] sm:$0xff]
    %v1320 = vld [vmem:[%s3 + $0x568] sm:$0xff]
    %v1321 = vld [vmem:[%s3 + $0x570] sm:$0xff]
    %v1322 = vld [vmem:[%s3 + $0x578] sm:$0xff]
    %v1323 = vld [vmem:[%s3 + $0x580] sm:$0xff]
    %v1324 = vld [vmem:[%s3 + $0x588] sm:$0xff]
    %v1325 = vld [vmem:[%s3 + $0x590] sm:$0xff]
    %v1326 = vld [vmem:[%s3 + $0x598] sm:$0xff]
    %v1327 = vld [vmem:[%s3 + $0x5a0] sm:$0xff]
    %v1328 = vld [vmem:[%s3 + $0x5a8] sm:$0xff]
    %v1329 = vld [vmem:[%s3 + $0x5b0] sm:$0xff]
    %v1330 = vld [vmem:[%s3 + $0x5b8] sm:$0xff]
    %v1331 = vld [vmem:[%s3 + $0x5c0] sm:$0xff]
    %v1332 = vld [vmem:[%s3 + $0x5c8] sm:$0xff]
    %v1333 = vld [vmem:[%s3 + $0x5d0] sm:$0xff]
    %v1334 = vld [vmem:[%s3 + $0x5d8] sm:$0xff]
    %v1335 = vld [vmem:[%s3 + $0x5e0] sm:$0xff]
    %v1336 = vld [vmem:[%s3 + $0x5e8] sm:$0xff]
    %v1337 = vld [vmem:[%s3 + $0x5f0] sm:$0xff]
    %v1338 = vld [vmem:[%s3 + $0x5f8] sm:$0xff]
    %v1339 = vld [vmem:[%s3 + $0x600] sm:$0xff]
    %v1340 = vld [vmem:[%s3 + $0x608] sm:$0xff]
    %v1341 = vld [vmem:[%s3 + $0x610] sm:$0xff]
    %v1342 = vld [vmem:[%s3 + $0x618] sm:$0xff]
    %v1343 = vld [vmem:[%s3 + $0x620] sm:$0xff]
    %v1344 = vld [vmem:[%s3 + $0x628] sm:$0xff]
    %v1345 = vld [vmem:[%s3 + $0x630] sm:$0xff]
    %v1346 = vld [vmem:[%s3 + $0x638] sm:$0xff]
    %v1347 = vld [vmem:[%s3 + $0x640] sm:$0xff]
    %v1348 = vld [vmem:[%s3 + $0x648] sm:$0xff]
    %v1349 = vld [vmem:[%s3 + $0x650] sm:$0xff]
    %v1350 = vld [vmem:[%s3 + $0x658] sm:$0xff]
    %v1351 = vld [vmem:[%s3 + $0x660] sm:$0xff]
    %v1352 = vld [vmem:[%s3 + $0x668] sm:$0xff]
    %v1353 = vld [vmem:[%s3 + $0x670] sm:$0xff]
    %v1354 = vld [vmem:[%s3 + $0x678] sm:$0xff]
    %v1355 = vld [vmem:[%s3 + $0x680] sm:$0xff]
    %v1356 = vld [vmem:[%s3 + $0x688] sm:$0xff]
    %v1357 = vld [vmem:[%s3 + $0x690] sm:$0xff]
    %v1358 = vld [vmem:[%s3 + $0x698] sm:$0xff]
    %v1359 = vld [vmem:[%s3 + $0x6a0] sm:$0xff]
    %v1360 = vld [vmem:[%s3 + $0x6a8] sm:$0xff]
    %v1361 = vld [vmem:[%s3 + $0x6b0] sm:$0xff]
    %v1362 = vld [vmem:[%s3 + $0x6b8] sm:$0xff]
    %v1363 = vld [vmem:[%s3 + $0x6c0] sm:$0xff]
    %v1364 = vld [vmem:[%s3 + $0x6c8] sm:$0xff]
    %v1365 = vld [vmem:[%s3 + $0x6d0] sm:$0xff]
    %v1366 = vld [vmem:[%s3 + $0x6d8] sm:$0xff]
    %v1367 = vld [vmem:[%s3 + $0x6e0] sm:$0xff]
    %v1368 = vld [vmem:[%s3 + $0x6e8] sm:$0xff]
    %v1369 = vld [vmem:[%s3 + $0x6f0] sm:$0xff]
    %v1370 = vld [vmem:[%s3 + $0x6f8] sm:$0xff]
    %v1371 = vld [vmem:[%s3 + $0x700] sm:$0xff]
    %v1372 = vld [vmem:[%s3 + $0x708] sm:$0xff]
    %v1373 = vld [vmem:[%s3 + $0x710] sm:$0xff]
    %v1374 = vld [vmem:[%s3 + $0x718] sm:$0xff]
    %v1375 = vld [vmem:[%s3 + $0x720] sm:$0xff]
    %v1376 = vld [vmem:[%s3 + $0x728] sm:$0xff]
    %v1377 = vld [vmem:[%s3 + $0x730] sm:$0xff]
    %v1378 = vld [vmem:[%s3 + $0x738] sm:$0xff]
    %v1379 = vld [vmem:[%s3 + $0x740] sm:$0xff]
    %v1380 = vld [vmem:[%s3 + $0x748] sm:$0xff]
    %v1381 = vld [vmem:[%s3 + $0x750] sm:$0xff]
    %v1382 = vld [vmem:[%s3 + $0x758] sm:$0xff]
    %v1383 = vld [vmem:[%s3 + $0x760] sm:$0xff]
    %v1384 = vld [vmem:[%s3 + $0x768] sm:$0xff]
    %v1385 = vld [vmem:[%s3 + $0x770] sm:$0xff]
    %v1386 = vld [vmem:[%s3 + $0x778] sm:$0xff]
    %v1387 = vld [vmem:[%s3 + $0x780] sm:$0xff]
    %v1388 = vld [vmem:[%s3 + $0x788] sm:$0xff]
    %v1389 = vld [vmem:[%s3 + $0x790] sm:$0xff]
    %v1390 = vld [vmem:[%s3 + $0x798] sm:$0xff]
    %v1391 = vld [vmem:[%s3 + $0x7a0] sm:$0xff]
    %v1392 = vld [vmem:[%s3 + $0x7a8] sm:$0xff]
    %v1393 = vld [vmem:[%s3 + $0x7b0] sm:$0xff]
    %v1394 = vld [vmem:[%s3 + $0x7b8] sm:$0xff]
    %v1395 = vld [vmem:[%s3 + $0x7c0] sm:$0xff]
    %v1396 = vld [vmem:[%s3 + $0x7c8] sm:$0xff]
    %v1397 = vld [vmem:[%s3 + $0x7d0] sm:$0xff]
    %v1398 = vld [vmem:[%s3 + $0x7d8] sm:$0xff]
    %v1399 = vld [vmem:[%s3 + $0x7e0] sm:$0xff]
    %v1400 = vld [vmem:[%s3 + $0x7e8] sm:$0xff]
    %v1401 = vld [vmem:[%s3 + $0x7f0] sm:$0xff]
    %v1402 = vld [vmem:[%s3 + $0x7f8] sm:$0xff]
    %v1403 = vld [vmem:[%s3 + $0x800] sm:$0xff]
    %v1404 = vld [vmem:[%s3 + $0x808] sm:$0xff]
    %v1405 = vld [vmem:[%s3 + $0x810] sm:$0xff]
    %v1406 = vld [vmem:[%s3 + $0x818] sm:$0xff]
    %v1407 = vld [vmem:[%s3 + $0x820] sm:$0xff]
    %v1408 = vld [vmem:[%s3 + $0x828] sm:$0xff]
    %v1409 = vld [vmem:[%s3 + $0x830] sm:$0xff]
    %v1410 = vld [vmem:[%s3 + $0x838] sm:$0xff]
    %v1411 = vld [vmem:[%s3 + $0x840] sm:$0xff]
    %v1412 = vld [vmem:[%s3 + $0x848] sm:$0xff]
    %v1413 = vld [vmem:[%s3 + $0x850] sm:$0xff]
    %v1414 = vld [vmem:[%s3 + $0x858] sm:$0xff]
    %v1415 = vld [vmem:[%s3 + $0x860] sm:$0xff]
    %v1416 = vld [vmem:[%s3 + $0x868] sm:$0xff]
    %v1417 = vld [vmem:[%s3 + $0x870] sm:$0xff]
    %v1418 = vld [vmem:[%s3 + $0x878] sm:$0xff]
    %v1419 = vld [vmem:[%s3 + $0x880] sm:$0xff]
    %v1420 = vld [vmem:[%s3 + $0x888] sm:$0xff]
    %v1421 = vld [vmem:[%s3 + $0x890] sm:$0xff]
    %v1422 = vld [vmem:[%s3 + $0x898] sm:$0xff]
    %v1423 = vld [vmem:[%s3 + $0x8a0] sm:$0xff]
    %v1424 = vld [vmem:[%s3 + $0x8a8] sm:$0xff]
    %v1425 = vld [vmem:[%s3 + $0x8b0] sm:$0xff]
    %v1426 = vld [vmem:[%s3 + $0x8b8] sm:$0xff]
    %v1427 = vld [vmem:[%s3 + $0x8c0] sm:$0xff]
    %v1428 = vld [vmem:[%s3 + $0x8c8] sm:$0xff]
    %v1429 = vld [vmem:[%s3 + $0x8d0] sm:$0xff]
    %v1430 = vld [vmem:[%s3 + $0x8d8] sm:$0xff]
    %v1431 = vld [vmem:[%s3 + $0x8e0] sm:$0xff]
    %v1432 = vld [vmem:[%s3 + $0x8e8] sm:$0xff]
    %v1433 = vld [vmem:[%s3 + $0x8f0] sm:$0xff]
    %v1434 = vld [vmem:[%s3 + $0x8f8] sm:$0xff]
    %v1435 = vld [vmem:[%s3 + $0x900] sm:$0xff]
    %v1436 = vld [vmem:[%s3 + $0x908] sm:$0xff]
    %v1437 = vld [vmem:[%s3 + $0x910] sm:$0xff]
    %v1438 = vld [vmem:[%s3 + $0x918] sm:$0xff]
    %v1439 = vld [vmem:[%s3 + $0x920] sm:$0xff]
    %v1440 = vld [vmem:[%s3 + $0x928] sm:$0xff]
    %v1441 = vld [vmem:[%s3 + $0x930] sm:$0xff]
    %v1442 = vld [vmem:[%s3 + $0x938] sm:$0xff]
    %v1443 = vld [vmem:[%s3 + $0x940] sm:$0xff]
    %v1444 = vld [vmem:[%s3 + $0x948] sm:$0xff]
    %v1445 = vld [vmem:[%s3 + $0x950] sm:$0xff]
    %v1446 = vld [vmem:[%s3 + $0x958] sm:$0xff]
    %v1447 = vld [vmem:[%s3 + $0x960] sm:$0xff]
    %v1448 = vld [vmem:[%s3 + $0x968] sm:$0xff]
    %v1449 = vld [vmem:[%s3 + $0x970] sm:$0xff]
    %v1450 = vld [vmem:[%s3 + $0x978] sm:$0xff]
    %v1451 = vld [vmem:[%s3 + $0x980] sm:$0xff]
    %v1452 = vld [vmem:[%s3 + $0x988] sm:$0xff]
    %v1453 = vld [vmem:[%s3 + $0x990] sm:$0xff]
    %v1454 = vld [vmem:[%s3 + $0x998] sm:$0xff]
    %v1455 = vld [vmem:[%s3 + $0x9a0] sm:$0xff]
    %v1456 = vld [vmem:[%s3 + $0x9a8] sm:$0xff]
    %v1457 = vld [vmem:[%s3 + $0x9b0] sm:$0xff]
    %v1458 = vld [vmem:[%s3 + $0x9b8] sm:$0xff]
    %v1459 = vld [vmem:[%s3 + $0x9c0] sm:$0xff]
    %v1460 = vld [vmem:[%s3 + $0x9c8] sm:$0xff]
    %v1461 = vld [vmem:[%s3 + $0x9d0] sm:$0xff]
    %v1462 = vld [vmem:[%s3 + $0x9d8] sm:$0xff]
    %v1463 = vld [vmem:[%s3 + $0x9e0] sm:$0xff]
    %v1464 = vld [vmem:[%s3 + $0x9e8] sm:$0xff]
    %v1465 = vld [vmem:[%s3 + $0x9f0] sm:$0xff]
    %v1466 = vld [vmem:[%s3 + $0x9f8] sm:$0xff]
    %v1467 = vld [vmem:[%s3 + $0xa00] sm:$0xff]
    %v1468 = vld [vmem:[%s3 + $0xa08] sm:$0xff]
    %v1469 = vld [vmem:[%s3 + $0xa10] sm:$0xff]
    %v1470 = vld [vmem:[%s3 + $0xa18] sm:$0xff]
    %v1471 = vld [vmem:[%s3 + $0xa20] sm:$0xff]
    %v1472 = vld [vmem:[%s3 + $0xa28] sm:$0xff]
    %v1473 = vld [vmem:[%s3 + $0xa30] sm:$0xff]
    %v1474 = vld [vmem:[%s3 + $0xa38] sm:$0xff]
    %v1475 = vld [vmem:[%s3 + $0xa40] sm:$0xff]
    %v1476 = vld [vmem:[%s3 + $0xa48] sm:$0xff]
    %v1477 = vld [vmem:[%s3 + $0xa50] sm:$0xff]
    %v1478 = vld [vmem:[%s3 + $0xa58] sm:$0xff]
    %v1479 = vld [vmem:[%s3 + $0xa60] sm:$0xff]
    %v1480 = vld [vmem:[%s3 + $0xa68] sm:$0xff]
    %v1481 = vld [vmem:[%s3 + $0xa70] sm:$0xff]
    %v1482 = vld [vmem:[%s3 + $0xa78] sm:$0xff]
    %v1483 = vld [vmem:[%s3 + $0xa80] sm:$0xff]
    %v1484 = vld [vmem:[%s3 + $0xa88] sm:$0xff]
    %v1485 = vld [vmem:[%s3 + $0xa90] sm:$0xff]
    %v1486 = vld [vmem:[%s3 + $0xa98] sm:$0xff]
    %v1487 = vld [vmem:[%s3 + $0xaa0] sm:$0xff]
    %v1488 = vld [vmem:[%s3 + $0xaa8] sm:$0xff]
    %v1489 = vld [vmem:[%s3 + $0xab0] sm:$0xff]
    %v1490 = vld [vmem:[%s3 + $0xab8] sm:$0xff]
    %v1491 = vld [vmem:[%s3 + $0xac0] sm:$0xff]
    %v1492 = vld [vmem:[%s3 + $0xac8] sm:$0xff]
    %v1493 = vld [vmem:[%s3 + $0xad0] sm:$0xff]
    %v1494 = vld [vmem:[%s3 + $0xad8] sm:$0xff]
    %v1495 = vld [vmem:[%s3 + $0xae0] sm:$0xff]
    %v1496 = vld [vmem:[%s3 + $0xae8] sm:$0xff]
    %v1497 = vld [vmem:[%s3 + $0xaf0] sm:$0xff]
    %v1498 = vld [vmem:[%s3 + $0xaf8] sm:$0xff]
    %v1499 = vld [vmem:[%s3 + $0xb00] sm:$0xff]
    %v1500 = vld [vmem:[%s3 + $0xb08] sm:$0xff]
    %v1501 = vld [vmem:[%s3 + $0xb10] sm:$0xff]
    %v1502 = vld [vmem:[%s3 + $0xb18] sm:$0xff]
    %v1503 = vld [vmem:[%s3 + $0xb20] sm:$0xff]
    %v1504 = vld [vmem:[%s3 + $0xb28] sm:$0xff]
    %v1505 = vld [vmem:[%s3 + $0xb30] sm:$0xff]
    %v1506 = vld [vmem:[%s3 + $0xb38] sm:$0xff]
    %v1507 = vld [vmem:[%s3 + $0xb40] sm:$0xff]
    %v1508 = vld [vmem:[%s3 + $0xb48] sm:$0xff]
    %v1509 = vld [vmem:[%s3 + $0xb50] sm:$0xff]
    %v1510 = vld [vmem:[%s3 + $0xb58] sm:$0xff]
    %v1511 = vld [vmem:[%s3 + $0xb60] sm:$0xff]
    %v1512 = vld [vmem:[%s3 + $0xb68] sm:$0xff]
    %v1513 = vld [vmem:[%s3 + $0xb70] sm:$0xff]
    %v1514 = vld [vmem:[%s3 + $0xb78] sm:$0xff]
    %v1515 = vld [vmem:[%s3 + $0xb80] sm:$0xff]
    %v1516 = vld [vmem:[%s3 + $0xb88] sm:$0xff]
    %v1517 = vld [vmem:[%s3 + $0xb90] sm:$0xff]
    %v1518 = vld [vmem:[%s3 + $0xb98] sm:$0xff]
    %v1519 = vld [vmem:[%s3 + $0xba0] sm:$0xff]
    %v1520 = vld [vmem:[%s3 + $0xba8] sm:$0xff]
    %v1521 = vld [vmem:[%s3 + $0xbb0] sm:$0xff]
    %v1522 = vld [vmem:[%s3 + $0xbb8] sm:$0xff]
    %v1523 = vld [vmem:[%s3 + $0xbc0] sm:$0xff]
    %v1524 = vld [vmem:[%s3 + $0xbc8] sm:$0xff]
    %v1525 = vld [vmem:[%s3 + $0xbd0] sm:$0xff]
    %v1526 = vld [vmem:[%s3 + $0xbd8] sm:$0xff]
    %v1527 = vld [vmem:[%s3 + $0xbe0] sm:$0xff]
    %v1528 = vld [vmem:[%s3 + $0xbe8] sm:$0xff]
    %v1529 = vld [vmem:[%s3 + $0xbf0] sm:$0xff]
    %v1530 = vld [vmem:[%s3 + $0xbf8] sm:$0xff]
    %v1531 = vld [vmem:[%s4] sm:$0xf]
    %v1533 = vlaneseq
    %v1534 = vshrl.u32 %v1533, 7
    %v1535 = vsub.s32 0, %v1534
    %v1536 = vrot.slane %v1531, %v1535
    %v1537 = vlaneseq
    %v1538 = vshrl.u32 %v1537, 7
    %v1539 = vsub.s32 1, %v1538
    %v1540 = vrot.slane %v1531, %v1539
    %v1541 = vlaneseq
    %v1542 = vshrl.u32 %v1541, 7
    %v1543 = vsub.s32 2, %v1542
    %v1544 = vrot.slane %v1531, %v1543
    %v1545 = vlaneseq
    %v1546 = vshrl.u32 %v1545, 7
    %v1547 = vsub.s32 3, %v1546
    %v1548 = vrot.slane %v1531, %v1547
    %v1937 = vunpack.c.l.b16 %v1147
    %v1938 = vunpack.c.h.b16 %v1147
    %v1939 = vunpack.c.l.b16 %v1148
    %v1940 = vunpack.c.h.b16 %v1148
    %v1941 = vunpack.c.l.b16 %v1149
    %v1942 = vunpack.c.h.b16 %v1149
    %v1943 = vunpack.c.l.b16 %v1150
    %v1944 = vunpack.c.h.b16 %v1150
    %v1945 = vunpack.c.l.b16 %v1151
    %v1946 = vunpack.c.h.b16 %v1151
    %v1947 = vunpack.c.l.b16 %v1152
    %v1948 = vunpack.c.h.b16 %v1152
    %v1949 = vunpack.c.l.b16 %v1153
    %v1950 = vunpack.c.h.b16 %v1153
    %v1951 = vunpack.c.l.b16 %v1154
    %v1952 = vunpack.c.h.b16 %v1154
    %v1953 = vunpack.c.l.b16 %v1155
    %v1954 = vunpack.c.h.b16 %v1155
    %v1955 = vunpack.c.l.b16 %v1156
    %v1956 = vunpack.c.h.b16 %v1156
    %v1957 = vunpack.c.l.b16 %v1157
    %v1958 = vunpack.c.h.b16 %v1157
    %v1959 = vunpack.c.l.b16 %v1158
    %v1960 = vunpack.c.h.b16 %v1158
    %v1961 = vunpack.c.l.b16 %v1159
    %v1962 = vunpack.c.h.b16 %v1159
    %v1963 = vunpack.c.l.b16 %v1160
    %v1964 = vunpack.c.h.b16 %v1160
    %v1965 = vunpack.c.l.b16 %v1161
    %v1966 = vunpack.c.h.b16 %v1161
    %v1967 = vunpack.c.l.b16 %v1162
    %v1968 = vunpack.c.h.b16 %v1162
    %v1969 = vunpack.c.l.b16 %v1163
    %v1970 = vunpack.c.h.b16 %v1163
    %v1971 = vunpack.c.l.b16 %v1164
    %v1972 = vunpack.c.h.b16 %v1164
    %v1973 = vunpack.c.l.b16 %v1165
    %v1974 = vunpack.c.h.b16 %v1165
    %v1975 = vunpack.c.l.b16 %v1166
    %v1976 = vunpack.c.h.b16 %v1166
    %v1977 = vunpack.c.l.b16 %v1167
    %v1978 = vunpack.c.h.b16 %v1167
    %v1979 = vunpack.c.l.b16 %v1168
    %v1980 = vunpack.c.h.b16 %v1168
    %v1981 = vunpack.c.l.b16 %v1169
    %v1982 = vunpack.c.h.b16 %v1169
    %v1983 = vunpack.c.l.b16 %v1170
    %v1984 = vunpack.c.h.b16 %v1170
    %v1985 = vunpack.c.l.b16 %v1171
    %v1986 = vunpack.c.h.b16 %v1171
    %v1987 = vunpack.c.l.b16 %v1172
    %v1988 = vunpack.c.h.b16 %v1172
    %v1989 = vunpack.c.l.b16 %v1173
    %v1990 = vunpack.c.h.b16 %v1173
    %v1991 = vunpack.c.l.b16 %v1174
    %v1992 = vunpack.c.h.b16 %v1174
    %v1993 = vunpack.c.l.b16 %v1175
    %v1994 = vunpack.c.h.b16 %v1175
    %v1995 = vunpack.c.l.b16 %v1176
    %v1996 = vunpack.c.h.b16 %v1176
    %v1997 = vunpack.c.l.b16 %v1177
    %v1998 = vunpack.c.h.b16 %v1177
    %v1999 = vunpack.c.l.b16 %v1178
    %v2000 = vunpack.c.h.b16 %v1178
    %v2001 = vunpack.c.l.b16 %v1179
    %v2002 = vunpack.c.h.b16 %v1179
    %v2003 = vunpack.c.l.b16 %v1180
    %v2004 = vunpack.c.h.b16 %v1180
    %v2005 = vunpack.c.l.b16 %v1181
    %v2006 = vunpack.c.h.b16 %v1181
    %v2007 = vunpack.c.l.b16 %v1182
    %v2008 = vunpack.c.h.b16 %v1182
    %v2009 = vunpack.c.l.b16 %v1183
    %v2010 = vunpack.c.h.b16 %v1183
    %v2011 = vunpack.c.l.b16 %v1184
    %v2012 = vunpack.c.h.b16 %v1184
    %v2013 = vunpack.c.l.b16 %v1185
    %v2014 = vunpack.c.h.b16 %v1185
    %v2015 = vunpack.c.l.b16 %v1186
    %v2016 = vunpack.c.h.b16 %v1186
    %v2017 = vunpack.c.l.b16 %v1187
    %v2018 = vunpack.c.h.b16 %v1187
    %v2019 = vunpack.c.l.b16 %v1188
    %v2020 = vunpack.c.h.b16 %v1188
    %v2021 = vunpack.c.l.b16 %v1189
    %v2022 = vunpack.c.h.b16 %v1189
    %v2023 = vunpack.c.l.b16 %v1190
    %v2024 = vunpack.c.h.b16 %v1190
    %v2025 = vunpack.c.l.b16 %v1191
    %v2026 = vunpack.c.h.b16 %v1191
    %v2027 = vunpack.c.l.b16 %v1192
    %v2028 = vunpack.c.h.b16 %v1192
    %v2029 = vunpack.c.l.b16 %v1193
    %v2030 = vunpack.c.h.b16 %v1193
    %v2031 = vunpack.c.l.b16 %v1194
    %v2032 = vunpack.c.h.b16 %v1194
    %v2033 = vunpack.c.l.b16 %v1195
    %v2034 = vunpack.c.h.b16 %v1195
    %v2035 = vunpack.c.l.b16 %v1196
    %v2036 = vunpack.c.h.b16 %v1196
    %v2037 = vunpack.c.l.b16 %v1197
    %v2038 = vunpack.c.h.b16 %v1197
    %v2039 = vunpack.c.l.b16 %v1198
    %v2040 = vunpack.c.h.b16 %v1198
    %v2041 = vunpack.c.l.b16 %v1199
    %v2042 = vunpack.c.h.b16 %v1199
    %v2043 = vunpack.c.l.b16 %v1200
    %v2044 = vunpack.c.h.b16 %v1200
    %v2045 = vunpack.c.l.b16 %v1201
    %v2046 = vunpack.c.h.b16 %v1201
    %v2047 = vunpack.c.l.b16 %v1202
    %v2048 = vunpack.c.h.b16 %v1202
    %v2049 = vunpack.c.l.b16 %v1203
    %v2050 = vunpack.c.h.b16 %v1203
    %v2051 = vunpack.c.l.b16 %v1204
    %v2052 = vunpack.c.h.b16 %v1204
    %v2053 = vunpack.c.l.b16 %v1205
    %v2054 = vunpack.c.h.b16 %v1205
    %v2055 = vunpack.c.l.b16 %v1206
    %v2056 = vunpack.c.h.b16 %v1206
    %v2057 = vunpack.c.l.b16 %v1207
    %v2058 = vunpack.c.h.b16 %v1207
    %v2059 = vunpack.c.l.b16 %v1208
    %v2060 = vunpack.c.h.b16 %v1208
    %v2061 = vunpack.c.l.b16 %v1209
    %v2062 = vunpack.c.h.b16 %v1209
    %v2063 = vunpack.c.l.b16 %v1210
    %v2064 = vunpack.c.h.b16 %v1210
    %v2065 = vunpack.c.l.b16 %v1211
    %v2066 = vunpack.c.h.b16 %v1211
    %v2067 = vunpack.c.l.b16 %v1212
    %v2068 = vunpack.c.h.b16 %v1212
    %v2069 = vunpack.c.l.b16 %v1213
    %v2070 = vunpack.c.h.b16 %v1213
    %v2071 = vunpack.c.l.b16 %v1214
    %v2072 = vunpack.c.h.b16 %v1214
    %v2073 = vunpack.c.l.b16 %v1215
    %v2074 = vunpack.c.h.b16 %v1215
    %v2075 = vunpack.c.l.b16 %v1216
    %v2076 = vunpack.c.h.b16 %v1216
    %v2077 = vunpack.c.l.b16 %v1217
    %v2078 = vunpack.c.h.b16 %v1217
    %v2079 = vunpack.c.l.b16 %v1218
    %v2080 = vunpack.c.h.b16 %v1218
    %v2081 = vunpack.c.l.b16 %v1219
    %v2082 = vunpack.c.h.b16 %v1219
    %v2083 = vunpack.c.l.b16 %v1220
    %v2084 = vunpack.c.h.b16 %v1220
    %v2085 = vunpack.c.l.b16 %v1221
    %v2086 = vunpack.c.h.b16 %v1221
    %v2087 = vunpack.c.l.b16 %v1222
    %v2088 = vunpack.c.h.b16 %v1222
    %v2089 = vunpack.c.l.b16 %v1223
    %v2090 = vunpack.c.h.b16 %v1223
    %v2091 = vunpack.c.l.b16 %v1224
    %v2092 = vunpack.c.h.b16 %v1224
    %v2093 = vunpack.c.l.b16 %v1225
    %v2094 = vunpack.c.h.b16 %v1225
    %v2095 = vunpack.c.l.b16 %v1226
    %v2096 = vunpack.c.h.b16 %v1226
    %v2097 = vunpack.c.l.b16 %v1227
    %v2098 = vunpack.c.h.b16 %v1227
    %v2099 = vunpack.c.l.b16 %v1228
    %v2100 = vunpack.c.h.b16 %v1228
    %v2101 = vunpack.c.l.b16 %v1229
    %v2102 = vunpack.c.h.b16 %v1229
    %v2103 = vunpack.c.l.b16 %v1230
    %v2104 = vunpack.c.h.b16 %v1230
    %v2105 = vunpack.c.l.b16 %v1231
    %v2106 = vunpack.c.h.b16 %v1231
    %v2107 = vunpack.c.l.b16 %v1232
    %v2108 = vunpack.c.h.b16 %v1232
    %v2109 = vunpack.c.l.b16 %v1233
    %v2110 = vunpack.c.h.b16 %v1233
    %v2111 = vunpack.c.l.b16 %v1234
    %v2112 = vunpack.c.h.b16 %v1234
    %v2113 = vunpack.c.l.b16 %v1235
    %v2114 = vunpack.c.h.b16 %v1235
    %v2115 = vunpack.c.l.b16 %v1236
    %v2116 = vunpack.c.h.b16 %v1236
    %v2117 = vunpack.c.l.b16 %v1237
    %v2118 = vunpack.c.h.b16 %v1237
    %v2119 = vunpack.c.l.b16 %v1238
    %v2120 = vunpack.c.h.b16 %v1238
    %v2121 = vunpack.c.l.b16 %v1239
    %v2122 = vunpack.c.h.b16 %v1239
    %v2123 = vunpack.c.l.b16 %v1240
    %v2124 = vunpack.c.h.b16 %v1240
    %v2125 = vunpack.c.l.b16 %v1241
    %v2126 = vunpack.c.h.b16 %v1241
    %v2127 = vunpack.c.l.b16 %v1242
    %v2128 = vunpack.c.h.b16 %v1242
    %v2129 = vunpack.c.l.b16 %v1243
    %v2130 = vunpack.c.h.b16 %v1243
    %v2131 = vunpack.c.l.b16 %v1244
    %v2132 = vunpack.c.h.b16 %v1244
    %v2133 = vunpack.c.l.b16 %v1245
    %v2134 = vunpack.c.h.b16 %v1245
    %v2135 = vunpack.c.l.b16 %v1246
    %v2136 = vunpack.c.h.b16 %v1246
    %v2137 = vunpack.c.l.b16 %v1247
    %v2138 = vunpack.c.h.b16 %v1247
    %v2139 = vunpack.c.l.b16 %v1248
    %v2140 = vunpack.c.h.b16 %v1248
    %v2141 = vunpack.c.l.b16 %v1249
    %v2142 = vunpack.c.h.b16 %v1249
    %v2143 = vunpack.c.l.b16 %v1250
    %v2144 = vunpack.c.h.b16 %v1250
    %v2145 = vunpack.c.l.b16 %v1251
    %v2146 = vunpack.c.h.b16 %v1251
    %v2147 = vunpack.c.l.b16 %v1252
    %v2148 = vunpack.c.h.b16 %v1252
    %v2149 = vunpack.c.l.b16 %v1253
    %v2150 = vunpack.c.h.b16 %v1253
    %v2151 = vunpack.c.l.b16 %v1254
    %v2152 = vunpack.c.h.b16 %v1254
    %v2153 = vunpack.c.l.b16 %v1255
    %v2154 = vunpack.c.h.b16 %v1255
    %v2155 = vunpack.c.l.b16 %v1256
    %v2156 = vunpack.c.h.b16 %v1256
    %v2157 = vunpack.c.l.b16 %v1257
    %v2158 = vunpack.c.h.b16 %v1257
    %v2159 = vunpack.c.l.b16 %v1258
    %v2160 = vunpack.c.h.b16 %v1258
    %v2161 = vunpack.c.l.b16 %v1259
    %v2162 = vunpack.c.h.b16 %v1259
    %v2163 = vunpack.c.l.b16 %v1260
    %v2164 = vunpack.c.h.b16 %v1260
    %v2165 = vunpack.c.l.b16 %v1261
    %v2166 = vunpack.c.h.b16 %v1261
    %v2167 = vunpack.c.l.b16 %v1262
    %v2168 = vunpack.c.h.b16 %v1262
    %v2169 = vunpack.c.l.b16 %v1263
    %v2170 = vunpack.c.h.b16 %v1263
    %v2171 = vunpack.c.l.b16 %v1264
    %v2172 = vunpack.c.h.b16 %v1264
    %v2173 = vunpack.c.l.b16 %v1265
    %v2174 = vunpack.c.h.b16 %v1265
    %v2175 = vunpack.c.l.b16 %v1266
    %v2176 = vunpack.c.h.b16 %v1266
    %v2177 = vunpack.c.l.b16 %v1267
    %v2178 = vunpack.c.h.b16 %v1267
    %v2179 = vunpack.c.l.b16 %v1268
    %v2180 = vunpack.c.h.b16 %v1268
    %v2181 = vunpack.c.l.b16 %v1269
    %v2182 = vunpack.c.h.b16 %v1269
    %v2183 = vunpack.c.l.b16 %v1270
    %v2184 = vunpack.c.h.b16 %v1270
    %v2185 = vunpack.c.l.b16 %v1271
    %v2186 = vunpack.c.h.b16 %v1271
    %v2187 = vunpack.c.l.b16 %v1272
    %v2188 = vunpack.c.h.b16 %v1272
    %v2189 = vunpack.c.l.b16 %v1273
    %v2190 = vunpack.c.h.b16 %v1273
    %v2191 = vunpack.c.l.b16 %v1274
    %v2192 = vunpack.c.h.b16 %v1274
    %v2193 = vunpack.c.l.b16 %v1275
    %v2194 = vunpack.c.h.b16 %v1275
    %v2195 = vunpack.c.l.b16 %v1276
    %v2196 = vunpack.c.h.b16 %v1276
    %v2197 = vunpack.c.l.b16 %v1277
    %v2198 = vunpack.c.h.b16 %v1277
    %v2199 = vunpack.c.l.b16 %v1278
    %v2200 = vunpack.c.h.b16 %v1278
    %v2201 = vunpack.c.l.b16 %v1279
    %v2202 = vunpack.c.h.b16 %v1279
    %v2203 = vunpack.c.l.b16 %v1280
    %v2204 = vunpack.c.h.b16 %v1280
    %v2205 = vunpack.c.l.b16 %v1281
    %v2206 = vunpack.c.h.b16 %v1281
    %v2207 = vunpack.c.l.b16 %v1282
    %v2208 = vunpack.c.h.b16 %v1282
    %v2209 = vunpack.c.l.b16 %v1283
    %v2210 = vunpack.c.h.b16 %v1283
    %v2211 = vunpack.c.l.b16 %v1284
    %v2212 = vunpack.c.h.b16 %v1284
    %v2213 = vunpack.c.l.b16 %v1285
    %v2214 = vunpack.c.h.b16 %v1285
    %v2215 = vunpack.c.l.b16 %v1286
    %v2216 = vunpack.c.h.b16 %v1286
    %v2217 = vunpack.c.l.b16 %v1287
    %v2218 = vunpack.c.h.b16 %v1287
    %v2219 = vunpack.c.l.b16 %v1288
    %v2220 = vunpack.c.h.b16 %v1288
    %v2221 = vunpack.c.l.b16 %v1289
    %v2222 = vunpack.c.h.b16 %v1289
    %v2223 = vunpack.c.l.b16 %v1290
    %v2224 = vunpack.c.h.b16 %v1290
    %v2225 = vunpack.c.l.b16 %v1291
    %v2226 = vunpack.c.h.b16 %v1291
    %v2227 = vunpack.c.l.b16 %v1292
    %v2228 = vunpack.c.h.b16 %v1292
    %v2229 = vunpack.c.l.b16 %v1293
    %v2230 = vunpack.c.h.b16 %v1293
    %v2231 = vunpack.c.l.b16 %v1294
    %v2232 = vunpack.c.h.b16 %v1294
    %v2233 = vunpack.c.l.b16 %v1295
    %v2234 = vunpack.c.h.b16 %v1295
    %v2235 = vunpack.c.l.b16 %v1296
    %v2236 = vunpack.c.h.b16 %v1296
    %v2237 = vunpack.c.l.b16 %v1297
    %v2238 = vunpack.c.h.b16 %v1297
    %v2239 = vunpack.c.l.b16 %v1298
    %v2240 = vunpack.c.h.b16 %v1298
    %v2241 = vunpack.c.l.b16 %v1299
    %v2242 = vunpack.c.h.b16 %v1299
    %v2243 = vunpack.c.l.b16 %v1300
    %v2244 = vunpack.c.h.b16 %v1300
    %v2245 = vunpack.c.l.b16 %v1301
    %v2246 = vunpack.c.h.b16 %v1301
    %v2247 = vunpack.c.l.b16 %v1302
    %v2248 = vunpack.c.h.b16 %v1302
    %v2249 = vunpack.c.l.b16 %v1303
    %v2250 = vunpack.c.h.b16 %v1303
    %v2251 = vunpack.c.l.b16 %v1304
    %v2252 = vunpack.c.h.b16 %v1304
    %v2253 = vunpack.c.l.b16 %v1305
    %v2254 = vunpack.c.h.b16 %v1305
    %v2255 = vunpack.c.l.b16 %v1306
    %v2256 = vunpack.c.h.b16 %v1306
    %v2257 = vunpack.c.l.b16 %v1307
    %v2258 = vunpack.c.h.b16 %v1307
    %v2259 = vunpack.c.l.b16 %v1308
    %v2260 = vunpack.c.h.b16 %v1308
    %v2261 = vunpack.c.l.b16 %v1309
    %v2262 = vunpack.c.h.b16 %v1309
    %v2263 = vunpack.c.l.b16 %v1310
    %v2264 = vunpack.c.h.b16 %v1310
    %v2265 = vunpack.c.l.b16 %v1311
    %v2266 = vunpack.c.h.b16 %v1311
    %v2267 = vunpack.c.l.b16 %v1312
    %v2268 = vunpack.c.h.b16 %v1312
    %v2269 = vunpack.c.l.b16 %v1313
    %v2270 = vunpack.c.h.b16 %v1313
    %v2271 = vunpack.c.l.b16 %v1314
    %v2272 = vunpack.c.h.b16 %v1314
    %v2273 = vunpack.c.l.b16 %v1315
    %v2274 = vunpack.c.h.b16 %v1315
    %v2275 = vunpack.c.l.b16 %v1316
    %v2276 = vunpack.c.h.b16 %v1316
    %v2277 = vunpack.c.l.b16 %v1317
    %v2278 = vunpack.c.h.b16 %v1317
    %v2279 = vunpack.c.l.b16 %v1318
    %v2280 = vunpack.c.h.b16 %v1318
    %v2281 = vunpack.c.l.b16 %v1319
    %v2282 = vunpack.c.h.b16 %v1319
    %v2283 = vunpack.c.l.b16 %v1320
    %v2284 = vunpack.c.h.b16 %v1320
    %v2285 = vunpack.c.l.b16 %v1321
    %v2286 = vunpack.c.h.b16 %v1321
    %v2287 = vunpack.c.l.b16 %v1322
    %v2288 = vunpack.c.h.b16 %v1322
    %v2289 = vunpack.c.l.b16 %v1323
    %v2290 = vunpack.c.h.b16 %v1323
    %v2291 = vunpack.c.l.b16 %v1324
    %v2292 = vunpack.c.h.b16 %v1324
    %v2293 = vunpack.c.l.b16 %v1325
    %v2294 = vunpack.c.h.b16 %v1325
    %v2295 = vunpack.c.l.b16 %v1326
    %v2296 = vunpack.c.h.b16 %v1326
    %v2297 = vunpack.c.l.b16 %v1327
    %v2298 = vunpack.c.h.b16 %v1327
    %v2299 = vunpack.c.l.b16 %v1328
    %v2300 = vunpack.c.h.b16 %v1328
    %v2301 = vunpack.c.l.b16 %v1329
    %v2302 = vunpack.c.h.b16 %v1329
    %v2303 = vunpack.c.l.b16 %v1330
    %v2304 = vunpack.c.h.b16 %v1330
    %v2305 = vunpack.c.l.b16 %v1331
    %v2306 = vunpack.c.h.b16 %v1331
    %v2307 = vunpack.c.l.b16 %v1332
    %v2308 = vunpack.c.h.b16 %v1332
    %v2309 = vunpack.c.l.b16 %v1333
    %v2310 = vunpack.c.h.b16 %v1333
    %v2311 = vunpack.c.l.b16 %v1334
    %v2312 = vunpack.c.h.b16 %v1334
    %v2313 = vunpack.c.l.b16 %v1335
    %v2314 = vunpack.c.h.b16 %v1335
    %v2315 = vunpack.c.l.b16 %v1336
    %v2316 = vunpack.c.h.b16 %v1336
    %v2317 = vunpack.c.l.b16 %v1337
    %v2318 = vunpack.c.h.b16 %v1337
    %v2319 = vunpack.c.l.b16 %v1338
    %v2320 = vunpack.c.h.b16 %v1338
    %v2321 = vunpack.c.l.b16 %v1339
    %v2322 = vunpack.c.h.b16 %v1339
    %v2323 = vunpack.c.l.b16 %v1340
    %v2324 = vunpack.c.h.b16 %v1340
    %v2325 = vunpack.c.l.b16 %v1341
    %v2326 = vunpack.c.h.b16 %v1341
    %v2327 = vunpack.c.l.b16 %v1342
    %v2328 = vunpack.c.h.b16 %v1342
    %v2329 = vunpack.c.l.b16 %v1343
    %v2330 = vunpack.c.h.b16 %v1343
    %v2331 = vunpack.c.l.b16 %v1344
    %v2332 = vunpack.c.h.b16 %v1344
    %v2333 = vunpack.c.l.b16 %v1345
    %v2334 = vunpack.c.h.b16 %v1345
    %v2335 = vunpack.c.l.b16 %v1346
    %v2336 = vunpack.c.h.b16 %v1346
    %v2337 = vunpack.c.l.b16 %v1347
    %v2338 = vunpack.c.h.b16 %v1347
    %v2339 = vunpack.c.l.b16 %v1348
    %v2340 = vunpack.c.h.b16 %v1348
    %v2341 = vunpack.c.l.b16 %v1349
    %v2342 = vunpack.c.h.b16 %v1349
    %v2343 = vunpack.c.l.b16 %v1350
    %v2344 = vunpack.c.h.b16 %v1350
    %v2345 = vunpack.c.l.b16 %v1351
    %v2346 = vunpack.c.h.b16 %v1351
    %v2347 = vunpack.c.l.b16 %v1352
    %v2348 = vunpack.c.h.b16 %v1352
    %v2349 = vunpack.c.l.b16 %v1353
    %v2350 = vunpack.c.h.b16 %v1353
    %v2351 = vunpack.c.l.b16 %v1354
    %v2352 = vunpack.c.h.b16 %v1354
    %v2353 = vunpack.c.l.b16 %v1355
    %v2354 = vunpack.c.h.b16 %v1355
    %v2355 = vunpack.c.l.b16 %v1356
    %v2356 = vunpack.c.h.b16 %v1356
    %v2357 = vunpack.c.l.b16 %v1357
    %v2358 = vunpack.c.h.b16 %v1357
    %v2359 = vunpack.c.l.b16 %v1358
    %v2360 = vunpack.c.h.b16 %v1358
    %v2361 = vunpack.c.l.b16 %v1359
    %v2362 = vunpack.c.h.b16 %v1359
    %v2363 = vunpack.c.l.b16 %v1360
    %v2364 = vunpack.c.h.b16 %v1360
    %v2365 = vunpack.c.l.b16 %v1361
    %v2366 = vunpack.c.h.b16 %v1361
    %v2367 = vunpack.c.l.b16 %v1362
    %v2368 = vunpack.c.h.b16 %v1362
    %v2369 = vunpack.c.l.b16 %v1363
    %v2370 = vunpack.c.h.b16 %v1363
    %v2371 = vunpack.c.l.b16 %v1364
    %v2372 = vunpack.c.h.b16 %v1364
    %v2373 = vunpack.c.l.b16 %v1365
    %v2374 = vunpack.c.h.b16 %v1365
    %v2375 = vunpack.c.l.b16 %v1366
    %v2376 = vunpack.c.h.b16 %v1366
    %v2377 = vunpack.c.l.b16 %v1367
    %v2378 = vunpack.c.h.b16 %v1367
    %v2379 = vunpack.c.l.b16 %v1368
    %v2380 = vunpack.c.h.b16 %v1368
    %v2381 = vunpack.c.l.b16 %v1369
    %v2382 = vunpack.c.h.b16 %v1369
    %v2383 = vunpack.c.l.b16 %v1370
    %v2384 = vunpack.c.h.b16 %v1370
    %v2385 = vunpack.c.l.b16 %v1371
    %v2386 = vunpack.c.h.b16 %v1371
    %v2387 = vunpack.c.l.b16 %v1372
    %v2388 = vunpack.c.h.b16 %v1372
    %v2389 = vunpack.c.l.b16 %v1373
    %v2390 = vunpack.c.h.b16 %v1373
    %v2391 = vunpack.c.l.b16 %v1374
    %v2392 = vunpack.c.h.b16 %v1374
    %v2393 = vunpack.c.l.b16 %v1375
    %v2394 = vunpack.c.h.b16 %v1375
    %v2395 = vunpack.c.l.b16 %v1376
    %v2396 = vunpack.c.h.b16 %v1376
    %v2397 = vunpack.c.l.b16 %v1377
    %v2398 = vunpack.c.h.b16 %v1377
    %v2399 = vunpack.c.l.b16 %v1378
    %v2400 = vunpack.c.h.b16 %v1378
    %v2401 = vunpack.c.l.b16 %v1379
    %v2402 = vunpack.c.h.b16 %v1379
    %v2403 = vunpack.c.l.b16 %v1380
    %v2404 = vunpack.c.h.b16 %v1380
    %v2405 = vunpack.c.l.b16 %v1381
    %v2406 = vunpack.c.h.b16 %v1381
    %v2407 = vunpack.c.l.b16 %v1382
    %v2408 = vunpack.c.h.b16 %v1382
    %v2409 = vunpack.c.l.b16 %v1383
    %v2410 = vunpack.c.h.b16 %v1383
    %v2411 = vunpack.c.l.b16 %v1384
    %v2412 = vunpack.c.h.b16 %v1384
    %v2413 = vunpack.c.l.b16 %v1385
    %v2414 = vunpack.c.h.b16 %v1385
    %v2415 = vunpack.c.l.b16 %v1386
    %v2416 = vunpack.c.h.b16 %v1386
    %v2417 = vunpack.c.l.b16 %v1387
    %v2418 = vunpack.c.h.b16 %v1387
    %v2419 = vunpack.c.l.b16 %v1388
    %v2420 = vunpack.c.h.b16 %v1388
    %v2421 = vunpack.c.l.b16 %v1389
    %v2422 = vunpack.c.h.b16 %v1389
    %v2423 = vunpack.c.l.b16 %v1390
    %v2424 = vunpack.c.h.b16 %v1390
    %v2425 = vunpack.c.l.b16 %v1391
    %v2426 = vunpack.c.h.b16 %v1391
    %v2427 = vunpack.c.l.b16 %v1392
    %v2428 = vunpack.c.h.b16 %v1392
    %v2429 = vunpack.c.l.b16 %v1393
    %v2430 = vunpack.c.h.b16 %v1393
    %v2431 = vunpack.c.l.b16 %v1394
    %v2432 = vunpack.c.h.b16 %v1394
    %v2433 = vunpack.c.l.b16 %v1395
    %v2434 = vunpack.c.h.b16 %v1395
    %v2435 = vunpack.c.l.b16 %v1396
    %v2436 = vunpack.c.h.b16 %v1396
    %v2437 = vunpack.c.l.b16 %v1397
    %v2438 = vunpack.c.h.b16 %v1397
    %v2439 = vunpack.c.l.b16 %v1398
    %v2440 = vunpack.c.h.b16 %v1398
    %v2441 = vunpack.c.l.b16 %v1399
    %v2442 = vunpack.c.h.b16 %v1399
    %v2443 = vunpack.c.l.b16 %v1400
    %v2444 = vunpack.c.h.b16 %v1400
    %v2445 = vunpack.c.l.b16 %v1401
    %v2446 = vunpack.c.h.b16 %v1401
    %v2447 = vunpack.c.l.b16 %v1402
    %v2448 = vunpack.c.h.b16 %v1402
    %v2449 = vunpack.c.l.b16 %v1403
    %v2450 = vunpack.c.h.b16 %v1403
    %v2451 = vunpack.c.l.b16 %v1404
    %v2452 = vunpack.c.h.b16 %v1404
    %v2453 = vunpack.c.l.b16 %v1405
    %v2454 = vunpack.c.h.b16 %v1405
    %v2455 = vunpack.c.l.b16 %v1406
    %v2456 = vunpack.c.h.b16 %v1406
    %v2457 = vunpack.c.l.b16 %v1407
    %v2458 = vunpack.c.h.b16 %v1407
    %v2459 = vunpack.c.l.b16 %v1408
    %v2460 = vunpack.c.h.b16 %v1408
    %v2461 = vunpack.c.l.b16 %v1409
    %v2462 = vunpack.c.h.b16 %v1409
    %v2463 = vunpack.c.l.b16 %v1410
    %v2464 = vunpack.c.h.b16 %v1410
    %v2465 = vunpack.c.l.b16 %v1411
    %v2466 = vunpack.c.h.b16 %v1411
    %v2467 = vunpack.c.l.b16 %v1412
    %v2468 = vunpack.c.h.b16 %v1412
    %v2469 = vunpack.c.l.b16 %v1413
    %v2470 = vunpack.c.h.b16 %v1413
    %v2471 = vunpack.c.l.b16 %v1414
    %v2472 = vunpack.c.h.b16 %v1414
    %v2473 = vunpack.c.l.b16 %v1415
    %v2474 = vunpack.c.h.b16 %v1415
    %v2475 = vunpack.c.l.b16 %v1416
    %v2476 = vunpack.c.h.b16 %v1416
    %v2477 = vunpack.c.l.b16 %v1417
    %v2478 = vunpack.c.h.b16 %v1417
    %v2479 = vunpack.c.l.b16 %v1418
    %v2480 = vunpack.c.h.b16 %v1418
    %v2481 = vunpack.c.l.b16 %v1419
    %v2482 = vunpack.c.h.b16 %v1419
    %v2483 = vunpack.c.l.b16 %v1420
    %v2484 = vunpack.c.h.b16 %v1420
    %v2485 = vunpack.c.l.b16 %v1421
    %v2486 = vunpack.c.h.b16 %v1421
    %v2487 = vunpack.c.l.b16 %v1422
    %v2488 = vunpack.c.h.b16 %v1422
    %v2489 = vunpack.c.l.b16 %v1423
    %v2490 = vunpack.c.h.b16 %v1423
    %v2491 = vunpack.c.l.b16 %v1424
    %v2492 = vunpack.c.h.b16 %v1424
    %v2493 = vunpack.c.l.b16 %v1425
    %v2494 = vunpack.c.h.b16 %v1425
    %v2495 = vunpack.c.l.b16 %v1426
    %v2496 = vunpack.c.h.b16 %v1426
    %v2497 = vunpack.c.l.b16 %v1427
    %v2498 = vunpack.c.h.b16 %v1427
    %v2499 = vunpack.c.l.b16 %v1428
    %v2500 = vunpack.c.h.b16 %v1428
    %v2501 = vunpack.c.l.b16 %v1429
    %v2502 = vunpack.c.h.b16 %v1429
    %v2503 = vunpack.c.l.b16 %v1430
    %v2504 = vunpack.c.h.b16 %v1430
    %v2505 = vunpack.c.l.b16 %v1431
    %v2506 = vunpack.c.h.b16 %v1431
    %v2507 = vunpack.c.l.b16 %v1432
    %v2508 = vunpack.c.h.b16 %v1432
    %v2509 = vunpack.c.l.b16 %v1433
    %v2510 = vunpack.c.h.b16 %v1433
    %v2511 = vunpack.c.l.b16 %v1434
    %v2512 = vunpack.c.h.b16 %v1434
    %v2513 = vunpack.c.l.b16 %v1435
    %v2514 = vunpack.c.h.b16 %v1435
    %v2515 = vunpack.c.l.b16 %v1436
    %v2516 = vunpack.c.h.b16 %v1436
    %v2517 = vunpack.c.l.b16 %v1437
    %v2518 = vunpack.c.h.b16 %v1437
    %v2519 = vunpack.c.l.b16 %v1438
    %v2520 = vunpack.c.h.b16 %v1438
    %v2521 = vunpack.c.l.b16 %v1439
    %v2522 = vunpack.c.h.b16 %v1439
    %v2523 = vunpack.c.l.b16 %v1440
    %v2524 = vunpack.c.h.b16 %v1440
    %v2525 = vunpack.c.l.b16 %v1441
    %v2526 = vunpack.c.h.b16 %v1441
    %v2527 = vunpack.c.l.b16 %v1442
    %v2528 = vunpack.c.h.b16 %v1442
    %v2529 = vunpack.c.l.b16 %v1443
    %v2530 = vunpack.c.h.b16 %v1443
    %v2531 = vunpack.c.l.b16 %v1444
    %v2532 = vunpack.c.h.b16 %v1444
    %v2533 = vunpack.c.l.b16 %v1445
    %v2534 = vunpack.c.h.b16 %v1445
    %v2535 = vunpack.c.l.b16 %v1446
    %v2536 = vunpack.c.h.b16 %v1446
    %v2537 = vunpack.c.l.b16 %v1447
    %v2538 = vunpack.c.h.b16 %v1447
    %v2539 = vunpack.c.l.b16 %v1448
    %v2540 = vunpack.c.h.b16 %v1448
    %v2541 = vunpack.c.l.b16 %v1449
    %v2542 = vunpack.c.h.b16 %v1449
    %v2543 = vunpack.c.l.b16 %v1450
    %v2544 = vunpack.c.h.b16 %v1450
    %v2545 = vunpack.c.l.b16 %v1451
    %v2546 = vunpack.c.h.b16 %v1451
    %v2547 = vunpack.c.l.b16 %v1452
    %v2548 = vunpack.c.h.b16 %v1452
    %v2549 = vunpack.c.l.b16 %v1453
    %v2550 = vunpack.c.h.b16 %v1453
    %v2551 = vunpack.c.l.b16 %v1454
    %v2552 = vunpack.c.h.b16 %v1454
    %v2553 = vunpack.c.l.b16 %v1455
    %v2554 = vunpack.c.h.b16 %v1455
    %v2555 = vunpack.c.l.b16 %v1456
    %v2556 = vunpack.c.h.b16 %v1456
    %v2557 = vunpack.c.l.b16 %v1457
    %v2558 = vunpack.c.h.b16 %v1457
    %v2559 = vunpack.c.l.b16 %v1458
    %v2560 = vunpack.c.h.b16 %v1458
    %v2561 = vunpack.c.l.b16 %v1459
    %v2562 = vunpack.c.h.b16 %v1459
    %v2563 = vunpack.c.l.b16 %v1460
    %v2564 = vunpack.c.h.b16 %v1460
    %v2565 = vunpack.c.l.b16 %v1461
    %v2566 = vunpack.c.h.b16 %v1461
    %v2567 = vunpack.c.l.b16 %v1462
    %v2568 = vunpack.c.h.b16 %v1462
    %v2569 = vunpack.c.l.b16 %v1463
    %v2570 = vunpack.c.h.b16 %v1463
    %v2571 = vunpack.c.l.b16 %v1464
    %v2572 = vunpack.c.h.b16 %v1464
    %v2573 = vunpack.c.l.b16 %v1465
    %v2574 = vunpack.c.h.b16 %v1465
    %v2575 = vunpack.c.l.b16 %v1466
    %v2576 = vunpack.c.h.b16 %v1466
    %v2577 = vunpack.c.l.b16 %v1467
    %v2578 = vunpack.c.h.b16 %v1467
    %v2579 = vunpack.c.l.b16 %v1468
    %v2580 = vunpack.c.h.b16 %v1468
    %v2581 = vunpack.c.l.b16 %v1469
    %v2582 = vunpack.c.h.b16 %v1469
    %v2583 = vunpack.c.l.b16 %v1470
    %v2584 = vunpack.c.h.b16 %v1470
    %v2585 = vunpack.c.l.b16 %v1471
    %v2586 = vunpack.c.h.b16 %v1471
    %v2587 = vunpack.c.l.b16 %v1472
    %v2588 = vunpack.c.h.b16 %v1472
    %v2589 = vunpack.c.l.b16 %v1473
    %v2590 = vunpack.c.h.b16 %v1473
    %v2591 = vunpack.c.l.b16 %v1474
    %v2592 = vunpack.c.h.b16 %v1474
    %v2593 = vunpack.c.l.b16 %v1475
    %v2594 = vunpack.c.h.b16 %v1475
    %v2595 = vunpack.c.l.b16 %v1476
    %v2596 = vunpack.c.h.b16 %v1476
    %v2597 = vunpack.c.l.b16 %v1477
    %v2598 = vunpack.c.h.b16 %v1477
    %v2599 = vunpack.c.l.b16 %v1478
    %v2600 = vunpack.c.h.b16 %v1478
    %v2601 = vunpack.c.l.b16 %v1479
    %v2602 = vunpack.c.h.b16 %v1479
    %v2603 = vunpack.c.l.b16 %v1480
    %v2604 = vunpack.c.h.b16 %v1480
    %v2605 = vunpack.c.l.b16 %v1481
    %v2606 = vunpack.c.h.b16 %v1481
    %v2607 = vunpack.c.l.b16 %v1482
    %v2608 = vunpack.c.h.b16 %v1482
    %v2609 = vunpack.c.l.b16 %v1483
    %v2610 = vunpack.c.h.b16 %v1483
    %v2611 = vunpack.c.l.b16 %v1484
    %v2612 = vunpack.c.h.b16 %v1484
    %v2613 = vunpack.c.l.b16 %v1485
    %v2614 = vunpack.c.h.b16 %v1485
    %v2615 = vunpack.c.l.b16 %v1486
    %v2616 = vunpack.c.h.b16 %v1486
    %v2617 = vunpack.c.l.b16 %v1487
    %v2618 = vunpack.c.h.b16 %v1487
    %v2619 = vunpack.c.l.b16 %v1488
    %v2620 = vunpack.c.h.b16 %v1488
    %v2621 = vunpack.c.l.b16 %v1489
    %v2622 = vunpack.c.h.b16 %v1489
    %v2623 = vunpack.c.l.b16 %v1490
    %v2624 = vunpack.c.h.b16 %v1490
    %v2625 = vunpack.c.l.b16 %v1491
    %v2626 = vunpack.c.h.b16 %v1491
    %v2627 = vunpack.c.l.b16 %v1492
    %v2628 = vunpack.c.h.b16 %v1492
    %v2629 = vunpack.c.l.b16 %v1493
    %v2630 = vunpack.c.h.b16 %v1493
    %v2631 = vunpack.c.l.b16 %v1494
    %v2632 = vunpack.c.h.b16 %v1494
    %v2633 = vunpack.c.l.b16 %v1495
    %v2634 = vunpack.c.h.b16 %v1495
    %v2635 = vunpack.c.l.b16 %v1496
    %v2636 = vunpack.c.h.b16 %v1496
    %v2637 = vunpack.c.l.b16 %v1497
    %v2638 = vunpack.c.h.b16 %v1497
    %v2639 = vunpack.c.l.b16 %v1498
    %v2640 = vunpack.c.h.b16 %v1498
    %v2641 = vunpack.c.l.b16 %v1499
    %v2642 = vunpack.c.h.b16 %v1499
    %v2643 = vunpack.c.l.b16 %v1500
    %v2644 = vunpack.c.h.b16 %v1500
    %v2645 = vunpack.c.l.b16 %v1501
    %v2646 = vunpack.c.h.b16 %v1501
    %v2647 = vunpack.c.l.b16 %v1502
    %v2648 = vunpack.c.h.b16 %v1502
    %v2649 = vunpack.c.l.b16 %v1503
    %v2650 = vunpack.c.h.b16 %v1503
    %v2651 = vunpack.c.l.b16 %v1504
    %v2652 = vunpack.c.h.b16 %v1504
    %v2653 = vunpack.c.l.b16 %v1505
    %v2654 = vunpack.c.h.b16 %v1505
    %v2655 = vunpack.c.l.b16 %v1506
    %v2656 = vunpack.c.h.b16 %v1506
    %v2657 = vunpack.c.l.b16 %v1507
    %v2658 = vunpack.c.h.b16 %v1507
    %v2659 = vunpack.c.l.b16 %v1508
    %v2660 = vunpack.c.h.b16 %v1508
    %v2661 = vunpack.c.l.b16 %v1509
    %v2662 = vunpack.c.h.b16 %v1509
    %v2663 = vunpack.c.l.b16 %v1510
    %v2664 = vunpack.c.h.b16 %v1510
    %v2665 = vunpack.c.l.b16 %v1511
    %v2666 = vunpack.c.h.b16 %v1511
    %v2667 = vunpack.c.l.b16 %v1512
    %v2668 = vunpack.c.h.b16 %v1512
    %v2669 = vunpack.c.l.b16 %v1513
    %v2670 = vunpack.c.h.b16 %v1513
    %v2671 = vunpack.c.l.b16 %v1514
    %v2672 = vunpack.c.h.b16 %v1514
    %v2673 = vunpack.c.l.b16 %v1515
    %v2674 = vunpack.c.h.b16 %v1515
    %v2675 = vunpack.c.l.b16 %v1516
    %v2676 = vunpack.c.h.b16 %v1516
    %v2677 = vunpack.c.l.b16 %v1517
    %v2678 = vunpack.c.h.b16 %v1517
    %v2679 = vunpack.c.l.b16 %v1518
    %v2680 = vunpack.c.h.b16 %v1518
    %v2681 = vunpack.c.l.b16 %v1519
    %v2682 = vunpack.c.h.b16 %v1519
    %v2683 = vunpack.c.l.b16 %v1520
    %v2684 = vunpack.c.h.b16 %v1520
    %v2685 = vunpack.c.l.b16 %v1521
    %v2686 = vunpack.c.h.b16 %v1521
    %v2687 = vunpack.c.l.b16 %v1522
    %v2688 = vunpack.c.h.b16 %v1522
    %v2689 = vunpack.c.l.b16 %v1523
    %v2690 = vunpack.c.h.b16 %v1523
    %v2691 = vunpack.c.l.b16 %v1524
    %v2692 = vunpack.c.h.b16 %v1524
    %v2693 = vunpack.c.l.b16 %v1525
    %v2694 = vunpack.c.h.b16 %v1525
    %v2695 = vunpack.c.l.b16 %v1526
    %v2696 = vunpack.c.h.b16 %v1526
    %v2697 = vunpack.c.l.b16 %v1527
    %v2698 = vunpack.c.h.b16 %v1527
    %v2699 = vunpack.c.l.b16 %v1528
    %v2700 = vunpack.c.h.b16 %v1528
    %v2701 = vunpack.c.l.b16 %v1529
    %v2702 = vunpack.c.h.b16 %v1529
    %v2703 = vunpack.c.l.b16 %v1530
    %v2704 = vunpack.c.h.b16 %v1530
    %v2705 = vpack.c.b16 %v1941, %v1937
    %v2706 = vpack.c.b16 %v1942, %v1938
    %v2707 = vpack.c.b16 %v1943, %v1939
    %v2708 = vpack.c.b16 %v1944, %v1940
    %v2709 = vpack.c.b16 %v1949, %v1945
    %v2710 = vpack.c.b16 %v1950, %v1946
    %v2711 = vpack.c.b16 %v1951, %v1947
    %v2712 = vpack.c.b16 %v1952, %v1948
    %v2713 = vpack.c.b16 %v1957, %v1953
    %v2714 = vpack.c.b16 %v1958, %v1954
    %v2715 = vpack.c.b16 %v1959, %v1955
    %v2716 = vpack.c.b16 %v1960, %v1956
    %v2717 = vpack.c.b16 %v1965, %v1961
    %v2718 = vpack.c.b16 %v1966, %v1962
    %v2719 = vpack.c.b16 %v1967, %v1963
    %v2720 = vpack.c.b16 %v1968, %v1964
    %v2721 = vpack.c.b16 %v1973, %v1969
    %v2722 = vpack.c.b16 %v1974, %v1970
    %v2723 = vpack.c.b16 %v1975, %v1971
    %v2724 = vpack.c.b16 %v1976, %v1972
    %v2725 = vpack.c.b16 %v1981, %v1977
    %v2726 = vpack.c.b16 %v1982, %v1978
    %v2727 = vpack.c.b16 %v1983, %v1979
    %v2728 = vpack.c.b16 %v1984, %v1980
    %v2729 = vpack.c.b16 %v1989, %v1985
    %v2730 = vpack.c.b16 %v1990, %v1986
    %v2731 = vpack.c.b16 %v1991, %v1987
    %v2732 = vpack.c.b16 %v1992, %v1988
    %v2733 = vpack.c.b16 %v1997, %v1993
    %v2734 = vpack.c.b16 %v1998, %v1994
    %v2735 = vpack.c.b16 %v1999, %v1995
    %v2736 = vpack.c.b16 %v2000, %v1996
    %v2737 = vpack.c.b16 %v2005, %v2001
    %v2738 = vpack.c.b16 %v2006, %v2002
    %v2739 = vpack.c.b16 %v2007, %v2003
    %v2740 = vpack.c.b16 %v2008, %v2004
    %v2741 = vpack.c.b16 %v2013, %v2009
    %v2742 = vpack.c.b16 %v2014, %v2010
    %v2743 = vpack.c.b16 %v2015, %v2011
    %v2744 = vpack.c.b16 %v2016, %v2012
    %v2745 = vpack.c.b16 %v2021, %v2017
    %v2746 = vpack.c.b16 %v2022, %v2018
    %v2747 = vpack.c.b16 %v2023, %v2019
    %v2748 = vpack.c.b16 %v2024, %v2020
    %v2749 = vpack.c.b16 %v2029, %v2025
    %v2750 = vpack.c.b16 %v2030, %v2026
    %v2751 = vpack.c.b16 %v2031, %v2027
    %v2752 = vpack.c.b16 %v2032, %v2028
    %v2753 = vpack.c.b16 %v2037, %v2033
    %v2754 = vpack.c.b16 %v2038, %v2034
    %v2755 = vpack.c.b16 %v2039, %v2035
    %v2756 = vpack.c.b16 %v2040, %v2036
    %v2757 = vpack.c.b16 %v2045, %v2041
    %v2758 = vpack.c.b16 %v2046, %v2042
    %v2759 = vpack.c.b16 %v2047, %v2043
    %v2760 = vpack.c.b16 %v2048, %v2044
    %v2761 = vpack.c.b16 %v2053, %v2049
    %v2762 = vpack.c.b16 %v2054, %v2050
    %v2763 = vpack.c.b16 %v2055, %v2051
    %v2764 = vpack.c.b16 %v2056, %v2052
    %v2765 = vpack.c.b16 %v2061, %v2057
    %v2766 = vpack.c.b16 %v2062, %v2058
    %v2767 = vpack.c.b16 %v2063, %v2059
    %v2768 = vpack.c.b16 %v2064, %v2060
    %v2769 = vpack.c.b16 %v2069, %v2065
    %v2770 = vpack.c.b16 %v2070, %v2066
    %v2771 = vpack.c.b16 %v2071, %v2067
    %v2772 = vpack.c.b16 %v2072, %v2068
    %v2773 = vpack.c.b16 %v2077, %v2073
    %v2774 = vpack.c.b16 %v2078, %v2074
    %v2775 = vpack.c.b16 %v2079, %v2075
    %v2776 = vpack.c.b16 %v2080, %v2076
    %v2777 = vpack.c.b16 %v2085, %v2081
    %v2778 = vpack.c.b16 %v2086, %v2082
    %v2779 = vpack.c.b16 %v2087, %v2083
    %v2780 = vpack.c.b16 %v2088, %v2084
    %v2781 = vpack.c.b16 %v2093, %v2089
    %v2782 = vpack.c.b16 %v2094, %v2090
    %v2783 = vpack.c.b16 %v2095, %v2091
    %v2784 = vpack.c.b16 %v2096, %v2092
    %v2785 = vpack.c.b16 %v2101, %v2097
    %v2786 = vpack.c.b16 %v2102, %v2098
    %v2787 = vpack.c.b16 %v2103, %v2099
    %v2788 = vpack.c.b16 %v2104, %v2100
    %v2789 = vpack.c.b16 %v2109, %v2105
    %v2790 = vpack.c.b16 %v2110, %v2106
    %v2791 = vpack.c.b16 %v2111, %v2107
    %v2792 = vpack.c.b16 %v2112, %v2108
    %v2793 = vpack.c.b16 %v2117, %v2113
    %v2794 = vpack.c.b16 %v2118, %v2114
    %v2795 = vpack.c.b16 %v2119, %v2115
    %v2796 = vpack.c.b16 %v2120, %v2116
    %v2797 = vpack.c.b16 %v2125, %v2121
    %v2798 = vpack.c.b16 %v2126, %v2122
    %v2799 = vpack.c.b16 %v2127, %v2123
    %v2800 = vpack.c.b16 %v2128, %v2124
    %v2801 = vpack.c.b16 %v2133, %v2129
    %v2802 = vpack.c.b16 %v2134, %v2130
    %v2803 = vpack.c.b16 %v2135, %v2131
    %v2804 = vpack.c.b16 %v2136, %v2132
    %v2805 = vpack.c.b16 %v2141, %v2137
    %v2806 = vpack.c.b16 %v2142, %v2138
    %v2807 = vpack.c.b16 %v2143, %v2139
    %v2808 = vpack.c.b16 %v2144, %v2140
    %v2809 = vpack.c.b16 %v2149, %v2145
    %v2810 = vpack.c.b16 %v2150, %v2146
    %v2811 = vpack.c.b16 %v2151, %v2147
    %v2812 = vpack.c.b16 %v2152, %v2148
    %v2813 = vpack.c.b16 %v2157, %v2153
    %v2814 = vpack.c.b16 %v2158, %v2154
    %v2815 = vpack.c.b16 %v2159, %v2155
    %v2816 = vpack.c.b16 %v2160, %v2156
    %v2817 = vpack.c.b16 %v2165, %v2161
    %v2818 = vpack.c.b16 %v2166, %v2162
    %v2819 = vpack.c.b16 %v2167, %v2163
    %v2820 = vpack.c.b16 %v2168, %v2164
    %v2821 = vpack.c.b16 %v2173, %v2169
    %v2822 = vpack.c.b16 %v2174, %v2170
    %v2823 = vpack.c.b16 %v2175, %v2171
    %v2824 = vpack.c.b16 %v2176, %v2172
    %v2825 = vpack.c.b16 %v2181, %v2177
    %v2826 = vpack.c.b16 %v2182, %v2178
    %v2827 = vpack.c.b16 %v2183, %v2179
    %v2828 = vpack.c.b16 %v2184, %v2180
    %v2829 = vpack.c.b16 %v2189, %v2185
    %v2830 = vpack.c.b16 %v2190, %v2186
    %v2831 = vpack.c.b16 %v2191, %v2187
    %v2832 = vpack.c.b16 %v2192, %v2188
    %v2833 = vpack.c.b16 %v2197, %v2193
    %v2834 = vpack.c.b16 %v2198, %v2194
    %v2835 = vpack.c.b16 %v2199, %v2195
    %v2836 = vpack.c.b16 %v2200, %v2196
    %v2837 = vpack.c.b16 %v2205, %v2201
    %v2838 = vpack.c.b16 %v2206, %v2202
    %v2839 = vpack.c.b16 %v2207, %v2203
    %v2840 = vpack.c.b16 %v2208, %v2204
    %v2841 = vpack.c.b16 %v2213, %v2209
    %v2842 = vpack.c.b16 %v2214, %v2210
    %v2843 = vpack.c.b16 %v2215, %v2211
    %v2844 = vpack.c.b16 %v2216, %v2212
    %v2845 = vpack.c.b16 %v2221, %v2217
    %v2846 = vpack.c.b16 %v2222, %v2218
    %v2847 = vpack.c.b16 %v2223, %v2219
    %v2848 = vpack.c.b16 %v2224, %v2220
    %v2849 = vpack.c.b16 %v2229, %v2225
    %v2850 = vpack.c.b16 %v2230, %v2226
    %v2851 = vpack.c.b16 %v2231, %v2227
    %v2852 = vpack.c.b16 %v2232, %v2228
    %v2853 = vpack.c.b16 %v2237, %v2233
    %v2854 = vpack.c.b16 %v2238, %v2234
    %v2855 = vpack.c.b16 %v2239, %v2235
    %v2856 = vpack.c.b16 %v2240, %v2236
    %v2857 = vpack.c.b16 %v2245, %v2241
    %v2858 = vpack.c.b16 %v2246, %v2242
    %v2859 = vpack.c.b16 %v2247, %v2243
    %v2860 = vpack.c.b16 %v2248, %v2244
    %v2861 = vpack.c.b16 %v2253, %v2249
    %v2862 = vpack.c.b16 %v2254, %v2250
    %v2863 = vpack.c.b16 %v2255, %v2251
    %v2864 = vpack.c.b16 %v2256, %v2252
    %v2865 = vpack.c.b16 %v2261, %v2257
    %v2866 = vpack.c.b16 %v2262, %v2258
    %v2867 = vpack.c.b16 %v2263, %v2259
    %v2868 = vpack.c.b16 %v2264, %v2260
    %v2869 = vpack.c.b16 %v2269, %v2265
    %v2870 = vpack.c.b16 %v2270, %v2266
    %v2871 = vpack.c.b16 %v2271, %v2267
    %v2872 = vpack.c.b16 %v2272, %v2268
    %v2873 = vpack.c.b16 %v2277, %v2273
    %v2874 = vpack.c.b16 %v2278, %v2274
    %v2875 = vpack.c.b16 %v2279, %v2275
    %v2876 = vpack.c.b16 %v2280, %v2276
    %v2877 = vpack.c.b16 %v2285, %v2281
    %v2878 = vpack.c.b16 %v2286, %v2282
    %v2879 = vpack.c.b16 %v2287, %v2283
    %v2880 = vpack.c.b16 %v2288, %v2284
    %v2881 = vpack.c.b16 %v2293, %v2289
    %v2882 = vpack.c.b16 %v2294, %v2290
    %v2883 = vpack.c.b16 %v2295, %v2291
    %v2884 = vpack.c.b16 %v2296, %v2292
    %v2885 = vpack.c.b16 %v2301, %v2297
    %v2886 = vpack.c.b16 %v2302, %v2298
    %v2887 = vpack.c.b16 %v2303, %v2299
    %v2888 = vpack.c.b16 %v2304, %v2300
    %v2889 = vpack.c.b16 %v2309, %v2305
    %v2890 = vpack.c.b16 %v2310, %v2306
    %v2891 = vpack.c.b16 %v2311, %v2307
    %v2892 = vpack.c.b16 %v2312, %v2308
    %v2893 = vpack.c.b16 %v2317, %v2313
    %v2894 = vpack.c.b16 %v2318, %v2314
    %v2895 = vpack.c.b16 %v2319, %v2315
    %v2896 = vpack.c.b16 %v2320, %v2316
    %v2897 = vpack.c.b16 %v2325, %v2321
    %v2898 = vpack.c.b16 %v2326, %v2322
    %v2899 = vpack.c.b16 %v2327, %v2323
    %v2900 = vpack.c.b16 %v2328, %v2324
    %v2901 = vpack.c.b16 %v2333, %v2329
    %v2902 = vpack.c.b16 %v2334, %v2330
    %v2903 = vpack.c.b16 %v2335, %v2331
    %v2904 = vpack.c.b16 %v2336, %v2332
    %v2905 = vpack.c.b16 %v2341, %v2337
    %v2906 = vpack.c.b16 %v2342, %v2338
    %v2907 = vpack.c.b16 %v2343, %v2339
    %v2908 = vpack.c.b16 %v2344, %v2340
    %v2909 = vpack.c.b16 %v2349, %v2345
    %v2910 = vpack.c.b16 %v2350, %v2346
    %v2911 = vpack.c.b16 %v2351, %v2347
    %v2912 = vpack.c.b16 %v2352, %v2348
    %v2913 = vpack.c.b16 %v2357, %v2353
    %v2914 = vpack.c.b16 %v2358, %v2354
    %v2915 = vpack.c.b16 %v2359, %v2355
    %v2916 = vpack.c.b16 %v2360, %v2356
    %v2917 = vpack.c.b16 %v2365, %v2361
    %v2918 = vpack.c.b16 %v2366, %v2362
    %v2919 = vpack.c.b16 %v2367, %v2363
    %v2920 = vpack.c.b16 %v2368, %v2364
    %v2921 = vpack.c.b16 %v2373, %v2369
    %v2922 = vpack.c.b16 %v2374, %v2370
    %v2923 = vpack.c.b16 %v2375, %v2371
    %v2924 = vpack.c.b16 %v2376, %v2372
    %v2925 = vpack.c.b16 %v2381, %v2377
    %v2926 = vpack.c.b16 %v2382, %v2378
    %v2927 = vpack.c.b16 %v2383, %v2379
    %v2928 = vpack.c.b16 %v2384, %v2380
    %v2929 = vpack.c.b16 %v2389, %v2385
    %v2930 = vpack.c.b16 %v2390, %v2386
    %v2931 = vpack.c.b16 %v2391, %v2387
    %v2932 = vpack.c.b16 %v2392, %v2388
    %v2933 = vpack.c.b16 %v2397, %v2393
    %v2934 = vpack.c.b16 %v2398, %v2394
    %v2935 = vpack.c.b16 %v2399, %v2395
    %v2936 = vpack.c.b16 %v2400, %v2396
    %v2937 = vpack.c.b16 %v2405, %v2401
    %v2938 = vpack.c.b16 %v2406, %v2402
    %v2939 = vpack.c.b16 %v2407, %v2403
    %v2940 = vpack.c.b16 %v2408, %v2404
    %v2941 = vpack.c.b16 %v2413, %v2409
    %v2942 = vpack.c.b16 %v2414, %v2410
    %v2943 = vpack.c.b16 %v2415, %v2411
    %v2944 = vpack.c.b16 %v2416, %v2412
    %v2945 = vpack.c.b16 %v2421, %v2417
    %v2946 = vpack.c.b16 %v2422, %v2418
    %v2947 = vpack.c.b16 %v2423, %v2419
    %v2948 = vpack.c.b16 %v2424, %v2420
    %v2949 = vpack.c.b16 %v2429, %v2425
    %v2950 = vpack.c.b16 %v2430, %v2426
    %v2951 = vpack.c.b16 %v2431, %v2427
    %v2952 = vpack.c.b16 %v2432, %v2428
    %v2953 = vpack.c.b16 %v2437, %v2433
    %v2954 = vpack.c.b16 %v2438, %v2434
    %v2955 = vpack.c.b16 %v2439, %v2435
    %v2956 = vpack.c.b16 %v2440, %v2436
    %v2957 = vpack.c.b16 %v2445, %v2441
    %v2958 = vpack.c.b16 %v2446, %v2442
    %v2959 = vpack.c.b16 %v2447, %v2443
    %v2960 = vpack.c.b16 %v2448, %v2444
    %v2961 = vpack.c.b16 %v2453, %v2449
    %v2962 = vpack.c.b16 %v2454, %v2450
    %v2963 = vpack.c.b16 %v2455, %v2451
    %v2964 = vpack.c.b16 %v2456, %v2452
    %v2965 = vpack.c.b16 %v2461, %v2457
    %v2966 = vpack.c.b16 %v2462, %v2458
    %v2967 = vpack.c.b16 %v2463, %v2459
    %v2968 = vpack.c.b16 %v2464, %v2460
    %v2969 = vpack.c.b16 %v2469, %v2465
    %v2970 = vpack.c.b16 %v2470, %v2466
    %v2971 = vpack.c.b16 %v2471, %v2467
    %v2972 = vpack.c.b16 %v2472, %v2468
    %v2973 = vpack.c.b16 %v2477, %v2473
    %v2974 = vpack.c.b16 %v2478, %v2474
    %v2975 = vpack.c.b16 %v2479, %v2475
    %v2976 = vpack.c.b16 %v2480, %v2476
    %v2977 = vpack.c.b16 %v2485, %v2481
    %v2978 = vpack.c.b16 %v2486, %v2482
    %v2979 = vpack.c.b16 %v2487, %v2483
    %v2980 = vpack.c.b16 %v2488, %v2484
    %v2981 = vpack.c.b16 %v2493, %v2489
    %v2982 = vpack.c.b16 %v2494, %v2490
    %v2983 = vpack.c.b16 %v2495, %v2491
    %v2984 = vpack.c.b16 %v2496, %v2492
    %v2985 = vpack.c.b16 %v2501, %v2497
    %v2986 = vpack.c.b16 %v2502, %v2498
    %v2987 = vpack.c.b16 %v2503, %v2499
    %v2988 = vpack.c.b16 %v2504, %v2500
    %v2989 = vpack.c.b16 %v2509, %v2505
    %v2990 = vpack.c.b16 %v2510, %v2506
    %v2991 = vpack.c.b16 %v2511, %v2507
    %v2992 = vpack.c.b16 %v2512, %v2508
    %v2993 = vpack.c.b16 %v2517, %v2513
    %v2994 = vpack.c.b16 %v2518, %v2514
    %v2995 = vpack.c.b16 %v2519, %v2515
    %v2996 = vpack.c.b16 %v2520, %v2516
    %v2997 = vpack.c.b16 %v2525, %v2521
    %v2998 = vpack.c.b16 %v2526, %v2522
    %v2999 = vpack.c.b16 %v2527, %v2523
    %v3000 = vpack.c.b16 %v2528, %v2524
    %v3001 = vpack.c.b16 %v2533, %v2529
    %v3002 = vpack.c.b16 %v2534, %v2530
    %v3003 = vpack.c.b16 %v2535, %v2531
    %v3004 = vpack.c.b16 %v2536, %v2532
    %v3005 = vpack.c.b16 %v2541, %v2537
    %v3006 = vpack.c.b16 %v2542, %v2538
    %v3007 = vpack.c.b16 %v2543, %v2539
    %v3008 = vpack.c.b16 %v2544, %v2540
    %v3009 = vpack.c.b16 %v2549, %v2545
    %v3010 = vpack.c.b16 %v2550, %v2546
    %v3011 = vpack.c.b16 %v2551, %v2547
    %v3012 = vpack.c.b16 %v2552, %v2548
    %v3013 = vpack.c.b16 %v2557, %v2553
    %v3014 = vpack.c.b16 %v2558, %v2554
    %v3015 = vpack.c.b16 %v2559, %v2555
    %v3016 = vpack.c.b16 %v2560, %v2556
    %v3017 = vpack.c.b16 %v2565, %v2561
    %v3018 = vpack.c.b16 %v2566, %v2562
    %v3019 = vpack.c.b16 %v2567, %v2563
    %v3020 = vpack.c.b16 %v2568, %v2564
    %v3021 = vpack.c.b16 %v2573, %v2569
    %v3022 = vpack.c.b16 %v2574, %v2570
    %v3023 = vpack.c.b16 %v2575, %v2571
    %v3024 = vpack.c.b16 %v2576, %v2572
    %v3025 = vpack.c.b16 %v2581, %v2577
    %v3026 = vpack.c.b16 %v2582, %v2578
    %v3027 = vpack.c.b16 %v2583, %v2579
    %v3028 = vpack.c.b16 %v2584, %v2580
    %v3029 = vpack.c.b16 %v2589, %v2585
    %v3030 = vpack.c.b16 %v2590, %v2586
    %v3031 = vpack.c.b16 %v2591, %v2587
    %v3032 = vpack.c.b16 %v2592, %v2588
    %v3033 = vpack.c.b16 %v2597, %v2593
    %v3034 = vpack.c.b16 %v2598, %v2594
    %v3035 = vpack.c.b16 %v2599, %v2595
    %v3036 = vpack.c.b16 %v2600, %v2596
    %v3037 = vpack.c.b16 %v2605, %v2601
    %v3038 = vpack.c.b16 %v2606, %v2602
    %v3039 = vpack.c.b16 %v2607, %v2603
    %v3040 = vpack.c.b16 %v2608, %v2604
    %v3041 = vpack.c.b16 %v2613, %v2609
    %v3042 = vpack.c.b16 %v2614, %v2610
    %v3043 = vpack.c.b16 %v2615, %v2611
    %v3044 = vpack.c.b16 %v2616, %v2612
    %v3045 = vpack.c.b16 %v2621, %v2617
    %v3046 = vpack.c.b16 %v2622, %v2618
    %v3047 = vpack.c.b16 %v2623, %v2619
    %v3048 = vpack.c.b16 %v2624, %v2620
    %v3049 = vpack.c.b16 %v2629, %v2625
    %v3050 = vpack.c.b16 %v2630, %v2626
    %v3051 = vpack.c.b16 %v2631, %v2627
    %v3052 = vpack.c.b16 %v2632, %v2628
    %v3053 = vpack.c.b16 %v2637, %v2633
    %v3054 = vpack.c.b16 %v2638, %v2634
    %v3055 = vpack.c.b16 %v2639, %v2635
    %v3056 = vpack.c.b16 %v2640, %v2636
    %v3057 = vpack.c.b16 %v2645, %v2641
    %v3058 = vpack.c.b16 %v2646, %v2642
    %v3059 = vpack.c.b16 %v2647, %v2643
    %v3060 = vpack.c.b16 %v2648, %v2644
    %v3061 = vpack.c.b16 %v2653, %v2649
    %v3062 = vpack.c.b16 %v2654, %v2650
    %v3063 = vpack.c.b16 %v2655, %v2651
    %v3064 = vpack.c.b16 %v2656, %v2652
    %v3065 = vpack.c.b16 %v2661, %v2657
    %v3066 = vpack.c.b16 %v2662, %v2658
    %v3067 = vpack.c.b16 %v2663, %v2659
    %v3068 = vpack.c.b16 %v2664, %v2660
    %v3069 = vpack.c.b16 %v2669, %v2665
    %v3070 = vpack.c.b16 %v2670, %v2666
    %v3071 = vpack.c.b16 %v2671, %v2667
    %v3072 = vpack.c.b16 %v2672, %v2668
    %v3073 = vpack.c.b16 %v2677, %v2673
    %v3074 = vpack.c.b16 %v2678, %v2674
    %v3075 = vpack.c.b16 %v2679, %v2675
    %v3076 = vpack.c.b16 %v2680, %v2676
    %v3077 = vpack.c.b16 %v2685, %v2681
    %v3078 = vpack.c.b16 %v2686, %v2682
    %v3079 = vpack.c.b16 %v2687, %v2683
    %v3080 = vpack.c.b16 %v2688, %v2684
    %v3081 = vpack.c.b16 %v2693, %v2689
    %v3082 = vpack.c.b16 %v2694, %v2690
    %v3083 = vpack.c.b16 %v2695, %v2691
    %v3084 = vpack.c.b16 %v2696, %v2692
    %v3085 = vpack.c.b16 %v2701, %v2697
    %v3086 = vpack.c.b16 %v2702, %v2698
    %v3087 = vpack.c.b16 %v2703, %v2699
    %v3088 = vpack.c.b16 %v2704, %v2700
    %3473 = vmatprep.subr.bf16.mxu0 %v2734
    %3474 = vmatpush1.bf16.msra.mxu0 %v2733
    %3475 = vmatprep.subr.bf16.mxu0 %v2730
    %3476 = vmatpush1.bf16.msra.mxu0 %v2729
    %3477 = vmatprep.subr.bf16.mxu0 %v2726
    %3478 = vmatpush1.bf16.msra.mxu0 %v2725
    %3479 = vmatprep.subr.bf16.mxu0 %v2722
    %3480 = vmatpush1.bf16.msra.mxu0 %v2721
    %3481 = vmatprep.subr.bf16.mxu0 %v2718
    %3482 = vmatpush1.bf16.msra.mxu0 %v2717
    %3483 = vmatprep.subr.bf16.mxu0 %v2714
    %3484 = vmatpush1.bf16.msra.mxu0 %v2713
    %3485 = vmatprep.subr.bf16.mxu0 %v2710
    %3486 = vmatpush1.bf16.msra.mxu0 %v2709
    %3487 = vmatprep.subr.bf16.mxu0 %v2706
    %3488 = vmatpush1.bf16.msra.mxu0 %v2705
    %3489 = vmatprep.subr.bf16.mxu0 %v2766
    %3490 = vmatpush2.bf16.msra.mxu0 %v2765
    %3491 = vmatprep.subr.bf16.mxu0 %v2762
    %3492 = vmatpush2.bf16.msra.mxu0 %v2761
    %3493 = vmatprep.subr.bf16.mxu0 %v2758
    %3494 = vmatpush2.bf16.msra.mxu0 %v2757
    %3495 = vmatprep.subr.bf16.mxu0 %v2754
    %3496 = vmatpush2.bf16.msra.mxu0 %v2753
    %3497 = vmatprep.subr.bf16.mxu0 %v2750
    %3498 = vmatpush2.bf16.msra.mxu0 %v2749
    %3499 = vmatprep.subr.bf16.mxu0 %v2746
    %3500 = vmatpush2.bf16.msra.mxu0 %v2745
    %3501 = vmatprep.subr.bf16.mxu0 %v2742
    %3502 = vmatpush2.bf16.msra.mxu0 %v2741
    %3503 = vmatprep.subr.bf16.mxu0 %v2738
    %3504 = vmatpush2.bf16.msra.mxu0 %v2737
    %3505 = vmatprep.mubr.bf16.mxu0 %v1124
    %3506 = vmatmul.mubr.bf16.gmra.mxu0 %v1123
    %v3507 = vpop.f32.mrf.mxu0
    %v3508 = vadd.f32 %v1536, %v3507
    %v3509 = vpop.f32.mrf.mxu0
    %v3510 = vadd.f32 %v1540, %v3509
    %v3511 = vpop.f32.mrf.mxu0
    %v3512 = vadd.f32 %v1536, %v3511
    %v3513 = vpop.f32.mrf.mxu0
    %v3514 = vadd.f32 %v1540, %v3513
    %3515 = vmatprep.mubr.bf16.mxu0 %v1136
    %3516 = vmatmul.mubr.bf16.gmra.mxu0 %v1135
    %v3517 = vpop.f32.mrf.mxu0
    %v3518 = vadd.f32 %v1536, %v3517
    %v3519 = vpop.f32.mrf.mxu0
    %v3520 = vadd.f32 %v1540, %v3519
    %v3521 = vpop.f32.mrf.mxu0
    %v3522 = vadd.f32 %v1536, %v3521
    %v3523 = vpop.f32.mrf.mxu0
    %v3524 = vadd.f32 %v1540, %v3523
    %3525 = vdwg.mxu0
    %3526 = vmatprep.subr.bf16.mxu0 %v2798
    %3527 = vmatpush1.bf16.msra.mxu0 %v2797
    %3528 = vmatprep.subr.bf16.mxu0 %v2794
    %3529 = vmatpush1.bf16.msra.mxu0 %v2793
    %3530 = vmatprep.subr.bf16.mxu0 %v2790
    %3531 = vmatpush1.bf16.msra.mxu0 %v2789
    %3532 = vmatprep.subr.bf16.mxu0 %v2786
    %3533 = vmatpush1.bf16.msra.mxu0 %v2785
    %3534 = vmatprep.subr.bf16.mxu0 %v2782
    %3535 = vmatpush1.bf16.msra.mxu0 %v2781
    %3536 = vmatprep.subr.bf16.mxu0 %v2778
    %3537 = vmatpush1.bf16.msra.mxu0 %v2777
    %3538 = vmatprep.subr.bf16.mxu0 %v2774
    %3539 = vmatpush1.bf16.msra.mxu0 %v2773
    %3540 = vmatprep.subr.bf16.mxu0 %v2770
    %3541 = vmatpush1.bf16.msra.mxu0 %v2769
    %3542 = vmatprep.subr.bf16.mxu0 %v2830
    %3543 = vmatpush2.bf16.msra.mxu0 %v2829
    %3544 = vmatprep.subr.bf16.mxu0 %v2826
    %3545 = vmatpush2.bf16.msra.mxu0 %v2825
    %3546 = vmatprep.subr.bf16.mxu0 %v2822
    %3547 = vmatpush2.bf16.msra.mxu0 %v2821
    %3548 = vmatprep.subr.bf16.mxu0 %v2818
    %3549 = vmatpush2.bf16.msra.mxu0 %v2817
    %3550 = vmatprep.subr.bf16.mxu0 %v2814
    %3551 = vmatpush2.bf16.msra.mxu0 %v2813
    %3552 = vmatprep.subr.bf16.mxu0 %v2810
    %3553 = vmatpush2.bf16.msra.mxu0 %v2809
    %3554 = vmatprep.subr.bf16.mxu0 %v2806
    %3555 = vmatpush2.bf16.msra.mxu0 %v2805
    %3556 = vmatprep.subr.bf16.mxu0 %v2802
    %3557 = vmatpush2.bf16.msra.mxu0 %v2801
    %3558 = vmatprep.mubr.bf16.mxu0 %v1126
    %3559 = vmatmul.mubr.bf16.gmra.mxu0 %v1125
    %v3560 = vpop.f32.mrf.mxu0
    %v3561 = vadd.f32 %v3508, %v3560
    %v3562 = vpop.f32.mrf.mxu0
    %v3563 = vadd.f32 %v3510, %v3562
    %v3564 = vpop.f32.mrf.mxu0
    %v3565 = vadd.f32 %v3512, %v3564
    %v3566 = vpop.f32.mrf.mxu0
    %v3567 = vadd.f32 %v3514, %v3566
    %3568 = vmatprep.mubr.bf16.mxu0 %v1138
    %3569 = vmatmul.mubr.bf16.gmra.mxu0 %v1137
    %v3570 = vpop.f32.mrf.mxu0
    %v3571 = vadd.f32 %v3518, %v3570
    %v3572 = vpop.f32.mrf.mxu0
    %v3573 = vadd.f32 %v3520, %v3572
    %v3574 = vpop.f32.mrf.mxu0
    %v3575 = vadd.f32 %v3522, %v3574
    %v3576 = vpop.f32.mrf.mxu0
    %v3577 = vadd.f32 %v3524, %v3576
    %3578 = vdwg.mxu0
    %3579 = vmatprep.subr.bf16.mxu0 %v2862
    %3580 = vmatpush1.bf16.msra.mxu0 %v2861
    %3581 = vmatprep.subr.bf16.mxu0 %v2858
    %3582 = vmatpush1.bf16.msra.mxu0 %v2857
    %3583 = vmatprep.subr.bf16.mxu0 %v2854
    %3584 = vmatpush1.bf16.msra.mxu0 %v2853
    %3585 = vmatprep.subr.bf16.mxu0 %v2850
    %3586 = vmatpush1.bf16.msra.mxu0 %v2849
    %3587 = vmatprep.subr.bf16.mxu0 %v2846
    %3588 = vmatpush1.bf16.msra.mxu0 %v2845
    %3589 = vmatprep.subr.bf16.mxu0 %v2842
    %3590 = vmatpush1.bf16.msra.mxu0 %v2841
    %3591 = vmatprep.subr.bf16.mxu0 %v2838
    %3592 = vmatpush1.bf16.msra.mxu0 %v2837
    %3593 = vmatprep.subr.bf16.mxu0 %v2834
    %3594 = vmatpush1.bf16.msra.mxu0 %v2833
    %3595 = vmatprep.subr.bf16.mxu0 %v2894
    %3596 = vmatpush2.bf16.msra.mxu0 %v2893
    %3597 = vmatprep.subr.bf16.mxu0 %v2890
    %3598 = vmatpush2.bf16.msra.mxu0 %v2889
    %3599 = vmatprep.subr.bf16.mxu0 %v2886
    %3600 = vmatpush2.bf16.msra.mxu0 %v2885
    %3601 = vmatprep.subr.bf16.mxu0 %v2882
    %3602 = vmatpush2.bf16.msra.mxu0 %v2881
    %3603 = vmatprep.subr.bf16.mxu0 %v2878
    %3604 = vmatpush2.bf16.msra.mxu0 %v2877
    %3605 = vmatprep.subr.bf16.mxu0 %v2874
    %3606 = vmatpush2.bf16.msra.mxu0 %v2873
    %3607 = vmatprep.subr.bf16.mxu0 %v2870
    %3608 = vmatpush2.bf16.msra.mxu0 %v2869
    %3609 = vmatprep.subr.bf16.mxu0 %v2866
    %3610 = vmatpush2.bf16.msra.mxu0 %v2865
    %3611 = vmatprep.mubr.bf16.mxu0 %v1128
    %3612 = vmatmul.mubr.bf16.gmra.mxu0 %v1127
    %v3613 = vpop.f32.mrf.mxu0
    %v3614 = vadd.f32 %v3561, %v3613
    %v3615 = vpop.f32.mrf.mxu0
    %v3616 = vadd.f32 %v3563, %v3615
    %v3617 = vpop.f32.mrf.mxu0
    %v3618 = vadd.f32 %v3565, %v3617
    %v3619 = vpop.f32.mrf.mxu0
    %v3620 = vadd.f32 %v3567, %v3619
    %3621 = vmatprep.mubr.bf16.mxu0 %v1140
    %3622 = vmatmul.mubr.bf16.gmra.mxu0 %v1139
    %v3623 = vpop.f32.mrf.mxu0
    %v3624 = vadd.f32 %v3571, %v3623
    %v3625 = vpop.f32.mrf.mxu0
    %v3626 = vadd.f32 %v3573, %v3625
    %v3627 = vpop.f32.mrf.mxu0
    %v3628 = vadd.f32 %v3575, %v3627
    %v3629 = vpop.f32.mrf.mxu0
    %v3630 = vadd.f32 %v3577, %v3629
    %3631 = vdwg.mxu0
    %3632 = vmatprep.subr.bf16.mxu0 %v2926
    %3633 = vmatpush1.bf16.msra.mxu0 %v2925
    %3634 = vmatprep.subr.bf16.mxu0 %v2922
    %3635 = vmatpush1.bf16.msra.mxu0 %v2921
    %3636 = vmatprep.subr.bf16.mxu0 %v2918
    %3637 = vmatpush1.bf16.msra.mxu0 %v2917
    %3638 = vmatprep.subr.bf16.mxu0 %v2914
    %3639 = vmatpush1.bf16.msra.mxu0 %v2913
    %3640 = vmatprep.subr.bf16.mxu0 %v2910
    %3641 = vmatpush1.bf16.msra.mxu0 %v2909
    %3642 = vmatprep.subr.bf16.mxu0 %v2906
    %3643 = vmatpush1.bf16.msra.mxu0 %v2905
    %3644 = vmatprep.subr.bf16.mxu0 %v2902
    %3645 = vmatpush1.bf16.msra.mxu0 %v2901
    %3646 = vmatprep.subr.bf16.mxu0 %v2898
    %3647 = vmatpush1.bf16.msra.mxu0 %v2897
    %3648 = vmatprep.subr.bf16.mxu0 %v2958
    %3649 = vmatpush2.bf16.msra.mxu0 %v2957
    %3650 = vmatprep.subr.bf16.mxu0 %v2954
    %3651 = vmatpush2.bf16.msra.mxu0 %v2953
    %3652 = vmatprep.subr.bf16.mxu0 %v2950
    %3653 = vmatpush2.bf16.msra.mxu0 %v2949
    %3654 = vmatprep.subr.bf16.mxu0 %v2946
    %3655 = vmatpush2.bf16.msra.mxu0 %v2945
    %3656 = vmatprep.subr.bf16.mxu0 %v2942
    %3657 = vmatpush2.bf16.msra.mxu0 %v2941
    %3658 = vmatprep.subr.bf16.mxu0 %v2938
    %3659 = vmatpush2.bf16.msra.mxu0 %v2937
    %3660 = vmatprep.subr.bf16.mxu0 %v2934
    %3661 = vmatpush2.bf16.msra.mxu0 %v2933
    %3662 = vmatprep.subr.bf16.mxu0 %v2930
    %3663 = vmatpush2.bf16.msra.mxu0 %v2929
    %3664 = vmatprep.mubr.bf16.mxu0 %v1130
    %3665 = vmatmul.mubr.bf16.gmra.mxu0 %v1129
    %v3666 = vpop.f32.mrf.mxu0
    %v3667 = vadd.f32 %v3614, %v3666
    %v3668 = vpop.f32.mrf.mxu0
    %v3669 = vadd.f32 %v3616, %v3668
    %v3670 = vpop.f32.mrf.mxu0
    %v3671 = vadd.f32 %v3618, %v3670
    %v3672 = vpop.f32.mrf.mxu0
    %v3673 = vadd.f32 %v3620, %v3672
    %3674 = vmatprep.mubr.bf16.mxu0 %v1142
    %3675 = vmatmul.mubr.bf16.gmra.mxu0 %v1141
    %v3676 = vpop.f32.mrf.mxu0
    %v3677 = vadd.f32 %v3624, %v3676
    %v3678 = vpop.f32.mrf.mxu0
    %v3679 = vadd.f32 %v3626, %v3678
    %v3680 = vpop.f32.mrf.mxu0
    %v3681 = vadd.f32 %v3628, %v3680
    %v3682 = vpop.f32.mrf.mxu0
    %v3683 = vadd.f32 %v3630, %v3682
    %3684 = vdwg.mxu0
    %3685 = vmatprep.subr.bf16.mxu0 %v2990
    %3686 = vmatpush1.bf16.msra.mxu0 %v2989
    %3687 = vmatprep.subr.bf16.mxu0 %v2986
    %3688 = vmatpush1.bf16.msra.mxu0 %v2985
    %3689 = vmatprep.subr.bf16.mxu0 %v2982
    %3690 = vmatpush1.bf16.msra.mxu0 %v2981
    %3691 = vmatprep.subr.bf16.mxu0 %v2978
    %3692 = vmatpush1.bf16.msra.mxu0 %v2977
    %3693 = vmatprep.subr.bf16.mxu0 %v2974
    %3694 = vmatpush1.bf16.msra.mxu0 %v2973
    %3695 = vmatprep.subr.bf16.mxu0 %v2970
    %3696 = vmatpush1.bf16.msra.mxu0 %v2969
    %3697 = vmatprep.subr.bf16.mxu0 %v2966
    %3698 = vmatpush1.bf16.msra.mxu0 %v2965
    %3699 = vmatprep.subr.bf16.mxu0 %v2962
    %3700 = vmatpush1.bf16.msra.mxu0 %v2961
    %3701 = vmatprep.subr.bf16.mxu0 %v3022
    %3702 = vmatpush2.bf16.msra.mxu0 %v3021
    %3703 = vmatprep.subr.bf16.mxu0 %v3018
    %3704 = vmatpush2.bf16.msra.mxu0 %v3017
    %3705 = vmatprep.subr.bf16.mxu0 %v3014
    %3706 = vmatpush2.bf16.msra.mxu0 %v3013
    %3707 = vmatprep.subr.bf16.mxu0 %v3010
    %3708 = vmatpush2.bf16.msra.mxu0 %v3009
    %3709 = vmatprep.subr.bf16.mxu0 %v3006
    %3710 = vmatpush2.bf16.msra.mxu0 %v3005
    %3711 = vmatprep.subr.bf16.mxu0 %v3002
    %3712 = vmatpush2.bf16.msra.mxu0 %v3001
    %3713 = vmatprep.subr.bf16.mxu0 %v2998
    %3714 = vmatpush2.bf16.msra.mxu0 %v2997
    %3715 = vmatprep.subr.bf16.mxu0 %v2994
    %3716 = vmatpush2.bf16.msra.mxu0 %v2993
    %3717 = vmatprep.mubr.bf16.mxu0 %v1132
    %3718 = vmatmul.mubr.bf16.gmra.mxu0 %v1131
    %v3719 = vpop.f32.mrf.mxu0
    %v3720 = vadd.f32 %v3667, %v3719
    %v3721 = vpop.f32.mrf.mxu0
    %v3722 = vadd.f32 %v3669, %v3721
    %v3723 = vpop.f32.mrf.mxu0
    %v3724 = vadd.f32 %v3671, %v3723
    %v3725 = vpop.f32.mrf.mxu0
    %v3726 = vadd.f32 %v3673, %v3725
    %3727 = vmatprep.mubr.bf16.mxu0 %v1144
    %3728 = vmatmul.mubr.bf16.gmra.mxu0 %v1143
    %v3729 = vpop.f32.mrf.mxu0
    %v3730 = vadd.f32 %v3677, %v3729
    %v3731 = vpop.f32.mrf.mxu0
    %v3732 = vadd.f32 %v3679, %v3731
    %v3733 = vpop.f32.mrf.mxu0
    %v3734 = vadd.f32 %v3681, %v3733
    %v3735 = vpop.f32.mrf.mxu0
    %v3736 = vadd.f32 %v3683, %v3735
    %3737 = vdwg.mxu0
    %3738 = vmatprep.subr.bf16.mxu0 %v3054
    %3739 = vmatpush1.bf16.msra.mxu0 %v3053
    %3740 = vmatprep.subr.bf16.mxu0 %v3050
    %3741 = vmatpush1.bf16.msra.mxu0 %v3049
    %3742 = vmatprep.subr.bf16.mxu0 %v3046
    %3743 = vmatpush1.bf16.msra.mxu0 %v3045
    %3744 = vmatprep.subr.bf16.mxu0 %v3042
    %3745 = vmatpush1.bf16.msra.mxu0 %v3041
    %3746 = vmatprep.subr.bf16.mxu0 %v3038
    %3747 = vmatpush1.bf16.msra.mxu0 %v3037
    %3748 = vmatprep.subr.bf16.mxu0 %v3034
    %3749 = vmatpush1.bf16.msra.mxu0 %v3033
    %3750 = vmatprep.subr.bf16.mxu0 %v3030
    %3751 = vmatpush1.bf16.msra.mxu0 %v3029
    %3752 = vmatprep.subr.bf16.mxu0 %v3026
    %3753 = vmatpush1.bf16.msra.mxu0 %v3025
    %3754 = vmatprep.subr.bf16.mxu0 %v3086
    %3755 = vmatpush2.bf16.msra.mxu0 %v3085
    %3756 = vmatprep.subr.bf16.mxu0 %v3082
    %3757 = vmatpush2.bf16.msra.mxu0 %v3081
    %3758 = vmatprep.subr.bf16.mxu0 %v3078
    %3759 = vmatpush2.bf16.msra.mxu0 %v3077
    %3760 = vmatprep.subr.bf16.mxu0 %v3074
    %3761 = vmatpush2.bf16.msra.mxu0 %v3073
    %3762 = vmatprep.subr.bf16.mxu0 %v3070
    %3763 = vmatpush2.bf16.msra.mxu0 %v3069
    %3764 = vmatprep.subr.bf16.mxu0 %v3066
    %3765 = vmatpush2.bf16.msra.mxu0 %v3065
    %3766 = vmatprep.subr.bf16.mxu0 %v3062
    %3767 = vmatpush2.bf16.msra.mxu0 %v3061
    %3768 = vmatprep.subr.bf16.mxu0 %v3058
    %3769 = vmatpush2.bf16.msra.mxu0 %v3057
    %3770 = vmatprep.mubr.bf16.mxu0 %v1134
    %3771 = vmatmul.mubr.bf16.gmra.mxu0 %v1133
    %v3772 = vpop.f32.mrf.mxu0
    %v3773 = vadd.f32 %v3720, %v3772
    %v3774 = vpop.f32.mrf.mxu0
    %v3775 = vadd.f32 %v3722, %v3774
    %v3776 = vpop.f32.mrf.mxu0
    %v3777 = vadd.f32 %v3724, %v3776
    %v3778 = vpop.f32.mrf.mxu0
    %v3779 = vadd.f32 %v3726, %v3778
    %3780 = vmatprep.mubr.bf16.mxu0 %v1146
    %3781 = vmatmul.mubr.bf16.gmra.mxu0 %v1145
    %v3782 = vpop.f32.mrf.mxu0
    %v3783 = vadd.f32 %v3730, %v3782
    %v3784 = vpop.f32.mrf.mxu0
    %v3785 = vadd.f32 %v3732, %v3784
    %v3786 = vpop.f32.mrf.mxu0
    %v3787 = vadd.f32 %v3734, %v3786
    %v3788 = vpop.f32.mrf.mxu0
    %v3789 = vadd.f32 %v3736, %v3788
    %3790 = vdwg.mxu0
    %3791 = vmatprep.subr.bf16.mxu0 %v2736
    %3792 = vmatpush1.bf16.msra.mxu0 %v2735
    %3793 = vmatprep.subr.bf16.mxu0 %v2732
    %3794 = vmatpush1.bf16.msra.mxu0 %v2731
    %3795 = vmatprep.subr.bf16.mxu0 %v2728
    %3796 = vmatpush1.bf16.msra.mxu0 %v2727
    %3797 = vmatprep.subr.bf16.mxu0 %v2724
    %3798 = vmatpush1.bf16.msra.mxu0 %v2723
    %3799 = vmatprep.subr.bf16.mxu0 %v2720
    %3800 = vmatpush1.bf16.msra.mxu0 %v2719
    %3801 = vmatprep.subr.bf16.mxu0 %v2716
    %3802 = vmatpush1.bf16.msra.mxu0 %v2715
    %3803 = vmatprep.subr.bf16.mxu0 %v2712
    %3804 = vmatpush1.bf16.msra.mxu0 %v2711
    %3805 = vmatprep.subr.bf16.mxu0 %v2708
    %3806 = vmatpush1.bf16.msra.mxu0 %v2707
    %3807 = vmatprep.subr.bf16.mxu0 %v2768
    %3808 = vmatpush2.bf16.msra.mxu0 %v2767
    %3809 = vmatprep.subr.bf16.mxu0 %v2764
    %3810 = vmatpush2.bf16.msra.mxu0 %v2763
    %3811 = vmatprep.subr.bf16.mxu0 %v2760
    %3812 = vmatpush2.bf16.msra.mxu0 %v2759
    %3813 = vmatprep.subr.bf16.mxu0 %v2756
    %3814 = vmatpush2.bf16.msra.mxu0 %v2755
    %3815 = vmatprep.subr.bf16.mxu0 %v2752
    %3816 = vmatpush2.bf16.msra.mxu0 %v2751
    %3817 = vmatprep.subr.bf16.mxu0 %v2748
    %3818 = vmatpush2.bf16.msra.mxu0 %v2747
    %3819 = vmatprep.subr.bf16.mxu0 %v2744
    %3820 = vmatpush2.bf16.msra.mxu0 %v2743
    %3821 = vmatprep.subr.bf16.mxu0 %v2740
    %3822 = vmatpush2.bf16.msra.mxu0 %v2739
    %3823 = vmatprep.mubr.bf16.mxu0 %v1124
    %3824 = vmatmul.mubr.bf16.gmra.mxu0 %v1123
    %v3825 = vpop.f32.mrf.mxu0
    %v3826 = vadd.f32 %v1544, %v3825
    %v3827 = vpop.f32.mrf.mxu0
    %v3828 = vadd.f32 %v1548, %v3827
    %v3829 = vpop.f32.mrf.mxu0
    %v3830 = vadd.f32 %v1544, %v3829
    %v3831 = vpop.f32.mrf.mxu0
    %v3832 = vadd.f32 %v1548, %v3831
    %3833 = vmatprep.mubr.bf16.mxu0 %v1136
    %3834 = vmatmul.mubr.bf16.gmra.mxu0 %v1135
    %v3835 = vpop.f32.mrf.mxu0
    %v3836 = vadd.f32 %v1544, %v3835
    %v3837 = vpop.f32.mrf.mxu0
    %v3838 = vadd.f32 %v1548, %v3837
    %v3839 = vpop.f32.mrf.mxu0
    %v3840 = vadd.f32 %v1544, %v3839
    %v3841 = vpop.f32.mrf.mxu0
    %v3842 = vadd.f32 %v1548, %v3841
    %3843 = vdwg.mxu0
    %3844 = vmatprep.subr.bf16.mxu0 %v2800
    %3845 = vmatpush1.bf16.msra.mxu0 %v2799
    %3846 = vmatprep.subr.bf16.mxu0 %v2796
    %3847 = vmatpush1.bf16.msra.mxu0 %v2795
    %3848 = vmatprep.subr.bf16.mxu0 %v2792
    %3849 = vmatpush1.bf16.msra.mxu0 %v2791
    %3850 = vmatprep.subr.bf16.mxu0 %v2788
    %3851 = vmatpush1.bf16.msra.mxu0 %v2787
    %3852 = vmatprep.subr.bf16.mxu0 %v2784
    %3853 = vmatpush1.bf16.msra.mxu0 %v2783
    %3854 = vmatprep.subr.bf16.mxu0 %v2780
    %3855 = vmatpush1.bf16.msra.mxu0 %v2779
    %3856 = vmatprep.subr.bf16.mxu0 %v2776
    %3857 = vmatpush1.bf16.msra.mxu0 %v2775
    %3858 = vmatprep.subr.bf16.mxu0 %v2772
    %3859 = vmatpush1.bf16.msra.mxu0 %v2771
    %3860 = vmatprep.subr.bf16.mxu0 %v2832
    %3861 = vmatpush2.bf16.msra.mxu0 %v2831
    %3862 = vmatprep.subr.bf16.mxu0 %v2828
    %3863 = vmatpush2.bf16.msra.mxu0 %v2827
    %3864 = vmatprep.subr.bf16.mxu0 %v2824
    %3865 = vmatpush2.bf16.msra.mxu0 %v2823
    %3866 = vmatprep.subr.bf16.mxu0 %v2820
    %3867 = vmatpush2.bf16.msra.mxu0 %v2819
    %3868 = vmatprep.subr.bf16.mxu0 %v2816
    %3869 = vmatpush2.bf16.msra.mxu0 %v2815
    %3870 = vmatprep.subr.bf16.mxu0 %v2812
    %3871 = vmatpush2.bf16.msra.mxu0 %v2811
    %3872 = vmatprep.subr.bf16.mxu0 %v2808
    %3873 = vmatpush2.bf16.msra.mxu0 %v2807
    %3874 = vmatprep.subr.bf16.mxu0 %v2804
    %3875 = vmatpush2.bf16.msra.mxu0 %v2803
    %3876 = vmatprep.mubr.bf16.mxu0 %v1126
    %3877 = vmatmul.mubr.bf16.gmra.mxu0 %v1125
    %v3878 = vpop.f32.mrf.mxu0
    %v3879 = vadd.f32 %v3826, %v3878
    %v3880 = vpop.f32.mrf.mxu0
    %v3881 = vadd.f32 %v3828, %v3880
    %v3882 = vpop.f32.mrf.mxu0
    %v3883 = vadd.f32 %v3830, %v3882
    %v3884 = vpop.f32.mrf.mxu0
    %v3885 = vadd.f32 %v3832, %v3884
    %3886 = vmatprep.mubr.bf16.mxu0 %v1138
    %3887 = vmatmul.mubr.bf16.gmra.mxu0 %v1137
    %v3888 = vpop.f32.mrf.mxu0
    %v3889 = vadd.f32 %v3836, %v3888
    %v3890 = vpop.f32.mrf.mxu0
    %v3891 = vadd.f32 %v3838, %v3890
    %v3892 = vpop.f32.mrf.mxu0
    %v3893 = vadd.f32 %v3840, %v3892
    %v3894 = vpop.f32.mrf.mxu0
    %v3895 = vadd.f32 %v3842, %v3894
    %3896 = vdwg.mxu0
    %3897 = vmatprep.subr.bf16.mxu0 %v2864
    %3898 = vmatpush1.bf16.msra.mxu0 %v2863
    %3899 = vmatprep.subr.bf16.mxu0 %v2860
    %3900 = vmatpush1.bf16.msra.mxu0 %v2859
    %3901 = vmatprep.subr.bf16.mxu0 %v2856
    %3902 = vmatpush1.bf16.msra.mxu0 %v2855
    %3903 = vmatprep.subr.bf16.mxu0 %v2852
    %3904 = vmatpush1.bf16.msra.mxu0 %v2851
    %3905 = vmatprep.subr.bf16.mxu0 %v2848
    %3906 = vmatpush1.bf16.msra.mxu0 %v2847
    %3907 = vmatprep.subr.bf16.mxu0 %v2844
    %3908 = vmatpush1.bf16.msra.mxu0 %v2843
    %3909 = vmatprep.subr.bf16.mxu0 %v2840
    %3910 = vmatpush1.bf16.msra.mxu0 %v2839
    %3911 = vmatprep.subr.bf16.mxu0 %v2836
    %3912 = vmatpush1.bf16.msra.mxu0 %v2835
    %3913 = vmatprep.subr.bf16.mxu0 %v2896
    %3914 = vmatpush2.bf16.msra.mxu0 %v2895
    %3915 = vmatprep.subr.bf16.mxu0 %v2892
    %3916 = vmatpush2.bf16.msra.mxu0 %v2891
    %3917 = vmatprep.subr.bf16.mxu0 %v2888
    %3918 = vmatpush2.bf16.msra.mxu0 %v2887
    %3919 = vmatprep.subr.bf16.mxu0 %v2884
    %3920 = vmatpush2.bf16.msra.mxu0 %v2883
    %3921 = vmatprep.subr.bf16.mxu0 %v2880
    %3922 = vmatpush2.bf16.msra.mxu0 %v2879
    %3923 = vmatprep.subr.bf16.mxu0 %v2876
    %3924 = vmatpush2.bf16.msra.mxu0 %v2875
    %3925 = vmatprep.subr.bf16.mxu0 %v2872
    %3926 = vmatpush2.bf16.msra.mxu0 %v2871
    %3927 = vmatprep.subr.bf16.mxu0 %v2868
    %3928 = vmatpush2.bf16.msra.mxu0 %v2867
    %3929 = vmatprep.mubr.bf16.mxu0 %v1128
    %3930 = vmatmul.mubr.bf16.gmra.mxu0 %v1127
    %v3931 = vpop.f32.mrf.mxu0
    %v3932 = vadd.f32 %v3879, %v3931
    %v3933 = vpop.f32.mrf.mxu0
    %v3934 = vadd.f32 %v3881, %v3933
    %v3935 = vpop.f32.mrf.mxu0
    %v3936 = vadd.f32 %v3883, %v3935
    %v3937 = vpop.f32.mrf.mxu0
    %v3938 = vadd.f32 %v3885, %v3937
    %3939 = vmatprep.mubr.bf16.mxu0 %v1140
    %3940 = vmatmul.mubr.bf16.gmra.mxu0 %v1139
    %v3941 = vpop.f32.mrf.mxu0
    %v3942 = vadd.f32 %v3889, %v3941
    %v3943 = vpop.f32.mrf.mxu0
    %v3944 = vadd.f32 %v3891, %v3943
    %v3945 = vpop.f32.mrf.mxu0
    %v3946 = vadd.f32 %v3893, %v3945
    %v3947 = vpop.f32.mrf.mxu0
    %v3948 = vadd.f32 %v3895, %v3947
    %3949 = vdwg.mxu0
    %3950 = vmatprep.subr.bf16.mxu0 %v2928
    %3951 = vmatpush1.bf16.msra.mxu0 %v2927
    %3952 = vmatprep.subr.bf16.mxu0 %v2924
    %3953 = vmatpush1.bf16.msra.mxu0 %v2923
    %3954 = vmatprep.subr.bf16.mxu0 %v2920
    %3955 = vmatpush1.bf16.msra.mxu0 %v2919
    %3956 = vmatprep.subr.bf16.mxu0 %v2916
    %3957 = vmatpush1.bf16.msra.mxu0 %v2915
    %3958 = vmatprep.subr.bf16.mxu0 %v2912
    %3959 = vmatpush1.bf16.msra.mxu0 %v2911
    %3960 = vmatprep.subr.bf16.mxu0 %v2908
    %3961 = vmatpush1.bf16.msra.mxu0 %v2907
    %3962 = vmatprep.subr.bf16.mxu0 %v2904
    %3963 = vmatpush1.bf16.msra.mxu0 %v2903
    %3964 = vmatprep.subr.bf16.mxu0 %v2900
    %3965 = vmatpush1.bf16.msra.mxu0 %v2899
    %3966 = vmatprep.subr.bf16.mxu0 %v2960
    %3967 = vmatpush2.bf16.msra.mxu0 %v2959
    %3968 = vmatprep.subr.bf16.mxu0 %v2956
    %3969 = vmatpush2.bf16.msra.mxu0 %v2955
    %3970 = vmatprep.subr.bf16.mxu0 %v2952
    %3971 = vmatpush2.bf16.msra.mxu0 %v2951
    %3972 = vmatprep.subr.bf16.mxu0 %v2948
    %3973 = vmatpush2.bf16.msra.mxu0 %v2947
    %3974 = vmatprep.subr.bf16.mxu0 %v2944
    %3975 = vmatpush2.bf16.msra.mxu0 %v2943
    %3976 = vmatprep.subr.bf16.mxu0 %v2940
    %3977 = vmatpush2.bf16.msra.mxu0 %v2939
    %3978 = vmatprep.subr.bf16.mxu0 %v2936
    %3979 = vmatpush2.bf16.msra.mxu0 %v2935
    %3980 = vmatprep.subr.bf16.mxu0 %v2932
    %3981 = vmatpush2.bf16.msra.mxu0 %v2931
    %3982 = vmatprep.mubr.bf16.mxu0 %v1130
    %3983 = vmatmul.mubr.bf16.gmra.mxu0 %v1129
    %v3984 = vpop.f32.mrf.mxu0
    %v3985 = vadd.f32 %v3932, %v3984
    %v3986 = vpop.f32.mrf.mxu0
    %v3987 = vadd.f32 %v3934, %v3986
    %v3988 = vpop.f32.mrf.mxu0
    %v3989 = vadd.f32 %v3936, %v3988
    %v3990 = vpop.f32.mrf.mxu0
    %v3991 = vadd.f32 %v3938, %v3990
    %3992 = vmatprep.mubr.bf16.mxu0 %v1142
    %3993 = vmatmul.mubr.bf16.gmra.mxu0 %v1141
    %v3994 = vpop.f32.mrf.mxu0
    %v3995 = vadd.f32 %v3942, %v3994
    %v3996 = vpop.f32.mrf.mxu0
    %v3997 = vadd.f32 %v3944, %v3996
    %v3998 = vpop.f32.mrf.mxu0
    %v3999 = vadd.f32 %v3946, %v3998
    %v4000 = vpop.f32.mrf.mxu0
    %v4001 = vadd.f32 %v3948, %v4000
    %4002 = vdwg.mxu0
    %4003 = vmatprep.subr.bf16.mxu0 %v2992
    %4004 = vmatpush1.bf16.msra.mxu0 %v2991
    %4005 = vmatprep.subr.bf16.mxu0 %v2988
    %4006 = vmatpush1.bf16.msra.mxu0 %v2987
    %4007 = vmatprep.subr.bf16.mxu0 %v2984
    %4008 = vmatpush1.bf16.msra.mxu0 %v2983
    %4009 = vmatprep.subr.bf16.mxu0 %v2980
    %4010 = vmatpush1.bf16.msra.mxu0 %v2979
    %4011 = vmatprep.subr.bf16.mxu0 %v2976
    %4012 = vmatpush1.bf16.msra.mxu0 %v2975
    %4013 = vmatprep.subr.bf16.mxu0 %v2972
    %4014 = vmatpush1.bf16.msra.mxu0 %v2971
    %4015 = vmatprep.subr.bf16.mxu0 %v2968
    %4016 = vmatpush1.bf16.msra.mxu0 %v2967
    %4017 = vmatprep.subr.bf16.mxu0 %v2964
    %4018 = vmatpush1.bf16.msra.mxu0 %v2963
    %4019 = vmatprep.subr.bf16.mxu0 %v3024
    %4020 = vmatpush2.bf16.msra.mxu0 %v3023
    %4021 = vmatprep.subr.bf16.mxu0 %v3020
    %4022 = vmatpush2.bf16.msra.mxu0 %v3019
    %4023 = vmatprep.subr.bf16.mxu0 %v3016
    %4024 = vmatpush2.bf16.msra.mxu0 %v3015
    %4025 = vmatprep.subr.bf16.mxu0 %v3012
    %4026 = vmatpush2.bf16.msra.mxu0 %v3011
    %4027 = vmatprep.subr.bf16.mxu0 %v3008
    %4028 = vmatpush2.bf16.msra.mxu0 %v3007
    %4029 = vmatprep.subr.bf16.mxu0 %v3004
    %4030 = vmatpush2.bf16.msra.mxu0 %v3003
    %4031 = vmatprep.subr.bf16.mxu0 %v3000
    %4032 = vmatpush2.bf16.msra.mxu0 %v2999
    %4033 = vmatprep.subr.bf16.mxu0 %v2996
    %4034 = vmatpush2.bf16.msra.mxu0 %v2995
    %4035 = vmatprep.mubr.bf16.mxu0 %v1132
    %4036 = vmatmul.mubr.bf16.gmra.mxu0 %v1131
    %v4037 = vpop.f32.mrf.mxu0
    %v4038 = vadd.f32 %v3985, %v4037
    %v4039 = vpop.f32.mrf.mxu0
    %v4040 = vadd.f32 %v3987, %v4039
    %v4041 = vpop.f32.mrf.mxu0
    %v4042 = vadd.f32 %v3989, %v4041
    %v4043 = vpop.f32.mrf.mxu0
    %v4044 = vadd.f32 %v3991, %v4043
    %4045 = vmatprep.mubr.bf16.mxu0 %v1144
    %4046 = vmatmul.mubr.bf16.gmra.mxu0 %v1143
    %v4047 = vpop.f32.mrf.mxu0
    %v4048 = vadd.f32 %v3995, %v4047
    %v4049 = vpop.f32.mrf.mxu0
    %v4050 = vadd.f32 %v3997, %v4049
    %v4051 = vpop.f32.mrf.mxu0
    %v4052 = vadd.f32 %v3999, %v4051
    %v4053 = vpop.f32.mrf.mxu0
    %v4054 = vadd.f32 %v4001, %v4053
    %4055 = vdwg.mxu0
    %4056 = vmatprep.subr.bf16.mxu0 %v3056
    %4057 = vmatpush1.bf16.msra.mxu0 %v3055
    %4058 = vmatprep.subr.bf16.mxu0 %v3052
    %4059 = vmatpush1.bf16.msra.mxu0 %v3051
    %4060 = vmatprep.subr.bf16.mxu0 %v3048
    %4061 = vmatpush1.bf16.msra.mxu0 %v3047
    %4062 = vmatprep.subr.bf16.mxu0 %v3044
    %4063 = vmatpush1.bf16.msra.mxu0 %v3043
    %4064 = vmatprep.subr.bf16.mxu0 %v3040
    %4065 = vmatpush1.bf16.msra.mxu0 %v3039
    %4066 = vmatprep.subr.bf16.mxu0 %v3036
    %4067 = vmatpush1.bf16.msra.mxu0 %v3035
    %4068 = vmatprep.subr.bf16.mxu0 %v3032
    %4069 = vmatpush1.bf16.msra.mxu0 %v3031
    %4070 = vmatprep.subr.bf16.mxu0 %v3028
    %4071 = vmatpush1.bf16.msra.mxu0 %v3027
    %4072 = vmatprep.subr.bf16.mxu0 %v3088
    %4073 = vmatpush2.bf16.msra.mxu0 %v3087
    %4074 = vmatprep.subr.bf16.mxu0 %v3084
    %4075 = vmatpush2.bf16.msra.mxu0 %v3083
    %4076 = vmatprep.subr.bf16.mxu0 %v3080
    %4077 = vmatpush2.bf16.msra.mxu0 %v3079
    %4078 = vmatprep.subr.bf16.mxu0 %v3076
    %4079 = vmatpush2.bf16.msra.mxu0 %v3075
    %4080 = vmatprep.subr.bf16.mxu0 %v3072
    %4081 = vmatpush2.bf16.msra.mxu0 %v3071
    %4082 = vmatprep.subr.bf16.mxu0 %v3068
    %4083 = vmatpush2.bf16.msra.mxu0 %v3067
    %4084 = vmatprep.subr.bf16.mxu0 %v3064
    %4085 = vmatpush2.bf16.msra.mxu0 %v3063
    %4086 = vmatprep.subr.bf16.mxu0 %v3060
    %4087 = vmatpush2.bf16.msra.mxu0 %v3059
    %4088 = vmatprep.mubr.bf16.mxu0 %v1134
    %4089 = vmatmul.mubr.bf16.gmra.mxu0 %v1133
    %v4090 = vpop.f32.mrf.mxu0
    %v4091 = vadd.f32 %v4038, %v4090
    %v4092 = vpop.f32.mrf.mxu0
    %v4093 = vadd.f32 %v4040, %v4092
    %v4094 = vpop.f32.mrf.mxu0
    %v4095 = vadd.f32 %v4042, %v4094
    %v4096 = vpop.f32.mrf.mxu0
    %v4097 = vadd.f32 %v4044, %v4096
    %4098 = vmatprep.mubr.bf16.mxu0 %v1146
    %4099 = vmatmul.mubr.bf16.gmra.mxu0 %v1145
    %v4100 = vpop.f32.mrf.mxu0
    %v4101 = vadd.f32 %v4048, %v4100
    %v4102 = vpop.f32.mrf.mxu0
    %v4103 = vadd.f32 %v4050, %v4102
    %v4104 = vpop.f32.mrf.mxu0
    %v4105 = vadd.f32 %v4052, %v4104
    %v4106 = vpop.f32.mrf.mxu0
    %v4107 = vadd.f32 %v4054, %v4106
    %4108 = vdwg.mxu0
    %v4109 = vmax.f32 %v3773, 0.0
    %v4110 = vmax.f32 %v3775, 0.0
    %v4111 = vmax.f32 %v4091, 0.0
    %v4112 = vmax.f32 %v4093, 0.0
    %v4113 = vmax.f32 %v3777, 0.0
    %v4114 = vmax.f32 %v3779, 0.0
    %v4115 = vmax.f32 %v4095, 0.0
    %v4116 = vmax.f32 %v4097, 0.0
    %v4117 = vmax.f32 %v3783, 0.0
    %v4118 = vmax.f32 %v3785, 0.0
    %v4119 = vmax.f32 %v4101, 0.0
    %v4120 = vmax.f32 %v4103, 0.0
    %v4121 = vmax.f32 %v3787, 0.0
    %v4122 = vmax.f32 %v3789, 0.0
    %v4123 = vmax.f32 %v4105, 0.0
    %v4124 = vmax.f32 %v4107, 0.0
    %4125 = vst [vmem:[#allocation2 + $0x20] sm:$0xff] %v4109
    %4126 = vst [vmem:[#allocation2 + $0x28] sm:$0xff] %v4110
    %4127 = vst [vmem:[#allocation2 + $0x30] sm:$0xff] %v4111
    %4128 = vst [vmem:[#allocation2 + $0x38] sm:$0xff] %v4112
    %4129 = vst [vmem:[#allocation2 + $0x40] sm:$0xff] %v4113
    %4130 = vst [vmem:[#allocation2 + $0x48] sm:$0xff] %v4114
    %4131 = vst [vmem:[#allocation2 + $0x50] sm:$0xff] %v4115
    %4132 = vst [vmem:[#allocation2 + $0x58] sm:$0xff] %v4116
    %4133 = vst [vmem:[#allocation2 + $0xa0] sm:$0xff] %v4117
    %4134 = vst [vmem:[#allocation2 + $0xa8] sm:$0xff] %v4118
    %4135 = vst [vmem:[#allocation2 + $0xb0] sm:$0xff] %v4119
    %4136 = vst [vmem:[#allocation2 + $0xb8] sm:$0xff] %v4120
    %4137 = vst [vmem:[#allocation2 + $0xc0] sm:$0xff] %v4121
    %4138 = vst [vmem:[#allocation2 + $0xc8] sm:$0xff] %v4122
    %4139 = vst [vmem:[#allocation2 + $0xd0] sm:$0xff] %v4123
    %4140 = vst [vmem:[#allocation2 + $0xd8] sm:$0xff] %v4124
    %v4141 = vld [vmem:[#allocation2] sm:$0x80]
    %v4142 = vld [vmem:[#allocation2 + $0x8] sm:$0x80]
    %v4143 = vld [vmem:[#allocation2 + $0x10] sm:$0x80]
    %v4144 = vld [vmem:[#allocation2 + $0x18] sm:$0x80]
    %v4145 = vld [vmem:[#allocation2 + $0x20] sm:$0xff]
    %v4146 = vld [vmem:[#allocation2 + $0x28] sm:$0xff]
    %v4147 = vld [vmem:[#allocation2 + $0x30] sm:$0xff]
    %v4148 = vld [vmem:[#allocation2 + $0x38] sm:$0xff]
    %v4149 = vld [vmem:[#allocation2 + $0x40] sm:$0x7f]
    %v4150 = vld [vmem:[#allocation2 + $0x48] sm:$0x7f]
    %v4151 = vld [vmem:[#allocation2 + $0x50] sm:$0x7f]
    %v4152 = vld [vmem:[#allocation2 + $0x58] sm:$0x7f]
    %v4153 = vld [vmem:[#allocation2 + $0x80] sm:$0x80]
    %v4154 = vld [vmem:[#allocation2 + $0x88] sm:$0x80]
    %v4155 = vld [vmem:[#allocation2 + $0x90] sm:$0x80]
    %v4156 = vld [vmem:[#allocation2 + $0x98] sm:$0x80]
    %v4157 = vld [vmem:[#allocation2 + $0xa0] sm:$0xff]
    %v4158 = vld [vmem:[#allocation2 + $0xa8] sm:$0xff]
    %v4159 = vld [vmem:[#allocation2 + $0xb0] sm:$0xff]
    %v4160 = vld [vmem:[#allocation2 + $0xb8] sm:$0xff]
    %v4161 = vld [vmem:[#allocation2 + $0xc0] sm:$0x7f]
    %v4162 = vld [vmem:[#allocation2 + $0xc8] sm:$0x7f]
    %v4163 = vld [vmem:[#allocation2 + $0xd0] sm:$0x7f]
    %v4164 = vld [vmem:[#allocation2 + $0xd8] sm:$0x7f]
    %v4165 = vld [vmem:[#allocation2 + $0x20] sm:$0xfe]
    %v4166 = vld [vmem:[#allocation2 + $0x28] sm:$0xfe]
    %v4167 = vld [vmem:[#allocation2 + $0x30] sm:$0xfe]
    %v4168 = vld [vmem:[#allocation2 + $0x38] sm:$0xfe]
    %v4169 = vld [vmem:[#allocation2 + $0x40] sm:$0xff]
    %v4170 = vld [vmem:[#allocation2 + $0x48] sm:$0xff]
    %v4171 = vld [vmem:[#allocation2 + $0x50] sm:$0xff]
    %v4172 = vld [vmem:[#allocation2 + $0x58] sm:$0xff]
    %v4173 = vld [vmem:[#allocation2 + $0x60] sm:$0x1]
    %v4174 = vld [vmem:[#allocation2 + $0x68] sm:$0x1]
    %v4175 = vld [vmem:[#allocation2 + $0x70] sm:$0x1]
    %v4176 = vld [vmem:[#allocation2 + $0x78] sm:$0x1]
    %v4177 = vld [vmem:[#allocation2 + $0xa0] sm:$0xfe]
    %v4178 = vld [vmem:[#allocation2 + $0xa8] sm:$0xfe]
    %v4179 = vld [vmem:[#allocation2 + $0xb0] sm:$0xfe]
    %v4180 = vld [vmem:[#allocation2 + $0xb8] sm:$0xfe]
    %v4181 = vld [vmem:[#allocation2 + $0xc0] sm:$0xff]
    %v4182 = vld [vmem:[#allocation2 + $0xc8] sm:$0xff]
    %v4183 = vld [vmem:[#allocation2 + $0xd0] sm:$0xff]
    %v4184 = vld [vmem:[#allocation2 + $0xd8] sm:$0xff]
    %v4185 = vld [vmem:[#allocation2 + $0xe0] sm:$0x1]
    %v4186 = vld [vmem:[#allocation2 + $0xe8] sm:$0x1]
    %v4187 = vld [vmem:[#allocation2 + $0xf0] sm:$0x1]
    %v4188 = vld [vmem:[#allocation2 + $0xf8] sm:$0x1]
    %v4205 = vrot.slane %v4109, 1
    %v4206 = vrot.slane %v4110, 1
    %v4207 = vrot.slane %v4111, 1
    %v4208 = vrot.slane %v4112, 1
    %v4209 = vrot.slane %v4113, 1
    %v4210 = vsel %vm840, %v4205, %v4209
    %v4211 = vrot.slane %v4114, 1
    %v4212 = vsel %vm840, %v4206, %v4211
    %v4213 = vrot.slane %v4115, 1
    %v4214 = vsel %vm840, %v4207, %v4213
    %v4215 = vrot.slane %v4116, 1
    %v4216 = vsel %vm840, %v4208, %v4215
    %v4217 = vrot.slane %v4117, 1
    %v4218 = vrot.slane %v4118, 1
    %v4219 = vrot.slane %v4119, 1
    %v4220 = vrot.slane %v4120, 1
    %v4221 = vrot.slane %v4121, 1
    %v4222 = vsel %vm840, %v4217, %v4221
    %v4223 = vrot.slane %v4122, 1
    %v4224 = vsel %vm840, %v4218, %v4223
    %v4225 = vrot.slane %v4123, 1
    %v4226 = vsel %vm840, %v4219, %v4225
    %v4227 = vrot.slane %v4124, 1
    %v4228 = vsel %vm840, %v4220, %v4227
    %v4253 = vrot.slane %v4165, 2
    %v4254 = vrot.slane %v4166, 2
    %v4255 = vrot.slane %v4167, 2
    %v4256 = vrot.slane %v4168, 2
    %v4257 = vrot.slane %v4169, 2
    %v4258 = vsel %vm889, %v4253, %v4257
    %v4259 = vrot.slane %v4170, 2
    %v4260 = vsel %vm889, %v4254, %v4259
    %v4261 = vrot.slane %v4171, 2
    %v4262 = vsel %vm889, %v4255, %v4261
    %v4263 = vrot.slane %v4172, 2
    %v4264 = vsel %vm889, %v4256, %v4263
    %v4265 = vrot.slane %v4173, 2
    %v4266 = vsel %vm889, %v4257, %v4265
    %v4267 = vrot.slane %v4174, 2
    %v4268 = vsel %vm889, %v4259, %v4267
    %v4269 = vrot.slane %v4175, 2
    %v4270 = vsel %vm889, %v4261, %v4269
    %v4271 = vrot.slane %v4176, 2
    %v4272 = vsel %vm889, %v4263, %v4271
    %v4273 = vrot.slane %v4177, 2
    %v4274 = vrot.slane %v4178, 2
    %v4275 = vrot.slane %v4179, 2
    %v4276 = vrot.slane %v4180, 2
    %v4277 = vrot.slane %v4181, 2
    %v4278 = vsel %vm889, %v4273, %v4277
    %v4279 = vrot.slane %v4182, 2
    %v4280 = vsel %vm889, %v4274, %v4279
    %v4281 = vrot.slane %v4183, 2
    %v4282 = vsel %vm889, %v4275, %v4281
    %v4283 = vrot.slane %v4184, 2
    %v4284 = vsel %vm889, %v4276, %v4283
    %v4285 = vrot.slane %v4185, 2
    %v4286 = vsel %vm889, %v4277, %v4285
    %v4287 = vrot.slane %v4186, 2
    %v4288 = vsel %vm889, %v4279, %v4287
    %v4289 = vrot.slane %v4187, 2
    %v4290 = vsel %vm889, %v4281, %v4289
    %v4291 = vrot.slane %v4188, 2
    %v4292 = vsel %vm889, %v4283, %v4291
    %v4317 = vrot.slane %v4141, 7
    %v4318 = vrot.slane %v4145, 7
    %v4319 = vsel %vm954, %v4317, %v4318
    %v4320 = vrot.slane %v4142, 7
    %v4321 = vrot.slane %v4146, 7
    %v4322 = vsel %vm954, %v4320, %v4321
    %v4323 = vrot.slane %v4143, 7
    %v4324 = vrot.slane %v4147, 7
    %v4325 = vsel %vm954, %v4323, %v4324
    %v4326 = vrot.slane %v4144, 7
    %v4327 = vrot.slane %v4148, 7
    %v4328 = vsel %vm954, %v4326, %v4327
    %v4329 = vrot.slane %v4205, 7
    %v4330 = vrot.slane %v4210, 7
    %v4331 = vsel %vm954, %v4329, %v4330
    %v4332 = vrot.slane %v4206, 7
    %v4333 = vrot.slane %v4212, 7
    %v4334 = vsel %vm954, %v4332, %v4333
    %v4335 = vrot.slane %v4207, 7
    %v4336 = vrot.slane %v4214, 7
    %v4337 = vsel %vm954, %v4335, %v4336
    %v4338 = vrot.slane %v4208, 7
    %v4339 = vrot.slane %v4216, 7
    %v4340 = vsel %vm954, %v4338, %v4339
    %v4341 = vrot.slane %v4253, 7
    %v4342 = vrot.slane %v4258, 7
    %v4343 = vsel %vm954, %v4341, %v4342
    %v4344 = vrot.slane %v4254, 7
    %v4345 = vrot.slane %v4260, 7
    %v4346 = vsel %vm954, %v4344, %v4345
    %v4347 = vrot.slane %v4255, 7
    %v4348 = vrot.slane %v4262, 7
    %v4349 = vsel %vm954, %v4347, %v4348
    %v4350 = vrot.slane %v4256, 7
    %v4351 = vrot.slane %v4264, 7
    %v4352 = vsel %vm954, %v4350, %v4351
    %v4353 = vrot.slane %v4149, 7
    %v4354 = vsel %vm954, %v4318, %v4353
    %v4355 = vrot.slane %v4150, 7
    %v4356 = vsel %vm954, %v4321, %v4355
    %v4357 = vrot.slane %v4151, 7
    %v4358 = vsel %vm954, %v4324, %v4357
    %v4359 = vrot.slane %v4152, 7
    %v4360 = vsel %vm954, %v4327, %v4359
    %v4361 = vrot.slane %v4209, 7
    %v4362 = vsel %vm954, %v4330, %v4361
    %v4363 = vrot.slane %v4211, 7
    %v4364 = vsel %vm954, %v4333, %v4363
    %v4365 = vrot.slane %v4213, 7
    %v4366 = vsel %vm954, %v4336, %v4365
    %v4367 = vrot.slane %v4215, 7
    %v4368 = vsel %vm954, %v4339, %v4367
    %v4369 = vrot.slane %v4266, 7
    %v4370 = vsel %vm954, %v4342, %v4369
    %v4371 = vrot.slane %v4268, 7
    %v4372 = vsel %vm954, %v4345, %v4371
    %v4373 = vrot.slane %v4270, 7
    %v4374 = vsel %vm954, %v4348, %v4373
    %v4375 = vrot.slane %v4272, 7
    %v4376 = vsel %vm954, %v4351, %v4375
    %v4377 = vrot.slane %v4153, 7
    %v4378 = vrot.slane %v4157, 7
    %v4379 = vsel %vm954, %v4377, %v4378
    %v4380 = vrot.slane %v4154, 7
    %v4381 = vrot.slane %v4158, 7
    %v4382 = vsel %vm954, %v4380, %v4381
    %v4383 = vrot.slane %v4155, 7
    %v4384 = vrot.slane %v4159, 7
    %v4385 = vsel %vm954, %v4383, %v4384
    %v4386 = vrot.slane %v4156, 7
    %v4387 = vrot.slane %v4160, 7
    %v4388 = vsel %vm954, %v4386, %v4387
    %v4389 = vrot.slane %v4217, 7
    %v4390 = vrot.slane %v4222, 7
    %v4391 = vsel %vm954, %v4389, %v4390
    %v4392 = vrot.slane %v4218, 7
    %v4393 = vrot.slane %v4224, 7
    %v4394 = vsel %vm954, %v4392, %v4393
    %v4395 = vrot.slane %v4219, 7
    %v4396 = vrot.slane %v4226, 7
    %v4397 = vsel %vm954, %v4395, %v4396
    %v4398 = vrot.slane %v4220, 7
    %v4399 = vrot.slane %v4228, 7
    %v4400 = vsel %vm954, %v4398, %v4399
    %v4401 = vrot.slane %v4273, 7
    %v4402 = vrot.slane %v4278, 7
    %v4403 = vsel %vm954, %v4401, %v4402
    %v4404 = vrot.slane %v4274, 7
    %v4405 = vrot.slane %v4280, 7
    %v4406 = vsel %vm954, %v4404, %v4405
    %v4407 = vrot.slane %v4275, 7
    %v4408 = vrot.slane %v4282, 7
    %v4409 = vsel %vm954, %v4407, %v4408
    %v4410 = vrot.slane %v4276, 7
    %v4411 = vrot.slane %v4284, 7
    %v4412 = vsel %vm954, %v4410, %v4411
    %v4413 = vrot.slane %v4161, 7
    %v4414 = vsel %vm954, %v4378, %v4413
    %v4415 = vrot.slane %v4162, 7
    %v4416 = vsel %vm954, %v4381, %v4415
    %v4417 = vrot.slane %v4163, 7
    %v4418 = vsel %vm954, %v4384, %v4417
    %v4419 = vrot.slane %v4164, 7
    %v4420 = vsel %vm954, %v4387, %v4419
    %v4421 = vrot.slane %v4221, 7
    %v4422 = vsel %vm954, %v4390, %v4421
    %v4423 = vrot.slane %v4223, 7
    %v4424 = vsel %vm954, %v4393, %v4423
    %v4425 = vrot.slane %v4225, 7
    %v4426 = vsel %vm954, %v4396, %v4425
    %v4427 = vrot.slane %v4227, 7
    %v4428 = vsel %vm954, %v4399, %v4427
    %v4429 = vrot.slane %v4286, 7
    %v4430 = vsel %vm954, %v4402, %v4429
    %v4431 = vrot.slane %v4288, 7
    %v4432 = vsel %vm954, %v4405, %v4431
    %v4433 = vrot.slane %v4290, 7
    %v4434 = vsel %vm954, %v4408, %v4433
    %v4435 = vrot.slane %v4292, 7
    %v4436 = vsel %vm954, %v4411, %v4435
    %v4485 = vpack.c.bf16 %v4354, %v4319
    %v4486 = vpack.c.bf16 %v4356, %v4322
    %v4487 = vpack.c.bf16 %v4358, %v4325
    %v4488 = vpack.c.bf16 %v4360, %v4328
    %v4489 = vpack.c.bf16 %v4362, %v4331
    %v4490 = vpack.c.bf16 %v4364, %v4334
    %v4491 = vpack.c.bf16 %v4366, %v4337
    %v4492 = vpack.c.bf16 %v4368, %v4340
    %v4493 = vpack.c.bf16 %v4370, %v4343
    %v4494 = vpack.c.bf16 %v4372, %v4346
    %v4495 = vpack.c.bf16 %v4374, %v4349
    %v4496 = vpack.c.bf16 %v4376, %v4352
    %v4497 = vpack.c.bf16 %v4414, %v4379
    %v4498 = vpack.c.bf16 %v4416, %v4382
    %v4499 = vpack.c.bf16 %v4418, %v4385
    %v4500 = vpack.c.bf16 %v4420, %v4388
    %v4501 = vpack.c.bf16 %v4422, %v4391
    %v4502 = vpack.c.bf16 %v4424, %v4394
    %v4503 = vpack.c.bf16 %v4426, %v4397
    %v4504 = vpack.c.bf16 %v4428, %v4400
    %v4505 = vpack.c.bf16 %v4430, %v4403
    %v4506 = vpack.c.bf16 %v4432, %v4406
    %v4507 = vpack.c.bf16 %v4434, %v4409
    %v4508 = vpack.c.bf16 %v4436, %v4412
    %v4509 = vld [vmem:[#allocation3] sm:$0xff]
    %v4510 = vld [vmem:[#allocation3 + $0x8] sm:$0xff]
    %v4511 = vld [vmem:[#allocation3 + $0x10] sm:$0xff]
    %v4512 = vld [vmem:[#allocation3 + $0x18] sm:$0xff]
    %v4513 = vld [vmem:[#allocation3 + $0x20] sm:$0xff]
    %v4514 = vld [vmem:[#allocation3 + $0x28] sm:$0xff]
    %v4515 = vld [vmem:[#allocation3 + $0x30] sm:$0xff]
    %v4516 = vld [vmem:[#allocation3 + $0x38] sm:$0xff]
    %v4517 = vld [vmem:[#allocation3 + $0x40] sm:$0xff]
    %v4518 = vld [vmem:[#allocation3 + $0x48] sm:$0xff]
    %v4519 = vld [vmem:[#allocation3 + $0x50] sm:$0xff]
    %v4520 = vld [vmem:[#allocation3 + $0x58] sm:$0xff]
    %v4521 = vld [vmem:[#allocation3 + $0x60] sm:$0xff]
    %v4522 = vld [vmem:[#allocation3 + $0x68] sm:$0xff]
    %v4523 = vld [vmem:[#allocation3 + $0x70] sm:$0xff]
    %v4524 = vld [vmem:[#allocation3 + $0x78] sm:$0xff]
    %v4525 = vld [vmem:[#allocation3 + $0x80] sm:$0xff]
    %v4526 = vld [vmem:[#allocation3 + $0x88] sm:$0xff]
    %v4527 = vld [vmem:[#allocation3 + $0x90] sm:$0xff]
    %v4528 = vld [vmem:[#allocation3 + $0x98] sm:$0xff]
    %v4529 = vld [vmem:[#allocation3 + $0xa0] sm:$0xff]
    %v4530 = vld [vmem:[#allocation3 + $0xa8] sm:$0xff]
    %v4531 = vld [vmem:[#allocation3 + $0xb0] sm:$0xff]
    %v4532 = vld [vmem:[#allocation3 + $0xb8] sm:$0xff]
    %v4533 = vld [vmem:[#allocation3 + $0xc0] sm:$0xff]
    %v4534 = vld [vmem:[#allocation3 + $0xc8] sm:$0xff]
    %v4535 = vld [vmem:[#allocation3 + $0xd0] sm:$0xff]
    %v4536 = vld [vmem:[#allocation3 + $0xd8] sm:$0xff]
    %v4537 = vld [vmem:[#allocation3 + $0xe0] sm:$0xff]
    %v4538 = vld [vmem:[#allocation3 + $0xe8] sm:$0xff]
    %v4539 = vld [vmem:[#allocation3 + $0xf0] sm:$0xff]
    %v4540 = vld [vmem:[#allocation3 + $0xf8] sm:$0xff]
    %v4541 = vld [vmem:[#allocation3 + $0x100] sm:$0xff]
    %v4542 = vld [vmem:[#allocation3 + $0x108] sm:$0xff]
    %v4543 = vld [vmem:[#allocation3 + $0x110] sm:$0xff]
    %v4544 = vld [vmem:[#allocation3 + $0x118] sm:$0xff]
    %v4545 = vld [vmem:[#allocation3 + $0x120] sm:$0xff]
    %v4546 = vld [vmem:[#allocation3 + $0x128] sm:$0xff]
    %v4547 = vld [vmem:[#allocation3 + $0x130] sm:$0xff]
    %v4548 = vld [vmem:[#allocation3 + $0x138] sm:$0xff]
    %v4549 = vld [vmem:[#allocation3 + $0x140] sm:$0xff]
    %v4550 = vld [vmem:[#allocation3 + $0x148] sm:$0xff]
    %v4551 = vld [vmem:[#allocation3 + $0x150] sm:$0xff]
    %v4552 = vld [vmem:[#allocation3 + $0x158] sm:$0xff]
    %v4553 = vld [vmem:[#allocation3 + $0x160] sm:$0xff]
    %v4554 = vld [vmem:[#allocation3 + $0x168] sm:$0xff]
    %v4555 = vld [vmem:[#allocation3 + $0x170] sm:$0xff]
    %v4556 = vld [vmem:[#allocation3 + $0x178] sm:$0xff]
    %v4557 = vld [vmem:[#allocation3 + $0x180] sm:$0xff]
    %v4558 = vld [vmem:[#allocation3 + $0x188] sm:$0xff]
    %v4559 = vld [vmem:[#allocation3 + $0x190] sm:$0xff]
    %v4560 = vld [vmem:[#allocation3 + $0x198] sm:$0xff]
    %v4561 = vld [vmem:[#allocation3 + $0x1a0] sm:$0xff]
    %v4562 = vld [vmem:[#allocation3 + $0x1a8] sm:$0xff]
    %v4563 = vld [vmem:[#allocation3 + $0x1b0] sm:$0xff]
    %v4564 = vld [vmem:[#allocation3 + $0x1b8] sm:$0xff]
    %v4565 = vld [vmem:[#allocation3 + $0x1c0] sm:$0xff]
    %v4566 = vld [vmem:[#allocation3 + $0x1c8] sm:$0xff]
    %v4567 = vld [vmem:[#allocation3 + $0x1d0] sm:$0xff]
    %v4568 = vld [vmem:[#allocation3 + $0x1d8] sm:$0xff]
    %v4569 = vld [vmem:[#allocation3 + $0x1e0] sm:$0xff]
    %v4570 = vld [vmem:[#allocation3 + $0x1e8] sm:$0xff]
    %v4571 = vld [vmem:[#allocation3 + $0x1f0] sm:$0xff]
    %v4572 = vld [vmem:[#allocation3 + $0x1f8] sm:$0xff]
    %v4573 = vld [vmem:[#allocation3 + $0x200] sm:$0xff]
    %v4574 = vld [vmem:[#allocation3 + $0x208] sm:$0xff]
    %v4575 = vld [vmem:[#allocation3 + $0x210] sm:$0xff]
    %v4576 = vld [vmem:[#allocation3 + $0x218] sm:$0xff]
    %v4577 = vld [vmem:[#allocation3 + $0x220] sm:$0xff]
    %v4578 = vld [vmem:[#allocation3 + $0x228] sm:$0xff]
    %v4579 = vld [vmem:[#allocation3 + $0x230] sm:$0xff]
    %v4580 = vld [vmem:[#allocation3 + $0x238] sm:$0xff]
    %v4581 = vld [vmem:[#allocation3 + $0x240] sm:$0xff]
    %v4582 = vld [vmem:[#allocation3 + $0x248] sm:$0xff]
    %v4583 = vld [vmem:[#allocation3 + $0x250] sm:$0xff]
    %v4584 = vld [vmem:[#allocation3 + $0x258] sm:$0xff]
    %v4585 = vld [vmem:[#allocation3 + $0x260] sm:$0xff]
    %v4586 = vld [vmem:[#allocation3 + $0x268] sm:$0xff]
    %v4587 = vld [vmem:[#allocation3 + $0x270] sm:$0xff]
    %v4588 = vld [vmem:[#allocation3 + $0x278] sm:$0xff]
    %v4589 = vld [vmem:[#allocation3 + $0x280] sm:$0xff]
    %v4590 = vld [vmem:[#allocation3 + $0x288] sm:$0xff]
    %v4591 = vld [vmem:[#allocation3 + $0x290] sm:$0xff]
    %v4592 = vld [vmem:[#allocation3 + $0x298] sm:$0xff]
    %v4593 = vld [vmem:[#allocation3 + $0x2a0] sm:$0xff]
    %v4594 = vld [vmem:[#allocation3 + $0x2a8] sm:$0xff]
    %v4595 = vld [vmem:[#allocation3 + $0x2b0] sm:$0xff]
    %v4596 = vld [vmem:[#allocation3 + $0x2b8] sm:$0xff]
    %v4597 = vld [vmem:[#allocation3 + $0x2c0] sm:$0xff]
    %v4598 = vld [vmem:[#allocation3 + $0x2c8] sm:$0xff]
    %v4599 = vld [vmem:[#allocation3 + $0x2d0] sm:$0xff]
    %v4600 = vld [vmem:[#allocation3 + $0x2d8] sm:$0xff]
    %v4601 = vld [vmem:[#allocation3 + $0x2e0] sm:$0xff]
    %v4602 = vld [vmem:[#allocation3 + $0x2e8] sm:$0xff]
    %v4603 = vld [vmem:[#allocation3 + $0x2f0] sm:$0xff]
    %v4604 = vld [vmem:[#allocation3 + $0x2f8] sm:$0xff]
    %v4605 = vld [vmem:[#allocation3 + $0x300] sm:$0xff]
    %v4606 = vld [vmem:[#allocation3 + $0x308] sm:$0xff]
    %v4607 = vld [vmem:[#allocation3 + $0x310] sm:$0xff]
    %v4608 = vld [vmem:[#allocation3 + $0x318] sm:$0xff]
    %v4609 = vld [vmem:[#allocation3 + $0x320] sm:$0xff]
    %v4610 = vld [vmem:[#allocation3 + $0x328] sm:$0xff]
    %v4611 = vld [vmem:[#allocation3 + $0x330] sm:$0xff]
    %v4612 = vld [vmem:[#allocation3 + $0x338] sm:$0xff]
    %v4613 = vld [vmem:[#allocation3 + $0x340] sm:$0xff]
    %v4614 = vld [vmem:[#allocation3 + $0x348] sm:$0xff]
    %v4615 = vld [vmem:[#allocation3 + $0x350] sm:$0xff]
    %v4616 = vld [vmem:[#allocation3 + $0x358] sm:$0xff]
    %v4617 = vld [vmem:[#allocation3 + $0x360] sm:$0xff]
    %v4618 = vld [vmem:[#allocation3 + $0x368] sm:$0xff]
    %v4619 = vld [vmem:[#allocation3 + $0x370] sm:$0xff]
    %v4620 = vld [vmem:[#allocation3 + $0x378] sm:$0xff]
    %v4621 = vld [vmem:[#allocation3 + $0x380] sm:$0xff]
    %v4622 = vld [vmem:[#allocation3 + $0x388] sm:$0xff]
    %v4623 = vld [vmem:[#allocation3 + $0x390] sm:$0xff]
    %v4624 = vld [vmem:[#allocation3 + $0x398] sm:$0xff]
    %v4625 = vld [vmem:[#allocation3 + $0x3a0] sm:$0xff]
    %v4626 = vld [vmem:[#allocation3 + $0x3a8] sm:$0xff]
    %v4627 = vld [vmem:[#allocation3 + $0x3b0] sm:$0xff]
    %v4628 = vld [vmem:[#allocation3 + $0x3b8] sm:$0xff]
    %v4629 = vld [vmem:[#allocation3 + $0x3c0] sm:$0xff]
    %v4630 = vld [vmem:[#allocation3 + $0x3c8] sm:$0xff]
    %v4631 = vld [vmem:[#allocation3 + $0x3d0] sm:$0xff]
    %v4632 = vld [vmem:[#allocation3 + $0x3d8] sm:$0xff]
    %v4633 = vld [vmem:[#allocation3 + $0x3e0] sm:$0xff]
    %v4634 = vld [vmem:[#allocation3 + $0x3e8] sm:$0xff]
    %v4635 = vld [vmem:[#allocation3 + $0x3f0] sm:$0xff]
    %v4636 = vld [vmem:[#allocation3 + $0x3f8] sm:$0xff]
    %v4637 = vld [vmem:[#allocation3 + $0x400] sm:$0xff]
    %v4638 = vld [vmem:[#allocation3 + $0x408] sm:$0xff]
    %v4639 = vld [vmem:[#allocation3 + $0x410] sm:$0xff]
    %v4640 = vld [vmem:[#allocation3 + $0x418] sm:$0xff]
    %v4641 = vld [vmem:[#allocation3 + $0x420] sm:$0xff]
    %v4642 = vld [vmem:[#allocation3 + $0x428] sm:$0xff]
    %v4643 = vld [vmem:[#allocation3 + $0x430] sm:$0xff]
    %v4644 = vld [vmem:[#allocation3 + $0x438] sm:$0xff]
    %v4645 = vld [vmem:[#allocation3 + $0x440] sm:$0xff]
    %v4646 = vld [vmem:[#allocation3 + $0x448] sm:$0xff]
    %v4647 = vld [vmem:[#allocation3 + $0x450] sm:$0xff]
    %v4648 = vld [vmem:[#allocation3 + $0x458] sm:$0xff]
    %v4649 = vld [vmem:[#allocation3 + $0x460] sm:$0xff]
    %v4650 = vld [vmem:[#allocation3 + $0x468] sm:$0xff]
    %v4651 = vld [vmem:[#allocation3 + $0x470] sm:$0xff]
    %v4652 = vld [vmem:[#allocation3 + $0x478] sm:$0xff]
    %v4653 = vld [vmem:[#allocation3 + $0x480] sm:$0xff]
    %v4654 = vld [vmem:[#allocation3 + $0x488] sm:$0xff]
    %v4655 = vld [vmem:[#allocation3 + $0x490] sm:$0xff]
    %v4656 = vld [vmem:[#allocation3 + $0x498] sm:$0xff]
    %v4657 = vld [vmem:[#allocation3 + $0x4a0] sm:$0xff]
    %v4658 = vld [vmem:[#allocation3 + $0x4a8] sm:$0xff]
    %v4659 = vld [vmem:[#allocation3 + $0x4b0] sm:$0xff]
    %v4660 = vld [vmem:[#allocation3 + $0x4b8] sm:$0xff]
    %v4661 = vld [vmem:[#allocation3 + $0x4c0] sm:$0xff]
    %v4662 = vld [vmem:[#allocation3 + $0x4c8] sm:$0xff]
    %v4663 = vld [vmem:[#allocation3 + $0x4d0] sm:$0xff]
    %v4664 = vld [vmem:[#allocation3 + $0x4d8] sm:$0xff]
    %v4665 = vld [vmem:[#allocation3 + $0x4e0] sm:$0xff]
    %v4666 = vld [vmem:[#allocation3 + $0x4e8] sm:$0xff]
    %v4667 = vld [vmem:[#allocation3 + $0x4f0] sm:$0xff]
    %v4668 = vld [vmem:[#allocation3 + $0x4f8] sm:$0xff]
    %v4669 = vld [vmem:[#allocation3 + $0x500] sm:$0xff]
    %v4670 = vld [vmem:[#allocation3 + $0x508] sm:$0xff]
    %v4671 = vld [vmem:[#allocation3 + $0x510] sm:$0xff]
    %v4672 = vld [vmem:[#allocation3 + $0x518] sm:$0xff]
    %v4673 = vld [vmem:[#allocation3 + $0x520] sm:$0xff]
    %v4674 = vld [vmem:[#allocation3 + $0x528] sm:$0xff]
    %v4675 = vld [vmem:[#allocation3 + $0x530] sm:$0xff]
    %v4676 = vld [vmem:[#allocation3 + $0x538] sm:$0xff]
    %v4677 = vld [vmem:[#allocation3 + $0x540] sm:$0xff]
    %v4678 = vld [vmem:[#allocation3 + $0x548] sm:$0xff]
    %v4679 = vld [vmem:[#allocation3 + $0x550] sm:$0xff]
    %v4680 = vld [vmem:[#allocation3 + $0x558] sm:$0xff]
    %v4681 = vld [vmem:[#allocation3 + $0x560] sm:$0xff]
    %v4682 = vld [vmem:[#allocation3 + $0x568] sm:$0xff]
    %v4683 = vld [vmem:[#allocation3 + $0x570] sm:$0xff]
    %v4684 = vld [vmem:[#allocation3 + $0x578] sm:$0xff]
    %v4685 = vld [vmem:[#allocation3 + $0x580] sm:$0xff]
    %v4686 = vld [vmem:[#allocation3 + $0x588] sm:$0xff]
    %v4687 = vld [vmem:[#allocation3 + $0x590] sm:$0xff]
    %v4688 = vld [vmem:[#allocation3 + $0x598] sm:$0xff]
    %v4689 = vld [vmem:[#allocation3 + $0x5a0] sm:$0xff]
    %v4690 = vld [vmem:[#allocation3 + $0x5a8] sm:$0xff]
    %v4691 = vld [vmem:[#allocation3 + $0x5b0] sm:$0xff]
    %v4692 = vld [vmem:[#allocation3 + $0x5b8] sm:$0xff]
    %v4693 = vld [vmem:[#allocation3 + $0x5c0] sm:$0xff]
    %v4694 = vld [vmem:[#allocation3 + $0x5c8] sm:$0xff]
    %v4695 = vld [vmem:[#allocation3 + $0x5d0] sm:$0xff]
    %v4696 = vld [vmem:[#allocation3 + $0x5d8] sm:$0xff]
    %v4697 = vld [vmem:[#allocation3 + $0x5e0] sm:$0xff]
    %v4698 = vld [vmem:[#allocation3 + $0x5e8] sm:$0xff]
    %v4699 = vld [vmem:[#allocation3 + $0x5f0] sm:$0xff]
    %v4700 = vld [vmem:[#allocation3 + $0x5f8] sm:$0xff]
    %v4701 = vld [vmem:[#allocation3 + $0x600] sm:$0xff]
    %v4702 = vld [vmem:[#allocation3 + $0x608] sm:$0xff]
    %v4703 = vld [vmem:[#allocation3 + $0x610] sm:$0xff]
    %v4704 = vld [vmem:[#allocation3 + $0x618] sm:$0xff]
    %v4705 = vld [vmem:[#allocation3 + $0x620] sm:$0xff]
    %v4706 = vld [vmem:[#allocation3 + $0x628] sm:$0xff]
    %v4707 = vld [vmem:[#allocation3 + $0x630] sm:$0xff]
    %v4708 = vld [vmem:[#allocation3 + $0x638] sm:$0xff]
    %v4709 = vld [vmem:[#allocation3 + $0x640] sm:$0xff]
    %v4710 = vld [vmem:[#allocation3 + $0x648] sm:$0xff]
    %v4711 = vld [vmem:[#allocation3 + $0x650] sm:$0xff]
    %v4712 = vld [vmem:[#allocation3 + $0x658] sm:$0xff]
    %v4713 = vld [vmem:[#allocation3 + $0x660] sm:$0xff]
    %v4714 = vld [vmem:[#allocation3 + $0x668] sm:$0xff]
    %v4715 = vld [vmem:[#allocation3 + $0x670] sm:$0xff]
    %v4716 = vld [vmem:[#allocation3 + $0x678] sm:$0xff]
    %v4717 = vld [vmem:[#allocation3 + $0x680] sm:$0xff]
    %v4718 = vld [vmem:[#allocation3 + $0x688] sm:$0xff]
    %v4719 = vld [vmem:[#allocation3 + $0x690] sm:$0xff]
    %v4720 = vld [vmem:[#allocation3 + $0x698] sm:$0xff]
    %v4721 = vld [vmem:[#allocation3 + $0x6a0] sm:$0xff]
    %v4722 = vld [vmem:[#allocation3 + $0x6a8] sm:$0xff]
    %v4723 = vld [vmem:[#allocation3 + $0x6b0] sm:$0xff]
    %v4724 = vld [vmem:[#allocation3 + $0x6b8] sm:$0xff]
    %v4725 = vld [vmem:[#allocation3 + $0x6c0] sm:$0xff]
    %v4726 = vld [vmem:[#allocation3 + $0x6c8] sm:$0xff]
    %v4727 = vld [vmem:[#allocation3 + $0x6d0] sm:$0xff]
    %v4728 = vld [vmem:[#allocation3 + $0x6d8] sm:$0xff]
    %v4729 = vld [vmem:[#allocation3 + $0x6e0] sm:$0xff]
    %v4730 = vld [vmem:[#allocation3 + $0x6e8] sm:$0xff]
    %v4731 = vld [vmem:[#allocation3 + $0x6f0] sm:$0xff]
    %v4732 = vld [vmem:[#allocation3 + $0x6f8] sm:$0xff]
    %v4733 = vld [vmem:[#allocation3 + $0x700] sm:$0xff]
    %v4734 = vld [vmem:[#allocation3 + $0x708] sm:$0xff]
    %v4735 = vld [vmem:[#allocation3 + $0x710] sm:$0xff]
    %v4736 = vld [vmem:[#allocation3 + $0x718] sm:$0xff]
    %v4737 = vld [vmem:[#allocation3 + $0x720] sm:$0xff]
    %v4738 = vld [vmem:[#allocation3 + $0x728] sm:$0xff]
    %v4739 = vld [vmem:[#allocation3 + $0x730] sm:$0xff]
    %v4740 = vld [vmem:[#allocation3 + $0x738] sm:$0xff]
    %v4741 = vld [vmem:[#allocation3 + $0x740] sm:$0xff]
    %v4742 = vld [vmem:[#allocation3 + $0x748] sm:$0xff]
    %v4743 = vld [vmem:[#allocation3 + $0x750] sm:$0xff]
    %v4744 = vld [vmem:[#allocation3 + $0x758] sm:$0xff]
    %v4745 = vld [vmem:[#allocation3 + $0x760] sm:$0xff]
    %v4746 = vld [vmem:[#allocation3 + $0x768] sm:$0xff]
    %v4747 = vld [vmem:[#allocation3 + $0x770] sm:$0xff]
    %v4748 = vld [vmem:[#allocation3 + $0x778] sm:$0xff]
    %v4749 = vld [vmem:[#allocation3 + $0x780] sm:$0xff]
    %v4750 = vld [vmem:[#allocation3 + $0x788] sm:$0xff]
    %v4751 = vld [vmem:[#allocation3 + $0x790] sm:$0xff]
    %v4752 = vld [vmem:[#allocation3 + $0x798] sm:$0xff]
    %v4753 = vld [vmem:[#allocation3 + $0x7a0] sm:$0xff]
    %v4754 = vld [vmem:[#allocation3 + $0x7a8] sm:$0xff]
    %v4755 = vld [vmem:[#allocation3 + $0x7b0] sm:$0xff]
    %v4756 = vld [vmem:[#allocation3 + $0x7b8] sm:$0xff]
    %v4757 = vld [vmem:[#allocation3 + $0x7c0] sm:$0xff]
    %v4758 = vld [vmem:[#allocation3 + $0x7c8] sm:$0xff]
    %v4759 = vld [vmem:[#allocation3 + $0x7d0] sm:$0xff]
    %v4760 = vld [vmem:[#allocation3 + $0x7d8] sm:$0xff]
    %v4761 = vld [vmem:[#allocation3 + $0x7e0] sm:$0xff]
    %v4762 = vld [vmem:[#allocation3 + $0x7e8] sm:$0xff]
    %v4763 = vld [vmem:[#allocation3 + $0x7f0] sm:$0xff]
    %v4764 = vld [vmem:[#allocation3 + $0x7f8] sm:$0xff]
    %v4765 = vld [vmem:[#allocation3 + $0x800] sm:$0xff]
    %v4766 = vld [vmem:[#allocation3 + $0x808] sm:$0xff]
    %v4767 = vld [vmem:[#allocation3 + $0x810] sm:$0xff]
    %v4768 = vld [vmem:[#allocation3 + $0x818] sm:$0xff]
    %v4769 = vld [vmem:[#allocation3 + $0x820] sm:$0xff]
    %v4770 = vld [vmem:[#allocation3 + $0x828] sm:$0xff]
    %v4771 = vld [vmem:[#allocation3 + $0x830] sm:$0xff]
    %v4772 = vld [vmem:[#allocation3 + $0x838] sm:$0xff]
    %v4773 = vld [vmem:[#allocation3 + $0x840] sm:$0xff]
    %v4774 = vld [vmem:[#allocation3 + $0x848] sm:$0xff]
    %v4775 = vld [vmem:[#allocation3 + $0x850] sm:$0xff]
    %v4776 = vld [vmem:[#allocation3 + $0x858] sm:$0xff]
    %v4777 = vld [vmem:[#allocation3 + $0x860] sm:$0xff]
    %v4778 = vld [vmem:[#allocation3 + $0x868] sm:$0xff]
    %v4779 = vld [vmem:[#allocation3 + $0x870] sm:$0xff]
    %v4780 = vld [vmem:[#allocation3 + $0x878] sm:$0xff]
    %v4781 = vld [vmem:[#allocation3 + $0x880] sm:$0xff]
    %v4782 = vld [vmem:[#allocation3 + $0x888] sm:$0xff]
    %v4783 = vld [vmem:[#allocation3 + $0x890] sm:$0xff]
    %v4784 = vld [vmem:[#allocation3 + $0x898] sm:$0xff]
    %v4785 = vld [vmem:[#allocation3 + $0x8a0] sm:$0xff]
    %v4786 = vld [vmem:[#allocation3 + $0x8a8] sm:$0xff]
    %v4787 = vld [vmem:[#allocation3 + $0x8b0] sm:$0xff]
    %v4788 = vld [vmem:[#allocation3 + $0x8b8] sm:$0xff]
    %v4789 = vld [vmem:[#allocation3 + $0x8c0] sm:$0xff]
    %v4790 = vld [vmem:[#allocation3 + $0x8c8] sm:$0xff]
    %v4791 = vld [vmem:[#allocation3 + $0x8d0] sm:$0xff]
    %v4792 = vld [vmem:[#allocation3 + $0x8d8] sm:$0xff]
    %v4793 = vld [vmem:[#allocation3 + $0x8e0] sm:$0xff]
    %v4794 = vld [vmem:[#allocation3 + $0x8e8] sm:$0xff]
    %v4795 = vld [vmem:[#allocation3 + $0x8f0] sm:$0xff]
    %v4796 = vld [vmem:[#allocation3 + $0x8f8] sm:$0xff]
    %v4797 = vld [vmem:[#allocation3 + $0x900] sm:$0xff]
    %v4798 = vld [vmem:[#allocation3 + $0x908] sm:$0xff]
    %v4799 = vld [vmem:[#allocation3 + $0x910] sm:$0xff]
    %v4800 = vld [vmem:[#allocation3 + $0x918] sm:$0xff]
    %v4801 = vld [vmem:[#allocation3 + $0x920] sm:$0xff]
    %v4802 = vld [vmem:[#allocation3 + $0x928] sm:$0xff]
    %v4803 = vld [vmem:[#allocation3 + $0x930] sm:$0xff]
    %v4804 = vld [vmem:[#allocation3 + $0x938] sm:$0xff]
    %v4805 = vld [vmem:[#allocation3 + $0x940] sm:$0xff]
    %v4806 = vld [vmem:[#allocation3 + $0x948] sm:$0xff]
    %v4807 = vld [vmem:[#allocation3 + $0x950] sm:$0xff]
    %v4808 = vld [vmem:[#allocation3 + $0x958] sm:$0xff]
    %v4809 = vld [vmem:[#allocation3 + $0x960] sm:$0xff]
    %v4810 = vld [vmem:[#allocation3 + $0x968] sm:$0xff]
    %v4811 = vld [vmem:[#allocation3 + $0x970] sm:$0xff]
    %v4812 = vld [vmem:[#allocation3 + $0x978] sm:$0xff]
    %v4813 = vld [vmem:[#allocation3 + $0x980] sm:$0xff]
    %v4814 = vld [vmem:[#allocation3 + $0x988] sm:$0xff]
    %v4815 = vld [vmem:[#allocation3 + $0x990] sm:$0xff]
    %v4816 = vld [vmem:[#allocation3 + $0x998] sm:$0xff]
    %v4817 = vld [vmem:[#allocation3 + $0x9a0] sm:$0xff]
    %v4818 = vld [vmem:[#allocation3 + $0x9a8] sm:$0xff]
    %v4819 = vld [vmem:[#allocation3 + $0x9b0] sm:$0xff]
    %v4820 = vld [vmem:[#allocation3 + $0x9b8] sm:$0xff]
    %v4821 = vld [vmem:[#allocation3 + $0x9c0] sm:$0xff]
    %v4822 = vld [vmem:[#allocation3 + $0x9c8] sm:$0xff]
    %v4823 = vld [vmem:[#allocation3 + $0x9d0] sm:$0xff]
    %v4824 = vld [vmem:[#allocation3 + $0x9d8] sm:$0xff]
    %v4825 = vld [vmem:[#allocation3 + $0x9e0] sm:$0xff]
    %v4826 = vld [vmem:[#allocation3 + $0x9e8] sm:$0xff]
    %v4827 = vld [vmem:[#allocation3 + $0x9f0] sm:$0xff]
    %v4828 = vld [vmem:[#allocation3 + $0x9f8] sm:$0xff]
    %v4829 = vld [vmem:[#allocation3 + $0xa00] sm:$0xff]
    %v4830 = vld [vmem:[#allocation3 + $0xa08] sm:$0xff]
    %v4831 = vld [vmem:[#allocation3 + $0xa10] sm:$0xff]
    %v4832 = vld [vmem:[#allocation3 + $0xa18] sm:$0xff]
    %v4833 = vld [vmem:[#allocation3 + $0xa20] sm:$0xff]
    %v4834 = vld [vmem:[#allocation3 + $0xa28] sm:$0xff]
    %v4835 = vld [vmem:[#allocation3 + $0xa30] sm:$0xff]
    %v4836 = vld [vmem:[#allocation3 + $0xa38] sm:$0xff]
    %v4837 = vld [vmem:[#allocation3 + $0xa40] sm:$0xff]
    %v4838 = vld [vmem:[#allocation3 + $0xa48] sm:$0xff]
    %v4839 = vld [vmem:[#allocation3 + $0xa50] sm:$0xff]
    %v4840 = vld [vmem:[#allocation3 + $0xa58] sm:$0xff]
    %v4841 = vld [vmem:[#allocation3 + $0xa60] sm:$0xff]
    %v4842 = vld [vmem:[#allocation3 + $0xa68] sm:$0xff]
    %v4843 = vld [vmem:[#allocation3 + $0xa70] sm:$0xff]
    %v4844 = vld [vmem:[#allocation3 + $0xa78] sm:$0xff]
    %v4845 = vld [vmem:[#allocation3 + $0xa80] sm:$0xff]
    %v4846 = vld [vmem:[#allocation3 + $0xa88] sm:$0xff]
    %v4847 = vld [vmem:[#allocation3 + $0xa90] sm:$0xff]
    %v4848 = vld [vmem:[#allocation3 + $0xa98] sm:$0xff]
    %v4849 = vld [vmem:[#allocation3 + $0xaa0] sm:$0xff]
    %v4850 = vld [vmem:[#allocation3 + $0xaa8] sm:$0xff]
    %v4851 = vld [vmem:[#allocation3 + $0xab0] sm:$0xff]
    %v4852 = vld [vmem:[#allocation3 + $0xab8] sm:$0xff]
    %v4853 = vld [vmem:[#allocation3 + $0xac0] sm:$0xff]
    %v4854 = vld [vmem:[#allocation3 + $0xac8] sm:$0xff]
    %v4855 = vld [vmem:[#allocation3 + $0xad0] sm:$0xff]
    %v4856 = vld [vmem:[#allocation3 + $0xad8] sm:$0xff]
    %v4857 = vld [vmem:[#allocation3 + $0xae0] sm:$0xff]
    %v4858 = vld [vmem:[#allocation3 + $0xae8] sm:$0xff]
    %v4859 = vld [vmem:[#allocation3 + $0xaf0] sm:$0xff]
    %v4860 = vld [vmem:[#allocation3 + $0xaf8] sm:$0xff]
    %v4861 = vld [vmem:[#allocation3 + $0xb00] sm:$0xff]
    %v4862 = vld [vmem:[#allocation3 + $0xb08] sm:$0xff]
    %v4863 = vld [vmem:[#allocation3 + $0xb10] sm:$0xff]
    %v4864 = vld [vmem:[#allocation3 + $0xb18] sm:$0xff]
    %v4865 = vld [vmem:[#allocation3 + $0xb20] sm:$0xff]
    %v4866 = vld [vmem:[#allocation3 + $0xb28] sm:$0xff]
    %v4867 = vld [vmem:[#allocation3 + $0xb30] sm:$0xff]
    %v4868 = vld [vmem:[#allocation3 + $0xb38] sm:$0xff]
    %v4869 = vld [vmem:[#allocation3 + $0xb40] sm:$0xff]
    %v4870 = vld [vmem:[#allocation3 + $0xb48] sm:$0xff]
    %v4871 = vld [vmem:[#allocation3 + $0xb50] sm:$0xff]
    %v4872 = vld [vmem:[#allocation3 + $0xb58] sm:$0xff]
    %v4873 = vld [vmem:[#allocation3 + $0xb60] sm:$0xff]
    %v4874 = vld [vmem:[#allocation3 + $0xb68] sm:$0xff]
    %v4875 = vld [vmem:[#allocation3 + $0xb70] sm:$0xff]
    %v4876 = vld [vmem:[#allocation3 + $0xb78] sm:$0xff]
    %v4877 = vld [vmem:[#allocation3 + $0xb80] sm:$0xff]
    %v4878 = vld [vmem:[#allocation3 + $0xb88] sm:$0xff]
    %v4879 = vld [vmem:[#allocation3 + $0xb90] sm:$0xff]
    %v4880 = vld [vmem:[#allocation3 + $0xb98] sm:$0xff]
    %v4881 = vld [vmem:[#allocation3 + $0xba0] sm:$0xff]
    %v4882 = vld [vmem:[#allocation3 + $0xba8] sm:$0xff]
    %v4883 = vld [vmem:[#allocation3 + $0xbb0] sm:$0xff]
    %v4884 = vld [vmem:[#allocation3 + $0xbb8] sm:$0xff]
    %v4885 = vld [vmem:[#allocation3 + $0xbc0] sm:$0xff]
    %v4886 = vld [vmem:[#allocation3 + $0xbc8] sm:$0xff]
    %v4887 = vld [vmem:[#allocation3 + $0xbd0] sm:$0xff]
    %v4888 = vld [vmem:[#allocation3 + $0xbd8] sm:$0xff]
    %v4889 = vld [vmem:[#allocation3 + $0xbe0] sm:$0xff]
    %v4890 = vld [vmem:[#allocation3 + $0xbe8] sm:$0xff]
    %v4891 = vld [vmem:[#allocation3 + $0xbf0] sm:$0xff]
    %v4892 = vld [vmem:[#allocation3 + $0xbf8] sm:$0xff]
    %v4893 = vld [vmem:[%s6] sm:$0xf]
    %v4895 = vlaneseq
    %v4896 = vshrl.u32 %v4895, 7
    %v4897 = vsub.s32 0, %v4896
    %v4898 = vrot.slane %v4893, %v4897
    %v4899 = vlaneseq
    %v4900 = vshrl.u32 %v4899, 7
    %v4901 = vsub.s32 1, %v4900
    %v4902 = vrot.slane %v4893, %v4901
    %v4903 = vlaneseq
    %v4904 = vshrl.u32 %v4903, 7
    %v4905 = vsub.s32 2, %v4904
    %v4906 = vrot.slane %v4893, %v4905
    %v4907 = vlaneseq
    %v4908 = vshrl.u32 %v4907, 7
    %v4909 = vsub.s32 3, %v4908
    %v4910 = vrot.slane %v4893, %v4909
    %v5299 = vunpack.c.l.b16 %v4509
    %v5300 = vunpack.c.h.b16 %v4509
    %v5301 = vunpack.c.l.b16 %v4510
    %v5302 = vunpack.c.h.b16 %v4510
    %v5303 = vunpack.c.l.b16 %v4511
    %v5304 = vunpack.c.h.b16 %v4511
    %v5305 = vunpack.c.l.b16 %v4512
    %v5306 = vunpack.c.h.b16 %v4512
    %v5307 = vunpack.c.l.b16 %v4513
    %v5308 = vunpack.c.h.b16 %v4513
    %v5309 = vunpack.c.l.b16 %v4514
    %v5310 = vunpack.c.h.b16 %v4514
    %v5311 = vunpack.c.l.b16 %v4515
    %v5312 = vunpack.c.h.b16 %v4515
    %v5313 = vunpack.c.l.b16 %v4516
    %v5314 = vunpack.c.h.b16 %v4516
    %v5315 = vunpack.c.l.b16 %v4517
    %v5316 = vunpack.c.h.b16 %v4517
    %v5317 = vunpack.c.l.b16 %v4518
    %v5318 = vunpack.c.h.b16 %v4518
    %v5319 = vunpack.c.l.b16 %v4519
    %v5320 = vunpack.c.h.b16 %v4519
    %v5321 = vunpack.c.l.b16 %v4520
    %v5322 = vunpack.c.h.b16 %v4520
    %v5323 = vunpack.c.l.b16 %v4521
    %v5324 = vunpack.c.h.b16 %v4521
    %v5325 = vunpack.c.l.b16 %v4522
    %v5326 = vunpack.c.h.b16 %v4522
    %v5327 = vunpack.c.l.b16 %v4523
    %v5328 = vunpack.c.h.b16 %v4523
    %v5329 = vunpack.c.l.b16 %v4524
    %v5330 = vunpack.c.h.b16 %v4524
    %v5331 = vunpack.c.l.b16 %v4525
    %v5332 = vunpack.c.h.b16 %v4525
    %v5333 = vunpack.c.l.b16 %v4526
    %v5334 = vunpack.c.h.b16 %v4526
    %v5335 = vunpack.c.l.b16 %v4527
    %v5336 = vunpack.c.h.b16 %v4527
    %v5337 = vunpack.c.l.b16 %v4528
    %v5338 = vunpack.c.h.b16 %v4528
    %v5339 = vunpack.c.l.b16 %v4529
    %v5340 = vunpack.c.h.b16 %v4529
    %v5341 = vunpack.c.l.b16 %v4530
    %v5342 = vunpack.c.h.b16 %v4530
    %v5343 = vunpack.c.l.b16 %v4531
    %v5344 = vunpack.c.h.b16 %v4531
    %v5345 = vunpack.c.l.b16 %v4532
    %v5346 = vunpack.c.h.b16 %v4532
    %v5347 = vunpack.c.l.b16 %v4533
    %v5348 = vunpack.c.h.b16 %v4533
    %v5349 = vunpack.c.l.b16 %v4534
    %v5350 = vunpack.c.h.b16 %v4534
    %v5351 = vunpack.c.l.b16 %v4535
    %v5352 = vunpack.c.h.b16 %v4535
    %v5353 = vunpack.c.l.b16 %v4536
    %v5354 = vunpack.c.h.b16 %v4536
    %v5355 = vunpack.c.l.b16 %v4537
    %v5356 = vunpack.c.h.b16 %v4537
    %v5357 = vunpack.c.l.b16 %v4538
    %v5358 = vunpack.c.h.b16 %v4538
    %v5359 = vunpack.c.l.b16 %v4539
    %v5360 = vunpack.c.h.b16 %v4539
    %v5361 = vunpack.c.l.b16 %v4540
    %v5362 = vunpack.c.h.b16 %v4540
    %v5363 = vunpack.c.l.b16 %v4541
    %v5364 = vunpack.c.h.b16 %v4541
    %v5365 = vunpack.c.l.b16 %v4542
    %v5366 = vunpack.c.h.b16 %v4542
    %v5367 = vunpack.c.l.b16 %v4543
    %v5368 = vunpack.c.h.b16 %v4543
    %v5369 = vunpack.c.l.b16 %v4544
    %v5370 = vunpack.c.h.b16 %v4544
    %v5371 = vunpack.c.l.b16 %v4545
    %v5372 = vunpack.c.h.b16 %v4545
    %v5373 = vunpack.c.l.b16 %v4546
    %v5374 = vunpack.c.h.b16 %v4546
    %v5375 = vunpack.c.l.b16 %v4547
    %v5376 = vunpack.c.h.b16 %v4547
    %v5377 = vunpack.c.l.b16 %v4548
    %v5378 = vunpack.c.h.b16 %v4548
    %v5379 = vunpack.c.l.b16 %v4549
    %v5380 = vunpack.c.h.b16 %v4549
    %v5381 = vunpack.c.l.b16 %v4550
    %v5382 = vunpack.c.h.b16 %v4550
    %v5383 = vunpack.c.l.b16 %v4551
    %v5384 = vunpack.c.h.b16 %v4551
    %v5385 = vunpack.c.l.b16 %v4552
    %v5386 = vunpack.c.h.b16 %v4552
    %v5387 = vunpack.c.l.b16 %v4553
    %v5388 = vunpack.c.h.b16 %v4553
    %v5389 = vunpack.c.l.b16 %v4554
    %v5390 = vunpack.c.h.b16 %v4554
    %v5391 = vunpack.c.l.b16 %v4555
    %v5392 = vunpack.c.h.b16 %v4555
    %v5393 = vunpack.c.l.b16 %v4556
    %v5394 = vunpack.c.h.b16 %v4556
    %v5395 = vunpack.c.l.b16 %v4557
    %v5396 = vunpack.c.h.b16 %v4557
    %v5397 = vunpack.c.l.b16 %v4558
    %v5398 = vunpack.c.h.b16 %v4558
    %v5399 = vunpack.c.l.b16 %v4559
    %v5400 = vunpack.c.h.b16 %v4559
    %v5401 = vunpack.c.l.b16 %v4560
    %v5402 = vunpack.c.h.b16 %v4560
    %v5403 = vunpack.c.l.b16 %v4561
    %v5404 = vunpack.c.h.b16 %v4561
    %v5405 = vunpack.c.l.b16 %v4562
    %v5406 = vunpack.c.h.b16 %v4562
    %v5407 = vunpack.c.l.b16 %v4563
    %v5408 = vunpack.c.h.b16 %v4563
    %v5409 = vunpack.c.l.b16 %v4564
    %v5410 = vunpack.c.h.b16 %v4564
    %v5411 = vunpack.c.l.b16 %v4565
    %v5412 = vunpack.c.h.b16 %v4565
    %v5413 = vunpack.c.l.b16 %v4566
    %v5414 = vunpack.c.h.b16 %v4566
    %v5415 = vunpack.c.l.b16 %v4567
    %v5416 = vunpack.c.h.b16 %v4567
    %v5417 = vunpack.c.l.b16 %v4568
    %v5418 = vunpack.c.h.b16 %v4568
    %v5419 = vunpack.c.l.b16 %v4569
    %v5420 = vunpack.c.h.b16 %v4569
    %v5421 = vunpack.c.l.b16 %v4570
    %v5422 = vunpack.c.h.b16 %v4570
    %v5423 = vunpack.c.l.b16 %v4571
    %v5424 = vunpack.c.h.b16 %v4571
    %v5425 = vunpack.c.l.b16 %v4572
    %v5426 = vunpack.c.h.b16 %v4572
    %v5427 = vunpack.c.l.b16 %v4573
    %v5428 = vunpack.c.h.b16 %v4573
    %v5429 = vunpack.c.l.b16 %v4574
    %v5430 = vunpack.c.h.b16 %v4574
    %v5431 = vunpack.c.l.b16 %v4575
    %v5432 = vunpack.c.h.b16 %v4575
    %v5433 = vunpack.c.l.b16 %v4576
    %v5434 = vunpack.c.h.b16 %v4576
    %v5435 = vunpack.c.l.b16 %v4577
    %v5436 = vunpack.c.h.b16 %v4577
    %v5437 = vunpack.c.l.b16 %v4578
    %v5438 = vunpack.c.h.b16 %v4578
    %v5439 = vunpack.c.l.b16 %v4579
    %v5440 = vunpack.c.h.b16 %v4579
    %v5441 = vunpack.c.l.b16 %v4580
    %v5442 = vunpack.c.h.b16 %v4580
    %v5443 = vunpack.c.l.b16 %v4581
    %v5444 = vunpack.c.h.b16 %v4581
    %v5445 = vunpack.c.l.b16 %v4582
    %v5446 = vunpack.c.h.b16 %v4582
    %v5447 = vunpack.c.l.b16 %v4583
    %v5448 = vunpack.c.h.b16 %v4583
    %v5449 = vunpack.c.l.b16 %v4584
    %v5450 = vunpack.c.h.b16 %v4584
    %v5451 = vunpack.c.l.b16 %v4585
    %v5452 = vunpack.c.h.b16 %v4585
    %v5453 = vunpack.c.l.b16 %v4586
    %v5454 = vunpack.c.h.b16 %v4586
    %v5455 = vunpack.c.l.b16 %v4587
    %v5456 = vunpack.c.h.b16 %v4587
    %v5457 = vunpack.c.l.b16 %v4588
    %v5458 = vunpack.c.h.b16 %v4588
    %v5459 = vunpack.c.l.b16 %v4589
    %v5460 = vunpack.c.h.b16 %v4589
    %v5461 = vunpack.c.l.b16 %v4590
    %v5462 = vunpack.c.h.b16 %v4590
    %v5463 = vunpack.c.l.b16 %v4591
    %v5464 = vunpack.c.h.b16 %v4591
    %v5465 = vunpack.c.l.b16 %v4592
    %v5466 = vunpack.c.h.b16 %v4592
    %v5467 = vunpack.c.l.b16 %v4593
    %v5468 = vunpack.c.h.b16 %v4593
    %v5469 = vunpack.c.l.b16 %v4594
    %v5470 = vunpack.c.h.b16 %v4594
    %v5471 = vunpack.c.l.b16 %v4595
    %v5472 = vunpack.c.h.b16 %v4595
    %v5473 = vunpack.c.l.b16 %v4596
    %v5474 = vunpack.c.h.b16 %v4596
    %v5475 = vunpack.c.l.b16 %v4597
    %v5476 = vunpack.c.h.b16 %v4597
    %v5477 = vunpack.c.l.b16 %v4598
    %v5478 = vunpack.c.h.b16 %v4598
    %v5479 = vunpack.c.l.b16 %v4599
    %v5480 = vunpack.c.h.b16 %v4599
    %v5481 = vunpack.c.l.b16 %v4600
    %v5482 = vunpack.c.h.b16 %v4600
    %v5483 = vunpack.c.l.b16 %v4601
    %v5484 = vunpack.c.h.b16 %v4601
    %v5485 = vunpack.c.l.b16 %v4602
    %v5486 = vunpack.c.h.b16 %v4602
    %v5487 = vunpack.c.l.b16 %v4603
    %v5488 = vunpack.c.h.b16 %v4603
    %v5489 = vunpack.c.l.b16 %v4604
    %v5490 = vunpack.c.h.b16 %v4604
    %v5491 = vunpack.c.l.b16 %v4605
    %v5492 = vunpack.c.h.b16 %v4605
    %v5493 = vunpack.c.l.b16 %v4606
    %v5494 = vunpack.c.h.b16 %v4606
    %v5495 = vunpack.c.l.b16 %v4607
    %v5496 = vunpack.c.h.b16 %v4607
    %v5497 = vunpack.c.l.b16 %v4608
    %v5498 = vunpack.c.h.b16 %v4608
    %v5499 = vunpack.c.l.b16 %v4609
    %v5500 = vunpack.c.h.b16 %v4609
    %v5501 = vunpack.c.l.b16 %v4610
    %v5502 = vunpack.c.h.b16 %v4610
    %v5503 = vunpack.c.l.b16 %v4611
    %v5504 = vunpack.c.h.b16 %v4611
    %v5505 = vunpack.c.l.b16 %v4612
    %v5506 = vunpack.c.h.b16 %v4612
    %v5507 = vunpack.c.l.b16 %v4613
    %v5508 = vunpack.c.h.b16 %v4613
    %v5509 = vunpack.c.l.b16 %v4614
    %v5510 = vunpack.c.h.b16 %v4614
    %v5511 = vunpack.c.l.b16 %v4615
    %v5512 = vunpack.c.h.b16 %v4615
    %v5513 = vunpack.c.l.b16 %v4616
    %v5514 = vunpack.c.h.b16 %v4616
    %v5515 = vunpack.c.l.b16 %v4617
    %v5516 = vunpack.c.h.b16 %v4617
    %v5517 = vunpack.c.l.b16 %v4618
    %v5518 = vunpack.c.h.b16 %v4618
    %v5519 = vunpack.c.l.b16 %v4619
    %v5520 = vunpack.c.h.b16 %v4619
    %v5521 = vunpack.c.l.b16 %v4620
    %v5522 = vunpack.c.h.b16 %v4620
    %v5523 = vunpack.c.l.b16 %v4621
    %v5524 = vunpack.c.h.b16 %v4621
    %v5525 = vunpack.c.l.b16 %v4622
    %v5526 = vunpack.c.h.b16 %v4622
    %v5527 = vunpack.c.l.b16 %v4623
    %v5528 = vunpack.c.h.b16 %v4623
    %v5529 = vunpack.c.l.b16 %v4624
    %v5530 = vunpack.c.h.b16 %v4624
    %v5531 = vunpack.c.l.b16 %v4625
    %v5532 = vunpack.c.h.b16 %v4625
    %v5533 = vunpack.c.l.b16 %v4626
    %v5534 = vunpack.c.h.b16 %v4626
    %v5535 = vunpack.c.l.b16 %v4627
    %v5536 = vunpack.c.h.b16 %v4627
    %v5537 = vunpack.c.l.b16 %v4628
    %v5538 = vunpack.c.h.b16 %v4628
    %v5539 = vunpack.c.l.b16 %v4629
    %v5540 = vunpack.c.h.b16 %v4629
    %v5541 = vunpack.c.l.b16 %v4630
    %v5542 = vunpack.c.h.b16 %v4630
    %v5543 = vunpack.c.l.b16 %v4631
    %v5544 = vunpack.c.h.b16 %v4631
    %v5545 = vunpack.c.l.b16 %v4632
    %v5546 = vunpack.c.h.b16 %v4632
    %v5547 = vunpack.c.l.b16 %v4633
    %v5548 = vunpack.c.h.b16 %v4633
    %v5549 = vunpack.c.l.b16 %v4634
    %v5550 = vunpack.c.h.b16 %v4634
    %v5551 = vunpack.c.l.b16 %v4635
    %v5552 = vunpack.c.h.b16 %v4635
    %v5553 = vunpack.c.l.b16 %v4636
    %v5554 = vunpack.c.h.b16 %v4636
    %v5555 = vunpack.c.l.b16 %v4637
    %v5556 = vunpack.c.h.b16 %v4637
    %v5557 = vunpack.c.l.b16 %v4638
    %v5558 = vunpack.c.h.b16 %v4638
    %v5559 = vunpack.c.l.b16 %v4639
    %v5560 = vunpack.c.h.b16 %v4639
    %v5561 = vunpack.c.l.b16 %v4640
    %v5562 = vunpack.c.h.b16 %v4640
    %v5563 = vunpack.c.l.b16 %v4641
    %v5564 = vunpack.c.h.b16 %v4641
    %v5565 = vunpack.c.l.b16 %v4642
    %v5566 = vunpack.c.h.b16 %v4642
    %v5567 = vunpack.c.l.b16 %v4643
    %v5568 = vunpack.c.h.b16 %v4643
    %v5569 = vunpack.c.l.b16 %v4644
    %v5570 = vunpack.c.h.b16 %v4644
    %v5571 = vunpack.c.l.b16 %v4645
    %v5572 = vunpack.c.h.b16 %v4645
    %v5573 = vunpack.c.l.b16 %v4646
    %v5574 = vunpack.c.h.b16 %v4646
    %v5575 = vunpack.c.l.b16 %v4647
    %v5576 = vunpack.c.h.b16 %v4647
    %v5577 = vunpack.c.l.b16 %v4648
    %v5578 = vunpack.c.h.b16 %v4648
    %v5579 = vunpack.c.l.b16 %v4649
    %v5580 = vunpack.c.h.b16 %v4649
    %v5581 = vunpack.c.l.b16 %v4650
    %v5582 = vunpack.c.h.b16 %v4650
    %v5583 = vunpack.c.l.b16 %v4651
    %v5584 = vunpack.c.h.b16 %v4651
    %v5585 = vunpack.c.l.b16 %v4652
    %v5586 = vunpack.c.h.b16 %v4652
    %v5587 = vunpack.c.l.b16 %v4653
    %v5588 = vunpack.c.h.b16 %v4653
    %v5589 = vunpack.c.l.b16 %v4654
    %v5590 = vunpack.c.h.b16 %v4654
    %v5591 = vunpack.c.l.b16 %v4655
    %v5592 = vunpack.c.h.b16 %v4655
    %v5593 = vunpack.c.l.b16 %v4656
    %v5594 = vunpack.c.h.b16 %v4656
    %v5595 = vunpack.c.l.b16 %v4657
    %v5596 = vunpack.c.h.b16 %v4657
    %v5597 = vunpack.c.l.b16 %v4658
    %v5598 = vunpack.c.h.b16 %v4658
    %v5599 = vunpack.c.l.b16 %v4659
    %v5600 = vunpack.c.h.b16 %v4659
    %v5601 = vunpack.c.l.b16 %v4660
    %v5602 = vunpack.c.h.b16 %v4660
    %v5603 = vunpack.c.l.b16 %v4661
    %v5604 = vunpack.c.h.b16 %v4661
    %v5605 = vunpack.c.l.b16 %v4662
    %v5606 = vunpack.c.h.b16 %v4662
    %v5607 = vunpack.c.l.b16 %v4663
    %v5608 = vunpack.c.h.b16 %v4663
    %v5609 = vunpack.c.l.b16 %v4664
    %v5610 = vunpack.c.h.b16 %v4664
    %v5611 = vunpack.c.l.b16 %v4665
    %v5612 = vunpack.c.h.b16 %v4665
    %v5613 = vunpack.c.l.b16 %v4666
    %v5614 = vunpack.c.h.b16 %v4666
    %v5615 = vunpack.c.l.b16 %v4667
    %v5616 = vunpack.c.h.b16 %v4667
    %v5617 = vunpack.c.l.b16 %v4668
    %v5618 = vunpack.c.h.b16 %v4668
    %v5619 = vunpack.c.l.b16 %v4669
    %v5620 = vunpack.c.h.b16 %v4669
    %v5621 = vunpack.c.l.b16 %v4670
    %v5622 = vunpack.c.h.b16 %v4670
    %v5623 = vunpack.c.l.b16 %v4671
    %v5624 = vunpack.c.h.b16 %v4671
    %v5625 = vunpack.c.l.b16 %v4672
    %v5626 = vunpack.c.h.b16 %v4672
    %v5627 = vunpack.c.l.b16 %v4673
    %v5628 = vunpack.c.h.b16 %v4673
    %v5629 = vunpack.c.l.b16 %v4674
    %v5630 = vunpack.c.h.b16 %v4674
    %v5631 = vunpack.c.l.b16 %v4675
    %v5632 = vunpack.c.h.b16 %v4675
    %v5633 = vunpack.c.l.b16 %v4676
    %v5634 = vunpack.c.h.b16 %v4676
    %v5635 = vunpack.c.l.b16 %v4677
    %v5636 = vunpack.c.h.b16 %v4677
    %v5637 = vunpack.c.l.b16 %v4678
    %v5638 = vunpack.c.h.b16 %v4678
    %v5639 = vunpack.c.l.b16 %v4679
    %v5640 = vunpack.c.h.b16 %v4679
    %v5641 = vunpack.c.l.b16 %v4680
    %v5642 = vunpack.c.h.b16 %v4680
    %v5643 = vunpack.c.l.b16 %v4681
    %v5644 = vunpack.c.h.b16 %v4681
    %v5645 = vunpack.c.l.b16 %v4682
    %v5646 = vunpack.c.h.b16 %v4682
    %v5647 = vunpack.c.l.b16 %v4683
    %v5648 = vunpack.c.h.b16 %v4683
    %v5649 = vunpack.c.l.b16 %v4684
    %v5650 = vunpack.c.h.b16 %v4684
    %v5651 = vunpack.c.l.b16 %v4685
    %v5652 = vunpack.c.h.b16 %v4685
    %v5653 = vunpack.c.l.b16 %v4686
    %v5654 = vunpack.c.h.b16 %v4686
    %v5655 = vunpack.c.l.b16 %v4687
    %v5656 = vunpack.c.h.b16 %v4687
    %v5657 = vunpack.c.l.b16 %v4688
    %v5658 = vunpack.c.h.b16 %v4688
    %v5659 = vunpack.c.l.b16 %v4689
    %v5660 = vunpack.c.h.b16 %v4689
    %v5661 = vunpack.c.l.b16 %v4690
    %v5662 = vunpack.c.h.b16 %v4690
    %v5663 = vunpack.c.l.b16 %v4691
    %v5664 = vunpack.c.h.b16 %v4691
    %v5665 = vunpack.c.l.b16 %v4692
    %v5666 = vunpack.c.h.b16 %v4692
    %v5667 = vunpack.c.l.b16 %v4693
    %v5668 = vunpack.c.h.b16 %v4693
    %v5669 = vunpack.c.l.b16 %v4694
    %v5670 = vunpack.c.h.b16 %v4694
    %v5671 = vunpack.c.l.b16 %v4695
    %v5672 = vunpack.c.h.b16 %v4695
    %v5673 = vunpack.c.l.b16 %v4696
    %v5674 = vunpack.c.h.b16 %v4696
    %v5675 = vunpack.c.l.b16 %v4697
    %v5676 = vunpack.c.h.b16 %v4697
    %v5677 = vunpack.c.l.b16 %v4698
    %v5678 = vunpack.c.h.b16 %v4698
    %v5679 = vunpack.c.l.b16 %v4699
    %v5680 = vunpack.c.h.b16 %v4699
    %v5681 = vunpack.c.l.b16 %v4700
    %v5682 = vunpack.c.h.b16 %v4700
    %v5683 = vunpack.c.l.b16 %v4701
    %v5684 = vunpack.c.h.b16 %v4701
    %v5685 = vunpack.c.l.b16 %v4702
    %v5686 = vunpack.c.h.b16 %v4702
    %v5687 = vunpack.c.l.b16 %v4703
    %v5688 = vunpack.c.h.b16 %v4703
    %v5689 = vunpack.c.l.b16 %v4704
    %v5690 = vunpack.c.h.b16 %v4704
    %v5691 = vunpack.c.l.b16 %v4705
    %v5692 = vunpack.c.h.b16 %v4705
    %v5693 = vunpack.c.l.b16 %v4706
    %v5694 = vunpack.c.h.b16 %v4706
    %v5695 = vunpack.c.l.b16 %v4707
    %v5696 = vunpack.c.h.b16 %v4707
    %v5697 = vunpack.c.l.b16 %v4708
    %v5698 = vunpack.c.h.b16 %v4708
    %v5699 = vunpack.c.l.b16 %v4709
    %v5700 = vunpack.c.h.b16 %v4709
    %v5701 = vunpack.c.l.b16 %v4710
    %v5702 = vunpack.c.h.b16 %v4710
    %v5703 = vunpack.c.l.b16 %v4711
    %v5704 = vunpack.c.h.b16 %v4711
    %v5705 = vunpack.c.l.b16 %v4712
    %v5706 = vunpack.c.h.b16 %v4712
    %v5707 = vunpack.c.l.b16 %v4713
    %v5708 = vunpack.c.h.b16 %v4713
    %v5709 = vunpack.c.l.b16 %v4714
    %v5710 = vunpack.c.h.b16 %v4714
    %v5711 = vunpack.c.l.b16 %v4715
    %v5712 = vunpack.c.h.b16 %v4715
    %v5713 = vunpack.c.l.b16 %v4716
    %v5714 = vunpack.c.h.b16 %v4716
    %v5715 = vunpack.c.l.b16 %v4717
    %v5716 = vunpack.c.h.b16 %v4717
    %v5717 = vunpack.c.l.b16 %v4718
    %v5718 = vunpack.c.h.b16 %v4718
    %v5719 = vunpack.c.l.b16 %v4719
    %v5720 = vunpack.c.h.b16 %v4719
    %v5721 = vunpack.c.l.b16 %v4720
    %v5722 = vunpack.c.h.b16 %v4720
    %v5723 = vunpack.c.l.b16 %v4721
    %v5724 = vunpack.c.h.b16 %v4721
    %v5725 = vunpack.c.l.b16 %v4722
    %v5726 = vunpack.c.h.b16 %v4722
    %v5727 = vunpack.c.l.b16 %v4723
    %v5728 = vunpack.c.h.b16 %v4723
    %v5729 = vunpack.c.l.b16 %v4724
    %v5730 = vunpack.c.h.b16 %v4724
    %v5731 = vunpack.c.l.b16 %v4725
    %v5732 = vunpack.c.h.b16 %v4725
    %v5733 = vunpack.c.l.b16 %v4726
    %v5734 = vunpack.c.h.b16 %v4726
    %v5735 = vunpack.c.l.b16 %v4727
    %v5736 = vunpack.c.h.b16 %v4727
    %v5737 = vunpack.c.l.b16 %v4728
    %v5738 = vunpack.c.h.b16 %v4728
    %v5739 = vunpack.c.l.b16 %v4729
    %v5740 = vunpack.c.h.b16 %v4729
    %v5741 = vunpack.c.l.b16 %v4730
    %v5742 = vunpack.c.h.b16 %v4730
    %v5743 = vunpack.c.l.b16 %v4731
    %v5744 = vunpack.c.h.b16 %v4731
    %v5745 = vunpack.c.l.b16 %v4732
    %v5746 = vunpack.c.h.b16 %v4732
    %v5747 = vunpack.c.l.b16 %v4733
    %v5748 = vunpack.c.h.b16 %v4733
    %v5749 = vunpack.c.l.b16 %v4734
    %v5750 = vunpack.c.h.b16 %v4734
    %v5751 = vunpack.c.l.b16 %v4735
    %v5752 = vunpack.c.h.b16 %v4735
    %v5753 = vunpack.c.l.b16 %v4736
    %v5754 = vunpack.c.h.b16 %v4736
    %v5755 = vunpack.c.l.b16 %v4737
    %v5756 = vunpack.c.h.b16 %v4737
    %v5757 = vunpack.c.l.b16 %v4738
    %v5758 = vunpack.c.h.b16 %v4738
    %v5759 = vunpack.c.l.b16 %v4739
    %v5760 = vunpack.c.h.b16 %v4739
    %v5761 = vunpack.c.l.b16 %v4740
    %v5762 = vunpack.c.h.b16 %v4740
    %v5763 = vunpack.c.l.b16 %v4741
    %v5764 = vunpack.c.h.b16 %v4741
    %v5765 = vunpack.c.l.b16 %v4742
    %v5766 = vunpack.c.h.b16 %v4742
    %v5767 = vunpack.c.l.b16 %v4743
    %v5768 = vunpack.c.h.b16 %v4743
    %v5769 = vunpack.c.l.b16 %v4744
    %v5770 = vunpack.c.h.b16 %v4744
    %v5771 = vunpack.c.l.b16 %v4745
    %v5772 = vunpack.c.h.b16 %v4745
    %v5773 = vunpack.c.l.b16 %v4746
    %v5774 = vunpack.c.h.b16 %v4746
    %v5775 = vunpack.c.l.b16 %v4747
    %v5776 = vunpack.c.h.b16 %v4747
    %v5777 = vunpack.c.l.b16 %v4748
    %v5778 = vunpack.c.h.b16 %v4748
    %v5779 = vunpack.c.l.b16 %v4749
    %v5780 = vunpack.c.h.b16 %v4749
    %v5781 = vunpack.c.l.b16 %v4750
    %v5782 = vunpack.c.h.b16 %v4750
    %v5783 = vunpack.c.l.b16 %v4751
    %v5784 = vunpack.c.h.b16 %v4751
    %v5785 = vunpack.c.l.b16 %v4752
    %v5786 = vunpack.c.h.b16 %v4752
    %v5787 = vunpack.c.l.b16 %v4753
    %v5788 = vunpack.c.h.b16 %v4753
    %v5789 = vunpack.c.l.b16 %v4754
    %v5790 = vunpack.c.h.b16 %v4754
    %v5791 = vunpack.c.l.b16 %v4755
    %v5792 = vunpack.c.h.b16 %v4755
    %v5793 = vunpack.c.l.b16 %v4756
    %v5794 = vunpack.c.h.b16 %v4756
    %v5795 = vunpack.c.l.b16 %v4757
    %v5796 = vunpack.c.h.b16 %v4757
    %v5797 = vunpack.c.l.b16 %v4758
    %v5798 = vunpack.c.h.b16 %v4758
    %v5799 = vunpack.c.l.b16 %v4759
    %v5800 = vunpack.c.h.b16 %v4759
    %v5801 = vunpack.c.l.b16 %v4760
    %v5802 = vunpack.c.h.b16 %v4760
    %v5803 = vunpack.c.l.b16 %v4761
    %v5804 = vunpack.c.h.b16 %v4761
    %v5805 = vunpack.c.l.b16 %v4762
    %v5806 = vunpack.c.h.b16 %v4762
    %v5807 = vunpack.c.l.b16 %v4763
    %v5808 = vunpack.c.h.b16 %v4763
    %v5809 = vunpack.c.l.b16 %v4764
    %v5810 = vunpack.c.h.b16 %v4764
    %v5811 = vunpack.c.l.b16 %v4765
    %v5812 = vunpack.c.h.b16 %v4765
    %v5813 = vunpack.c.l.b16 %v4766
    %v5814 = vunpack.c.h.b16 %v4766
    %v5815 = vunpack.c.l.b16 %v4767
    %v5816 = vunpack.c.h.b16 %v4767
    %v5817 = vunpack.c.l.b16 %v4768
    %v5818 = vunpack.c.h.b16 %v4768
    %v5819 = vunpack.c.l.b16 %v4769
    %v5820 = vunpack.c.h.b16 %v4769
    %v5821 = vunpack.c.l.b16 %v4770
    %v5822 = vunpack.c.h.b16 %v4770
    %v5823 = vunpack.c.l.b16 %v4771
    %v5824 = vunpack.c.h.b16 %v4771
    %v5825 = vunpack.c.l.b16 %v4772
    %v5826 = vunpack.c.h.b16 %v4772
    %v5827 = vunpack.c.l.b16 %v4773
    %v5828 = vunpack.c.h.b16 %v4773
    %v5829 = vunpack.c.l.b16 %v4774
    %v5830 = vunpack.c.h.b16 %v4774
    %v5831 = vunpack.c.l.b16 %v4775
    %v5832 = vunpack.c.h.b16 %v4775
    %v5833 = vunpack.c.l.b16 %v4776
    %v5834 = vunpack.c.h.b16 %v4776
    %v5835 = vunpack.c.l.b16 %v4777
    %v5836 = vunpack.c.h.b16 %v4777
    %v5837 = vunpack.c.l.b16 %v4778
    %v5838 = vunpack.c.h.b16 %v4778
    %v5839 = vunpack.c.l.b16 %v4779
    %v5840 = vunpack.c.h.b16 %v4779
    %v5841 = vunpack.c.l.b16 %v4780
    %v5842 = vunpack.c.h.b16 %v4780
    %v5843 = vunpack.c.l.b16 %v4781
    %v5844 = vunpack.c.h.b16 %v4781
    %v5845 = vunpack.c.l.b16 %v4782
    %v5846 = vunpack.c.h.b16 %v4782
    %v5847 = vunpack.c.l.b16 %v4783
    %v5848 = vunpack.c.h.b16 %v4783
    %v5849 = vunpack.c.l.b16 %v4784
    %v5850 = vunpack.c.h.b16 %v4784
    %v5851 = vunpack.c.l.b16 %v4785
    %v5852 = vunpack.c.h.b16 %v4785
    %v5853 = vunpack.c.l.b16 %v4786
    %v5854 = vunpack.c.h.b16 %v4786
    %v5855 = vunpack.c.l.b16 %v4787
    %v5856 = vunpack.c.h.b16 %v4787
    %v5857 = vunpack.c.l.b16 %v4788
    %v5858 = vunpack.c.h.b16 %v4788
    %v5859 = vunpack.c.l.b16 %v4789
    %v5860 = vunpack.c.h.b16 %v4789
    %v5861 = vunpack.c.l.b16 %v4790
    %v5862 = vunpack.c.h.b16 %v4790
    %v5863 = vunpack.c.l.b16 %v4791
    %v5864 = vunpack.c.h.b16 %v4791
    %v5865 = vunpack.c.l.b16 %v4792
    %v5866 = vunpack.c.h.b16 %v4792
    %v5867 = vunpack.c.l.b16 %v4793
    %v5868 = vunpack.c.h.b16 %v4793
    %v5869 = vunpack.c.l.b16 %v4794
    %v5870 = vunpack.c.h.b16 %v4794
    %v5871 = vunpack.c.l.b16 %v4795
    %v5872 = vunpack.c.h.b16 %v4795
    %v5873 = vunpack.c.l.b16 %v4796
    %v5874 = vunpack.c.h.b16 %v4796
    %v5875 = vunpack.c.l.b16 %v4797
    %v5876 = vunpack.c.h.b16 %v4797
    %v5877 = vunpack.c.l.b16 %v4798
    %v5878 = vunpack.c.h.b16 %v4798
    %v5879 = vunpack.c.l.b16 %v4799
    %v5880 = vunpack.c.h.b16 %v4799
    %v5881 = vunpack.c.l.b16 %v4800
    %v5882 = vunpack.c.h.b16 %v4800
    %v5883 = vunpack.c.l.b16 %v4801
    %v5884 = vunpack.c.h.b16 %v4801
    %v5885 = vunpack.c.l.b16 %v4802
    %v5886 = vunpack.c.h.b16 %v4802
    %v5887 = vunpack.c.l.b16 %v4803
    %v5888 = vunpack.c.h.b16 %v4803
    %v5889 = vunpack.c.l.b16 %v4804
    %v5890 = vunpack.c.h.b16 %v4804
    %v5891 = vunpack.c.l.b16 %v4805
    %v5892 = vunpack.c.h.b16 %v4805
    %v5893 = vunpack.c.l.b16 %v4806
    %v5894 = vunpack.c.h.b16 %v4806
    %v5895 = vunpack.c.l.b16 %v4807
    %v5896 = vunpack.c.h.b16 %v4807
    %v5897 = vunpack.c.l.b16 %v4808
    %v5898 = vunpack.c.h.b16 %v4808
    %v5899 = vunpack.c.l.b16 %v4809
    %v5900 = vunpack.c.h.b16 %v4809
    %v5901 = vunpack.c.l.b16 %v4810
    %v5902 = vunpack.c.h.b16 %v4810
    %v5903 = vunpack.c.l.b16 %v4811
    %v5904 = vunpack.c.h.b16 %v4811
    %v5905 = vunpack.c.l.b16 %v4812
    %v5906 = vunpack.c.h.b16 %v4812
    %v5907 = vunpack.c.l.b16 %v4813
    %v5908 = vunpack.c.h.b16 %v4813
    %v5909 = vunpack.c.l.b16 %v4814
    %v5910 = vunpack.c.h.b16 %v4814
    %v5911 = vunpack.c.l.b16 %v4815
    %v5912 = vunpack.c.h.b16 %v4815
    %v5913 = vunpack.c.l.b16 %v4816
    %v5914 = vunpack.c.h.b16 %v4816
    %v5915 = vunpack.c.l.b16 %v4817
    %v5916 = vunpack.c.h.b16 %v4817
    %v5917 = vunpack.c.l.b16 %v4818
    %v5918 = vunpack.c.h.b16 %v4818
    %v5919 = vunpack.c.l.b16 %v4819
    %v5920 = vunpack.c.h.b16 %v4819
    %v5921 = vunpack.c.l.b16 %v4820
    %v5922 = vunpack.c.h.b16 %v4820
    %v5923 = vunpack.c.l.b16 %v4821
    %v5924 = vunpack.c.h.b16 %v4821
    %v5925 = vunpack.c.l.b16 %v4822
    %v5926 = vunpack.c.h.b16 %v4822
    %v5927 = vunpack.c.l.b16 %v4823
    %v5928 = vunpack.c.h.b16 %v4823
    %v5929 = vunpack.c.l.b16 %v4824
    %v5930 = vunpack.c.h.b16 %v4824
    %v5931 = vunpack.c.l.b16 %v4825
    %v5932 = vunpack.c.h.b16 %v4825
    %v5933 = vunpack.c.l.b16 %v4826
    %v5934 = vunpack.c.h.b16 %v4826
    %v5935 = vunpack.c.l.b16 %v4827
    %v5936 = vunpack.c.h.b16 %v4827
    %v5937 = vunpack.c.l.b16 %v4828
    %v5938 = vunpack.c.h.b16 %v4828
    %v5939 = vunpack.c.l.b16 %v4829
    %v5940 = vunpack.c.h.b16 %v4829
    %v5941 = vunpack.c.l.b16 %v4830
    %v5942 = vunpack.c.h.b16 %v4830
    %v5943 = vunpack.c.l.b16 %v4831
    %v5944 = vunpack.c.h.b16 %v4831
    %v5945 = vunpack.c.l.b16 %v4832
    %v5946 = vunpack.c.h.b16 %v4832
    %v5947 = vunpack.c.l.b16 %v4833
    %v5948 = vunpack.c.h.b16 %v4833
    %v5949 = vunpack.c.l.b16 %v4834
    %v5950 = vunpack.c.h.b16 %v4834
    %v5951 = vunpack.c.l.b16 %v4835
    %v5952 = vunpack.c.h.b16 %v4835
    %v5953 = vunpack.c.l.b16 %v4836
    %v5954 = vunpack.c.h.b16 %v4836
    %v5955 = vunpack.c.l.b16 %v4837
    %v5956 = vunpack.c.h.b16 %v4837
    %v5957 = vunpack.c.l.b16 %v4838
    %v5958 = vunpack.c.h.b16 %v4838
    %v5959 = vunpack.c.l.b16 %v4839
    %v5960 = vunpack.c.h.b16 %v4839
    %v5961 = vunpack.c.l.b16 %v4840
    %v5962 = vunpack.c.h.b16 %v4840
    %v5963 = vunpack.c.l.b16 %v4841
    %v5964 = vunpack.c.h.b16 %v4841
    %v5965 = vunpack.c.l.b16 %v4842
    %v5966 = vunpack.c.h.b16 %v4842
    %v5967 = vunpack.c.l.b16 %v4843
    %v5968 = vunpack.c.h.b16 %v4843
    %v5969 = vunpack.c.l.b16 %v4844
    %v5970 = vunpack.c.h.b16 %v4844
    %v5971 = vunpack.c.l.b16 %v4845
    %v5972 = vunpack.c.h.b16 %v4845
    %v5973 = vunpack.c.l.b16 %v4846
    %v5974 = vunpack.c.h.b16 %v4846
    %v5975 = vunpack.c.l.b16 %v4847
    %v5976 = vunpack.c.h.b16 %v4847
    %v5977 = vunpack.c.l.b16 %v4848
    %v5978 = vunpack.c.h.b16 %v4848
    %v5979 = vunpack.c.l.b16 %v4849
    %v5980 = vunpack.c.h.b16 %v4849
    %v5981 = vunpack.c.l.b16 %v4850
    %v5982 = vunpack.c.h.b16 %v4850
    %v5983 = vunpack.c.l.b16 %v4851
    %v5984 = vunpack.c.h.b16 %v4851
    %v5985 = vunpack.c.l.b16 %v4852
    %v5986 = vunpack.c.h.b16 %v4852
    %v5987 = vunpack.c.l.b16 %v4853
    %v5988 = vunpack.c.h.b16 %v4853
    %v5989 = vunpack.c.l.b16 %v4854
    %v5990 = vunpack.c.h.b16 %v4854
    %v5991 = vunpack.c.l.b16 %v4855
    %v5992 = vunpack.c.h.b16 %v4855
    %v5993 = vunpack.c.l.b16 %v4856
    %v5994 = vunpack.c.h.b16 %v4856
    %v5995 = vunpack.c.l.b16 %v4857
    %v5996 = vunpack.c.h.b16 %v4857
    %v5997 = vunpack.c.l.b16 %v4858
    %v5998 = vunpack.c.h.b16 %v4858
    %v5999 = vunpack.c.l.b16 %v4859
    %v6000 = vunpack.c.h.b16 %v4859
    %v6001 = vunpack.c.l.b16 %v4860
    %v6002 = vunpack.c.h.b16 %v4860
    %v6003 = vunpack.c.l.b16 %v4861
    %v6004 = vunpack.c.h.b16 %v4861
    %v6005 = vunpack.c.l.b16 %v4862
    %v6006 = vunpack.c.h.b16 %v4862
    %v6007 = vunpack.c.l.b16 %v4863
    %v6008 = vunpack.c.h.b16 %v4863
    %v6009 = vunpack.c.l.b16 %v4864
    %v6010 = vunpack.c.h.b16 %v4864
    %v6011 = vunpack.c.l.b16 %v4865
    %v6012 = vunpack.c.h.b16 %v4865
    %v6013 = vunpack.c.l.b16 %v4866
    %v6014 = vunpack.c.h.b16 %v4866
    %v6015 = vunpack.c.l.b16 %v4867
    %v6016 = vunpack.c.h.b16 %v4867
    %v6017 = vunpack.c.l.b16 %v4868
    %v6018 = vunpack.c.h.b16 %v4868
    %v6019 = vunpack.c.l.b16 %v4869
    %v6020 = vunpack.c.h.b16 %v4869
    %v6021 = vunpack.c.l.b16 %v4870
    %v6022 = vunpack.c.h.b16 %v4870
    %v6023 = vunpack.c.l.b16 %v4871
    %v6024 = vunpack.c.h.b16 %v4871
    %v6025 = vunpack.c.l.b16 %v4872
    %v6026 = vunpack.c.h.b16 %v4872
    %v6027 = vunpack.c.l.b16 %v4873
    %v6028 = vunpack.c.h.b16 %v4873
    %v6029 = vunpack.c.l.b16 %v4874
    %v6030 = vunpack.c.h.b16 %v4874
    %v6031 = vunpack.c.l.b16 %v4875
    %v6032 = vunpack.c.h.b16 %v4875
    %v6033 = vunpack.c.l.b16 %v4876
    %v6034 = vunpack.c.h.b16 %v4876
    %v6035 = vunpack.c.l.b16 %v4877
    %v6036 = vunpack.c.h.b16 %v4877
    %v6037 = vunpack.c.l.b16 %v4878
    %v6038 = vunpack.c.h.b16 %v4878
    %v6039 = vunpack.c.l.b16 %v4879
    %v6040 = vunpack.c.h.b16 %v4879
    %v6041 = vunpack.c.l.b16 %v4880
    %v6042 = vunpack.c.h.b16 %v4880
    %v6043 = vunpack.c.l.b16 %v4881
    %v6044 = vunpack.c.h.b16 %v4881
    %v6045 = vunpack.c.l.b16 %v4882
    %v6046 = vunpack.c.h.b16 %v4882
    %v6047 = vunpack.c.l.b16 %v4883
    %v6048 = vunpack.c.h.b16 %v4883
    %v6049 = vunpack.c.l.b16 %v4884
    %v6050 = vunpack.c.h.b16 %v4884
    %v6051 = vunpack.c.l.b16 %v4885
    %v6052 = vunpack.c.h.b16 %v4885
    %v6053 = vunpack.c.l.b16 %v4886
    %v6054 = vunpack.c.h.b16 %v4886
    %v6055 = vunpack.c.l.b16 %v4887
    %v6056 = vunpack.c.h.b16 %v4887
    %v6057 = vunpack.c.l.b16 %v4888
    %v6058 = vunpack.c.h.b16 %v4888
    %v6059 = vunpack.c.l.b16 %v4889
    %v6060 = vunpack.c.h.b16 %v4889
    %v6061 = vunpack.c.l.b16 %v4890
    %v6062 = vunpack.c.h.b16 %v4890
    %v6063 = vunpack.c.l.b16 %v4891
    %v6064 = vunpack.c.h.b16 %v4891
    %v6065 = vunpack.c.l.b16 %v4892
    %v6066 = vunpack.c.h.b16 %v4892
    %v6067 = vpack.c.b16 %v5303, %v5299
    %v6068 = vpack.c.b16 %v5304, %v5300
    %v6069 = vpack.c.b16 %v5305, %v5301
    %v6070 = vpack.c.b16 %v5306, %v5302
    %v6071 = vpack.c.b16 %v5311, %v5307
    %v6072 = vpack.c.b16 %v5312, %v5308
    %v6073 = vpack.c.b16 %v5313, %v5309
    %v6074 = vpack.c.b16 %v5314, %v5310
    %v6075 = vpack.c.b16 %v5319, %v5315
    %v6076 = vpack.c.b16 %v5320, %v5316
    %v6077 = vpack.c.b16 %v5321, %v5317
    %v6078 = vpack.c.b16 %v5322, %v5318
    %v6079 = vpack.c.b16 %v5327, %v5323
    %v6080 = vpack.c.b16 %v5328, %v5324
    %v6081 = vpack.c.b16 %v5329, %v5325
    %v6082 = vpack.c.b16 %v5330, %v5326
    %v6083 = vpack.c.b16 %v5335, %v5331
    %v6084 = vpack.c.b16 %v5336, %v5332
    %v6085 = vpack.c.b16 %v5337, %v5333
    %v6086 = vpack.c.b16 %v5338, %v5334
    %v6087 = vpack.c.b16 %v5343, %v5339
    %v6088 = vpack.c.b16 %v5344, %v5340
    %v6089 = vpack.c.b16 %v5345, %v5341
    %v6090 = vpack.c.b16 %v5346, %v5342
    %v6091 = vpack.c.b16 %v5351, %v5347
    %v6092 = vpack.c.b16 %v5352, %v5348
    %v6093 = vpack.c.b16 %v5353, %v5349
    %v6094 = vpack.c.b16 %v5354, %v5350
    %v6095 = vpack.c.b16 %v5359, %v5355
    %v6096 = vpack.c.b16 %v5360, %v5356
    %v6097 = vpack.c.b16 %v5361, %v5357
    %v6098 = vpack.c.b16 %v5362, %v5358
    %v6099 = vpack.c.b16 %v5367, %v5363
    %v6100 = vpack.c.b16 %v5368, %v5364
    %v6101 = vpack.c.b16 %v5369, %v5365
    %v6102 = vpack.c.b16 %v5370, %v5366
    %v6103 = vpack.c.b16 %v5375, %v5371
    %v6104 = vpack.c.b16 %v5376, %v5372
    %v6105 = vpack.c.b16 %v5377, %v5373
    %v6106 = vpack.c.b16 %v5378, %v5374
    %v6107 = vpack.c.b16 %v5383, %v5379
    %v6108 = vpack.c.b16 %v5384, %v5380
    %v6109 = vpack.c.b16 %v5385, %v5381
    %v6110 = vpack.c.b16 %v5386, %v5382
    %v6111 = vpack.c.b16 %v5391, %v5387
    %v6112 = vpack.c.b16 %v5392, %v5388
    %v6113 = vpack.c.b16 %v5393, %v5389
    %v6114 = vpack.c.b16 %v5394, %v5390
    %v6115 = vpack.c.b16 %v5399, %v5395
    %v6116 = vpack.c.b16 %v5400, %v5396
    %v6117 = vpack.c.b16 %v5401, %v5397
    %v6118 = vpack.c.b16 %v5402, %v5398
    %v6119 = vpack.c.b16 %v5407, %v5403
    %v6120 = vpack.c.b16 %v5408, %v5404
    %v6121 = vpack.c.b16 %v5409, %v5405
    %v6122 = vpack.c.b16 %v5410, %v5406
    %v6123 = vpack.c.b16 %v5415, %v5411
    %v6124 = vpack.c.b16 %v5416, %v5412
    %v6125 = vpack.c.b16 %v5417, %v5413
    %v6126 = vpack.c.b16 %v5418, %v5414
    %v6127 = vpack.c.b16 %v5423, %v5419
    %v6128 = vpack.c.b16 %v5424, %v5420
    %v6129 = vpack.c.b16 %v5425, %v5421
    %v6130 = vpack.c.b16 %v5426, %v5422
    %v6131 = vpack.c.b16 %v5431, %v5427
    %v6132 = vpack.c.b16 %v5432, %v5428
    %v6133 = vpack.c.b16 %v5433, %v5429
    %v6134 = vpack.c.b16 %v5434, %v5430
    %v6135 = vpack.c.b16 %v5439, %v5435
    %v6136 = vpack.c.b16 %v5440, %v5436
    %v6137 = vpack.c.b16 %v5441, %v5437
    %v6138 = vpack.c.b16 %v5442, %v5438
    %v6139 = vpack.c.b16 %v5447, %v5443
    %v6140 = vpack.c.b16 %v5448, %v5444
    %v6141 = vpack.c.b16 %v5449, %v5445
    %v6142 = vpack.c.b16 %v5450, %v5446
    %v6143 = vpack.c.b16 %v5455, %v5451
    %v6144 = vpack.c.b16 %v5456, %v5452
    %v6145 = vpack.c.b16 %v5457, %v5453
    %v6146 = vpack.c.b16 %v5458, %v5454
    %v6147 = vpack.c.b16 %v5463, %v5459
    %v6148 = vpack.c.b16 %v5464, %v5460
    %v6149 = vpack.c.b16 %v5465, %v5461
    %v6150 = vpack.c.b16 %v5466, %v5462
    %v6151 = vpack.c.b16 %v5471, %v5467
    %v6152 = vpack.c.b16 %v5472, %v5468
    %v6153 = vpack.c.b16 %v5473, %v5469
    %v6154 = vpack.c.b16 %v5474, %v5470
    %v6155 = vpack.c.b16 %v5479, %v5475
    %v6156 = vpack.c.b16 %v5480, %v5476
    %v6157 = vpack.c.b16 %v5481, %v5477
    %v6158 = vpack.c.b16 %v5482, %v5478
    %v6159 = vpack.c.b16 %v5487, %v5483
    %v6160 = vpack.c.b16 %v5488, %v5484
    %v6161 = vpack.c.b16 %v5489, %v5485
    %v6162 = vpack.c.b16 %v5490, %v5486
    %v6163 = vpack.c.b16 %v5495, %v5491
    %v6164 = vpack.c.b16 %v5496, %v5492
    %v6165 = vpack.c.b16 %v5497, %v5493
    %v6166 = vpack.c.b16 %v5498, %v5494
    %v6167 = vpack.c.b16 %v5503, %v5499
    %v6168 = vpack.c.b16 %v5504, %v5500
    %v6169 = vpack.c.b16 %v5505, %v5501
    %v6170 = vpack.c.b16 %v5506, %v5502
    %v6171 = vpack.c.b16 %v5511, %v5507
    %v6172 = vpack.c.b16 %v5512, %v5508
    %v6173 = vpack.c.b16 %v5513, %v5509
    %v6174 = vpack.c.b16 %v5514, %v5510
    %v6175 = vpack.c.b16 %v5519, %v5515
    %v6176 = vpack.c.b16 %v5520, %v5516
    %v6177 = vpack.c.b16 %v5521, %v5517
    %v6178 = vpack.c.b16 %v5522, %v5518
    %v6179 = vpack.c.b16 %v5527, %v5523
    %v6180 = vpack.c.b16 %v5528, %v5524
    %v6181 = vpack.c.b16 %v5529, %v5525
    %v6182 = vpack.c.b16 %v5530, %v5526
    %v6183 = vpack.c.b16 %v5535, %v5531
    %v6184 = vpack.c.b16 %v5536, %v5532
    %v6185 = vpack.c.b16 %v5537, %v5533
    %v6186 = vpack.c.b16 %v5538, %v5534
    %v6187 = vpack.c.b16 %v5543, %v5539
    %v6188 = vpack.c.b16 %v5544, %v5540
    %v6189 = vpack.c.b16 %v5545, %v5541
    %v6190 = vpack.c.b16 %v5546, %v5542
    %v6191 = vpack.c.b16 %v5551, %v5547
    %v6192 = vpack.c.b16 %v5552, %v5548
    %v6193 = vpack.c.b16 %v5553, %v5549
    %v6194 = vpack.c.b16 %v5554, %v5550
    %v6195 = vpack.c.b16 %v5559, %v5555
    %v6196 = vpack.c.b16 %v5560, %v5556
    %v6197 = vpack.c.b16 %v5561, %v5557
    %v6198 = vpack.c.b16 %v5562, %v5558
    %v6199 = vpack.c.b16 %v5567, %v5563
    %v6200 = vpack.c.b16 %v5568, %v5564
    %v6201 = vpack.c.b16 %v5569, %v5565
    %v6202 = vpack.c.b16 %v5570, %v5566
    %v6203 = vpack.c.b16 %v5575, %v5571
    %v6204 = vpack.c.b16 %v5576, %v5572
    %v6205 = vpack.c.b16 %v5577, %v5573
    %v6206 = vpack.c.b16 %v5578, %v5574
    %v6207 = vpack.c.b16 %v5583, %v5579
    %v6208 = vpack.c.b16 %v5584, %v5580
    %v6209 = vpack.c.b16 %v5585, %v5581
    %v6210 = vpack.c.b16 %v5586, %v5582
    %v6211 = vpack.c.b16 %v5591, %v5587
    %v6212 = vpack.c.b16 %v5592, %v5588
    %v6213 = vpack.c.b16 %v5593, %v5589
    %v6214 = vpack.c.b16 %v5594, %v5590
    %v6215 = vpack.c.b16 %v5599, %v5595
    %v6216 = vpack.c.b16 %v5600, %v5596
    %v6217 = vpack.c.b16 %v5601, %v5597
    %v6218 = vpack.c.b16 %v5602, %v5598
    %v6219 = vpack.c.b16 %v5607, %v5603
    %v6220 = vpack.c.b16 %v5608, %v5604
    %v6221 = vpack.c.b16 %v5609, %v5605
    %v6222 = vpack.c.b16 %v5610, %v5606
    %v6223 = vpack.c.b16 %v5615, %v5611
    %v6224 = vpack.c.b16 %v5616, %v5612
    %v6225 = vpack.c.b16 %v5617, %v5613
    %v6226 = vpack.c.b16 %v5618, %v5614
    %v6227 = vpack.c.b16 %v5623, %v5619
    %v6228 = vpack.c.b16 %v5624, %v5620
    %v6229 = vpack.c.b16 %v5625, %v5621
    %v6230 = vpack.c.b16 %v5626, %v5622
    %v6231 = vpack.c.b16 %v5631, %v5627
    %v6232 = vpack.c.b16 %v5632, %v5628
    %v6233 = vpack.c.b16 %v5633, %v5629
    %v6234 = vpack.c.b16 %v5634, %v5630
    %v6235 = vpack.c.b16 %v5639, %v5635
    %v6236 = vpack.c.b16 %v5640, %v5636
    %v6237 = vpack.c.b16 %v5641, %v5637
    %v6238 = vpack.c.b16 %v5642, %v5638
    %v6239 = vpack.c.b16 %v5647, %v5643
    %v6240 = vpack.c.b16 %v5648, %v5644
    %v6241 = vpack.c.b16 %v5649, %v5645
    %v6242 = vpack.c.b16 %v5650, %v5646
    %v6243 = vpack.c.b16 %v5655, %v5651
    %v6244 = vpack.c.b16 %v5656, %v5652
    %v6245 = vpack.c.b16 %v5657, %v5653
    %v6246 = vpack.c.b16 %v5658, %v5654
    %v6247 = vpack.c.b16 %v5663, %v5659
    %v6248 = vpack.c.b16 %v5664, %v5660
    %v6249 = vpack.c.b16 %v5665, %v5661
    %v6250 = vpack.c.b16 %v5666, %v5662
    %v6251 = vpack.c.b16 %v5671, %v5667
    %v6252 = vpack.c.b16 %v5672, %v5668
    %v6253 = vpack.c.b16 %v5673, %v5669
    %v6254 = vpack.c.b16 %v5674, %v5670
    %v6255 = vpack.c.b16 %v5679, %v5675
    %v6256 = vpack.c.b16 %v5680, %v5676
    %v6257 = vpack.c.b16 %v5681, %v5677
    %v6258 = vpack.c.b16 %v5682, %v5678
    %v6259 = vpack.c.b16 %v5687, %v5683
    %v6260 = vpack.c.b16 %v5688, %v5684
    %v6261 = vpack.c.b16 %v5689, %v5685
    %v6262 = vpack.c.b16 %v5690, %v5686
    %v6263 = vpack.c.b16 %v5695, %v5691
    %v6264 = vpack.c.b16 %v5696, %v5692
    %v6265 = vpack.c.b16 %v5697, %v5693
    %v6266 = vpack.c.b16 %v5698, %v5694
    %v6267 = vpack.c.b16 %v5703, %v5699
    %v6268 = vpack.c.b16 %v5704, %v5700
    %v6269 = vpack.c.b16 %v5705, %v5701
    %v6270 = vpack.c.b16 %v5706, %v5702
    %v6271 = vpack.c.b16 %v5711, %v5707
    %v6272 = vpack.c.b16 %v5712, %v5708
    %v6273 = vpack.c.b16 %v5713, %v5709
    %v6274 = vpack.c.b16 %v5714, %v5710
    %v6275 = vpack.c.b16 %v5719, %v5715
    %v6276 = vpack.c.b16 %v5720, %v5716
    %v6277 = vpack.c.b16 %v5721, %v5717
    %v6278 = vpack.c.b16 %v5722, %v5718
    %v6279 = vpack.c.b16 %v5727, %v5723
    %v6280 = vpack.c.b16 %v5728, %v5724
    %v6281 = vpack.c.b16 %v5729, %v5725
    %v6282 = vpack.c.b16 %v5730, %v5726
    %v6283 = vpack.c.b16 %v5735, %v5731
    %v6284 = vpack.c.b16 %v5736, %v5732
    %v6285 = vpack.c.b16 %v5737, %v5733
    %v6286 = vpack.c.b16 %v5738, %v5734
    %v6287 = vpack.c.b16 %v5743, %v5739
    %v6288 = vpack.c.b16 %v5744, %v5740
    %v6289 = vpack.c.b16 %v5745, %v5741
    %v6290 = vpack.c.b16 %v5746, %v5742
    %v6291 = vpack.c.b16 %v5751, %v5747
    %v6292 = vpack.c.b16 %v5752, %v5748
    %v6293 = vpack.c.b16 %v5753, %v5749
    %v6294 = vpack.c.b16 %v5754, %v5750
    %v6295 = vpack.c.b16 %v5759, %v5755
    %v6296 = vpack.c.b16 %v5760, %v5756
    %v6297 = vpack.c.b16 %v5761, %v5757
    %v6298 = vpack.c.b16 %v5762, %v5758
    %v6299 = vpack.c.b16 %v5767, %v5763
    %v6300 = vpack.c.b16 %v5768, %v5764
    %v6301 = vpack.c.b16 %v5769, %v5765
    %v6302 = vpack.c.b16 %v5770, %v5766
    %v6303 = vpack.c.b16 %v5775, %v5771
    %v6304 = vpack.c.b16 %v5776, %v5772
    %v6305 = vpack.c.b16 %v5777, %v5773
    %v6306 = vpack.c.b16 %v5778, %v5774
    %v6307 = vpack.c.b16 %v5783, %v5779
    %v6308 = vpack.c.b16 %v5784, %v5780
    %v6309 = vpack.c.b16 %v5785, %v5781
    %v6310 = vpack.c.b16 %v5786, %v5782
    %v6311 = vpack.c.b16 %v5791, %v5787
    %v6312 = vpack.c.b16 %v5792, %v5788
    %v6313 = vpack.c.b16 %v5793, %v5789
    %v6314 = vpack.c.b16 %v5794, %v5790
    %v6315 = vpack.c.b16 %v5799, %v5795
    %v6316 = vpack.c.b16 %v5800, %v5796
    %v6317 = vpack.c.b16 %v5801, %v5797
    %v6318 = vpack.c.b16 %v5802, %v5798
    %v6319 = vpack.c.b16 %v5807, %v5803
    %v6320 = vpack.c.b16 %v5808, %v5804
    %v6321 = vpack.c.b16 %v5809, %v5805
    %v6322 = vpack.c.b16 %v5810, %v5806
    %v6323 = vpack.c.b16 %v5815, %v5811
    %v6324 = vpack.c.b16 %v5816, %v5812
    %v6325 = vpack.c.b16 %v5817, %v5813
    %v6326 = vpack.c.b16 %v5818, %v5814
    %v6327 = vpack.c.b16 %v5823, %v5819
    %v6328 = vpack.c.b16 %v5824, %v5820
    %v6329 = vpack.c.b16 %v5825, %v5821
    %v6330 = vpack.c.b16 %v5826, %v5822
    %v6331 = vpack.c.b16 %v5831, %v5827
    %v6332 = vpack.c.b16 %v5832, %v5828
    %v6333 = vpack.c.b16 %v5833, %v5829
    %v6334 = vpack.c.b16 %v5834, %v5830
    %v6335 = vpack.c.b16 %v5839, %v5835
    %v6336 = vpack.c.b16 %v5840, %v5836
    %v6337 = vpack.c.b16 %v5841, %v5837
    %v6338 = vpack.c.b16 %v5842, %v5838
    %v6339 = vpack.c.b16 %v5847, %v5843
    %v6340 = vpack.c.b16 %v5848, %v5844
    %v6341 = vpack.c.b16 %v5849, %v5845
    %v6342 = vpack.c.b16 %v5850, %v5846
    %v6343 = vpack.c.b16 %v5855, %v5851
    %v6344 = vpack.c.b16 %v5856, %v5852
    %v6345 = vpack.c.b16 %v5857, %v5853
    %v6346 = vpack.c.b16 %v5858, %v5854
    %v6347 = vpack.c.b16 %v5863, %v5859
    %v6348 = vpack.c.b16 %v5864, %v5860
    %v6349 = vpack.c.b16 %v5865, %v5861
    %v6350 = vpack.c.b16 %v5866, %v5862
    %v6351 = vpack.c.b16 %v5871, %v5867
    %v6352 = vpack.c.b16 %v5872, %v5868
    %v6353 = vpack.c.b16 %v5873, %v5869
    %v6354 = vpack.c.b16 %v5874, %v5870
    %v6355 = vpack.c.b16 %v5879, %v5875
    %v6356 = vpack.c.b16 %v5880, %v5876
    %v6357 = vpack.c.b16 %v5881, %v5877
    %v6358 = vpack.c.b16 %v5882, %v5878
    %v6359 = vpack.c.b16 %v5887, %v5883
    %v6360 = vpack.c.b16 %v5888, %v5884
    %v6361 = vpack.c.b16 %v5889, %v5885
    %v6362 = vpack.c.b16 %v5890, %v5886
    %v6363 = vpack.c.b16 %v5895, %v5891
    %v6364 = vpack.c.b16 %v5896, %v5892
    %v6365 = vpack.c.b16 %v5897, %v5893
    %v6366 = vpack.c.b16 %v5898, %v5894
    %v6367 = vpack.c.b16 %v5903, %v5899
    %v6368 = vpack.c.b16 %v5904, %v5900
    %v6369 = vpack.c.b16 %v5905, %v5901
    %v6370 = vpack.c.b16 %v5906, %v5902
    %v6371 = vpack.c.b16 %v5911, %v5907
    %v6372 = vpack.c.b16 %v5912, %v5908
    %v6373 = vpack.c.b16 %v5913, %v5909
    %v6374 = vpack.c.b16 %v5914, %v5910
    %v6375 = vpack.c.b16 %v5919, %v5915
    %v6376 = vpack.c.b16 %v5920, %v5916
    %v6377 = vpack.c.b16 %v5921, %v5917
    %v6378 = vpack.c.b16 %v5922, %v5918
    %v6379 = vpack.c.b16 %v5927, %v5923
    %v6380 = vpack.c.b16 %v5928, %v5924
    %v6381 = vpack.c.b16 %v5929, %v5925
    %v6382 = vpack.c.b16 %v5930, %v5926
    %v6383 = vpack.c.b16 %v5935, %v5931
    %v6384 = vpack.c.b16 %v5936, %v5932
    %v6385 = vpack.c.b16 %v5937, %v5933
    %v6386 = vpack.c.b16 %v5938, %v5934
    %v6387 = vpack.c.b16 %v5943, %v5939
    %v6388 = vpack.c.b16 %v5944, %v5940
    %v6389 = vpack.c.b16 %v5945, %v5941
    %v6390 = vpack.c.b16 %v5946, %v5942
    %v6391 = vpack.c.b16 %v5951, %v5947
    %v6392 = vpack.c.b16 %v5952, %v5948
    %v6393 = vpack.c.b16 %v5953, %v5949
    %v6394 = vpack.c.b16 %v5954, %v5950
    %v6395 = vpack.c.b16 %v5959, %v5955
    %v6396 = vpack.c.b16 %v5960, %v5956
    %v6397 = vpack.c.b16 %v5961, %v5957
    %v6398 = vpack.c.b16 %v5962, %v5958
    %v6399 = vpack.c.b16 %v5967, %v5963
    %v6400 = vpack.c.b16 %v5968, %v5964
    %v6401 = vpack.c.b16 %v5969, %v5965
    %v6402 = vpack.c.b16 %v5970, %v5966
    %v6403 = vpack.c.b16 %v5975, %v5971
    %v6404 = vpack.c.b16 %v5976, %v5972
    %v6405 = vpack.c.b16 %v5977, %v5973
    %v6406 = vpack.c.b16 %v5978, %v5974
    %v6407 = vpack.c.b16 %v5983, %v5979
    %v6408 = vpack.c.b16 %v5984, %v5980
    %v6409 = vpack.c.b16 %v5985, %v5981
    %v6410 = vpack.c.b16 %v5986, %v5982
    %v6411 = vpack.c.b16 %v5991, %v5987
    %v6412 = vpack.c.b16 %v5992, %v5988
    %v6413 = vpack.c.b16 %v5993, %v5989
    %v6414 = vpack.c.b16 %v5994, %v5990
    %v6415 = vpack.c.b16 %v5999, %v5995
    %v6416 = vpack.c.b16 %v6000, %v5996
    %v6417 = vpack.c.b16 %v6001, %v5997
    %v6418 = vpack.c.b16 %v6002, %v5998
    %v6419 = vpack.c.b16 %v6007, %v6003
    %v6420 = vpack.c.b16 %v6008, %v6004
    %v6421 = vpack.c.b16 %v6009, %v6005
    %v6422 = vpack.c.b16 %v6010, %v6006
    %v6423 = vpack.c.b16 %v6015, %v6011
    %v6424 = vpack.c.b16 %v6016, %v6012
    %v6425 = vpack.c.b16 %v6017, %v6013
    %v6426 = vpack.c.b16 %v6018, %v6014
    %v6427 = vpack.c.b16 %v6023, %v6019
    %v6428 = vpack.c.b16 %v6024, %v6020
    %v6429 = vpack.c.b16 %v6025, %v6021
    %v6430 = vpack.c.b16 %v6026, %v6022
    %v6431 = vpack.c.b16 %v6031, %v6027
    %v6432 = vpack.c.b16 %v6032, %v6028
    %v6433 = vpack.c.b16 %v6033, %v6029
    %v6434 = vpack.c.b16 %v6034, %v6030
    %v6435 = vpack.c.b16 %v6039, %v6035
    %v6436 = vpack.c.b16 %v6040, %v6036
    %v6437 = vpack.c.b16 %v6041, %v6037
    %v6438 = vpack.c.b16 %v6042, %v6038
    %v6439 = vpack.c.b16 %v6047, %v6043
    %v6440 = vpack.c.b16 %v6048, %v6044
    %v6441 = vpack.c.b16 %v6049, %v6045
    %v6442 = vpack.c.b16 %v6050, %v6046
    %v6443 = vpack.c.b16 %v6055, %v6051
    %v6444 = vpack.c.b16 %v6056, %v6052
    %v6445 = vpack.c.b16 %v6057, %v6053
    %v6446 = vpack.c.b16 %v6058, %v6054
    %v6447 = vpack.c.b16 %v6063, %v6059
    %v6448 = vpack.c.b16 %v6064, %v6060
    %v6449 = vpack.c.b16 %v6065, %v6061
    %v6450 = vpack.c.b16 %v6066, %v6062
    %6835 = vmatprep.subr.bf16.mxu0 %v6096
    %6836 = vmatpush1.bf16.msra.mxu0 %v6095
    %6837 = vmatprep.subr.bf16.mxu0 %v6092
    %6838 = vmatpush1.bf16.msra.mxu0 %v6091
    %6839 = vmatprep.subr.bf16.mxu0 %v6088
    %6840 = vmatpush1.bf16.msra.mxu0 %v6087
    %6841 = vmatprep.subr.bf16.mxu0 %v6084
    %6842 = vmatpush1.bf16.msra.mxu0 %v6083
    %6843 = vmatprep.subr.bf16.mxu0 %v6080
    %6844 = vmatpush1.bf16.msra.mxu0 %v6079
    %6845 = vmatprep.subr.bf16.mxu0 %v6076
    %6846 = vmatpush1.bf16.msra.mxu0 %v6075
    %6847 = vmatprep.subr.bf16.mxu0 %v6072
    %6848 = vmatpush1.bf16.msra.mxu0 %v6071
    %6849 = vmatprep.subr.bf16.mxu0 %v6068
    %6850 = vmatpush1.bf16.msra.mxu0 %v6067
    %6851 = vmatprep.subr.bf16.mxu0 %v6128
    %6852 = vmatpush2.bf16.msra.mxu0 %v6127
    %6853 = vmatprep.subr.bf16.mxu0 %v6124
    %6854 = vmatpush2.bf16.msra.mxu0 %v6123
    %6855 = vmatprep.subr.bf16.mxu0 %v6120
    %6856 = vmatpush2.bf16.msra.mxu0 %v6119
    %6857 = vmatprep.subr.bf16.mxu0 %v6116
    %6858 = vmatpush2.bf16.msra.mxu0 %v6115
    %6859 = vmatprep.subr.bf16.mxu0 %v6112
    %6860 = vmatpush2.bf16.msra.mxu0 %v6111
    %6861 = vmatprep.subr.bf16.mxu0 %v6108
    %6862 = vmatpush2.bf16.msra.mxu0 %v6107
    %6863 = vmatprep.subr.bf16.mxu0 %v6104
    %6864 = vmatpush2.bf16.msra.mxu0 %v6103
    %6865 = vmatprep.subr.bf16.mxu0 %v6100
    %6866 = vmatpush2.bf16.msra.mxu0 %v6099
    %6867 = vmatprep.mubr.bf16.mxu0 %v4486
    %6868 = vmatmul.mubr.bf16.gmra.mxu0 %v4485
    %v6869 = vpop.f32.mrf.mxu0
    %v6870 = vadd.f32 %v4898, %v6869
    %v6871 = vpop.f32.mrf.mxu0
    %v6872 = vadd.f32 %v4902, %v6871
    %v6873 = vpop.f32.mrf.mxu0
    %v6874 = vadd.f32 %v4898, %v6873
    %v6875 = vpop.f32.mrf.mxu0
    %v6876 = vadd.f32 %v4902, %v6875
    %6877 = vmatprep.mubr.bf16.mxu0 %v4498
    %6878 = vmatmul.mubr.bf16.gmra.mxu0 %v4497
    %v6879 = vpop.f32.mrf.mxu0
    %v6880 = vadd.f32 %v4898, %v6879
    %v6881 = vpop.f32.mrf.mxu0
    %v6882 = vadd.f32 %v4902, %v6881
    %v6883 = vpop.f32.mrf.mxu0
    %v6884 = vadd.f32 %v4898, %v6883
    %v6885 = vpop.f32.mrf.mxu0
    %v6886 = vadd.f32 %v4902, %v6885
    %6887 = vdwg.mxu0
    %6888 = vmatprep.subr.bf16.mxu0 %v6160
    %6889 = vmatpush1.bf16.msra.mxu0 %v6159
    %6890 = vmatprep.subr.bf16.mxu0 %v6156
    %6891 = vmatpush1.bf16.msra.mxu0 %v6155
    %6892 = vmatprep.subr.bf16.mxu0 %v6152
    %6893 = vmatpush1.bf16.msra.mxu0 %v6151
    %6894 = vmatprep.subr.bf16.mxu0 %v6148
    %6895 = vmatpush1.bf16.msra.mxu0 %v6147
    %6896 = vmatprep.subr.bf16.mxu0 %v6144
    %6897 = vmatpush1.bf16.msra.mxu0 %v6143
    %6898 = vmatprep.subr.bf16.mxu0 %v6140
    %6899 = vmatpush1.bf16.msra.mxu0 %v6139
    %6900 = vmatprep.subr.bf16.mxu0 %v6136
    %6901 = vmatpush1.bf16.msra.mxu0 %v6135
    %6902 = vmatprep.subr.bf16.mxu0 %v6132
    %6903 = vmatpush1.bf16.msra.mxu0 %v6131
    %6904 = vmatprep.subr.bf16.mxu0 %v6192
    %6905 = vmatpush2.bf16.msra.mxu0 %v6191
    %6906 = vmatprep.subr.bf16.mxu0 %v6188
    %6907 = vmatpush2.bf16.msra.mxu0 %v6187
    %6908 = vmatprep.subr.bf16.mxu0 %v6184
    %6909 = vmatpush2.bf16.msra.mxu0 %v6183
    %6910 = vmatprep.subr.bf16.mxu0 %v6180
    %6911 = vmatpush2.bf16.msra.mxu0 %v6179
    %6912 = vmatprep.subr.bf16.mxu0 %v6176
    %6913 = vmatpush2.bf16.msra.mxu0 %v6175
    %6914 = vmatprep.subr.bf16.mxu0 %v6172
    %6915 = vmatpush2.bf16.msra.mxu0 %v6171
    %6916 = vmatprep.subr.bf16.mxu0 %v6168
    %6917 = vmatpush2.bf16.msra.mxu0 %v6167
    %6918 = vmatprep.subr.bf16.mxu0 %v6164
    %6919 = vmatpush2.bf16.msra.mxu0 %v6163
    %6920 = vmatprep.mubr.bf16.mxu0 %v4488
    %6921 = vmatmul.mubr.bf16.gmra.mxu0 %v4487
    %v6922 = vpop.f32.mrf.mxu0
    %v6923 = vadd.f32 %v6870, %v6922
    %v6924 = vpop.f32.mrf.mxu0
    %v6925 = vadd.f32 %v6872, %v6924
    %v6926 = vpop.f32.mrf.mxu0
    %v6927 = vadd.f32 %v6874, %v6926
    %v6928 = vpop.f32.mrf.mxu0
    %v6929 = vadd.f32 %v6876, %v6928
    %6930 = vmatprep.mubr.bf16.mxu0 %v4500
    %6931 = vmatmul.mubr.bf16.gmra.mxu0 %v4499
    %v6932 = vpop.f32.mrf.mxu0
    %v6933 = vadd.f32 %v6880, %v6932
    %v6934 = vpop.f32.mrf.mxu0
    %v6935 = vadd.f32 %v6882, %v6934
    %v6936 = vpop.f32.mrf.mxu0
    %v6937 = vadd.f32 %v6884, %v6936
    %v6938 = vpop.f32.mrf.mxu0
    %v6939 = vadd.f32 %v6886, %v6938
    %6940 = vdwg.mxu0
    %6941 = vmatprep.subr.bf16.mxu0 %v6224
    %6942 = vmatpush1.bf16.msra.mxu0 %v6223
    %6943 = vmatprep.subr.bf16.mxu0 %v6220
    %6944 = vmatpush1.bf16.msra.mxu0 %v6219
    %6945 = vmatprep.subr.bf16.mxu0 %v6216
    %6946 = vmatpush1.bf16.msra.mxu0 %v6215
    %6947 = vmatprep.subr.bf16.mxu0 %v6212
    %6948 = vmatpush1.bf16.msra.mxu0 %v6211
    %6949 = vmatprep.subr.bf16.mxu0 %v6208
    %6950 = vmatpush1.bf16.msra.mxu0 %v6207
    %6951 = vmatprep.subr.bf16.mxu0 %v6204
    %6952 = vmatpush1.bf16.msra.mxu0 %v6203
    %6953 = vmatprep.subr.bf16.mxu0 %v6200
    %6954 = vmatpush1.bf16.msra.mxu0 %v6199
    %6955 = vmatprep.subr.bf16.mxu0 %v6196
    %6956 = vmatpush1.bf16.msra.mxu0 %v6195
    %6957 = vmatprep.subr.bf16.mxu0 %v6256
    %6958 = vmatpush2.bf16.msra.mxu0 %v6255
    %6959 = vmatprep.subr.bf16.mxu0 %v6252
    %6960 = vmatpush2.bf16.msra.mxu0 %v6251
    %6961 = vmatprep.subr.bf16.mxu0 %v6248
    %6962 = vmatpush2.bf16.msra.mxu0 %v6247
    %6963 = vmatprep.subr.bf16.mxu0 %v6244
    %6964 = vmatpush2.bf16.msra.mxu0 %v6243
    %6965 = vmatprep.subr.bf16.mxu0 %v6240
    %6966 = vmatpush2.bf16.msra.mxu0 %v6239
    %6967 = vmatprep.subr.bf16.mxu0 %v6236
    %6968 = vmatpush2.bf16.msra.mxu0 %v6235
    %6969 = vmatprep.subr.bf16.mxu0 %v6232
    %6970 = vmatpush2.bf16.msra.mxu0 %v6231
    %6971 = vmatprep.subr.bf16.mxu0 %v6228
    %6972 = vmatpush2.bf16.msra.mxu0 %v6227
    %6973 = vmatprep.mubr.bf16.mxu0 %v4490
    %6974 = vmatmul.mubr.bf16.gmra.mxu0 %v4489
    %v6975 = vpop.f32.mrf.mxu0
    %v6976 = vadd.f32 %v6923, %v6975
    %v6977 = vpop.f32.mrf.mxu0
    %v6978 = vadd.f32 %v6925, %v6977
    %v6979 = vpop.f32.mrf.mxu0
    %v6980 = vadd.f32 %v6927, %v6979
    %v6981 = vpop.f32.mrf.mxu0
    %v6982 = vadd.f32 %v6929, %v6981
    %6983 = vmatprep.mubr.bf16.mxu0 %v4502
    %6984 = vmatmul.mubr.bf16.gmra.mxu0 %v4501
    %v6985 = vpop.f32.mrf.mxu0
    %v6986 = vadd.f32 %v6933, %v6985
    %v6987 = vpop.f32.mrf.mxu0
    %v6988 = vadd.f32 %v6935, %v6987
    %v6989 = vpop.f32.mrf.mxu0
    %v6990 = vadd.f32 %v6937, %v6989
    %v6991 = vpop.f32.mrf.mxu0
    %v6992 = vadd.f32 %v6939, %v6991
    %6993 = vdwg.mxu0
    %6994 = vmatprep.subr.bf16.mxu0 %v6288
    %6995 = vmatpush1.bf16.msra.mxu0 %v6287
    %6996 = vmatprep.subr.bf16.mxu0 %v6284
    %6997 = vmatpush1.bf16.msra.mxu0 %v6283
    %6998 = vmatprep.subr.bf16.mxu0 %v6280
    %6999 = vmatpush1.bf16.msra.mxu0 %v6279
    %7000 = vmatprep.subr.bf16.mxu0 %v6276
    %7001 = vmatpush1.bf16.msra.mxu0 %v6275
    %7002 = vmatprep.subr.bf16.mxu0 %v6272
    %7003 = vmatpush1.bf16.msra.mxu0 %v6271
    %7004 = vmatprep.subr.bf16.mxu0 %v6268
    %7005 = vmatpush1.bf16.msra.mxu0 %v6267
    %7006 = vmatprep.subr.bf16.mxu0 %v6264
    %7007 = vmatpush1.bf16.msra.mxu0 %v6263
    %7008 = vmatprep.subr.bf16.mxu0 %v6260
    %7009 = vmatpush1.bf16.msra.mxu0 %v6259
    %7010 = vmatprep.subr.bf16.mxu0 %v6320
    %7011 = vmatpush2.bf16.msra.mxu0 %v6319
    %7012 = vmatprep.subr.bf16.mxu0 %v6316
    %7013 = vmatpush2.bf16.msra.mxu0 %v6315
    %7014 = vmatprep.subr.bf16.mxu0 %v6312
    %7015 = vmatpush2.bf16.msra.mxu0 %v6311
    %7016 = vmatprep.subr.bf16.mxu0 %v6308
    %7017 = vmatpush2.bf16.msra.mxu0 %v6307
    %7018 = vmatprep.subr.bf16.mxu0 %v6304
    %7019 = vmatpush2.bf16.msra.mxu0 %v6303
    %7020 = vmatprep.subr.bf16.mxu0 %v6300
    %7021 = vmatpush2.bf16.msra.mxu0 %v6299
    %7022 = vmatprep.subr.bf16.mxu0 %v6296
    %7023 = vmatpush2.bf16.msra.mxu0 %v6295
    %7024 = vmatprep.subr.bf16.mxu0 %v6292
    %7025 = vmatpush2.bf16.msra.mxu0 %v6291
    %7026 = vmatprep.mubr.bf16.mxu0 %v4492
    %7027 = vmatmul.mubr.bf16.gmra.mxu0 %v4491
    %v7028 = vpop.f32.mrf.mxu0
    %v7029 = vadd.f32 %v6976, %v7028
    %v7030 = vpop.f32.mrf.mxu0
    %v7031 = vadd.f32 %v6978, %v7030
    %v7032 = vpop.f32.mrf.mxu0
    %v7033 = vadd.f32 %v6980, %v7032
    %v7034 = vpop.f32.mrf.mxu0
    %v7035 = vadd.f32 %v6982, %v7034
    %7036 = vmatprep.mubr.bf16.mxu0 %v4504
    %7037 = vmatmul.mubr.bf16.gmra.mxu0 %v4503
    %v7038 = vpop.f32.mrf.mxu0
    %v7039 = vadd.f32 %v6986, %v7038
    %v7040 = vpop.f32.mrf.mxu0
    %v7041 = vadd.f32 %v6988, %v7040
    %v7042 = vpop.f32.mrf.mxu0
    %v7043 = vadd.f32 %v6990, %v7042
    %v7044 = vpop.f32.mrf.mxu0
    %v7045 = vadd.f32 %v6992, %v7044
    %7046 = vdwg.mxu0
    %7047 = vmatprep.subr.bf16.mxu0 %v6352
    %7048 = vmatpush1.bf16.msra.mxu0 %v6351
    %7049 = vmatprep.subr.bf16.mxu0 %v6348
    %7050 = vmatpush1.bf16.msra.mxu0 %v6347
    %7051 = vmatprep.subr.bf16.mxu0 %v6344
    %7052 = vmatpush1.bf16.msra.mxu0 %v6343
    %7053 = vmatprep.subr.bf16.mxu0 %v6340
    %7054 = vmatpush1.bf16.msra.mxu0 %v6339
    %7055 = vmatprep.subr.bf16.mxu0 %v6336
    %7056 = vmatpush1.bf16.msra.mxu0 %v6335
    %7057 = vmatprep.subr.bf16.mxu0 %v6332
    %7058 = vmatpush1.bf16.msra.mxu0 %v6331
    %7059 = vmatprep.subr.bf16.mxu0 %v6328
    %7060 = vmatpush1.bf16.msra.mxu0 %v6327
    %7061 = vmatprep.subr.bf16.mxu0 %v6324
    %7062 = vmatpush1.bf16.msra.mxu0 %v6323
    %7063 = vmatprep.subr.bf16.mxu0 %v6384
    %7064 = vmatpush2.bf16.msra.mxu0 %v6383
    %7065 = vmatprep.subr.bf16.mxu0 %v6380
    %7066 = vmatpush2.bf16.msra.mxu0 %v6379
    %7067 = vmatprep.subr.bf16.mxu0 %v6376
    %7068 = vmatpush2.bf16.msra.mxu0 %v6375
    %7069 = vmatprep.subr.bf16.mxu0 %v6372
    %7070 = vmatpush2.bf16.msra.mxu0 %v6371
    %7071 = vmatprep.subr.bf16.mxu0 %v6368
    %7072 = vmatpush2.bf16.msra.mxu0 %v6367
    %7073 = vmatprep.subr.bf16.mxu0 %v6364
    %7074 = vmatpush2.bf16.msra.mxu0 %v6363
    %7075 = vmatprep.subr.bf16.mxu0 %v6360
    %7076 = vmatpush2.bf16.msra.mxu0 %v6359
    %7077 = vmatprep.subr.bf16.mxu0 %v6356
    %7078 = vmatpush2.bf16.msra.mxu0 %v6355
    %7079 = vmatprep.mubr.bf16.mxu0 %v4494
    %7080 = vmatmul.mubr.bf16.gmra.mxu0 %v4493
    %v7081 = vpop.f32.mrf.mxu0
    %v7082 = vadd.f32 %v7029, %v7081
    %v7083 = vpop.f32.mrf.mxu0
    %v7084 = vadd.f32 %v7031, %v7083
    %v7085 = vpop.f32.mrf.mxu0
    %v7086 = vadd.f32 %v7033, %v7085
    %v7087 = vpop.f32.mrf.mxu0
    %v7088 = vadd.f32 %v7035, %v7087
    %7089 = vmatprep.mubr.bf16.mxu0 %v4506
    %7090 = vmatmul.mubr.bf16.gmra.mxu0 %v4505
    %v7091 = vpop.f32.mrf.mxu0
    %v7092 = vadd.f32 %v7039, %v7091
    %v7093 = vpop.f32.mrf.mxu0
    %v7094 = vadd.f32 %v7041, %v7093
    %v7095 = vpop.f32.mrf.mxu0
    %v7096 = vadd.f32 %v7043, %v7095
    %v7097 = vpop.f32.mrf.mxu0
    %v7098 = vadd.f32 %v7045, %v7097
    %7099 = vdwg.mxu0
    %7100 = vmatprep.subr.bf16.mxu0 %v6416
    %7101 = vmatpush1.bf16.msra.mxu0 %v6415
    %7102 = vmatprep.subr.bf16.mxu0 %v6412
    %7103 = vmatpush1.bf16.msra.mxu0 %v6411
    %7104 = vmatprep.subr.bf16.mxu0 %v6408
    %7105 = vmatpush1.bf16.msra.mxu0 %v6407
    %7106 = vmatprep.subr.bf16.mxu0 %v6404
    %7107 = vmatpush1.bf16.msra.mxu0 %v6403
    %7108 = vmatprep.subr.bf16.mxu0 %v6400
    %7109 = vmatpush1.bf16.msra.mxu0 %v6399
    %7110 = vmatprep.subr.bf16.mxu0 %v6396
    %7111 = vmatpush1.bf16.msra.mxu0 %v6395
    %7112 = vmatprep.subr.bf16.mxu0 %v6392
    %7113 = vmatpush1.bf16.msra.mxu0 %v6391
    %7114 = vmatprep.subr.bf16.mxu0 %v6388
    %7115 = vmatpush1.bf16.msra.mxu0 %v6387
    %7116 = vmatprep.subr.bf16.mxu0 %v6448
    %7117 = vmatpush2.bf16.msra.mxu0 %v6447
    %7118 = vmatprep.subr.bf16.mxu0 %v6444
    %7119 = vmatpush2.bf16.msra.mxu0 %v6443
    %7120 = vmatprep.subr.bf16.mxu0 %v6440
    %7121 = vmatpush2.bf16.msra.mxu0 %v6439
    %7122 = vmatprep.subr.bf16.mxu0 %v6436
    %7123 = vmatpush2.bf16.msra.mxu0 %v6435
    %7124 = vmatprep.subr.bf16.mxu0 %v6432
    %7125 = vmatpush2.bf16.msra.mxu0 %v6431
    %7126 = vmatprep.subr.bf16.mxu0 %v6428
    %7127 = vmatpush2.bf16.msra.mxu0 %v6427
    %7128 = vmatprep.subr.bf16.mxu0 %v6424
    %7129 = vmatpush2.bf16.msra.mxu0 %v6423
    %7130 = vmatprep.subr.bf16.mxu0 %v6420
    %7131 = vmatpush2.bf16.msra.mxu0 %v6419
    %7132 = vmatprep.mubr.bf16.mxu0 %v4496
    %7133 = vmatmul.mubr.bf16.gmra.mxu0 %v4495
    %v7134 = vpop.f32.mrf.mxu0
    %v7135 = vadd.f32 %v7082, %v7134
    %v7136 = vpop.f32.mrf.mxu0
    %v7137 = vadd.f32 %v7084, %v7136
    %v7138 = vpop.f32.mrf.mxu0
    %v7139 = vadd.f32 %v7086, %v7138
    %v7140 = vpop.f32.mrf.mxu0
    %v7141 = vadd.f32 %v7088, %v7140
    %7142 = vmatprep.mubr.bf16.mxu0 %v4508
    %7143 = vmatmul.mubr.bf16.gmra.mxu0 %v4507
    %v7144 = vpop.f32.mrf.mxu0
    %v7145 = vadd.f32 %v7092, %v7144
    %v7146 = vpop.f32.mrf.mxu0
    %v7147 = vadd.f32 %v7094, %v7146
    %v7148 = vpop.f32.mrf.mxu0
    %v7149 = vadd.f32 %v7096, %v7148
    %v7150 = vpop.f32.mrf.mxu0
    %v7151 = vadd.f32 %v7098, %v7150
    %7152 = vdwg.mxu0
    %7153 = vmatprep.subr.bf16.mxu0 %v6098
    %7154 = vmatpush1.bf16.msra.mxu0 %v6097
    %7155 = vmatprep.subr.bf16.mxu0 %v6094
    %7156 = vmatpush1.bf16.msra.mxu0 %v6093
    %7157 = vmatprep.subr.bf16.mxu0 %v6090
    %7158 = vmatpush1.bf16.msra.mxu0 %v6089
    %7159 = vmatprep.subr.bf16.mxu0 %v6086
    %7160 = vmatpush1.bf16.msra.mxu0 %v6085
    %7161 = vmatprep.subr.bf16.mxu0 %v6082
    %7162 = vmatpush1.bf16.msra.mxu0 %v6081
    %7163 = vmatprep.subr.bf16.mxu0 %v6078
    %7164 = vmatpush1.bf16.msra.mxu0 %v6077
    %7165 = vmatprep.subr.bf16.mxu0 %v6074
    %7166 = vmatpush1.bf16.msra.mxu0 %v6073
    %7167 = vmatprep.subr.bf16.mxu0 %v6070
    %7168 = vmatpush1.bf16.msra.mxu0 %v6069
    %7169 = vmatprep.subr.bf16.mxu0 %v6130
    %7170 = vmatpush2.bf16.msra.mxu0 %v6129
    %7171 = vmatprep.subr.bf16.mxu0 %v6126
    %7172 = vmatpush2.bf16.msra.mxu0 %v6125
    %7173 = vmatprep.subr.bf16.mxu0 %v6122
    %7174 = vmatpush2.bf16.msra.mxu0 %v6121
    %7175 = vmatprep.subr.bf16.mxu0 %v6118
    %7176 = vmatpush2.bf16.msra.mxu0 %v6117
    %7177 = vmatprep.subr.bf16.mxu0 %v6114
    %7178 = vmatpush2.bf16.msra.mxu0 %v6113
    %7179 = vmatprep.subr.bf16.mxu0 %v6110
    %7180 = vmatpush2.bf16.msra.mxu0 %v6109
    %7181 = vmatprep.subr.bf16.mxu0 %v6106
    %7182 = vmatpush2.bf16.msra.mxu0 %v6105
    %7183 = vmatprep.subr.bf16.mxu0 %v6102
    %7184 = vmatpush2.bf16.msra.mxu0 %v6101
    %7185 = vmatprep.mubr.bf16.mxu0 %v4486
    %7186 = vmatmul.mubr.bf16.gmra.mxu0 %v4485
    %v7187 = vpop.f32.mrf.mxu0
    %v7188 = vadd.f32 %v4906, %v7187
    %v7189 = vpop.f32.mrf.mxu0
    %v7190 = vadd.f32 %v4910, %v7189
    %v7191 = vpop.f32.mrf.mxu0
    %v7192 = vadd.f32 %v4906, %v7191
    %v7193 = vpop.f32.mrf.mxu0
    %v7194 = vadd.f32 %v4910, %v7193
    %7195 = vmatprep.mubr.bf16.mxu0 %v4498
    %7196 = vmatmul.mubr.bf16.gmra.mxu0 %v4497
    %v7197 = vpop.f32.mrf.mxu0
    %v7198 = vadd.f32 %v4906, %v7197
    %v7199 = vpop.f32.mrf.mxu0
    %v7200 = vadd.f32 %v4910, %v7199
    %v7201 = vpop.f32.mrf.mxu0
    %v7202 = vadd.f32 %v4906, %v7201
    %v7203 = vpop.f32.mrf.mxu0
    %v7204 = vadd.f32 %v4910, %v7203
    %7205 = vdwg.mxu0
    %7206 = vmatprep.subr.bf16.mxu0 %v6162
    %7207 = vmatpush1.bf16.msra.mxu0 %v6161
    %7208 = vmatprep.subr.bf16.mxu0 %v6158
    %7209 = vmatpush1.bf16.msra.mxu0 %v6157
    %7210 = vmatprep.subr.bf16.mxu0 %v6154
    %7211 = vmatpush1.bf16.msra.mxu0 %v6153
    %7212 = vmatprep.subr.bf16.mxu0 %v6150
    %7213 = vmatpush1.bf16.msra.mxu0 %v6149
    %7214 = vmatprep.subr.bf16.mxu0 %v6146
    %7215 = vmatpush1.bf16.msra.mxu0 %v6145
    %7216 = vmatprep.subr.bf16.mxu0 %v6142
    %7217 = vmatpush1.bf16.msra.mxu0 %v6141
    %7218 = vmatprep.subr.bf16.mxu0 %v6138
    %7219 = vmatpush1.bf16.msra.mxu0 %v6137
    %7220 = vmatprep.subr.bf16.mxu0 %v6134
    %7221 = vmatpush1.bf16.msra.mxu0 %v6133
    %7222 = vmatprep.subr.bf16.mxu0 %v6194
    %7223 = vmatpush2.bf16.msra.mxu0 %v6193
    %7224 = vmatprep.subr.bf16.mxu0 %v6190
    %7225 = vmatpush2.bf16.msra.mxu0 %v6189
    %7226 = vmatprep.subr.bf16.mxu0 %v6186
    %7227 = vmatpush2.bf16.msra.mxu0 %v6185
    %7228 = vmatprep.subr.bf16.mxu0 %v6182
    %7229 = vmatpush2.bf16.msra.mxu0 %v6181
    %7230 = vmatprep.subr.bf16.mxu0 %v6178
    %7231 = vmatpush2.bf16.msra.mxu0 %v6177
    %7232 = vmatprep.subr.bf16.mxu0 %v6174
    %7233 = vmatpush2.bf16.msra.mxu0 %v6173
    %7234 = vmatprep.subr.bf16.mxu0 %v6170
    %7235 = vmatpush2.bf16.msra.mxu0 %v6169
    %7236 = vmatprep.subr.bf16.mxu0 %v6166
    %7237 = vmatpush2.bf16.msra.mxu0 %v6165
    %7238 = vmatprep.mubr.bf16.mxu0 %v4488
    %7239 = vmatmul.mubr.bf16.gmra.mxu0 %v4487
    %v7240 = vpop.f32.mrf.mxu0
    %v7241 = vadd.f32 %v7188, %v7240
    %v7242 = vpop.f32.mrf.mxu0
    %v7243 = vadd.f32 %v7190, %v7242
    %v7244 = vpop.f32.mrf.mxu0
    %v7245 = vadd.f32 %v7192, %v7244
    %v7246 = vpop.f32.mrf.mxu0
    %v7247 = vadd.f32 %v7194, %v7246
    %7248 = vmatprep.mubr.bf16.mxu0 %v4500
    %7249 = vmatmul.mubr.bf16.gmra.mxu0 %v4499
    %v7250 = vpop.f32.mrf.mxu0
    %v7251 = vadd.f32 %v7198, %v7250
    %v7252 = vpop.f32.mrf.mxu0
    %v7253 = vadd.f32 %v7200, %v7252
    %v7254 = vpop.f32.mrf.mxu0
    %v7255 = vadd.f32 %v7202, %v7254
    %v7256 = vpop.f32.mrf.mxu0
    %v7257 = vadd.f32 %v7204, %v7256
    %7258 = vdwg.mxu0
    %7259 = vmatprep.subr.bf16.mxu0 %v6226
    %7260 = vmatpush1.bf16.msra.mxu0 %v6225
    %7261 = vmatprep.subr.bf16.mxu0 %v6222
    %7262 = vmatpush1.bf16.msra.mxu0 %v6221
    %7263 = vmatprep.subr.bf16.mxu0 %v6218
    %7264 = vmatpush1.bf16.msra.mxu0 %v6217
    %7265 = vmatprep.subr.bf16.mxu0 %v6214
    %7266 = vmatpush1.bf16.msra.mxu0 %v6213
    %7267 = vmatprep.subr.bf16.mxu0 %v6210
    %7268 = vmatpush1.bf16.msra.mxu0 %v6209
    %7269 = vmatprep.subr.bf16.mxu0 %v6206
    %7270 = vmatpush1.bf16.msra.mxu0 %v6205
    %7271 = vmatprep.subr.bf16.mxu0 %v6202
    %7272 = vmatpush1.bf16.msra.mxu0 %v6201
    %7273 = vmatprep.subr.bf16.mxu0 %v6198
    %7274 = vmatpush1.bf16.msra.mxu0 %v6197
    %7275 = vmatprep.subr.bf16.mxu0 %v6258
    %7276 = vmatpush2.bf16.msra.mxu0 %v6257
    %7277 = vmatprep.subr.bf16.mxu0 %v6254
    %7278 = vmatpush2.bf16.msra.mxu0 %v6253
    %7279 = vmatprep.subr.bf16.mxu0 %v6250
    %7280 = vmatpush2.bf16.msra.mxu0 %v6249
    %7281 = vmatprep.subr.bf16.mxu0 %v6246
    %7282 = vmatpush2.bf16.msra.mxu0 %v6245
    %7283 = vmatprep.subr.bf16.mxu0 %v6242
    %7284 = vmatpush2.bf16.msra.mxu0 %v6241
    %7285 = vmatprep.subr.bf16.mxu0 %v6238
    %7286 = vmatpush2.bf16.msra.mxu0 %v6237
    %7287 = vmatprep.subr.bf16.mxu0 %v6234
    %7288 = vmatpush2.bf16.msra.mxu0 %v6233
    %7289 = vmatprep.subr.bf16.mxu0 %v6230
    %7290 = vmatpush2.bf16.msra.mxu0 %v6229
    %7291 = vmatprep.mubr.bf16.mxu0 %v4490
    %7292 = vmatmul.mubr.bf16.gmra.mxu0 %v4489
    %v7293 = vpop.f32.mrf.mxu0
    %v7294 = vadd.f32 %v7241, %v7293
    %v7295 = vpop.f32.mrf.mxu0
    %v7296 = vadd.f32 %v7243, %v7295
    %v7297 = vpop.f32.mrf.mxu0
    %v7298 = vadd.f32 %v7245, %v7297
    %v7299 = vpop.f32.mrf.mxu0
    %v7300 = vadd.f32 %v7247, %v7299
    %7301 = vmatprep.mubr.bf16.mxu0 %v4502
    %7302 = vmatmul.mubr.bf16.gmra.mxu0 %v4501
    %v7303 = vpop.f32.mrf.mxu0
    %v7304 = vadd.f32 %v7251, %v7303
    %v7305 = vpop.f32.mrf.mxu0
    %v7306 = vadd.f32 %v7253, %v7305
    %v7307 = vpop.f32.mrf.mxu0
    %v7308 = vadd.f32 %v7255, %v7307
    %v7309 = vpop.f32.mrf.mxu0
    %v7310 = vadd.f32 %v7257, %v7309
    %7311 = vdwg.mxu0
    %7312 = vmatprep.subr.bf16.mxu0 %v6290
    %7313 = vmatpush1.bf16.msra.mxu0 %v6289
    %7314 = vmatprep.subr.bf16.mxu0 %v6286
    %7315 = vmatpush1.bf16.msra.mxu0 %v6285
    %7316 = vmatprep.subr.bf16.mxu0 %v6282
    %7317 = vmatpush1.bf16.msra.mxu0 %v6281
    %7318 = vmatprep.subr.bf16.mxu0 %v6278
    %7319 = vmatpush1.bf16.msra.mxu0 %v6277
    %7320 = vmatprep.subr.bf16.mxu0 %v6274
    %7321 = vmatpush1.bf16.msra.mxu0 %v6273
    %7322 = vmatprep.subr.bf16.mxu0 %v6270
    %7323 = vmatpush1.bf16.msra.mxu0 %v6269
    %7324 = vmatprep.subr.bf16.mxu0 %v6266
    %7325 = vmatpush1.bf16.msra.mxu0 %v6265
    %7326 = vmatprep.subr.bf16.mxu0 %v6262
    %7327 = vmatpush1.bf16.msra.mxu0 %v6261
    %7328 = vmatprep.subr.bf16.mxu0 %v6322
    %7329 = vmatpush2.bf16.msra.mxu0 %v6321
    %7330 = vmatprep.subr.bf16.mxu0 %v6318
    %7331 = vmatpush2.bf16.msra.mxu0 %v6317
    %7332 = vmatprep.subr.bf16.mxu0 %v6314
    %7333 = vmatpush2.bf16.msra.mxu0 %v6313
    %7334 = vmatprep.subr.bf16.mxu0 %v6310
    %7335 = vmatpush2.bf16.msra.mxu0 %v6309
    %7336 = vmatprep.subr.bf16.mxu0 %v6306
    %7337 = vmatpush2.bf16.msra.mxu0 %v6305
    %7338 = vmatprep.subr.bf16.mxu0 %v6302
    %7339 = vmatpush2.bf16.msra.mxu0 %v6301
    %7340 = vmatprep.subr.bf16.mxu0 %v6298
    %7341 = vmatpush2.bf16.msra.mxu0 %v6297
    %7342 = vmatprep.subr.bf16.mxu0 %v6294
    %7343 = vmatpush2.bf16.msra.mxu0 %v6293
    %7344 = vmatprep.mubr.bf16.mxu0 %v4492
    %7345 = vmatmul.mubr.bf16.gmra.mxu0 %v4491
    %v7346 = vpop.f32.mrf.mxu0
    %v7347 = vadd.f32 %v7294, %v7346
    %v7348 = vpop.f32.mrf.mxu0
    %v7349 = vadd.f32 %v7296, %v7348
    %v7350 = vpop.f32.mrf.mxu0
    %v7351 = vadd.f32 %v7298, %v7350
    %v7352 = vpop.f32.mrf.mxu0
    %v7353 = vadd.f32 %v7300, %v7352
    %7354 = vmatprep.mubr.bf16.mxu0 %v4504
    %7355 = vmatmul.mubr.bf16.gmra.mxu0 %v4503
    %v7356 = vpop.f32.mrf.mxu0
    %v7357 = vadd.f32 %v7304, %v7356
    %v7358 = vpop.f32.mrf.mxu0
    %v7359 = vadd.f32 %v7306, %v7358
    %v7360 = vpop.f32.mrf.mxu0
    %v7361 = vadd.f32 %v7308, %v7360
    %v7362 = vpop.f32.mrf.mxu0
    %v7363 = vadd.f32 %v7310, %v7362
    %7364 = vdwg.mxu0
    %7365 = vmatprep.subr.bf16.mxu0 %v6354
    %7366 = vmatpush1.bf16.msra.mxu0 %v6353
    %7367 = vmatprep.subr.bf16.mxu0 %v6350
    %7368 = vmatpush1.bf16.msra.mxu0 %v6349
    %7369 = vmatprep.subr.bf16.mxu0 %v6346
    %7370 = vmatpush1.bf16.msra.mxu0 %v6345
    %7371 = vmatprep.subr.bf16.mxu0 %v6342
    %7372 = vmatpush1.bf16.msra.mxu0 %v6341
    %7373 = vmatprep.subr.bf16.mxu0 %v6338
    %7374 = vmatpush1.bf16.msra.mxu0 %v6337
    %7375 = vmatprep.subr.bf16.mxu0 %v6334
    %7376 = vmatpush1.bf16.msra.mxu0 %v6333
    %7377 = vmatprep.subr.bf16.mxu0 %v6330
    %7378 = vmatpush1.bf16.msra.mxu0 %v6329
    %7379 = vmatprep.subr.bf16.mxu0 %v6326
    %7380 = vmatpush1.bf16.msra.mxu0 %v6325
    %7381 = vmatprep.subr.bf16.mxu0 %v6386
    %7382 = vmatpush2.bf16.msra.mxu0 %v6385
    %7383 = vmatprep.subr.bf16.mxu0 %v6382
    %7384 = vmatpush2.bf16.msra.mxu0 %v6381
    %7385 = vmatprep.subr.bf16.mxu0 %v6378
    %7386 = vmatpush2.bf16.msra.mxu0 %v6377
    %7387 = vmatprep.subr.bf16.mxu0 %v6374
    %7388 = vmatpush2.bf16.msra.mxu0 %v6373
    %7389 = vmatprep.subr.bf16.mxu0 %v6370
    %7390 = vmatpush2.bf16.msra.mxu0 %v6369
    %7391 = vmatprep.subr.bf16.mxu0 %v6366
    %7392 = vmatpush2.bf16.msra.mxu0 %v6365
    %7393 = vmatprep.subr.bf16.mxu0 %v6362
    %7394 = vmatpush2.bf16.msra.mxu0 %v6361
    %7395 = vmatprep.subr.bf16.mxu0 %v6358
    %7396 = vmatpush2.bf16.msra.mxu0 %v6357
    %7397 = vmatprep.mubr.bf16.mxu0 %v4494
    %7398 = vmatmul.mubr.bf16.gmra.mxu0 %v4493
    %v7399 = vpop.f32.mrf.mxu0
    %v7400 = vadd.f32 %v7347, %v7399
    %v7401 = vpop.f32.mrf.mxu0
    %v7402 = vadd.f32 %v7349, %v7401
    %v7403 = vpop.f32.mrf.mxu0
    %v7404 = vadd.f32 %v7351, %v7403
    %v7405 = vpop.f32.mrf.mxu0
    %v7406 = vadd.f32 %v7353, %v7405
    %7407 = vmatprep.mubr.bf16.mxu0 %v4506
    %7408 = vmatmul.mubr.bf16.gmra.mxu0 %v4505
    %v7409 = vpop.f32.mrf.mxu0
    %v7410 = vadd.f32 %v7357, %v7409
    %v7411 = vpop.f32.mrf.mxu0
    %v7412 = vadd.f32 %v7359, %v7411
    %v7413 = vpop.f32.mrf.mxu0
    %v7414 = vadd.f32 %v7361, %v7413
    %v7415 = vpop.f32.mrf.mxu0
    %v7416 = vadd.f32 %v7363, %v7415
    %7417 = vdwg.mxu0
    %7418 = vmatprep.subr.bf16.mxu0 %v6418
    %7419 = vmatpush1.bf16.msra.mxu0 %v6417
    %7420 = vmatprep.subr.bf16.mxu0 %v6414
    %7421 = vmatpush1.bf16.msra.mxu0 %v6413
    %7422 = vmatprep.subr.bf16.mxu0 %v6410
    %7423 = vmatpush1.bf16.msra.mxu0 %v6409
    %7424 = vmatprep.subr.bf16.mxu0 %v6406
    %7425 = vmatpush1.bf16.msra.mxu0 %v6405
    %7426 = vmatprep.subr.bf16.mxu0 %v6402
    %7427 = vmatpush1.bf16.msra.mxu0 %v6401
    %7428 = vmatprep.subr.bf16.mxu0 %v6398
    %7429 = vmatpush1.bf16.msra.mxu0 %v6397
    %7430 = vmatprep.subr.bf16.mxu0 %v6394
    %7431 = vmatpush1.bf16.msra.mxu0 %v6393
    %7432 = vmatprep.subr.bf16.mxu0 %v6390
    %7433 = vmatpush1.bf16.msra.mxu0 %v6389
    %7434 = vmatprep.subr.bf16.mxu0 %v6450
    %7435 = vmatpush2.bf16.msra.mxu0 %v6449
    %7436 = vmatprep.subr.bf16.mxu0 %v6446
    %7437 = vmatpush2.bf16.msra.mxu0 %v6445
    %7438 = vmatprep.subr.bf16.mxu0 %v6442
    %7439 = vmatpush2.bf16.msra.mxu0 %v6441
    %7440 = vmatprep.subr.bf16.mxu0 %v6438
    %7441 = vmatpush2.bf16.msra.mxu0 %v6437
    %7442 = vmatprep.subr.bf16.mxu0 %v6434
    %7443 = vmatpush2.bf16.msra.mxu0 %v6433
    %7444 = vmatprep.subr.bf16.mxu0 %v6430
    %7445 = vmatpush2.bf16.msra.mxu0 %v6429
    %7446 = vmatprep.subr.bf16.mxu0 %v6426
    %7447 = vmatpush2.bf16.msra.mxu0 %v6425
    %7448 = vmatprep.subr.bf16.mxu0 %v6422
    %7449 = vmatpush2.bf16.msra.mxu0 %v6421
    %7450 = vmatprep.mubr.bf16.mxu0 %v4496
    %7451 = vmatmul.mubr.bf16.gmra.mxu0 %v4495
    %v7452 = vpop.f32.mrf.mxu0
    %v7453 = vadd.f32 %v7400, %v7452
    %v7454 = vpop.f32.mrf.mxu0
    %v7455 = vadd.f32 %v7402, %v7454
    %v7456 = vpop.f32.mrf.mxu0
    %v7457 = vadd.f32 %v7404, %v7456
    %v7458 = vpop.f32.mrf.mxu0
    %v7459 = vadd.f32 %v7406, %v7458
    %7460 = vmatprep.mubr.bf16.mxu0 %v4508
    %7461 = vmatmul.mubr.bf16.gmra.mxu0 %v4507
    %v7462 = vpop.f32.mrf.mxu0
    %v7463 = vadd.f32 %v7410, %v7462
    %v7464 = vpop.f32.mrf.mxu0
    %v7465 = vadd.f32 %v7412, %v7464
    %v7466 = vpop.f32.mrf.mxu0
    %v7467 = vadd.f32 %v7414, %v7466
    %v7468 = vpop.f32.mrf.mxu0
    %v7469 = vadd.f32 %v7416, %v7468
    %7470 = vdwg.mxu0
    %7471 = vst [vmem:[#allocation2 + $0x20] sm:$0xff] %v7135
    %7472 = vst [vmem:[#allocation2 + $0x28] sm:$0xff] %v7137
    %7473 = vst [vmem:[#allocation2 + $0x30] sm:$0xff] %v7453
    %7474 = vst [vmem:[#allocation2 + $0x38] sm:$0xff] %v7455
    %7475 = vst [vmem:[#allocation2 + $0x40] sm:$0xff] %v7139
    %7476 = vst [vmem:[#allocation2 + $0x48] sm:$0xff] %v7141
    %7477 = vst [vmem:[#allocation2 + $0x50] sm:$0xff] %v7457
    %7478 = vst [vmem:[#allocation2 + $0x58] sm:$0xff] %v7459
    %7479 = vst [vmem:[#allocation2 + $0xa0] sm:$0xff] %v7145
    %7480 = vst [vmem:[#allocation2 + $0xa8] sm:$0xff] %v7147
    %7481 = vst [vmem:[#allocation2 + $0xb0] sm:$0xff] %v7463
    %7482 = vst [vmem:[#allocation2 + $0xb8] sm:$0xff] %v7465
    %7483 = vst [vmem:[#allocation2 + $0xc0] sm:$0xff] %v7149
    %7484 = vst [vmem:[#allocation2 + $0xc8] sm:$0xff] %v7151
    %7485 = vst [vmem:[#allocation2 + $0xd0] sm:$0xff] %v7467
    %7486 = vst [vmem:[#allocation2 + $0xd8] sm:$0xff] %v7469
    %v7487 = vld [vmem:[#allocation2] sm:$0x80]
    %v7488 = vld [vmem:[#allocation2 + $0x8] sm:$0x80]
    %v7489 = vld [vmem:[#allocation2 + $0x10] sm:$0x80]
    %v7490 = vld [vmem:[#allocation2 + $0x18] sm:$0x80]
    %v7491 = vld [vmem:[#allocation2 + $0x20] sm:$0xff]
    %v7492 = vld [vmem:[#allocation2 + $0x28] sm:$0xff]
    %v7493 = vld [vmem:[#allocation2 + $0x30] sm:$0xff]
    %v7494 = vld [vmem:[#allocation2 + $0x38] sm:$0xff]
    %v7495 = vld [vmem:[#allocation2 + $0x40] sm:$0x7f]
    %v7496 = vld [vmem:[#allocation2 + $0x48] sm:$0x7f]
    %v7497 = vld [vmem:[#allocation2 + $0x50] sm:$0x7f]
    %v7498 = vld [vmem:[#allocation2 + $0x58] sm:$0x7f]
    %v7499 = vld [vmem:[#allocation2 + $0x80] sm:$0x80]
    %v7500 = vld [vmem:[#allocation2 + $0x88] sm:$0x80]
    %v7501 = vld [vmem:[#allocation2 + $0x90] sm:$0x80]
    %v7502 = vld [vmem:[#allocation2 + $0x98] sm:$0x80]
    %v7503 = vld [vmem:[#allocation2 + $0xa0] sm:$0xff]
    %v7504 = vld [vmem:[#allocation2 + $0xa8] sm:$0xff]
    %v7505 = vld [vmem:[#allocation2 + $0xb0] sm:$0xff]
    %v7506 = vld [vmem:[#allocation2 + $0xb8] sm:$0xff]
    %v7507 = vld [vmem:[#allocation2 + $0xc0] sm:$0x7f]
    %v7508 = vld [vmem:[#allocation2 + $0xc8] sm:$0x7f]
    %v7509 = vld [vmem:[#allocation2 + $0xd0] sm:$0x7f]
    %v7510 = vld [vmem:[#allocation2 + $0xd8] sm:$0x7f]
    %v7511 = vld [vmem:[#allocation2 + $0x20] sm:$0xfe]
    %v7512 = vld [vmem:[#allocation2 + $0x28] sm:$0xfe]
    %v7513 = vld [vmem:[#allocation2 + $0x30] sm:$0xfe]
    %v7514 = vld [vmem:[#allocation2 + $0x38] sm:$0xfe]
    %v7515 = vld [vmem:[#allocation2 + $0x40] sm:$0xff]
    %v7516 = vld [vmem:[#allocation2 + $0x48] sm:$0xff]
    %v7517 = vld [vmem:[#allocation2 + $0x50] sm:$0xff]
    %v7518 = vld [vmem:[#allocation2 + $0x58] sm:$0xff]
    %v7519 = vld [vmem:[#allocation2 + $0x60] sm:$0x1]
    %v7520 = vld [vmem:[#allocation2 + $0x68] sm:$0x1]
    %v7521 = vld [vmem:[#allocation2 + $0x70] sm:$0x1]
    %v7522 = vld [vmem:[#allocation2 + $0x78] sm:$0x1]
    %v7523 = vld [vmem:[#allocation2 + $0xa0] sm:$0xfe]
    %v7524 = vld [vmem:[#allocation2 + $0xa8] sm:$0xfe]
    %v7525 = vld [vmem:[#allocation2 + $0xb0] sm:$0xfe]
    %v7526 = vld [vmem:[#allocation2 + $0xb8] sm:$0xfe]
    %v7527 = vld [vmem:[#allocation2 + $0xc0] sm:$0xff]
    %v7528 = vld [vmem:[#allocation2 + $0xc8] sm:$0xff]
    %v7529 = vld [vmem:[#allocation2 + $0xd0] sm:$0xff]
    %v7530 = vld [vmem:[#allocation2 + $0xd8] sm:$0xff]
    %v7531 = vld [vmem:[#allocation2 + $0xe0] sm:$0x1]
    %v7532 = vld [vmem:[#allocation2 + $0xe8] sm:$0x1]
    %v7533 = vld [vmem:[#allocation2 + $0xf0] sm:$0x1]
    %v7534 = vld [vmem:[#allocation2 + $0xf8] sm:$0x1]
    %v7551 = vrot.slane %v7135, 1
    %v7552 = vrot.slane %v7137, 1
    %v7553 = vrot.slane %v7453, 1
    %v7554 = vrot.slane %v7455, 1
    %v7555 = vrot.slane %v7139, 1
    %v7556 = vsel %vm840, %v7551, %v7555
    %v7557 = vrot.slane %v7141, 1
    %v7558 = vsel %vm840, %v7552, %v7557
    %v7559 = vrot.slane %v7457, 1
    %v7560 = vsel %vm840, %v7553, %v7559
    %v7561 = vrot.slane %v7459, 1
    %v7562 = vsel %vm840, %v7554, %v7561
    %v7563 = vrot.slane %v7145, 1
    %v7564 = vrot.slane %v7147, 1
    %v7565 = vrot.slane %v7463, 1
    %v7566 = vrot.slane %v7465, 1
    %v7567 = vrot.slane %v7149, 1
    %v7568 = vsel %vm840, %v7563, %v7567
    %v7569 = vrot.slane %v7151, 1
    %v7570 = vsel %vm840, %v7564, %v7569
    %v7571 = vrot.slane %v7467, 1
    %v7572 = vsel %vm840, %v7565, %v7571
    %v7573 = vrot.slane %v7469, 1
    %v7574 = vsel %vm840, %v7566, %v7573
    %v7599 = vrot.slane %v7511, 2
    %v7600 = vrot.slane %v7512, 2
    %v7601 = vrot.slane %v7513, 2
    %v7602 = vrot.slane %v7514, 2
    %v7603 = vrot.slane %v7515, 2
    %v7604 = vsel %vm889, %v7599, %v7603
    %v7605 = vrot.slane %v7516, 2
    %v7606 = vsel %vm889, %v7600, %v7605
    %v7607 = vrot.slane %v7517, 2
    %v7608 = vsel %vm889, %v7601, %v7607
    %v7609 = vrot.slane %v7518, 2
    %v7610 = vsel %vm889, %v7602, %v7609
    %v7611 = vrot.slane %v7519, 2
    %v7612 = vsel %vm889, %v7603, %v7611
    %v7613 = vrot.slane %v7520, 2
    %v7614 = vsel %vm889, %v7605, %v7613
    %v7615 = vrot.slane %v7521, 2
    %v7616 = vsel %vm889, %v7607, %v7615
    %v7617 = vrot.slane %v7522, 2
    %v7618 = vsel %vm889, %v7609, %v7617
    %v7619 = vrot.slane %v7523, 2
    %v7620 = vrot.slane %v7524, 2
    %v7621 = vrot.slane %v7525, 2
    %v7622 = vrot.slane %v7526, 2
    %v7623 = vrot.slane %v7527, 2
    %v7624 = vsel %vm889, %v7619, %v7623
    %v7625 = vrot.slane %v7528, 2
    %v7626 = vsel %vm889, %v7620, %v7625
    %v7627 = vrot.slane %v7529, 2
    %v7628 = vsel %vm889, %v7621, %v7627
    %v7629 = vrot.slane %v7530, 2
    %v7630 = vsel %vm889, %v7622, %v7629
    %v7631 = vrot.slane %v7531, 2
    %v7632 = vsel %vm889, %v7623, %v7631
    %v7633 = vrot.slane %v7532, 2
    %v7634 = vsel %vm889, %v7625, %v7633
    %v7635 = vrot.slane %v7533, 2
    %v7636 = vsel %vm889, %v7627, %v7635
    %v7637 = vrot.slane %v7534, 2
    %v7638 = vsel %vm889, %v7629, %v7637
    %v7663 = vrot.slane %v7487, 7
    %v7664 = vrot.slane %v7491, 7
    %v7665 = vsel %vm954, %v7663, %v7664
    %v7666 = vrot.slane %v7488, 7
    %v7667 = vrot.slane %v7492, 7
    %v7668 = vsel %vm954, %v7666, %v7667
    %v7669 = vrot.slane %v7489, 7
    %v7670 = vrot.slane %v7493, 7
    %v7671 = vsel %vm954, %v7669, %v7670
    %v7672 = vrot.slane %v7490, 7
    %v7673 = vrot.slane %v7494, 7
    %v7674 = vsel %vm954, %v7672, %v7673
    %v7675 = vrot.slane %v7551, 7
    %v7676 = vrot.slane %v7556, 7
    %v7677 = vsel %vm954, %v7675, %v7676
    %v7678 = vrot.slane %v7552, 7
    %v7679 = vrot.slane %v7558, 7
    %v7680 = vsel %vm954, %v7678, %v7679
    %v7681 = vrot.slane %v7553, 7
    %v7682 = vrot.slane %v7560, 7
    %v7683 = vsel %vm954, %v7681, %v7682
    %v7684 = vrot.slane %v7554, 7
    %v7685 = vrot.slane %v7562, 7
    %v7686 = vsel %vm954, %v7684, %v7685
    %v7687 = vrot.slane %v7599, 7
    %v7688 = vrot.slane %v7604, 7
    %v7689 = vsel %vm954, %v7687, %v7688
    %v7690 = vrot.slane %v7600, 7
    %v7691 = vrot.slane %v7606, 7
    %v7692 = vsel %vm954, %v7690, %v7691
    %v7693 = vrot.slane %v7601, 7
    %v7694 = vrot.slane %v7608, 7
    %v7695 = vsel %vm954, %v7693, %v7694
    %v7696 = vrot.slane %v7602, 7
    %v7697 = vrot.slane %v7610, 7
    %v7698 = vsel %vm954, %v7696, %v7697
    %v7699 = vrot.slane %v7495, 7
    %v7700 = vsel %vm954, %v7664, %v7699
    %v7701 = vrot.slane %v7496, 7
    %v7702 = vsel %vm954, %v7667, %v7701
    %v7703 = vrot.slane %v7497, 7
    %v7704 = vsel %vm954, %v7670, %v7703
    %v7705 = vrot.slane %v7498, 7
    %v7706 = vsel %vm954, %v7673, %v7705
    %v7707 = vrot.slane %v7555, 7
    %v7708 = vsel %vm954, %v7676, %v7707
    %v7709 = vrot.slane %v7557, 7
    %v7710 = vsel %vm954, %v7679, %v7709
    %v7711 = vrot.slane %v7559, 7
    %v7712 = vsel %vm954, %v7682, %v7711
    %v7713 = vrot.slane %v7561, 7
    %v7714 = vsel %vm954, %v7685, %v7713
    %v7715 = vrot.slane %v7612, 7
    %v7716 = vsel %vm954, %v7688, %v7715
    %v7717 = vrot.slane %v7614, 7
    %v7718 = vsel %vm954, %v7691, %v7717
    %v7719 = vrot.slane %v7616, 7
    %v7720 = vsel %vm954, %v7694, %v7719
    %v7721 = vrot.slane %v7618, 7
    %v7722 = vsel %vm954, %v7697, %v7721
    %v7723 = vrot.slane %v7499, 7
    %v7724 = vrot.slane %v7503, 7
    %v7725 = vsel %vm954, %v7723, %v7724
    %v7726 = vrot.slane %v7500, 7
    %v7727 = vrot.slane %v7504, 7
    %v7728 = vsel %vm954, %v7726, %v7727
    %v7729 = vrot.slane %v7501, 7
    %v7730 = vrot.slane %v7505, 7
    %v7731 = vsel %vm954, %v7729, %v7730
    %v7732 = vrot.slane %v7502, 7
    %v7733 = vrot.slane %v7506, 7
    %v7734 = vsel %vm954, %v7732, %v7733
    %v7735 = vrot.slane %v7563, 7
    %v7736 = vrot.slane %v7568, 7
    %v7737 = vsel %vm954, %v7735, %v7736
    %v7738 = vrot.slane %v7564, 7
    %v7739 = vrot.slane %v7570, 7
    %v7740 = vsel %vm954, %v7738, %v7739
    %v7741 = vrot.slane %v7565, 7
    %v7742 = vrot.slane %v7572, 7
    %v7743 = vsel %vm954, %v7741, %v7742
    %v7744 = vrot.slane %v7566, 7
    %v7745 = vrot.slane %v7574, 7
    %v7746 = vsel %vm954, %v7744, %v7745
    %v7747 = vrot.slane %v7619, 7
    %v7748 = vrot.slane %v7624, 7
    %v7749 = vsel %vm954, %v7747, %v7748
    %v7750 = vrot.slane %v7620, 7
    %v7751 = vrot.slane %v7626, 7
    %v7752 = vsel %vm954, %v7750, %v7751
    %v7753 = vrot.slane %v7621, 7
    %v7754 = vrot.slane %v7628, 7
    %v7755 = vsel %vm954, %v7753, %v7754
    %v7756 = vrot.slane %v7622, 7
    %v7757 = vrot.slane %v7630, 7
    %v7758 = vsel %vm954, %v7756, %v7757
    %v7759 = vrot.slane %v7507, 7
    %v7760 = vsel %vm954, %v7724, %v7759
    %v7761 = vrot.slane %v7508, 7
    %v7762 = vsel %vm954, %v7727, %v7761
    %v7763 = vrot.slane %v7509, 7
    %v7764 = vsel %vm954, %v7730, %v7763
    %v7765 = vrot.slane %v7510, 7
    %v7766 = vsel %vm954, %v7733, %v7765
    %v7767 = vrot.slane %v7567, 7
    %v7768 = vsel %vm954, %v7736, %v7767
    %v7769 = vrot.slane %v7569, 7
    %v7770 = vsel %vm954, %v7739, %v7769
    %v7771 = vrot.slane %v7571, 7
    %v7772 = vsel %vm954, %v7742, %v7771
    %v7773 = vrot.slane %v7573, 7
    %v7774 = vsel %vm954, %v7745, %v7773
    %v7775 = vrot.slane %v7632, 7
    %v7776 = vsel %vm954, %v7748, %v7775
    %v7777 = vrot.slane %v7634, 7
    %v7778 = vsel %vm954, %v7751, %v7777
    %v7779 = vrot.slane %v7636, 7
    %v7780 = vsel %vm954, %v7754, %v7779
    %v7781 = vrot.slane %v7638, 7
    %v7782 = vsel %vm954, %v7757, %v7781
    %v7831 = vpack.c.bf16 %v7700, %v7665
    %v7832 = vpack.c.bf16 %v7702, %v7668
    %v7833 = vpack.c.bf16 %v7704, %v7671
    %v7834 = vpack.c.bf16 %v7706, %v7674
    %v7835 = vpack.c.bf16 %v7708, %v7677
    %v7836 = vpack.c.bf16 %v7710, %v7680
    %v7837 = vpack.c.bf16 %v7712, %v7683
    %v7838 = vpack.c.bf16 %v7714, %v7686
    %v7839 = vpack.c.bf16 %v7716, %v7689
    %v7840 = vpack.c.bf16 %v7718, %v7692
    %v7841 = vpack.c.bf16 %v7720, %v7695
    %v7842 = vpack.c.bf16 %v7722, %v7698
    %v7843 = vpack.c.bf16 %v7760, %v7725
    %v7844 = vpack.c.bf16 %v7762, %v7728
    %v7845 = vpack.c.bf16 %v7764, %v7731
    %v7846 = vpack.c.bf16 %v7766, %v7734
    %v7847 = vpack.c.bf16 %v7768, %v7737
    %v7848 = vpack.c.bf16 %v7770, %v7740
    %v7849 = vpack.c.bf16 %v7772, %v7743
    %v7850 = vpack.c.bf16 %v7774, %v7746
    %v7851 = vpack.c.bf16 %v7776, %v7749
    %v7852 = vpack.c.bf16 %v7778, %v7752
    %v7853 = vpack.c.bf16 %v7780, %v7755
    %v7854 = vpack.c.bf16 %v7782, %v7758
    %v7855 = vld [vmem:[#allocation6] sm:$0xff]
    %v7856 = vld [vmem:[#allocation6 + $0x8] sm:$0xff]
    %v7857 = vld [vmem:[#allocation6 + $0x10] sm:$0xff]
    %v7858 = vld [vmem:[#allocation6 + $0x18] sm:$0xff]
    %v7859 = vld [vmem:[#allocation6 + $0x20] sm:$0xff]
    %v7860 = vld [vmem:[#allocation6 + $0x28] sm:$0xff]
    %v7861 = vld [vmem:[#allocation6 + $0x30] sm:$0xff]
    %v7862 = vld [vmem:[#allocation6 + $0x38] sm:$0xff]
    %v7863 = vld [vmem:[#allocation6 + $0x40] sm:$0xff]
    %v7864 = vld [vmem:[#allocation6 + $0x48] sm:$0xff]
    %v7865 = vld [vmem:[#allocation6 + $0x50] sm:$0xff]
    %v7866 = vld [vmem:[#allocation6 + $0x58] sm:$0xff]
    %v7867 = vld [vmem:[#allocation6 + $0x60] sm:$0xff]
    %v7868 = vld [vmem:[#allocation6 + $0x68] sm:$0xff]
    %v7869 = vld [vmem:[#allocation6 + $0x70] sm:$0xff]
    %v7870 = vld [vmem:[#allocation6 + $0x78] sm:$0xff]
    %v7871 = vld [vmem:[#allocation6 + $0x80] sm:$0xff]
    %v7872 = vld [vmem:[#allocation6 + $0x88] sm:$0xff]
    %v7873 = vld [vmem:[#allocation6 + $0x90] sm:$0xff]
    %v7874 = vld [vmem:[#allocation6 + $0x98] sm:$0xff]
    %v7875 = vld [vmem:[#allocation6 + $0xa0] sm:$0xff]
    %v7876 = vld [vmem:[#allocation6 + $0xa8] sm:$0xff]
    %v7877 = vld [vmem:[#allocation6 + $0xb0] sm:$0xff]
    %v7878 = vld [vmem:[#allocation6 + $0xb8] sm:$0xff]
    %v7879 = vld [vmem:[#allocation6 + $0xc0] sm:$0xff]
    %v7880 = vld [vmem:[#allocation6 + $0xc8] sm:$0xff]
    %v7881 = vld [vmem:[#allocation6 + $0xd0] sm:$0xff]
    %v7882 = vld [vmem:[#allocation6 + $0xd8] sm:$0xff]
    %v7883 = vld [vmem:[#allocation6 + $0xe0] sm:$0xff]
    %v7884 = vld [vmem:[#allocation6 + $0xe8] sm:$0xff]
    %v7885 = vld [vmem:[#allocation6 + $0xf0] sm:$0xff]
    %v7886 = vld [vmem:[#allocation6 + $0xf8] sm:$0xff]
    %v7887 = vld [vmem:[#allocation6 + $0x100] sm:$0xff]
    %v7888 = vld [vmem:[#allocation6 + $0x108] sm:$0xff]
    %v7889 = vld [vmem:[#allocation6 + $0x110] sm:$0xff]
    %v7890 = vld [vmem:[#allocation6 + $0x118] sm:$0xff]
    %v7891 = vld [vmem:[#allocation6 + $0x120] sm:$0xff]
    %v7892 = vld [vmem:[#allocation6 + $0x128] sm:$0xff]
    %v7893 = vld [vmem:[#allocation6 + $0x130] sm:$0xff]
    %v7894 = vld [vmem:[#allocation6 + $0x138] sm:$0xff]
    %v7895 = vld [vmem:[#allocation6 + $0x140] sm:$0xff]
    %v7896 = vld [vmem:[#allocation6 + $0x148] sm:$0xff]
    %v7897 = vld [vmem:[#allocation6 + $0x150] sm:$0xff]
    %v7898 = vld [vmem:[#allocation6 + $0x158] sm:$0xff]
    %v7899 = vld [vmem:[#allocation6 + $0x160] sm:$0xff]
    %v7900 = vld [vmem:[#allocation6 + $0x168] sm:$0xff]
    %v7901 = vld [vmem:[#allocation6 + $0x170] sm:$0xff]
    %v7902 = vld [vmem:[#allocation6 + $0x178] sm:$0xff]
    %v7903 = vld [vmem:[#allocation6 + $0x180] sm:$0xff]
    %v7904 = vld [vmem:[#allocation6 + $0x188] sm:$0xff]
    %v7905 = vld [vmem:[#allocation6 + $0x190] sm:$0xff]
    %v7906 = vld [vmem:[#allocation6 + $0x198] sm:$0xff]
    %v7907 = vld [vmem:[#allocation6 + $0x1a0] sm:$0xff]
    %v7908 = vld [vmem:[#allocation6 + $0x1a8] sm:$0xff]
    %v7909 = vld [vmem:[#allocation6 + $0x1b0] sm:$0xff]
    %v7910 = vld [vmem:[#allocation6 + $0x1b8] sm:$0xff]
    %v7911 = vld [vmem:[#allocation6 + $0x1c0] sm:$0xff]
    %v7912 = vld [vmem:[#allocation6 + $0x1c8] sm:$0xff]
    %v7913 = vld [vmem:[#allocation6 + $0x1d0] sm:$0xff]
    %v7914 = vld [vmem:[#allocation6 + $0x1d8] sm:$0xff]
    %v7915 = vld [vmem:[#allocation6 + $0x1e0] sm:$0xff]
    %v7916 = vld [vmem:[#allocation6 + $0x1e8] sm:$0xff]
    %v7917 = vld [vmem:[#allocation6 + $0x1f0] sm:$0xff]
    %v7918 = vld [vmem:[#allocation6 + $0x1f8] sm:$0xff]
    %v7919 = vld [vmem:[#allocation6 + $0x200] sm:$0xff]
    %v7920 = vld [vmem:[#allocation6 + $0x208] sm:$0xff]
    %v7921 = vld [vmem:[#allocation6 + $0x210] sm:$0xff]
    %v7922 = vld [vmem:[#allocation6 + $0x218] sm:$0xff]
    %v7923 = vld [vmem:[#allocation6 + $0x220] sm:$0xff]
    %v7924 = vld [vmem:[#allocation6 + $0x228] sm:$0xff]
    %v7925 = vld [vmem:[#allocation6 + $0x230] sm:$0xff]
    %v7926 = vld [vmem:[#allocation6 + $0x238] sm:$0xff]
    %v7927 = vld [vmem:[#allocation6 + $0x240] sm:$0xff]
    %v7928 = vld [vmem:[#allocation6 + $0x248] sm:$0xff]
    %v7929 = vld [vmem:[#allocation6 + $0x250] sm:$0xff]
    %v7930 = vld [vmem:[#allocation6 + $0x258] sm:$0xff]
    %v7931 = vld [vmem:[#allocation6 + $0x260] sm:$0xff]
    %v7932 = vld [vmem:[#allocation6 + $0x268] sm:$0xff]
    %v7933 = vld [vmem:[#allocation6 + $0x270] sm:$0xff]
    %v7934 = vld [vmem:[#allocation6 + $0x278] sm:$0xff]
    %v7935 = vld [vmem:[#allocation6 + $0x280] sm:$0xff]
    %v7936 = vld [vmem:[#allocation6 + $0x288] sm:$0xff]
    %v7937 = vld [vmem:[#allocation6 + $0x290] sm:$0xff]
    %v7938 = vld [vmem:[#allocation6 + $0x298] sm:$0xff]
    %v7939 = vld [vmem:[#allocation6 + $0x2a0] sm:$0xff]
    %v7940 = vld [vmem:[#allocation6 + $0x2a8] sm:$0xff]
    %v7941 = vld [vmem:[#allocation6 + $0x2b0] sm:$0xff]
    %v7942 = vld [vmem:[#allocation6 + $0x2b8] sm:$0xff]
    %v7943 = vld [vmem:[#allocation6 + $0x2c0] sm:$0xff]
    %v7944 = vld [vmem:[#allocation6 + $0x2c8] sm:$0xff]
    %v7945 = vld [vmem:[#allocation6 + $0x2d0] sm:$0xff]
    %v7946 = vld [vmem:[#allocation6 + $0x2d8] sm:$0xff]
    %v7947 = vld [vmem:[#allocation6 + $0x2e0] sm:$0xff]
    %v7948 = vld [vmem:[#allocation6 + $0x2e8] sm:$0xff]
    %v7949 = vld [vmem:[#allocation6 + $0x2f0] sm:$0xff]
    %v7950 = vld [vmem:[#allocation6 + $0x2f8] sm:$0xff]
    %v7951 = vld [vmem:[#allocation6 + $0x300] sm:$0xff]
    %v7952 = vld [vmem:[#allocation6 + $0x308] sm:$0xff]
    %v7953 = vld [vmem:[#allocation6 + $0x310] sm:$0xff]
    %v7954 = vld [vmem:[#allocation6 + $0x318] sm:$0xff]
    %v7955 = vld [vmem:[#allocation6 + $0x320] sm:$0xff]
    %v7956 = vld [vmem:[#allocation6 + $0x328] sm:$0xff]
    %v7957 = vld [vmem:[#allocation6 + $0x330] sm:$0xff]
    %v7958 = vld [vmem:[#allocation6 + $0x338] sm:$0xff]
    %v7959 = vld [vmem:[#allocation6 + $0x340] sm:$0xff]
    %v7960 = vld [vmem:[#allocation6 + $0x348] sm:$0xff]
    %v7961 = vld [vmem:[#allocation6 + $0x350] sm:$0xff]
    %v7962 = vld [vmem:[#allocation6 + $0x358] sm:$0xff]
    %v7963 = vld [vmem:[#allocation6 + $0x360] sm:$0xff]
    %v7964 = vld [vmem:[#allocation6 + $0x368] sm:$0xff]
    %v7965 = vld [vmem:[#allocation6 + $0x370] sm:$0xff]
    %v7966 = vld [vmem:[#allocation6 + $0x378] sm:$0xff]
    %v7967 = vld [vmem:[#allocation6 + $0x380] sm:$0xff]
    %v7968 = vld [vmem:[#allocation6 + $0x388] sm:$0xff]
    %v7969 = vld [vmem:[#allocation6 + $0x390] sm:$0xff]
    %v7970 = vld [vmem:[#allocation6 + $0x398] sm:$0xff]
    %v7971 = vld [vmem:[#allocation6 + $0x3a0] sm:$0xff]
    %v7972 = vld [vmem:[#allocation6 + $0x3a8] sm:$0xff]
    %v7973 = vld [vmem:[#allocation6 + $0x3b0] sm:$0xff]
    %v7974 = vld [vmem:[#allocation6 + $0x3b8] sm:$0xff]
    %v7975 = vld [vmem:[#allocation6 + $0x3c0] sm:$0xff]
    %v7976 = vld [vmem:[#allocation6 + $0x3c8] sm:$0xff]
    %v7977 = vld [vmem:[#allocation6 + $0x3d0] sm:$0xff]
    %v7978 = vld [vmem:[#allocation6 + $0x3d8] sm:$0xff]
    %v7979 = vld [vmem:[#allocation6 + $0x3e0] sm:$0xff]
    %v7980 = vld [vmem:[#allocation6 + $0x3e8] sm:$0xff]
    %v7981 = vld [vmem:[#allocation6 + $0x3f0] sm:$0xff]
    %v7982 = vld [vmem:[#allocation6 + $0x3f8] sm:$0xff]
    %v7983 = vld [vmem:[#allocation6 + $0x400] sm:$0xff]
    %v7984 = vld [vmem:[#allocation6 + $0x408] sm:$0xff]
    %v7985 = vld [vmem:[#allocation6 + $0x410] sm:$0xff]
    %v7986 = vld [vmem:[#allocation6 + $0x418] sm:$0xff]
    %v7987 = vld [vmem:[#allocation6 + $0x420] sm:$0xff]
    %v7988 = vld [vmem:[#allocation6 + $0x428] sm:$0xff]
    %v7989 = vld [vmem:[#allocation6 + $0x430] sm:$0xff]
    %v7990 = vld [vmem:[#allocation6 + $0x438] sm:$0xff]
    %v7991 = vld [vmem:[#allocation6 + $0x440] sm:$0xff]
    %v7992 = vld [vmem:[#allocation6 + $0x448] sm:$0xff]
    %v7993 = vld [vmem:[#allocation6 + $0x450] sm:$0xff]
    %v7994 = vld [vmem:[#allocation6 + $0x458] sm:$0xff]
    %v7995 = vld [vmem:[#allocation6 + $0x460] sm:$0xff]
    %v7996 = vld [vmem:[#allocation6 + $0x468] sm:$0xff]
    %v7997 = vld [vmem:[#allocation6 + $0x470] sm:$0xff]
    %v7998 = vld [vmem:[#allocation6 + $0x478] sm:$0xff]
    %v7999 = vld [vmem:[#allocation6 + $0x480] sm:$0xff]
    %v8000 = vld [vmem:[#allocation6 + $0x488] sm:$0xff]
    %v8001 = vld [vmem:[#allocation6 + $0x490] sm:$0xff]
    %v8002 = vld [vmem:[#allocation6 + $0x498] sm:$0xff]
    %v8003 = vld [vmem:[#allocation6 + $0x4a0] sm:$0xff]
    %v8004 = vld [vmem:[#allocation6 + $0x4a8] sm:$0xff]
    %v8005 = vld [vmem:[#allocation6 + $0x4b0] sm:$0xff]
    %v8006 = vld [vmem:[#allocation6 + $0x4b8] sm:$0xff]
    %v8007 = vld [vmem:[#allocation6 + $0x4c0] sm:$0xff]
    %v8008 = vld [vmem:[#allocation6 + $0x4c8] sm:$0xff]
    %v8009 = vld [vmem:[#allocation6 + $0x4d0] sm:$0xff]
    %v8010 = vld [vmem:[#allocation6 + $0x4d8] sm:$0xff]
    %v8011 = vld [vmem:[#allocation6 + $0x4e0] sm:$0xff]
    %v8012 = vld [vmem:[#allocation6 + $0x4e8] sm:$0xff]
    %v8013 = vld [vmem:[#allocation6 + $0x4f0] sm:$0xff]
    %v8014 = vld [vmem:[#allocation6 + $0x4f8] sm:$0xff]
    %v8015 = vld [vmem:[#allocation6 + $0x500] sm:$0xff]
    %v8016 = vld [vmem:[#allocation6 + $0x508] sm:$0xff]
    %v8017 = vld [vmem:[#allocation6 + $0x510] sm:$0xff]
    %v8018 = vld [vmem:[#allocation6 + $0x518] sm:$0xff]
    %v8019 = vld [vmem:[#allocation6 + $0x520] sm:$0xff]
    %v8020 = vld [vmem:[#allocation6 + $0x528] sm:$0xff]
    %v8021 = vld [vmem:[#allocation6 + $0x530] sm:$0xff]
    %v8022 = vld [vmem:[#allocation6 + $0x538] sm:$0xff]
    %v8023 = vld [vmem:[#allocation6 + $0x540] sm:$0xff]
    %v8024 = vld [vmem:[#allocation6 + $0x548] sm:$0xff]
    %v8025 = vld [vmem:[#allocation6 + $0x550] sm:$0xff]
    %v8026 = vld [vmem:[#allocation6 + $0x558] sm:$0xff]
    %v8027 = vld [vmem:[#allocation6 + $0x560] sm:$0xff]
    %v8028 = vld [vmem:[#allocation6 + $0x568] sm:$0xff]
    %v8029 = vld [vmem:[#allocation6 + $0x570] sm:$0xff]
    %v8030 = vld [vmem:[#allocation6 + $0x578] sm:$0xff]
    %v8031 = vld [vmem:[#allocation6 + $0x580] sm:$0xff]
    %v8032 = vld [vmem:[#allocation6 + $0x588] sm:$0xff]
    %v8033 = vld [vmem:[#allocation6 + $0x590] sm:$0xff]
    %v8034 = vld [vmem:[#allocation6 + $0x598] sm:$0xff]
    %v8035 = vld [vmem:[#allocation6 + $0x5a0] sm:$0xff]
    %v8036 = vld [vmem:[#allocation6 + $0x5a8] sm:$0xff]
    %v8037 = vld [vmem:[#allocation6 + $0x5b0] sm:$0xff]
    %v8038 = vld [vmem:[#allocation6 + $0x5b8] sm:$0xff]
    %v8039 = vld [vmem:[#allocation6 + $0x5c0] sm:$0xff]
    %v8040 = vld [vmem:[#allocation6 + $0x5c8] sm:$0xff]
    %v8041 = vld [vmem:[#allocation6 + $0x5d0] sm:$0xff]
    %v8042 = vld [vmem:[#allocation6 + $0x5d8] sm:$0xff]
    %v8043 = vld [vmem:[#allocation6 + $0x5e0] sm:$0xff]
    %v8044 = vld [vmem:[#allocation6 + $0x5e8] sm:$0xff]
    %v8045 = vld [vmem:[#allocation6 + $0x5f0] sm:$0xff]
    %v8046 = vld [vmem:[#allocation6 + $0x5f8] sm:$0xff]
    %v8047 = vld [vmem:[#allocation6 + $0x600] sm:$0xff]
    %v8048 = vld [vmem:[#allocation6 + $0x608] sm:$0xff]
    %v8049 = vld [vmem:[#allocation6 + $0x610] sm:$0xff]
    %v8050 = vld [vmem:[#allocation6 + $0x618] sm:$0xff]
    %v8051 = vld [vmem:[#allocation6 + $0x620] sm:$0xff]
    %v8052 = vld [vmem:[#allocation6 + $0x628] sm:$0xff]
    %v8053 = vld [vmem:[#allocation6 + $0x630] sm:$0xff]
    %v8054 = vld [vmem:[#allocation6 + $0x638] sm:$0xff]
    %v8055 = vld [vmem:[#allocation6 + $0x640] sm:$0xff]
    %v8056 = vld [vmem:[#allocation6 + $0x648] sm:$0xff]
    %v8057 = vld [vmem:[#allocation6 + $0x650] sm:$0xff]
    %v8058 = vld [vmem:[#allocation6 + $0x658] sm:$0xff]
    %v8059 = vld [vmem:[#allocation6 + $0x660] sm:$0xff]
    %v8060 = vld [vmem:[#allocation6 + $0x668] sm:$0xff]
    %v8061 = vld [vmem:[#allocation6 + $0x670] sm:$0xff]
    %v8062 = vld [vmem:[#allocation6 + $0x678] sm:$0xff]
    %v8063 = vld [vmem:[#allocation6 + $0x680] sm:$0xff]
    %v8064 = vld [vmem:[#allocation6 + $0x688] sm:$0xff]
    %v8065 = vld [vmem:[#allocation6 + $0x690] sm:$0xff]
    %v8066 = vld [vmem:[#allocation6 + $0x698] sm:$0xff]
    %v8067 = vld [vmem:[#allocation6 + $0x6a0] sm:$0xff]
    %v8068 = vld [vmem:[#allocation6 + $0x6a8] sm:$0xff]
    %v8069 = vld [vmem:[#allocation6 + $0x6b0] sm:$0xff]
    %v8070 = vld [vmem:[#allocation6 + $0x6b8] sm:$0xff]
    %v8071 = vld [vmem:[#allocation6 + $0x6c0] sm:$0xff]
    %v8072 = vld [vmem:[#allocation6 + $0x6c8] sm:$0xff]
    %v8073 = vld [vmem:[#allocation6 + $0x6d0] sm:$0xff]
    %v8074 = vld [vmem:[#allocation6 + $0x6d8] sm:$0xff]
    %v8075 = vld [vmem:[#allocation6 + $0x6e0] sm:$0xff]
    %v8076 = vld [vmem:[#allocation6 + $0x6e8] sm:$0xff]
    %v8077 = vld [vmem:[#allocation6 + $0x6f0] sm:$0xff]
    %v8078 = vld [vmem:[#allocation6 + $0x6f8] sm:$0xff]
    %v8079 = vld [vmem:[#allocation6 + $0x700] sm:$0xff]
    %v8080 = vld [vmem:[#allocation6 + $0x708] sm:$0xff]
    %v8081 = vld [vmem:[#allocation6 + $0x710] sm:$0xff]
    %v8082 = vld [vmem:[#allocation6 + $0x718] sm:$0xff]
    %v8083 = vld [vmem:[#allocation6 + $0x720] sm:$0xff]
    %v8084 = vld [vmem:[#allocation6 + $0x728] sm:$0xff]
    %v8085 = vld [vmem:[#allocation6 + $0x730] sm:$0xff]
    %v8086 = vld [vmem:[#allocation6 + $0x738] sm:$0xff]
    %v8087 = vld [vmem:[#allocation6 + $0x740] sm:$0xff]
    %v8088 = vld [vmem:[#allocation6 + $0x748] sm:$0xff]
    %v8089 = vld [vmem:[#allocation6 + $0x750] sm:$0xff]
    %v8090 = vld [vmem:[#allocation6 + $0x758] sm:$0xff]
    %v8091 = vld [vmem:[#allocation6 + $0x760] sm:$0xff]
    %v8092 = vld [vmem:[#allocation6 + $0x768] sm:$0xff]
    %v8093 = vld [vmem:[#allocation6 + $0x770] sm:$0xff]
    %v8094 = vld [vmem:[#allocation6 + $0x778] sm:$0xff]
    %v8095 = vld [vmem:[#allocation6 + $0x780] sm:$0xff]
    %v8096 = vld [vmem:[#allocation6 + $0x788] sm:$0xff]
    %v8097 = vld [vmem:[#allocation6 + $0x790] sm:$0xff]
    %v8098 = vld [vmem:[#allocation6 + $0x798] sm:$0xff]
    %v8099 = vld [vmem:[#allocation6 + $0x7a0] sm:$0xff]
    %v8100 = vld [vmem:[#allocation6 + $0x7a8] sm:$0xff]
    %v8101 = vld [vmem:[#allocation6 + $0x7b0] sm:$0xff]
    %v8102 = vld [vmem:[#allocation6 + $0x7b8] sm:$0xff]
    %v8103 = vld [vmem:[#allocation6 + $0x7c0] sm:$0xff]
    %v8104 = vld [vmem:[#allocation6 + $0x7c8] sm:$0xff]
    %v8105 = vld [vmem:[#allocation6 + $0x7d0] sm:$0xff]
    %v8106 = vld [vmem:[#allocation6 + $0x7d8] sm:$0xff]
    %v8107 = vld [vmem:[#allocation6 + $0x7e0] sm:$0xff]
    %v8108 = vld [vmem:[#allocation6 + $0x7e8] sm:$0xff]
    %v8109 = vld [vmem:[#allocation6 + $0x7f0] sm:$0xff]
    %v8110 = vld [vmem:[#allocation6 + $0x7f8] sm:$0xff]
    %v8111 = vld [vmem:[#allocation6 + $0x800] sm:$0xff]
    %v8112 = vld [vmem:[#allocation6 + $0x808] sm:$0xff]
    %v8113 = vld [vmem:[#allocation6 + $0x810] sm:$0xff]
    %v8114 = vld [vmem:[#allocation6 + $0x818] sm:$0xff]
    %v8115 = vld [vmem:[#allocation6 + $0x820] sm:$0xff]
    %v8116 = vld [vmem:[#allocation6 + $0x828] sm:$0xff]
    %v8117 = vld [vmem:[#allocation6 + $0x830] sm:$0xff]
    %v8118 = vld [vmem:[#allocation6 + $0x838] sm:$0xff]
    %v8119 = vld [vmem:[#allocation6 + $0x840] sm:$0xff]
    %v8120 = vld [vmem:[#allocation6 + $0x848] sm:$0xff]
    %v8121 = vld [vmem:[#allocation6 + $0x850] sm:$0xff]
    %v8122 = vld [vmem:[#allocation6 + $0x858] sm:$0xff]
    %v8123 = vld [vmem:[#allocation6 + $0x860] sm:$0xff]
    %v8124 = vld [vmem:[#allocation6 + $0x868] sm:$0xff]
    %v8125 = vld [vmem:[#allocation6 + $0x870] sm:$0xff]
    %v8126 = vld [vmem:[#allocation6 + $0x878] sm:$0xff]
    %v8127 = vld [vmem:[#allocation6 + $0x880] sm:$0xff]
    %v8128 = vld [vmem:[#allocation6 + $0x888] sm:$0xff]
    %v8129 = vld [vmem:[#allocation6 + $0x890] sm:$0xff]
    %v8130 = vld [vmem:[#allocation6 + $0x898] sm:$0xff]
    %v8131 = vld [vmem:[#allocation6 + $0x8a0] sm:$0xff]
    %v8132 = vld [vmem:[#allocation6 + $0x8a8] sm:$0xff]
    %v8133 = vld [vmem:[#allocation6 + $0x8b0] sm:$0xff]
    %v8134 = vld [vmem:[#allocation6 + $0x8b8] sm:$0xff]
    %v8135 = vld [vmem:[#allocation6 + $0x8c0] sm:$0xff]
    %v8136 = vld [vmem:[#allocation6 + $0x8c8] sm:$0xff]
    %v8137 = vld [vmem:[#allocation6 + $0x8d0] sm:$0xff]
    %v8138 = vld [vmem:[#allocation6 + $0x8d8] sm:$0xff]
    %v8139 = vld [vmem:[#allocation6 + $0x8e0] sm:$0xff]
    %v8140 = vld [vmem:[#allocation6 + $0x8e8] sm:$0xff]
    %v8141 = vld [vmem:[#allocation6 + $0x8f0] sm:$0xff]
    %v8142 = vld [vmem:[#allocation6 + $0x8f8] sm:$0xff]
    %v8143 = vld [vmem:[#allocation6 + $0x900] sm:$0xff]
    %v8144 = vld [vmem:[#allocation6 + $0x908] sm:$0xff]
    %v8145 = vld [vmem:[#allocation6 + $0x910] sm:$0xff]
    %v8146 = vld [vmem:[#allocation6 + $0x918] sm:$0xff]
    %v8147 = vld [vmem:[#allocation6 + $0x920] sm:$0xff]
    %v8148 = vld [vmem:[#allocation6 + $0x928] sm:$0xff]
    %v8149 = vld [vmem:[#allocation6 + $0x930] sm:$0xff]
    %v8150 = vld [vmem:[#allocation6 + $0x938] sm:$0xff]
    %v8151 = vld [vmem:[#allocation6 + $0x940] sm:$0xff]
    %v8152 = vld [vmem:[#allocation6 + $0x948] sm:$0xff]
    %v8153 = vld [vmem:[#allocation6 + $0x950] sm:$0xff]
    %v8154 = vld [vmem:[#allocation6 + $0x958] sm:$0xff]
    %v8155 = vld [vmem:[#allocation6 + $0x960] sm:$0xff]
    %v8156 = vld [vmem:[#allocation6 + $0x968] sm:$0xff]
    %v8157 = vld [vmem:[#allocation6 + $0x970] sm:$0xff]
    %v8158 = vld [vmem:[#allocation6 + $0x978] sm:$0xff]
    %v8159 = vld [vmem:[#allocation6 + $0x980] sm:$0xff]
    %v8160 = vld [vmem:[#allocation6 + $0x988] sm:$0xff]
    %v8161 = vld [vmem:[#allocation6 + $0x990] sm:$0xff]
    %v8162 = vld [vmem:[#allocation6 + $0x998] sm:$0xff]
    %v8163 = vld [vmem:[#allocation6 + $0x9a0] sm:$0xff]
    %v8164 = vld [vmem:[#allocation6 + $0x9a8] sm:$0xff]
    %v8165 = vld [vmem:[#allocation6 + $0x9b0] sm:$0xff]
    %v8166 = vld [vmem:[#allocation6 + $0x9b8] sm:$0xff]
    %v8167 = vld [vmem:[#allocation6 + $0x9c0] sm:$0xff]
    %v8168 = vld [vmem:[#allocation6 + $0x9c8] sm:$0xff]
    %v8169 = vld [vmem:[#allocation6 + $0x9d0] sm:$0xff]
    %v8170 = vld [vmem:[#allocation6 + $0x9d8] sm:$0xff]
    %v8171 = vld [vmem:[#allocation6 + $0x9e0] sm:$0xff]
    %v8172 = vld [vmem:[#allocation6 + $0x9e8] sm:$0xff]
    %v8173 = vld [vmem:[#allocation6 + $0x9f0] sm:$0xff]
    %v8174 = vld [vmem:[#allocation6 + $0x9f8] sm:$0xff]
    %v8175 = vld [vmem:[#allocation6 + $0xa00] sm:$0xff]
    %v8176 = vld [vmem:[#allocation6 + $0xa08] sm:$0xff]
    %v8177 = vld [vmem:[#allocation6 + $0xa10] sm:$0xff]
    %v8178 = vld [vmem:[#allocation6 + $0xa18] sm:$0xff]
    %v8179 = vld [vmem:[#allocation6 + $0xa20] sm:$0xff]
    %v8180 = vld [vmem:[#allocation6 + $0xa28] sm:$0xff]
    %v8181 = vld [vmem:[#allocation6 + $0xa30] sm:$0xff]
    %v8182 = vld [vmem:[#allocation6 + $0xa38] sm:$0xff]
    %v8183 = vld [vmem:[#allocation6 + $0xa40] sm:$0xff]
    %v8184 = vld [vmem:[#allocation6 + $0xa48] sm:$0xff]
    %v8185 = vld [vmem:[#allocation6 + $0xa50] sm:$0xff]
    %v8186 = vld [vmem:[#allocation6 + $0xa58] sm:$0xff]
    %v8187 = vld [vmem:[#allocation6 + $0xa60] sm:$0xff]
    %v8188 = vld [vmem:[#allocation6 + $0xa68] sm:$0xff]
    %v8189 = vld [vmem:[#allocation6 + $0xa70] sm:$0xff]
    %v8190 = vld [vmem:[#allocation6 + $0xa78] sm:$0xff]
    %v8191 = vld [vmem:[#allocation6 + $0xa80] sm:$0xff]
    %v8192 = vld [vmem:[#allocation6 + $0xa88] sm:$0xff]
    %v8193 = vld [vmem:[#allocation6 + $0xa90] sm:$0xff]
    %v8194 = vld [vmem:[#allocation6 + $0xa98] sm:$0xff]
    %v8195 = vld [vmem:[#allocation6 + $0xaa0] sm:$0xff]
    %v8196 = vld [vmem:[#allocation6 + $0xaa8] sm:$0xff]
    %v8197 = vld [vmem:[#allocation6 + $0xab0] sm:$0xff]
    %v8198 = vld [vmem:[#allocation6 + $0xab8] sm:$0xff]
    %v8199 = vld [vmem:[#allocation6 + $0xac0] sm:$0xff]
    %v8200 = vld [vmem:[#allocation6 + $0xac8] sm:$0xff]
    %v8201 = vld [vmem:[#allocation6 + $0xad0] sm:$0xff]
    %v8202 = vld [vmem:[#allocation6 + $0xad8] sm:$0xff]
    %v8203 = vld [vmem:[#allocation6 + $0xae0] sm:$0xff]
    %v8204 = vld [vmem:[#allocation6 + $0xae8] sm:$0xff]
    %v8205 = vld [vmem:[#allocation6 + $0xaf0] sm:$0xff]
    %v8206 = vld [vmem:[#allocation6 + $0xaf8] sm:$0xff]
    %v8207 = vld [vmem:[#allocation6 + $0xb00] sm:$0xff]
    %v8208 = vld [vmem:[#allocation6 + $0xb08] sm:$0xff]
    %v8209 = vld [vmem:[#allocation6 + $0xb10] sm:$0xff]
    %v8210 = vld [vmem:[#allocation6 + $0xb18] sm:$0xff]
    %v8211 = vld [vmem:[#allocation6 + $0xb20] sm:$0xff]
    %v8212 = vld [vmem:[#allocation6 + $0xb28] sm:$0xff]
    %v8213 = vld [vmem:[#allocation6 + $0xb30] sm:$0xff]
    %v8214 = vld [vmem:[#allocation6 + $0xb38] sm:$0xff]
    %v8215 = vld [vmem:[#allocation6 + $0xb40] sm:$0xff]
    %v8216 = vld [vmem:[#allocation6 + $0xb48] sm:$0xff]
    %v8217 = vld [vmem:[#allocation6 + $0xb50] sm:$0xff]
    %v8218 = vld [vmem:[#allocation6 + $0xb58] sm:$0xff]
    %v8219 = vld [vmem:[#allocation6 + $0xb60] sm:$0xff]
    %v8220 = vld [vmem:[#allocation6 + $0xb68] sm:$0xff]
    %v8221 = vld [vmem:[#allocation6 + $0xb70] sm:$0xff]
    %v8222 = vld [vmem:[#allocation6 + $0xb78] sm:$0xff]
    %v8223 = vld [vmem:[#allocation6 + $0xb80] sm:$0xff]
    %v8224 = vld [vmem:[#allocation6 + $0xb88] sm:$0xff]
    %v8225 = vld [vmem:[#allocation6 + $0xb90] sm:$0xff]
    %v8226 = vld [vmem:[#allocation6 + $0xb98] sm:$0xff]
    %v8227 = vld [vmem:[#allocation6 + $0xba0] sm:$0xff]
    %v8228 = vld [vmem:[#allocation6 + $0xba8] sm:$0xff]
    %v8229 = vld [vmem:[#allocation6 + $0xbb0] sm:$0xff]
    %v8230 = vld [vmem:[#allocation6 + $0xbb8] sm:$0xff]
    %v8231 = vld [vmem:[#allocation6 + $0xbc0] sm:$0xff]
    %v8232 = vld [vmem:[#allocation6 + $0xbc8] sm:$0xff]
    %v8233 = vld [vmem:[#allocation6 + $0xbd0] sm:$0xff]
    %v8234 = vld [vmem:[#allocation6 + $0xbd8] sm:$0xff]
    %v8235 = vld [vmem:[#allocation6 + $0xbe0] sm:$0xff]
    %v8236 = vld [vmem:[#allocation6 + $0xbe8] sm:$0xff]
    %v8237 = vld [vmem:[#allocation6 + $0xbf0] sm:$0xff]
    %v8238 = vld [vmem:[#allocation6 + $0xbf8] sm:$0xff]
    %v8239 = vld [vmem:[%s8] sm:$0xf]
    %v8241 = vlaneseq
    %v8242 = vshrl.u32 %v8241, 7
    %v8243 = vsub.s32 0, %v8242
    %v8244 = vrot.slane %v8239, %v8243
    %v8245 = vlaneseq
    %v8246 = vshrl.u32 %v8245, 7
    %v8247 = vsub.s32 1, %v8246
    %v8248 = vrot.slane %v8239, %v8247
    %v8249 = vlaneseq
    %v8250 = vshrl.u32 %v8249, 7
    %v8251 = vsub.s32 2, %v8250
    %v8252 = vrot.slane %v8239, %v8251
    %v8253 = vlaneseq
    %v8254 = vshrl.u32 %v8253, 7
    %v8255 = vsub.s32 3, %v8254
    %v8256 = vrot.slane %v8239, %v8255
    %v8645 = vunpack.c.l.b16 %v7855
    %v8646 = vunpack.c.h.b16 %v7855
    %v8647 = vunpack.c.l.b16 %v7856
    %v8648 = vunpack.c.h.b16 %v7856
    %v8649 = vunpack.c.l.b16 %v7857
    %v8650 = vunpack.c.h.b16 %v7857
    %v8651 = vunpack.c.l.b16 %v7858
    %v8652 = vunpack.c.h.b16 %v7858
    %v8653 = vunpack.c.l.b16 %v7859
    %v8654 = vunpack.c.h.b16 %v7859
    %v8655 = vunpack.c.l.b16 %v7860
    %v8656 = vunpack.c.h.b16 %v7860
    %v8657 = vunpack.c.l.b16 %v7861
    %v8658 = vunpack.c.h.b16 %v7861
    %v8659 = vunpack.c.l.b16 %v7862
    %v8660 = vunpack.c.h.b16 %v7862
    %v8661 = vunpack.c.l.b16 %v7863
    %v8662 = vunpack.c.h.b16 %v7863
    %v8663 = vunpack.c.l.b16 %v7864
    %v8664 = vunpack.c.h.b16 %v7864
    %v8665 = vunpack.c.l.b16 %v7865
    %v8666 = vunpack.c.h.b16 %v7865
    %v8667 = vunpack.c.l.b16 %v7866
    %v8668 = vunpack.c.h.b16 %v7866
    %v8669 = vunpack.c.l.b16 %v7867
    %v8670 = vunpack.c.h.b16 %v7867
    %v8671 = vunpack.c.l.b16 %v7868
    %v8672 = vunpack.c.h.b16 %v7868
    %v8673 = vunpack.c.l.b16 %v7869
    %v8674 = vunpack.c.h.b16 %v7869
    %v8675 = vunpack.c.l.b16 %v7870
    %v8676 = vunpack.c.h.b16 %v7870
    %v8677 = vunpack.c.l.b16 %v7871
    %v8678 = vunpack.c.h.b16 %v7871
    %v8679 = vunpack.c.l.b16 %v7872
    %v8680 = vunpack.c.h.b16 %v7872
    %v8681 = vunpack.c.l.b16 %v7873
    %v8682 = vunpack.c.h.b16 %v7873
    %v8683 = vunpack.c.l.b16 %v7874
    %v8684 = vunpack.c.h.b16 %v7874
    %v8685 = vunpack.c.l.b16 %v7875
    %v8686 = vunpack.c.h.b16 %v7875
    %v8687 = vunpack.c.l.b16 %v7876
    %v8688 = vunpack.c.h.b16 %v7876
    %v8689 = vunpack.c.l.b16 %v7877
    %v8690 = vunpack.c.h.b16 %v7877
    %v8691 = vunpack.c.l.b16 %v7878
    %v8692 = vunpack.c.h.b16 %v7878
    %v8693 = vunpack.c.l.b16 %v7879
    %v8694 = vunpack.c.h.b16 %v7879
    %v8695 = vunpack.c.l.b16 %v7880
    %v8696 = vunpack.c.h.b16 %v7880
    %v8697 = vunpack.c.l.b16 %v7881
    %v8698 = vunpack.c.h.b16 %v7881
    %v8699 = vunpack.c.l.b16 %v7882
    %v8700 = vunpack.c.h.b16 %v7882
    %v8701 = vunpack.c.l.b16 %v7883
    %v8702 = vunpack.c.h.b16 %v7883
    %v8703 = vunpack.c.l.b16 %v7884
    %v8704 = vunpack.c.h.b16 %v7884
    %v8705 = vunpack.c.l.b16 %v7885
    %v8706 = vunpack.c.h.b16 %v7885
    %v8707 = vunpack.c.l.b16 %v7886
    %v8708 = vunpack.c.h.b16 %v7886
    %v8709 = vunpack.c.l.b16 %v7887
    %v8710 = vunpack.c.h.b16 %v7887
    %v8711 = vunpack.c.l.b16 %v7888
    %v8712 = vunpack.c.h.b16 %v7888
    %v8713 = vunpack.c.l.b16 %v7889
    %v8714 = vunpack.c.h.b16 %v7889
    %v8715 = vunpack.c.l.b16 %v7890
    %v8716 = vunpack.c.h.b16 %v7890
    %v8717 = vunpack.c.l.b16 %v7891
    %v8718 = vunpack.c.h.b16 %v7891
    %v8719 = vunpack.c.l.b16 %v7892
    %v8720 = vunpack.c.h.b16 %v7892
    %v8721 = vunpack.c.l.b16 %v7893
    %v8722 = vunpack.c.h.b16 %v7893
    %v8723 = vunpack.c.l.b16 %v7894
    %v8724 = vunpack.c.h.b16 %v7894
    %v8725 = vunpack.c.l.b16 %v7895
    %v8726 = vunpack.c.h.b16 %v7895
    %v8727 = vunpack.c.l.b16 %v7896
    %v8728 = vunpack.c.h.b16 %v7896
    %v8729 = vunpack.c.l.b16 %v7897
    %v8730 = vunpack.c.h.b16 %v7897
    %v8731 = vunpack.c.l.b16 %v7898
    %v8732 = vunpack.c.h.b16 %v7898
    %v8733 = vunpack.c.l.b16 %v7899
    %v8734 = vunpack.c.h.b16 %v7899
    %v8735 = vunpack.c.l.b16 %v7900
    %v8736 = vunpack.c.h.b16 %v7900
    %v8737 = vunpack.c.l.b16 %v7901
    %v8738 = vunpack.c.h.b16 %v7901
    %v8739 = vunpack.c.l.b16 %v7902
    %v8740 = vunpack.c.h.b16 %v7902
    %v8741 = vunpack.c.l.b16 %v7903
    %v8742 = vunpack.c.h.b16 %v7903
    %v8743 = vunpack.c.l.b16 %v7904
    %v8744 = vunpack.c.h.b16 %v7904
    %v8745 = vunpack.c.l.b16 %v7905
    %v8746 = vunpack.c.h.b16 %v7905
    %v8747 = vunpack.c.l.b16 %v7906
    %v8748 = vunpack.c.h.b16 %v7906
    %v8749 = vunpack.c.l.b16 %v7907
    %v8750 = vunpack.c.h.b16 %v7907
    %v8751 = vunpack.c.l.b16 %v7908
    %v8752 = vunpack.c.h.b16 %v7908
    %v8753 = vunpack.c.l.b16 %v7909
    %v8754 = vunpack.c.h.b16 %v7909
    %v8755 = vunpack.c.l.b16 %v7910
    %v8756 = vunpack.c.h.b16 %v7910
    %v8757 = vunpack.c.l.b16 %v7911
    %v8758 = vunpack.c.h.b16 %v7911
    %v8759 = vunpack.c.l.b16 %v7912
    %v8760 = vunpack.c.h.b16 %v7912
    %v8761 = vunpack.c.l.b16 %v7913
    %v8762 = vunpack.c.h.b16 %v7913
    %v8763 = vunpack.c.l.b16 %v7914
    %v8764 = vunpack.c.h.b16 %v7914
    %v8765 = vunpack.c.l.b16 %v7915
    %v8766 = vunpack.c.h.b16 %v7915
    %v8767 = vunpack.c.l.b16 %v7916
    %v8768 = vunpack.c.h.b16 %v7916
    %v8769 = vunpack.c.l.b16 %v7917
    %v8770 = vunpack.c.h.b16 %v7917
    %v8771 = vunpack.c.l.b16 %v7918
    %v8772 = vunpack.c.h.b16 %v7918
    %v8773 = vunpack.c.l.b16 %v7919
    %v8774 = vunpack.c.h.b16 %v7919
    %v8775 = vunpack.c.l.b16 %v7920
    %v8776 = vunpack.c.h.b16 %v7920
    %v8777 = vunpack.c.l.b16 %v7921
    %v8778 = vunpack.c.h.b16 %v7921
    %v8779 = vunpack.c.l.b16 %v7922
    %v8780 = vunpack.c.h.b16 %v7922
    %v8781 = vunpack.c.l.b16 %v7923
    %v8782 = vunpack.c.h.b16 %v7923
    %v8783 = vunpack.c.l.b16 %v7924
    %v8784 = vunpack.c.h.b16 %v7924
    %v8785 = vunpack.c.l.b16 %v7925
    %v8786 = vunpack.c.h.b16 %v7925
    %v8787 = vunpack.c.l.b16 %v7926
    %v8788 = vunpack.c.h.b16 %v7926
    %v8789 = vunpack.c.l.b16 %v7927
    %v8790 = vunpack.c.h.b16 %v7927
    %v8791 = vunpack.c.l.b16 %v7928
    %v8792 = vunpack.c.h.b16 %v7928
    %v8793 = vunpack.c.l.b16 %v7929
    %v8794 = vunpack.c.h.b16 %v7929
    %v8795 = vunpack.c.l.b16 %v7930
    %v8796 = vunpack.c.h.b16 %v7930
    %v8797 = vunpack.c.l.b16 %v7931
    %v8798 = vunpack.c.h.b16 %v7931
    %v8799 = vunpack.c.l.b16 %v7932
    %v8800 = vunpack.c.h.b16 %v7932
    %v8801 = vunpack.c.l.b16 %v7933
    %v8802 = vunpack.c.h.b16 %v7933
    %v8803 = vunpack.c.l.b16 %v7934
    %v8804 = vunpack.c.h.b16 %v7934
    %v8805 = vunpack.c.l.b16 %v7935
    %v8806 = vunpack.c.h.b16 %v7935
    %v8807 = vunpack.c.l.b16 %v7936
    %v8808 = vunpack.c.h.b16 %v7936
    %v8809 = vunpack.c.l.b16 %v7937
    %v8810 = vunpack.c.h.b16 %v7937
    %v8811 = vunpack.c.l.b16 %v7938
    %v8812 = vunpack.c.h.b16 %v7938
    %v8813 = vunpack.c.l.b16 %v7939
    %v8814 = vunpack.c.h.b16 %v7939
    %v8815 = vunpack.c.l.b16 %v7940
    %v8816 = vunpack.c.h.b16 %v7940
    %v8817 = vunpack.c.l.b16 %v7941
    %v8818 = vunpack.c.h.b16 %v7941
    %v8819 = vunpack.c.l.b16 %v7942
    %v8820 = vunpack.c.h.b16 %v7942
    %v8821 = vunpack.c.l.b16 %v7943
    %v8822 = vunpack.c.h.b16 %v7943
    %v8823 = vunpack.c.l.b16 %v7944
    %v8824 = vunpack.c.h.b16 %v7944
    %v8825 = vunpack.c.l.b16 %v7945
    %v8826 = vunpack.c.h.b16 %v7945
    %v8827 = vunpack.c.l.b16 %v7946
    %v8828 = vunpack.c.h.b16 %v7946
    %v8829 = vunpack.c.l.b16 %v7947
    %v8830 = vunpack.c.h.b16 %v7947
    %v8831 = vunpack.c.l.b16 %v7948
    %v8832 = vunpack.c.h.b16 %v7948
    %v8833 = vunpack.c.l.b16 %v7949
    %v8834 = vunpack.c.h.b16 %v7949
    %v8835 = vunpack.c.l.b16 %v7950
    %v8836 = vunpack.c.h.b16 %v7950
    %v8837 = vunpack.c.l.b16 %v7951
    %v8838 = vunpack.c.h.b16 %v7951
    %v8839 = vunpack.c.l.b16 %v7952
    %v8840 = vunpack.c.h.b16 %v7952
    %v8841 = vunpack.c.l.b16 %v7953
    %v8842 = vunpack.c.h.b16 %v7953
    %v8843 = vunpack.c.l.b16 %v7954
    %v8844 = vunpack.c.h.b16 %v7954
    %v8845 = vunpack.c.l.b16 %v7955
    %v8846 = vunpack.c.h.b16 %v7955
    %v8847 = vunpack.c.l.b16 %v7956
    %v8848 = vunpack.c.h.b16 %v7956
    %v8849 = vunpack.c.l.b16 %v7957
    %v8850 = vunpack.c.h.b16 %v7957
    %v8851 = vunpack.c.l.b16 %v7958
    %v8852 = vunpack.c.h.b16 %v7958
    %v8853 = vunpack.c.l.b16 %v7959
    %v8854 = vunpack.c.h.b16 %v7959
    %v8855 = vunpack.c.l.b16 %v7960
    %v8856 = vunpack.c.h.b16 %v7960
    %v8857 = vunpack.c.l.b16 %v7961
    %v8858 = vunpack.c.h.b16 %v7961
    %v8859 = vunpack.c.l.b16 %v7962
    %v8860 = vunpack.c.h.b16 %v7962
    %v8861 = vunpack.c.l.b16 %v7963
    %v8862 = vunpack.c.h.b16 %v7963
    %v8863 = vunpack.c.l.b16 %v7964
    %v8864 = vunpack.c.h.b16 %v7964
    %v8865 = vunpack.c.l.b16 %v7965
    %v8866 = vunpack.c.h.b16 %v7965
    %v8867 = vunpack.c.l.b16 %v7966
    %v8868 = vunpack.c.h.b16 %v7966
    %v8869 = vunpack.c.l.b16 %v7967
    %v8870 = vunpack.c.h.b16 %v7967
    %v8871 = vunpack.c.l.b16 %v7968
    %v8872 = vunpack.c.h.b16 %v7968
    %v8873 = vunpack.c.l.b16 %v7969
    %v8874 = vunpack.c.h.b16 %v7969
    %v8875 = vunpack.c.l.b16 %v7970
    %v8876 = vunpack.c.h.b16 %v7970
    %v8877 = vunpack.c.l.b16 %v7971
    %v8878 = vunpack.c.h.b16 %v7971
    %v8879 = vunpack.c.l.b16 %v7972
    %v8880 = vunpack.c.h.b16 %v7972
    %v8881 = vunpack.c.l.b16 %v7973
    %v8882 = vunpack.c.h.b16 %v7973
    %v8883 = vunpack.c.l.b16 %v7974
    %v8884 = vunpack.c.h.b16 %v7974
    %v8885 = vunpack.c.l.b16 %v7975
    %v8886 = vunpack.c.h.b16 %v7975
    %v8887 = vunpack.c.l.b16 %v7976
    %v8888 = vunpack.c.h.b16 %v7976
    %v8889 = vunpack.c.l.b16 %v7977
    %v8890 = vunpack.c.h.b16 %v7977
    %v8891 = vunpack.c.l.b16 %v7978
    %v8892 = vunpack.c.h.b16 %v7978
    %v8893 = vunpack.c.l.b16 %v7979
    %v8894 = vunpack.c.h.b16 %v7979
    %v8895 = vunpack.c.l.b16 %v7980
    %v8896 = vunpack.c.h.b16 %v7980
    %v8897 = vunpack.c.l.b16 %v7981
    %v8898 = vunpack.c.h.b16 %v7981
    %v8899 = vunpack.c.l.b16 %v7982
    %v8900 = vunpack.c.h.b16 %v7982
    %v8901 = vunpack.c.l.b16 %v7983
    %v8902 = vunpack.c.h.b16 %v7983
    %v8903 = vunpack.c.l.b16 %v7984
    %v8904 = vunpack.c.h.b16 %v7984
    %v8905 = vunpack.c.l.b16 %v7985
    %v8906 = vunpack.c.h.b16 %v7985
    %v8907 = vunpack.c.l.b16 %v7986
    %v8908 = vunpack.c.h.b16 %v7986
    %v8909 = vunpack.c.l.b16 %v7987
    %v8910 = vunpack.c.h.b16 %v7987
    %v8911 = vunpack.c.l.b16 %v7988
    %v8912 = vunpack.c.h.b16 %v7988
    %v8913 = vunpack.c.l.b16 %v7989
    %v8914 = vunpack.c.h.b16 %v7989
    %v8915 = vunpack.c.l.b16 %v7990
    %v8916 = vunpack.c.h.b16 %v7990
    %v8917 = vunpack.c.l.b16 %v7991
    %v8918 = vunpack.c.h.b16 %v7991
    %v8919 = vunpack.c.l.b16 %v7992
    %v8920 = vunpack.c.h.b16 %v7992
    %v8921 = vunpack.c.l.b16 %v7993
    %v8922 = vunpack.c.h.b16 %v7993
    %v8923 = vunpack.c.l.b16 %v7994
    %v8924 = vunpack.c.h.b16 %v7994
    %v8925 = vunpack.c.l.b16 %v7995
    %v8926 = vunpack.c.h.b16 %v7995
    %v8927 = vunpack.c.l.b16 %v7996
    %v8928 = vunpack.c.h.b16 %v7996
    %v8929 = vunpack.c.l.b16 %v7997
    %v8930 = vunpack.c.h.b16 %v7997
    %v8931 = vunpack.c.l.b16 %v7998
    %v8932 = vunpack.c.h.b16 %v7998
    %v8933 = vunpack.c.l.b16 %v7999
    %v8934 = vunpack.c.h.b16 %v7999
    %v8935 = vunpack.c.l.b16 %v8000
    %v8936 = vunpack.c.h.b16 %v8000
    %v8937 = vunpack.c.l.b16 %v8001
    %v8938 = vunpack.c.h.b16 %v8001
    %v8939 = vunpack.c.l.b16 %v8002
    %v8940 = vunpack.c.h.b16 %v8002
    %v8941 = vunpack.c.l.b16 %v8003
    %v8942 = vunpack.c.h.b16 %v8003
    %v8943 = vunpack.c.l.b16 %v8004
    %v8944 = vunpack.c.h.b16 %v8004
    %v8945 = vunpack.c.l.b16 %v8005
    %v8946 = vunpack.c.h.b16 %v8005
    %v8947 = vunpack.c.l.b16 %v8006
    %v8948 = vunpack.c.h.b16 %v8006
    %v8949 = vunpack.c.l.b16 %v8007
    %v8950 = vunpack.c.h.b16 %v8007
    %v8951 = vunpack.c.l.b16 %v8008
    %v8952 = vunpack.c.h.b16 %v8008
    %v8953 = vunpack.c.l.b16 %v8009
    %v8954 = vunpack.c.h.b16 %v8009
    %v8955 = vunpack.c.l.b16 %v8010
    %v8956 = vunpack.c.h.b16 %v8010
    %v8957 = vunpack.c.l.b16 %v8011
    %v8958 = vunpack.c.h.b16 %v8011
    %v8959 = vunpack.c.l.b16 %v8012
    %v8960 = vunpack.c.h.b16 %v8012
    %v8961 = vunpack.c.l.b16 %v8013
    %v8962 = vunpack.c.h.b16 %v8013
    %v8963 = vunpack.c.l.b16 %v8014
    %v8964 = vunpack.c.h.b16 %v8014
    %v8965 = vunpack.c.l.b16 %v8015
    %v8966 = vunpack.c.h.b16 %v8015
    %v8967 = vunpack.c.l.b16 %v8016
    %v8968 = vunpack.c.h.b16 %v8016
    %v8969 = vunpack.c.l.b16 %v8017
    %v8970 = vunpack.c.h.b16 %v8017
    %v8971 = vunpack.c.l.b16 %v8018
    %v8972 = vunpack.c.h.b16 %v8018
    %v8973 = vunpack.c.l.b16 %v8019
    %v8974 = vunpack.c.h.b16 %v8019
    %v8975 = vunpack.c.l.b16 %v8020
    %v8976 = vunpack.c.h.b16 %v8020
    %v8977 = vunpack.c.l.b16 %v8021
    %v8978 = vunpack.c.h.b16 %v8021
    %v8979 = vunpack.c.l.b16 %v8022
    %v8980 = vunpack.c.h.b16 %v8022
    %v8981 = vunpack.c.l.b16 %v8023
    %v8982 = vunpack.c.h.b16 %v8023
    %v8983 = vunpack.c.l.b16 %v8024
    %v8984 = vunpack.c.h.b16 %v8024
    %v8985 = vunpack.c.l.b16 %v8025
    %v8986 = vunpack.c.h.b16 %v8025
    %v8987 = vunpack.c.l.b16 %v8026
    %v8988 = vunpack.c.h.b16 %v8026
    %v8989 = vunpack.c.l.b16 %v8027
    %v8990 = vunpack.c.h.b16 %v8027
    %v8991 = vunpack.c.l.b16 %v8028
    %v8992 = vunpack.c.h.b16 %v8028
    %v8993 = vunpack.c.l.b16 %v8029
    %v8994 = vunpack.c.h.b16 %v8029
    %v8995 = vunpack.c.l.b16 %v8030
    %v8996 = vunpack.c.h.b16 %v8030
    %v8997 = vunpack.c.l.b16 %v8031
    %v8998 = vunpack.c.h.b16 %v8031
    %v8999 = vunpack.c.l.b16 %v8032
    %v9000 = vunpack.c.h.b16 %v8032
    %v9001 = vunpack.c.l.b16 %v8033
    %v9002 = vunpack.c.h.b16 %v8033
    %v9003 = vunpack.c.l.b16 %v8034
    %v9004 = vunpack.c.h.b16 %v8034
    %v9005 = vunpack.c.l.b16 %v8035
    %v9006 = vunpack.c.h.b16 %v8035
    %v9007 = vunpack.c.l.b16 %v8036
    %v9008 = vunpack.c.h.b16 %v8036
    %v9009 = vunpack.c.l.b16 %v8037
    %v9010 = vunpack.c.h.b16 %v8037
    %v9011 = vunpack.c.l.b16 %v8038
    %v9012 = vunpack.c.h.b16 %v8038
    %v9013 = vunpack.c.l.b16 %v8039
    %v9014 = vunpack.c.h.b16 %v8039
    %v9015 = vunpack.c.l.b16 %v8040
    %v9016 = vunpack.c.h.b16 %v8040
    %v9017 = vunpack.c.l.b16 %v8041
    %v9018 = vunpack.c.h.b16 %v8041
    %v9019 = vunpack.c.l.b16 %v8042
    %v9020 = vunpack.c.h.b16 %v8042
    %v9021 = vunpack.c.l.b16 %v8043
    %v9022 = vunpack.c.h.b16 %v8043
    %v9023 = vunpack.c.l.b16 %v8044
    %v9024 = vunpack.c.h.b16 %v8044
    %v9025 = vunpack.c.l.b16 %v8045
    %v9026 = vunpack.c.h.b16 %v8045
    %v9027 = vunpack.c.l.b16 %v8046
    %v9028 = vunpack.c.h.b16 %v8046
    %v9029 = vunpack.c.l.b16 %v8047
    %v9030 = vunpack.c.h.b16 %v8047
    %v9031 = vunpack.c.l.b16 %v8048
    %v9032 = vunpack.c.h.b16 %v8048
    %v9033 = vunpack.c.l.b16 %v8049
    %v9034 = vunpack.c.h.b16 %v8049
    %v9035 = vunpack.c.l.b16 %v8050
    %v9036 = vunpack.c.h.b16 %v8050
    %v9037 = vunpack.c.l.b16 %v8051
    %v9038 = vunpack.c.h.b16 %v8051
    %v9039 = vunpack.c.l.b16 %v8052
    %v9040 = vunpack.c.h.b16 %v8052
    %v9041 = vunpack.c.l.b16 %v8053
    %v9042 = vunpack.c.h.b16 %v8053
    %v9043 = vunpack.c.l.b16 %v8054
    %v9044 = vunpack.c.h.b16 %v8054
    %v9045 = vunpack.c.l.b16 %v8055
    %v9046 = vunpack.c.h.b16 %v8055
    %v9047 = vunpack.c.l.b16 %v8056
    %v9048 = vunpack.c.h.b16 %v8056
    %v9049 = vunpack.c.l.b16 %v8057
    %v9050 = vunpack.c.h.b16 %v8057
    %v9051 = vunpack.c.l.b16 %v8058
    %v9052 = vunpack.c.h.b16 %v8058
    %v9053 = vunpack.c.l.b16 %v8059
    %v9054 = vunpack.c.h.b16 %v8059
    %v9055 = vunpack.c.l.b16 %v8060
    %v9056 = vunpack.c.h.b16 %v8060
    %v9057 = vunpack.c.l.b16 %v8061
    %v9058 = vunpack.c.h.b16 %v8061
    %v9059 = vunpack.c.l.b16 %v8062
    %v9060 = vunpack.c.h.b16 %v8062
    %v9061 = vunpack.c.l.b16 %v8063
    %v9062 = vunpack.c.h.b16 %v8063
    %v9063 = vunpack.c.l.b16 %v8064
    %v9064 = vunpack.c.h.b16 %v8064
    %v9065 = vunpack.c.l.b16 %v8065
    %v9066 = vunpack.c.h.b16 %v8065
    %v9067 = vunpack.c.l.b16 %v8066
    %v9068 = vunpack.c.h.b16 %v8066
    %v9069 = vunpack.c.l.b16 %v8067
    %v9070 = vunpack.c.h.b16 %v8067
    %v9071 = vunpack.c.l.b16 %v8068
    %v9072 = vunpack.c.h.b16 %v8068
    %v9073 = vunpack.c.l.b16 %v8069
    %v9074 = vunpack.c.h.b16 %v8069
    %v9075 = vunpack.c.l.b16 %v8070
    %v9076 = vunpack.c.h.b16 %v8070
    %v9077 = vunpack.c.l.b16 %v8071
    %v9078 = vunpack.c.h.b16 %v8071
    %v9079 = vunpack.c.l.b16 %v8072
    %v9080 = vunpack.c.h.b16 %v8072
    %v9081 = vunpack.c.l.b16 %v8073
    %v9082 = vunpack.c.h.b16 %v8073
    %v9083 = vunpack.c.l.b16 %v8074
    %v9084 = vunpack.c.h.b16 %v8074
    %v9085 = vunpack.c.l.b16 %v8075
    %v9086 = vunpack.c.h.b16 %v8075
    %v9087 = vunpack.c.l.b16 %v8076
    %v9088 = vunpack.c.h.b16 %v8076
    %v9089 = vunpack.c.l.b16 %v8077
    %v9090 = vunpack.c.h.b16 %v8077
    %v9091 = vunpack.c.l.b16 %v8078
    %v9092 = vunpack.c.h.b16 %v8078
    %v9093 = vunpack.c.l.b16 %v8079
    %v9094 = vunpack.c.h.b16 %v8079
    %v9095 = vunpack.c.l.b16 %v8080
    %v9096 = vunpack.c.h.b16 %v8080
    %v9097 = vunpack.c.l.b16 %v8081
    %v9098 = vunpack.c.h.b16 %v8081
    %v9099 = vunpack.c.l.b16 %v8082
    %v9100 = vunpack.c.h.b16 %v8082
    %v9101 = vunpack.c.l.b16 %v8083
    %v9102 = vunpack.c.h.b16 %v8083
    %v9103 = vunpack.c.l.b16 %v8084
    %v9104 = vunpack.c.h.b16 %v8084
    %v9105 = vunpack.c.l.b16 %v8085
    %v9106 = vunpack.c.h.b16 %v8085
    %v9107 = vunpack.c.l.b16 %v8086
    %v9108 = vunpack.c.h.b16 %v8086
    %v9109 = vunpack.c.l.b16 %v8087
    %v9110 = vunpack.c.h.b16 %v8087
    %v9111 = vunpack.c.l.b16 %v8088
    %v9112 = vunpack.c.h.b16 %v8088
    %v9113 = vunpack.c.l.b16 %v8089
    %v9114 = vunpack.c.h.b16 %v8089
    %v9115 = vunpack.c.l.b16 %v8090
    %v9116 = vunpack.c.h.b16 %v8090
    %v9117 = vunpack.c.l.b16 %v8091
    %v9118 = vunpack.c.h.b16 %v8091
    %v9119 = vunpack.c.l.b16 %v8092
    %v9120 = vunpack.c.h.b16 %v8092
    %v9121 = vunpack.c.l.b16 %v8093
    %v9122 = vunpack.c.h.b16 %v8093
    %v9123 = vunpack.c.l.b16 %v8094
    %v9124 = vunpack.c.h.b16 %v8094
    %v9125 = vunpack.c.l.b16 %v8095
    %v9126 = vunpack.c.h.b16 %v8095
    %v9127 = vunpack.c.l.b16 %v8096
    %v9128 = vunpack.c.h.b16 %v8096
    %v9129 = vunpack.c.l.b16 %v8097
    %v9130 = vunpack.c.h.b16 %v8097
    %v9131 = vunpack.c.l.b16 %v8098
    %v9132 = vunpack.c.h.b16 %v8098
    %v9133 = vunpack.c.l.b16 %v8099
    %v9134 = vunpack.c.h.b16 %v8099
    %v9135 = vunpack.c.l.b16 %v8100
    %v9136 = vunpack.c.h.b16 %v8100
    %v9137 = vunpack.c.l.b16 %v8101
    %v9138 = vunpack.c.h.b16 %v8101
    %v9139 = vunpack.c.l.b16 %v8102
    %v9140 = vunpack.c.h.b16 %v8102
    %v9141 = vunpack.c.l.b16 %v8103
    %v9142 = vunpack.c.h.b16 %v8103
    %v9143 = vunpack.c.l.b16 %v8104
    %v9144 = vunpack.c.h.b16 %v8104
    %v9145 = vunpack.c.l.b16 %v8105
    %v9146 = vunpack.c.h.b16 %v8105
    %v9147 = vunpack.c.l.b16 %v8106
    %v9148 = vunpack.c.h.b16 %v8106
    %v9149 = vunpack.c.l.b16 %v8107
    %v9150 = vunpack.c.h.b16 %v8107
    %v9151 = vunpack.c.l.b16 %v8108
    %v9152 = vunpack.c.h.b16 %v8108
    %v9153 = vunpack.c.l.b16 %v8109
    %v9154 = vunpack.c.h.b16 %v8109
    %v9155 = vunpack.c.l.b16 %v8110
    %v9156 = vunpack.c.h.b16 %v8110
    %v9157 = vunpack.c.l.b16 %v8111
    %v9158 = vunpack.c.h.b16 %v8111
    %v9159 = vunpack.c.l.b16 %v8112
    %v9160 = vunpack.c.h.b16 %v8112
    %v9161 = vunpack.c.l.b16 %v8113
    %v9162 = vunpack.c.h.b16 %v8113
    %v9163 = vunpack.c.l.b16 %v8114
    %v9164 = vunpack.c.h.b16 %v8114
    %v9165 = vunpack.c.l.b16 %v8115
    %v9166 = vunpack.c.h.b16 %v8115
    %v9167 = vunpack.c.l.b16 %v8116
    %v9168 = vunpack.c.h.b16 %v8116
    %v9169 = vunpack.c.l.b16 %v8117
    %v9170 = vunpack.c.h.b16 %v8117
    %v9171 = vunpack.c.l.b16 %v8118
    %v9172 = vunpack.c.h.b16 %v8118
    %v9173 = vunpack.c.l.b16 %v8119
    %v9174 = vunpack.c.h.b16 %v8119
    %v9175 = vunpack.c.l.b16 %v8120
    %v9176 = vunpack.c.h.b16 %v8120
    %v9177 = vunpack.c.l.b16 %v8121
    %v9178 = vunpack.c.h.b16 %v8121
    %v9179 = vunpack.c.l.b16 %v8122
    %v9180 = vunpack.c.h.b16 %v8122
    %v9181 = vunpack.c.l.b16 %v8123
    %v9182 = vunpack.c.h.b16 %v8123
    %v9183 = vunpack.c.l.b16 %v8124
    %v9184 = vunpack.c.h.b16 %v8124
    %v9185 = vunpack.c.l.b16 %v8125
    %v9186 = vunpack.c.h.b16 %v8125
    %v9187 = vunpack.c.l.b16 %v8126
    %v9188 = vunpack.c.h.b16 %v8126
    %v9189 = vunpack.c.l.b16 %v8127
    %v9190 = vunpack.c.h.b16 %v8127
    %v9191 = vunpack.c.l.b16 %v8128
    %v9192 = vunpack.c.h.b16 %v8128
    %v9193 = vunpack.c.l.b16 %v8129
    %v9194 = vunpack.c.h.b16 %v8129
    %v9195 = vunpack.c.l.b16 %v8130
    %v9196 = vunpack.c.h.b16 %v8130
    %v9197 = vunpack.c.l.b16 %v8131
    %v9198 = vunpack.c.h.b16 %v8131
    %v9199 = vunpack.c.l.b16 %v8132
    %v9200 = vunpack.c.h.b16 %v8132
    %v9201 = vunpack.c.l.b16 %v8133
    %v9202 = vunpack.c.h.b16 %v8133
    %v9203 = vunpack.c.l.b16 %v8134
    %v9204 = vunpack.c.h.b16 %v8134
    %v9205 = vunpack.c.l.b16 %v8135
    %v9206 = vunpack.c.h.b16 %v8135
    %v9207 = vunpack.c.l.b16 %v8136
    %v9208 = vunpack.c.h.b16 %v8136
    %v9209 = vunpack.c.l.b16 %v8137
    %v9210 = vunpack.c.h.b16 %v8137
    %v9211 = vunpack.c.l.b16 %v8138
    %v9212 = vunpack.c.h.b16 %v8138
    %v9213 = vunpack.c.l.b16 %v8139
    %v9214 = vunpack.c.h.b16 %v8139
    %v9215 = vunpack.c.l.b16 %v8140
    %v9216 = vunpack.c.h.b16 %v8140
    %v9217 = vunpack.c.l.b16 %v8141
    %v9218 = vunpack.c.h.b16 %v8141
    %v9219 = vunpack.c.l.b16 %v8142
    %v9220 = vunpack.c.h.b16 %v8142
    %v9221 = vunpack.c.l.b16 %v8143
    %v9222 = vunpack.c.h.b16 %v8143
    %v9223 = vunpack.c.l.b16 %v8144
    %v9224 = vunpack.c.h.b16 %v8144
    %v9225 = vunpack.c.l.b16 %v8145
    %v9226 = vunpack.c.h.b16 %v8145
    %v9227 = vunpack.c.l.b16 %v8146
    %v9228 = vunpack.c.h.b16 %v8146
    %v9229 = vunpack.c.l.b16 %v8147
    %v9230 = vunpack.c.h.b16 %v8147
    %v9231 = vunpack.c.l.b16 %v8148
    %v9232 = vunpack.c.h.b16 %v8148
    %v9233 = vunpack.c.l.b16 %v8149
    %v9234 = vunpack.c.h.b16 %v8149
    %v9235 = vunpack.c.l.b16 %v8150
    %v9236 = vunpack.c.h.b16 %v8150
    %v9237 = vunpack.c.l.b16 %v8151
    %v9238 = vunpack.c.h.b16 %v8151
    %v9239 = vunpack.c.l.b16 %v8152
    %v9240 = vunpack.c.h.b16 %v8152
    %v9241 = vunpack.c.l.b16 %v8153
    %v9242 = vunpack.c.h.b16 %v8153
    %v9243 = vunpack.c.l.b16 %v8154
    %v9244 = vunpack.c.h.b16 %v8154
    %v9245 = vunpack.c.l.b16 %v8155
    %v9246 = vunpack.c.h.b16 %v8155
    %v9247 = vunpack.c.l.b16 %v8156
    %v9248 = vunpack.c.h.b16 %v8156
    %v9249 = vunpack.c.l.b16 %v8157
    %v9250 = vunpack.c.h.b16 %v8157
    %v9251 = vunpack.c.l.b16 %v8158
    %v9252 = vunpack.c.h.b16 %v8158
    %v9253 = vunpack.c.l.b16 %v8159
    %v9254 = vunpack.c.h.b16 %v8159
    %v9255 = vunpack.c.l.b16 %v8160
    %v9256 = vunpack.c.h.b16 %v8160
    %v9257 = vunpack.c.l.b16 %v8161
    %v9258 = vunpack.c.h.b16 %v8161
    %v9259 = vunpack.c.l.b16 %v8162
    %v9260 = vunpack.c.h.b16 %v8162
    %v9261 = vunpack.c.l.b16 %v8163
    %v9262 = vunpack.c.h.b16 %v8163
    %v9263 = vunpack.c.l.b16 %v8164
    %v9264 = vunpack.c.h.b16 %v8164
    %v9265 = vunpack.c.l.b16 %v8165
    %v9266 = vunpack.c.h.b16 %v8165
    %v9267 = vunpack.c.l.b16 %v8166
    %v9268 = vunpack.c.h.b16 %v8166
    %v9269 = vunpack.c.l.b16 %v8167
    %v9270 = vunpack.c.h.b16 %v8167
    %v9271 = vunpack.c.l.b16 %v8168
    %v9272 = vunpack.c.h.b16 %v8168
    %v9273 = vunpack.c.l.b16 %v8169
    %v9274 = vunpack.c.h.b16 %v8169
    %v9275 = vunpack.c.l.b16 %v8170
    %v9276 = vunpack.c.h.b16 %v8170
    %v9277 = vunpack.c.l.b16 %v8171
    %v9278 = vunpack.c.h.b16 %v8171
    %v9279 = vunpack.c.l.b16 %v8172
    %v9280 = vunpack.c.h.b16 %v8172
    %v9281 = vunpack.c.l.b16 %v8173
    %v9282 = vunpack.c.h.b16 %v8173
    %v9283 = vunpack.c.l.b16 %v8174
    %v9284 = vunpack.c.h.b16 %v8174
    %v9285 = vunpack.c.l.b16 %v8175
    %v9286 = vunpack.c.h.b16 %v8175
    %v9287 = vunpack.c.l.b16 %v8176
    %v9288 = vunpack.c.h.b16 %v8176
    %v9289 = vunpack.c.l.b16 %v8177
    %v9290 = vunpack.c.h.b16 %v8177
    %v9291 = vunpack.c.l.b16 %v8178
    %v9292 = vunpack.c.h.b16 %v8178
    %v9293 = vunpack.c.l.b16 %v8179
    %v9294 = vunpack.c.h.b16 %v8179
    %v9295 = vunpack.c.l.b16 %v8180
    %v9296 = vunpack.c.h.b16 %v8180
    %v9297 = vunpack.c.l.b16 %v8181
    %v9298 = vunpack.c.h.b16 %v8181
    %v9299 = vunpack.c.l.b16 %v8182
    %v9300 = vunpack.c.h.b16 %v8182
    %v9301 = vunpack.c.l.b16 %v8183
    %v9302 = vunpack.c.h.b16 %v8183
    %v9303 = vunpack.c.l.b16 %v8184
    %v9304 = vunpack.c.h.b16 %v8184
    %v9305 = vunpack.c.l.b16 %v8185
    %v9306 = vunpack.c.h.b16 %v8185
    %v9307 = vunpack.c.l.b16 %v8186
    %v9308 = vunpack.c.h.b16 %v8186
    %v9309 = vunpack.c.l.b16 %v8187
    %v9310 = vunpack.c.h.b16 %v8187
    %v9311 = vunpack.c.l.b16 %v8188
    %v9312 = vunpack.c.h.b16 %v8188
    %v9313 = vunpack.c.l.b16 %v8189
    %v9314 = vunpack.c.h.b16 %v8189
    %v9315 = vunpack.c.l.b16 %v8190
    %v9316 = vunpack.c.h.b16 %v8190
    %v9317 = vunpack.c.l.b16 %v8191
    %v9318 = vunpack.c.h.b16 %v8191
    %v9319 = vunpack.c.l.b16 %v8192
    %v9320 = vunpack.c.h.b16 %v8192
    %v9321 = vunpack.c.l.b16 %v8193
    %v9322 = vunpack.c.h.b16 %v8193
    %v9323 = vunpack.c.l.b16 %v8194
    %v9324 = vunpack.c.h.b16 %v8194
    %v9325 = vunpack.c.l.b16 %v8195
    %v9326 = vunpack.c.h.b16 %v8195
    %v9327 = vunpack.c.l.b16 %v8196
    %v9328 = vunpack.c.h.b16 %v8196
    %v9329 = vunpack.c.l.b16 %v8197
    %v9330 = vunpack.c.h.b16 %v8197
    %v9331 = vunpack.c.l.b16 %v8198
    %v9332 = vunpack.c.h.b16 %v8198
    %v9333 = vunpack.c.l.b16 %v8199
    %v9334 = vunpack.c.h.b16 %v8199
    %v9335 = vunpack.c.l.b16 %v8200
    %v9336 = vunpack.c.h.b16 %v8200
    %v9337 = vunpack.c.l.b16 %v8201
    %v9338 = vunpack.c.h.b16 %v8201
    %v9339 = vunpack.c.l.b16 %v8202
    %v9340 = vunpack.c.h.b16 %v8202
    %v9341 = vunpack.c.l.b16 %v8203
    %v9342 = vunpack.c.h.b16 %v8203
    %v9343 = vunpack.c.l.b16 %v8204
    %v9344 = vunpack.c.h.b16 %v8204
    %v9345 = vunpack.c.l.b16 %v8205
    %v9346 = vunpack.c.h.b16 %v8205
    %v9347 = vunpack.c.l.b16 %v8206
    %v9348 = vunpack.c.h.b16 %v8206
    %v9349 = vunpack.c.l.b16 %v8207
    %v9350 = vunpack.c.h.b16 %v8207
    %v9351 = vunpack.c.l.b16 %v8208
    %v9352 = vunpack.c.h.b16 %v8208
    %v9353 = vunpack.c.l.b16 %v8209
    %v9354 = vunpack.c.h.b16 %v8209
    %v9355 = vunpack.c.l.b16 %v8210
    %v9356 = vunpack.c.h.b16 %v8210
    %v9357 = vunpack.c.l.b16 %v8211
    %v9358 = vunpack.c.h.b16 %v8211
    %v9359 = vunpack.c.l.b16 %v8212
    %v9360 = vunpack.c.h.b16 %v8212
    %v9361 = vunpack.c.l.b16 %v8213
    %v9362 = vunpack.c.h.b16 %v8213
    %v9363 = vunpack.c.l.b16 %v8214
    %v9364 = vunpack.c.h.b16 %v8214
    %v9365 = vunpack.c.l.b16 %v8215
    %v9366 = vunpack.c.h.b16 %v8215
    %v9367 = vunpack.c.l.b16 %v8216
    %v9368 = vunpack.c.h.b16 %v8216
    %v9369 = vunpack.c.l.b16 %v8217
    %v9370 = vunpack.c.h.b16 %v8217
    %v9371 = vunpack.c.l.b16 %v8218
    %v9372 = vunpack.c.h.b16 %v8218
    %v9373 = vunpack.c.l.b16 %v8219
    %v9374 = vunpack.c.h.b16 %v8219
    %v9375 = vunpack.c.l.b16 %v8220
    %v9376 = vunpack.c.h.b16 %v8220
    %v9377 = vunpack.c.l.b16 %v8221
    %v9378 = vunpack.c.h.b16 %v8221
    %v9379 = vunpack.c.l.b16 %v8222
    %v9380 = vunpack.c.h.b16 %v8222
    %v9381 = vunpack.c.l.b16 %v8223
    %v9382 = vunpack.c.h.b16 %v8223
    %v9383 = vunpack.c.l.b16 %v8224
    %v9384 = vunpack.c.h.b16 %v8224
    %v9385 = vunpack.c.l.b16 %v8225
    %v9386 = vunpack.c.h.b16 %v8225
    %v9387 = vunpack.c.l.b16 %v8226
    %v9388 = vunpack.c.h.b16 %v8226
    %v9389 = vunpack.c.l.b16 %v8227
    %v9390 = vunpack.c.h.b16 %v8227
    %v9391 = vunpack.c.l.b16 %v8228
    %v9392 = vunpack.c.h.b16 %v8228
    %v9393 = vunpack.c.l.b16 %v8229
    %v9394 = vunpack.c.h.b16 %v8229
    %v9395 = vunpack.c.l.b16 %v8230
    %v9396 = vunpack.c.h.b16 %v8230
    %v9397 = vunpack.c.l.b16 %v8231
    %v9398 = vunpack.c.h.b16 %v8231
    %v9399 = vunpack.c.l.b16 %v8232
    %v9400 = vunpack.c.h.b16 %v8232
    %v9401 = vunpack.c.l.b16 %v8233
    %v9402 = vunpack.c.h.b16 %v8233
    %v9403 = vunpack.c.l.b16 %v8234
    %v9404 = vunpack.c.h.b16 %v8234
    %v9405 = vunpack.c.l.b16 %v8235
    %v9406 = vunpack.c.h.b16 %v8235
    %v9407 = vunpack.c.l.b16 %v8236
    %v9408 = vunpack.c.h.b16 %v8236
    %v9409 = vunpack.c.l.b16 %v8237
    %v9410 = vunpack.c.h.b16 %v8237
    %v9411 = vunpack.c.l.b16 %v8238
    %v9412 = vunpack.c.h.b16 %v8238
    %v9413 = vpack.c.b16 %v8649, %v8645
    %v9414 = vpack.c.b16 %v8650, %v8646
    %v9415 = vpack.c.b16 %v8651, %v8647
    %v9416 = vpack.c.b16 %v8652, %v8648
    %v9417 = vpack.c.b16 %v8657, %v8653
    %v9418 = vpack.c.b16 %v8658, %v8654
    %v9419 = vpack.c.b16 %v8659, %v8655
    %v9420 = vpack.c.b16 %v8660, %v8656
    %v9421 = vpack.c.b16 %v8665, %v8661
    %v9422 = vpack.c.b16 %v8666, %v8662
    %v9423 = vpack.c.b16 %v8667, %v8663
    %v9424 = vpack.c.b16 %v8668, %v8664
    %v9425 = vpack.c.b16 %v8673, %v8669
    %v9426 = vpack.c.b16 %v8674, %v8670
    %v9427 = vpack.c.b16 %v8675, %v8671
    %v9428 = vpack.c.b16 %v8676, %v8672
    %v9429 = vpack.c.b16 %v8681, %v8677
    %v9430 = vpack.c.b16 %v8682, %v8678
    %v9431 = vpack.c.b16 %v8683, %v8679
    %v9432 = vpack.c.b16 %v8684, %v8680
    %v9433 = vpack.c.b16 %v8689, %v8685
    %v9434 = vpack.c.b16 %v8690, %v8686
    %v9435 = vpack.c.b16 %v8691, %v8687
    %v9436 = vpack.c.b16 %v8692, %v8688
    %v9437 = vpack.c.b16 %v8697, %v8693
    %v9438 = vpack.c.b16 %v8698, %v8694
    %v9439 = vpack.c.b16 %v8699, %v8695
    %v9440 = vpack.c.b16 %v8700, %v8696
    %v9441 = vpack.c.b16 %v8705, %v8701
    %v9442 = vpack.c.b16 %v8706, %v8702
    %v9443 = vpack.c.b16 %v8707, %v8703
    %v9444 = vpack.c.b16 %v8708, %v8704
    %v9445 = vpack.c.b16 %v8713, %v8709
    %v9446 = vpack.c.b16 %v8714, %v8710
    %v9447 = vpack.c.b16 %v8715, %v8711
    %v9448 = vpack.c.b16 %v8716, %v8712
    %v9449 = vpack.c.b16 %v8721, %v8717
    %v9450 = vpack.c.b16 %v8722, %v8718
    %v9451 = vpack.c.b16 %v8723, %v8719
    %v9452 = vpack.c.b16 %v8724, %v8720
    %v9453 = vpack.c.b16 %v8729, %v8725
    %v9454 = vpack.c.b16 %v8730, %v8726
    %v9455 = vpack.c.b16 %v8731, %v8727
    %v9456 = vpack.c.b16 %v8732, %v8728
    %v9457 = vpack.c.b16 %v8737, %v8733
    %v9458 = vpack.c.b16 %v8738, %v8734
    %v9459 = vpack.c.b16 %v8739, %v8735
    %v9460 = vpack.c.b16 %v8740, %v8736
    %v9461 = vpack.c.b16 %v8745, %v8741
    %v9462 = vpack.c.b16 %v8746, %v8742
    %v9463 = vpack.c.b16 %v8747, %v8743
    %v9464 = vpack.c.b16 %v8748, %v8744
    %v9465 = vpack.c.b16 %v8753, %v8749
    %v9466 = vpack.c.b16 %v8754, %v8750
    %v9467 = vpack.c.b16 %v8755, %v8751
    %v9468 = vpack.c.b16 %v8756, %v8752
    %v9469 = vpack.c.b16 %v8761, %v8757
    %v9470 = vpack.c.b16 %v8762, %v8758
    %v9471 = vpack.c.b16 %v8763, %v8759
    %v9472 = vpack.c.b16 %v8764, %v8760
    %v9473 = vpack.c.b16 %v8769, %v8765
    %v9474 = vpack.c.b16 %v8770, %v8766
    %v9475 = vpack.c.b16 %v8771, %v8767
    %v9476 = vpack.c.b16 %v8772, %v8768
    %v9477 = vpack.c.b16 %v8777, %v8773
    %v9478 = vpack.c.b16 %v8778, %v8774
    %v9479 = vpack.c.b16 %v8779, %v8775
    %v9480 = vpack.c.b16 %v8780, %v8776
    %v9481 = vpack.c.b16 %v8785, %v8781
    %v9482 = vpack.c.b16 %v8786, %v8782
    %v9483 = vpack.c.b16 %v8787, %v8783
    %v9484 = vpack.c.b16 %v8788, %v8784
    %v9485 = vpack.c.b16 %v8793, %v8789
    %v9486 = vpack.c.b16 %v8794, %v8790
    %v9487 = vpack.c.b16 %v8795, %v8791
    %v9488 = vpack.c.b16 %v8796, %v8792
    %v9489 = vpack.c.b16 %v8801, %v8797
    %v9490 = vpack.c.b16 %v8802, %v8798
    %v9491 = vpack.c.b16 %v8803, %v8799
    %v9492 = vpack.c.b16 %v8804, %v8800
    %v9493 = vpack.c.b16 %v8809, %v8805
    %v9494 = vpack.c.b16 %v8810, %v8806
    %v9495 = vpack.c.b16 %v8811, %v8807
    %v9496 = vpack.c.b16 %v8812, %v8808
    %v9497 = vpack.c.b16 %v8817, %v8813
    %v9498 = vpack.c.b16 %v8818, %v8814
    %v9499 = vpack.c.b16 %v8819, %v8815
    %v9500 = vpack.c.b16 %v8820, %v8816
    %v9501 = vpack.c.b16 %v8825, %v8821
    %v9502 = vpack.c.b16 %v8826, %v8822
    %v9503 = vpack.c.b16 %v8827, %v8823
    %v9504 = vpack.c.b16 %v8828, %v8824
    %v9505 = vpack.c.b16 %v8833, %v8829
    %v9506 = vpack.c.b16 %v8834, %v8830
    %v9507 = vpack.c.b16 %v8835, %v8831
    %v9508 = vpack.c.b16 %v8836, %v8832
    %v9509 = vpack.c.b16 %v8841, %v8837
    %v9510 = vpack.c.b16 %v8842, %v8838
    %v9511 = vpack.c.b16 %v8843, %v8839
    %v9512 = vpack.c.b16 %v8844, %v8840
    %v9513 = vpack.c.b16 %v8849, %v8845
    %v9514 = vpack.c.b16 %v8850, %v8846
    %v9515 = vpack.c.b16 %v8851, %v8847
    %v9516 = vpack.c.b16 %v8852, %v8848
    %v9517 = vpack.c.b16 %v8857, %v8853
    %v9518 = vpack.c.b16 %v8858, %v8854
    %v9519 = vpack.c.b16 %v8859, %v8855
    %v9520 = vpack.c.b16 %v8860, %v8856
    %v9521 = vpack.c.b16 %v8865, %v8861
    %v9522 = vpack.c.b16 %v8866, %v8862
    %v9523 = vpack.c.b16 %v8867, %v8863
    %v9524 = vpack.c.b16 %v8868, %v8864
    %v9525 = vpack.c.b16 %v8873, %v8869
    %v9526 = vpack.c.b16 %v8874, %v8870
    %v9527 = vpack.c.b16 %v8875, %v8871
    %v9528 = vpack.c.b16 %v8876, %v8872
    %v9529 = vpack.c.b16 %v8881, %v8877
    %v9530 = vpack.c.b16 %v8882, %v8878
    %v9531 = vpack.c.b16 %v8883, %v8879
    %v9532 = vpack.c.b16 %v8884, %v8880
    %v9533 = vpack.c.b16 %v8889, %v8885
    %v9534 = vpack.c.b16 %v8890, %v8886
    %v9535 = vpack.c.b16 %v8891, %v8887
    %v9536 = vpack.c.b16 %v8892, %v8888
    %v9537 = vpack.c.b16 %v8897, %v8893
    %v9538 = vpack.c.b16 %v8898, %v8894
    %v9539 = vpack.c.b16 %v8899, %v8895
    %v9540 = vpack.c.b16 %v8900, %v8896
    %v9541 = vpack.c.b16 %v8905, %v8901
    %v9542 = vpack.c.b16 %v8906, %v8902
    %v9543 = vpack.c.b16 %v8907, %v8903
    %v9544 = vpack.c.b16 %v8908, %v8904
    %v9545 = vpack.c.b16 %v8913, %v8909
    %v9546 = vpack.c.b16 %v8914, %v8910
    %v9547 = vpack.c.b16 %v8915, %v8911
    %v9548 = vpack.c.b16 %v8916, %v8912
    %v9549 = vpack.c.b16 %v8921, %v8917
    %v9550 = vpack.c.b16 %v8922, %v8918
    %v9551 = vpack.c.b16 %v8923, %v8919
    %v9552 = vpack.c.b16 %v8924, %v8920
    %v9553 = vpack.c.b16 %v8929, %v8925
    %v9554 = vpack.c.b16 %v8930, %v8926
    %v9555 = vpack.c.b16 %v8931, %v8927
    %v9556 = vpack.c.b16 %v8932, %v8928
    %v9557 = vpack.c.b16 %v8937, %v8933
    %v9558 = vpack.c.b16 %v8938, %v8934
    %v9559 = vpack.c.b16 %v8939, %v8935
    %v9560 = vpack.c.b16 %v8940, %v8936
    %v9561 = vpack.c.b16 %v8945, %v8941
    %v9562 = vpack.c.b16 %v8946, %v8942
    %v9563 = vpack.c.b16 %v8947, %v8943
    %v9564 = vpack.c.b16 %v8948, %v8944
    %v9565 = vpack.c.b16 %v8953, %v8949
    %v9566 = vpack.c.b16 %v8954, %v8950
    %v9567 = vpack.c.b16 %v8955, %v8951
    %v9568 = vpack.c.b16 %v8956, %v8952
    %v9569 = vpack.c.b16 %v8961, %v8957
    %v9570 = vpack.c.b16 %v8962, %v8958
    %v9571 = vpack.c.b16 %v8963, %v8959
    %v9572 = vpack.c.b16 %v8964, %v8960
    %v9573 = vpack.c.b16 %v8969, %v8965
    %v9574 = vpack.c.b16 %v8970, %v8966
    %v9575 = vpack.c.b16 %v8971, %v8967
    %v9576 = vpack.c.b16 %v8972, %v8968
    %v9577 = vpack.c.b16 %v8977, %v8973
    %v9578 = vpack.c.b16 %v8978, %v8974
    %v9579 = vpack.c.b16 %v8979, %v8975
    %v9580 = vpack.c.b16 %v8980, %v8976
    %v9581 = vpack.c.b16 %v8985, %v8981
    %v9582 = vpack.c.b16 %v8986, %v8982
    %v9583 = vpack.c.b16 %v8987, %v8983
    %v9584 = vpack.c.b16 %v8988, %v8984
    %v9585 = vpack.c.b16 %v8993, %v8989
    %v9586 = vpack.c.b16 %v8994, %v8990
    %v9587 = vpack.c.b16 %v8995, %v8991
    %v9588 = vpack.c.b16 %v8996, %v8992
    %v9589 = vpack.c.b16 %v9001, %v8997
    %v9590 = vpack.c.b16 %v9002, %v8998
    %v9591 = vpack.c.b16 %v9003, %v8999
    %v9592 = vpack.c.b16 %v9004, %v9000
    %v9593 = vpack.c.b16 %v9009, %v9005
    %v9594 = vpack.c.b16 %v9010, %v9006
    %v9595 = vpack.c.b16 %v9011, %v9007
    %v9596 = vpack.c.b16 %v9012, %v9008
    %v9597 = vpack.c.b16 %v9017, %v9013
    %v9598 = vpack.c.b16 %v9018, %v9014
    %v9599 = vpack.c.b16 %v9019, %v9015
    %v9600 = vpack.c.b16 %v9020, %v9016
    %v9601 = vpack.c.b16 %v9025, %v9021
    %v9602 = vpack.c.b16 %v9026, %v9022
    %v9603 = vpack.c.b16 %v9027, %v9023
    %v9604 = vpack.c.b16 %v9028, %v9024
    %v9605 = vpack.c.b16 %v9033, %v9029
    %v9606 = vpack.c.b16 %v9034, %v9030
    %v9607 = vpack.c.b16 %v9035, %v9031
    %v9608 = vpack.c.b16 %v9036, %v9032
    %v9609 = vpack.c.b16 %v9041, %v9037
    %v9610 = vpack.c.b16 %v9042, %v9038
    %v9611 = vpack.c.b16 %v9043, %v9039
    %v9612 = vpack.c.b16 %v9044, %v9040
    %v9613 = vpack.c.b16 %v9049, %v9045
    %v9614 = vpack.c.b16 %v9050, %v9046
    %v9615 = vpack.c.b16 %v9051, %v9047
    %v9616 = vpack.c.b16 %v9052, %v9048
    %v9617 = vpack.c.b16 %v9057, %v9053
    %v9618 = vpack.c.b16 %v9058, %v9054
    %v9619 = vpack.c.b16 %v9059, %v9055
    %v9620 = vpack.c.b16 %v9060, %v9056
    %v9621 = vpack.c.b16 %v9065, %v9061
    %v9622 = vpack.c.b16 %v9066, %v9062
    %v9623 = vpack.c.b16 %v9067, %v9063
    %v9624 = vpack.c.b16 %v9068, %v9064
    %v9625 = vpack.c.b16 %v9073, %v9069
    %v9626 = vpack.c.b16 %v9074, %v9070
    %v9627 = vpack.c.b16 %v9075, %v9071
    %v9628 = vpack.c.b16 %v9076, %v9072
    %v9629 = vpack.c.b16 %v9081, %v9077
    %v9630 = vpack.c.b16 %v9082, %v9078
    %v9631 = vpack.c.b16 %v9083, %v9079
    %v9632 = vpack.c.b16 %v9084, %v9080
    %v9633 = vpack.c.b16 %v9089, %v9085
    %v9634 = vpack.c.b16 %v9090, %v9086
    %v9635 = vpack.c.b16 %v9091, %v9087
    %v9636 = vpack.c.b16 %v9092, %v9088
    %v9637 = vpack.c.b16 %v9097, %v9093
    %v9638 = vpack.c.b16 %v9098, %v9094
    %v9639 = vpack.c.b16 %v9099, %v9095
    %v9640 = vpack.c.b16 %v9100, %v9096
    %v9641 = vpack.c.b16 %v9105, %v9101
    %v9642 = vpack.c.b16 %v9106, %v9102
    %v9643 = vpack.c.b16 %v9107, %v9103
    %v9644 = vpack.c.b16 %v9108, %v9104
    %v9645 = vpack.c.b16 %v9113, %v9109
    %v9646 = vpack.c.b16 %v9114, %v9110
    %v9647 = vpack.c.b16 %v9115, %v9111
    %v9648 = vpack.c.b16 %v9116, %v9112
    %v9649 = vpack.c.b16 %v9121, %v9117
    %v9650 = vpack.c.b16 %v9122, %v9118
    %v9651 = vpack.c.b16 %v9123, %v9119
    %v9652 = vpack.c.b16 %v9124, %v9120
    %v9653 = vpack.c.b16 %v9129, %v9125
    %v9654 = vpack.c.b16 %v9130, %v9126
    %v9655 = vpack.c.b16 %v9131, %v9127
    %v9656 = vpack.c.b16 %v9132, %v9128
    %v9657 = vpack.c.b16 %v9137, %v9133
    %v9658 = vpack.c.b16 %v9138, %v9134
    %v9659 = vpack.c.b16 %v9139, %v9135
    %v9660 = vpack.c.b16 %v9140, %v9136
    %v9661 = vpack.c.b16 %v9145, %v9141
    %v9662 = vpack.c.b16 %v9146, %v9142
    %v9663 = vpack.c.b16 %v9147, %v9143
    %v9664 = vpack.c.b16 %v9148, %v9144
    %v9665 = vpack.c.b16 %v9153, %v9149
    %v9666 = vpack.c.b16 %v9154, %v9150
    %v9667 = vpack.c.b16 %v9155, %v9151
    %v9668 = vpack.c.b16 %v9156, %v9152
    %v9669 = vpack.c.b16 %v9161, %v9157
    %v9670 = vpack.c.b16 %v9162, %v9158
    %v9671 = vpack.c.b16 %v9163, %v9159
    %v9672 = vpack.c.b16 %v9164, %v9160
    %v9673 = vpack.c.b16 %v9169, %v9165
    %v9674 = vpack.c.b16 %v9170, %v9166
    %v9675 = vpack.c.b16 %v9171, %v9167
    %v9676 = vpack.c.b16 %v9172, %v9168
    %v9677 = vpack.c.b16 %v9177, %v9173
    %v9678 = vpack.c.b16 %v9178, %v9174
    %v9679 = vpack.c.b16 %v9179, %v9175
    %v9680 = vpack.c.b16 %v9180, %v9176
    %v9681 = vpack.c.b16 %v9185, %v9181
    %v9682 = vpack.c.b16 %v9186, %v9182
    %v9683 = vpack.c.b16 %v9187, %v9183
    %v9684 = vpack.c.b16 %v9188, %v9184
    %v9685 = vpack.c.b16 %v9193, %v9189
    %v9686 = vpack.c.b16 %v9194, %v9190
    %v9687 = vpack.c.b16 %v9195, %v9191
    %v9688 = vpack.c.b16 %v9196, %v9192
    %v9689 = vpack.c.b16 %v9201, %v9197
    %v9690 = vpack.c.b16 %v9202, %v9198
    %v9691 = vpack.c.b16 %v9203, %v9199
    %v9692 = vpack.c.b16 %v9204, %v9200
    %v9693 = vpack.c.b16 %v9209, %v9205
    %v9694 = vpack.c.b16 %v9210, %v9206
    %v9695 = vpack.c.b16 %v9211, %v9207
    %v9696 = vpack.c.b16 %v9212, %v9208
    %v9697 = vpack.c.b16 %v9217, %v9213
    %v9698 = vpack.c.b16 %v9218, %v9214
    %v9699 = vpack.c.b16 %v9219, %v9215
    %v9700 = vpack.c.b16 %v9220, %v9216
    %v9701 = vpack.c.b16 %v9225, %v9221
    %v9702 = vpack.c.b16 %v9226, %v9222
    %v9703 = vpack.c.b16 %v9227, %v9223
    %v9704 = vpack.c.b16 %v9228, %v9224
    %v9705 = vpack.c.b16 %v9233, %v9229
    %v9706 = vpack.c.b16 %v9234, %v9230
    %v9707 = vpack.c.b16 %v9235, %v9231
    %v9708 = vpack.c.b16 %v9236, %v9232
    %v9709 = vpack.c.b16 %v9241, %v9237
    %v9710 = vpack.c.b16 %v9242, %v9238
    %v9711 = vpack.c.b16 %v9243, %v9239
    %v9712 = vpack.c.b16 %v9244, %v9240
    %v9713 = vpack.c.b16 %v9249, %v9245
    %v9714 = vpack.c.b16 %v9250, %v9246
    %v9715 = vpack.c.b16 %v9251, %v9247
    %v9716 = vpack.c.b16 %v9252, %v9248
    %v9717 = vpack.c.b16 %v9257, %v9253
    %v9718 = vpack.c.b16 %v9258, %v9254
    %v9719 = vpack.c.b16 %v9259, %v9255
    %v9720 = vpack.c.b16 %v9260, %v9256
    %v9721 = vpack.c.b16 %v9265, %v9261
    %v9722 = vpack.c.b16 %v9266, %v9262
    %v9723 = vpack.c.b16 %v9267, %v9263
    %v9724 = vpack.c.b16 %v9268, %v9264
    %v9725 = vpack.c.b16 %v9273, %v9269
    %v9726 = vpack.c.b16 %v9274, %v9270
    %v9727 = vpack.c.b16 %v9275, %v9271
    %v9728 = vpack.c.b16 %v9276, %v9272
    %v9729 = vpack.c.b16 %v9281, %v9277
    %v9730 = vpack.c.b16 %v9282, %v9278
    %v9731 = vpack.c.b16 %v9283, %v9279
    %v9732 = vpack.c.b16 %v9284, %v9280
    %v9733 = vpack.c.b16 %v9289, %v9285
    %v9734 = vpack.c.b16 %v9290, %v9286
    %v9735 = vpack.c.b16 %v9291, %v9287
    %v9736 = vpack.c.b16 %v9292, %v9288
    %v9737 = vpack.c.b16 %v9297, %v9293
    %v9738 = vpack.c.b16 %v9298, %v9294
    %v9739 = vpack.c.b16 %v9299, %v9295
    %v9740 = vpack.c.b16 %v9300, %v9296
    %v9741 = vpack.c.b16 %v9305, %v9301
    %v9742 = vpack.c.b16 %v9306, %v9302
    %v9743 = vpack.c.b16 %v9307, %v9303
    %v9744 = vpack.c.b16 %v9308, %v9304
    %v9745 = vpack.c.b16 %v9313, %v9309
    %v9746 = vpack.c.b16 %v9314, %v9310
    %v9747 = vpack.c.b16 %v9315, %v9311
    %v9748 = vpack.c.b16 %v9316, %v9312
    %v9749 = vpack.c.b16 %v9321, %v9317
    %v9750 = vpack.c.b16 %v9322, %v9318
    %v9751 = vpack.c.b16 %v9323, %v9319
    %v9752 = vpack.c.b16 %v9324, %v9320
    %v9753 = vpack.c.b16 %v9329, %v9325
    %v9754 = vpack.c.b16 %v9330, %v9326
    %v9755 = vpack.c.b16 %v9331, %v9327
    %v9756 = vpack.c.b16 %v9332, %v9328
    %v9757 = vpack.c.b16 %v9337, %v9333
    %v9758 = vpack.c.b16 %v9338, %v9334
    %v9759 = vpack.c.b16 %v9339, %v9335
    %v9760 = vpack.c.b16 %v9340, %v9336
    %v9761 = vpack.c.b16 %v9345, %v9341
    %v9762 = vpack.c.b16 %v9346, %v9342
    %v9763 = vpack.c.b16 %v9347, %v9343
    %v9764 = vpack.c.b16 %v9348, %v9344
    %v9765 = vpack.c.b16 %v9353, %v9349
    %v9766 = vpack.c.b16 %v9354, %v9350
    %v9767 = vpack.c.b16 %v9355, %v9351
    %v9768 = vpack.c.b16 %v9356, %v9352
    %v9769 = vpack.c.b16 %v9361, %v9357
    %v9770 = vpack.c.b16 %v9362, %v9358
    %v9771 = vpack.c.b16 %v9363, %v9359
    %v9772 = vpack.c.b16 %v9364, %v9360
    %v9773 = vpack.c.b16 %v9369, %v9365
    %v9774 = vpack.c.b16 %v9370, %v9366
    %v9775 = vpack.c.b16 %v9371, %v9367
    %v9776 = vpack.c.b16 %v9372, %v9368
    %v9777 = vpack.c.b16 %v9377, %v9373
    %v9778 = vpack.c.b16 %v9378, %v9374
    %v9779 = vpack.c.b16 %v9379, %v9375
    %v9780 = vpack.c.b16 %v9380, %v9376
    %v9781 = vpack.c.b16 %v9385, %v9381
    %v9782 = vpack.c.b16 %v9386, %v9382
    %v9783 = vpack.c.b16 %v9387, %v9383
    %v9784 = vpack.c.b16 %v9388, %v9384
    %v9785 = vpack.c.b16 %v9393, %v9389
    %v9786 = vpack.c.b16 %v9394, %v9390
    %v9787 = vpack.c.b16 %v9395, %v9391
    %v9788 = vpack.c.b16 %v9396, %v9392
    %v9789 = vpack.c.b16 %v9401, %v9397
    %v9790 = vpack.c.b16 %v9402, %v9398
    %v9791 = vpack.c.b16 %v9403, %v9399
    %v9792 = vpack.c.b16 %v9404, %v9400
    %v9793 = vpack.c.b16 %v9409, %v9405
    %v9794 = vpack.c.b16 %v9410, %v9406
    %v9795 = vpack.c.b16 %v9411, %v9407
    %v9796 = vpack.c.b16 %v9412, %v9408
    %10181 = vmatprep.subr.bf16.mxu0 %v9442
    %10182 = vmatpush1.bf16.msra.mxu0 %v9441
    %10183 = vmatprep.subr.bf16.mxu0 %v9438
    %10184 = vmatpush1.bf16.msra.mxu0 %v9437
    %10185 = vmatprep.subr.bf16.mxu0 %v9434
    %10186 = vmatpush1.bf16.msra.mxu0 %v9433
    %10187 = vmatprep.subr.bf16.mxu0 %v9430
    %10188 = vmatpush1.bf16.msra.mxu0 %v9429
    %10189 = vmatprep.subr.bf16.mxu0 %v9426
    %10190 = vmatpush1.bf16.msra.mxu0 %v9425
    %10191 = vmatprep.subr.bf16.mxu0 %v9422
    %10192 = vmatpush1.bf16.msra.mxu0 %v9421
    %10193 = vmatprep.subr.bf16.mxu0 %v9418
    %10194 = vmatpush1.bf16.msra.mxu0 %v9417
    %10195 = vmatprep.subr.bf16.mxu0 %v9414
    %10196 = vmatpush1.bf16.msra.mxu0 %v9413
    %10197 = vmatprep.subr.bf16.mxu0 %v9474
    %10198 = vmatpush2.bf16.msra.mxu0 %v9473
    %10199 = vmatprep.subr.bf16.mxu0 %v9470
    %10200 = vmatpush2.bf16.msra.mxu0 %v9469
    %10201 = vmatprep.subr.bf16.mxu0 %v9466
    %10202 = vmatpush2.bf16.msra.mxu0 %v9465
    %10203 = vmatprep.subr.bf16.mxu0 %v9462
    %10204 = vmatpush2.bf16.msra.mxu0 %v9461
    %10205 = vmatprep.subr.bf16.mxu0 %v9458
    %10206 = vmatpush2.bf16.msra.mxu0 %v9457
    %10207 = vmatprep.subr.bf16.mxu0 %v9454
    %10208 = vmatpush2.bf16.msra.mxu0 %v9453
    %10209 = vmatprep.subr.bf16.mxu0 %v9450
    %10210 = vmatpush2.bf16.msra.mxu0 %v9449
    %10211 = vmatprep.subr.bf16.mxu0 %v9446
    %10212 = vmatpush2.bf16.msra.mxu0 %v9445
    %10213 = vmatprep.mubr.bf16.mxu0 %v7832
    %10214 = vmatmul.mubr.bf16.gmra.mxu0 %v7831
    %v10215 = vpop.f32.mrf.mxu0
    %v10216 = vadd.f32 %v8244, %v10215
    %v10217 = vpop.f32.mrf.mxu0
    %v10218 = vadd.f32 %v8248, %v10217
    %v10219 = vpop.f32.mrf.mxu0
    %v10220 = vadd.f32 %v8244, %v10219
    %v10221 = vpop.f32.mrf.mxu0
    %v10222 = vadd.f32 %v8248, %v10221
    %10223 = vmatprep.mubr.bf16.mxu0 %v7844
    %10224 = vmatmul.mubr.bf16.gmra.mxu0 %v7843
    %v10225 = vpop.f32.mrf.mxu0
    %v10226 = vadd.f32 %v8244, %v10225
    %v10227 = vpop.f32.mrf.mxu0
    %v10228 = vadd.f32 %v8248, %v10227
    %v10229 = vpop.f32.mrf.mxu0
    %v10230 = vadd.f32 %v8244, %v10229
    %v10231 = vpop.f32.mrf.mxu0
    %v10232 = vadd.f32 %v8248, %v10231
    %10233 = vdwg.mxu0
    %10234 = vmatprep.subr.bf16.mxu0 %v9506
    %10235 = vmatpush1.bf16.msra.mxu0 %v9505
    %10236 = vmatprep.subr.bf16.mxu0 %v9502
    %10237 = vmatpush1.bf16.msra.mxu0 %v9501
    %10238 = vmatprep.subr.bf16.mxu0 %v9498
    %10239 = vmatpush1.bf16.msra.mxu0 %v9497
    %10240 = vmatprep.subr.bf16.mxu0 %v9494
    %10241 = vmatpush1.bf16.msra.mxu0 %v9493
    %10242 = vmatprep.subr.bf16.mxu0 %v9490
    %10243 = vmatpush1.bf16.msra.mxu0 %v9489
    %10244 = vmatprep.subr.bf16.mxu0 %v9486
    %10245 = vmatpush1.bf16.msra.mxu0 %v9485
    %10246 = vmatprep.subr.bf16.mxu0 %v9482
    %10247 = vmatpush1.bf16.msra.mxu0 %v9481
    %10248 = vmatprep.subr.bf16.mxu0 %v9478
    %10249 = vmatpush1.bf16.msra.mxu0 %v9477
    %10250 = vmatprep.subr.bf16.mxu0 %v9538
    %10251 = vmatpush2.bf16.msra.mxu0 %v9537
    %10252 = vmatprep.subr.bf16.mxu0 %v9534
    %10253 = vmatpush2.bf16.msra.mxu0 %v9533
    %10254 = vmatprep.subr.bf16.mxu0 %v9530
    %10255 = vmatpush2.bf16.msra.mxu0 %v9529
    %10256 = vmatprep.subr.bf16.mxu0 %v9526
    %10257 = vmatpush2.bf16.msra.mxu0 %v9525
    %10258 = vmatprep.subr.bf16.mxu0 %v9522
    %10259 = vmatpush2.bf16.msra.mxu0 %v9521
    %10260 = vmatprep.subr.bf16.mxu0 %v9518
    %10261 = vmatpush2.bf16.msra.mxu0 %v9517
    %10262 = vmatprep.subr.bf16.mxu0 %v9514
    %10263 = vmatpush2.bf16.msra.mxu0 %v9513
    %10264 = vmatprep.subr.bf16.mxu0 %v9510
    %10265 = vmatpush2.bf16.msra.mxu0 %v9509
    %10266 = vmatprep.mubr.bf16.mxu0 %v7834
    %10267 = vmatmul.mubr.bf16.gmra.mxu0 %v7833
    %v10268 = vpop.f32.mrf.mxu0
    %v10269 = vadd.f32 %v10216, %v10268
    %v10270 = vpop.f32.mrf.mxu0
    %v10271 = vadd.f32 %v10218, %v10270
    %v10272 = vpop.f32.mrf.mxu0
    %v10273 = vadd.f32 %v10220, %v10272
    %v10274 = vpop.f32.mrf.mxu0
    %v10275 = vadd.f32 %v10222, %v10274
    %10276 = vmatprep.mubr.bf16.mxu0 %v7846
    %10277 = vmatmul.mubr.bf16.gmra.mxu0 %v7845
    %v10278 = vpop.f32.mrf.mxu0
    %v10279 = vadd.f32 %v10226, %v10278
    %v10280 = vpop.f32.mrf.mxu0
    %v10281 = vadd.f32 %v10228, %v10280
    %v10282 = vpop.f32.mrf.mxu0
    %v10283 = vadd.f32 %v10230, %v10282
    %v10284 = vpop.f32.mrf.mxu0
    %v10285 = vadd.f32 %v10232, %v10284
    %10286 = vdwg.mxu0
    %10287 = vmatprep.subr.bf16.mxu0 %v9570
    %10288 = vmatpush1.bf16.msra.mxu0 %v9569
    %10289 = vmatprep.subr.bf16.mxu0 %v9566
    %10290 = vmatpush1.bf16.msra.mxu0 %v9565
    %10291 = vmatprep.subr.bf16.mxu0 %v9562
    %10292 = vmatpush1.bf16.msra.mxu0 %v9561
    %10293 = vmatprep.subr.bf16.mxu0 %v9558
    %10294 = vmatpush1.bf16.msra.mxu0 %v9557
    %10295 = vmatprep.subr.bf16.mxu0 %v9554
    %10296 = vmatpush1.bf16.msra.mxu0 %v9553
    %10297 = vmatprep.subr.bf16.mxu0 %v9550
    %10298 = vmatpush1.bf16.msra.mxu0 %v9549
    %10299 = vmatprep.subr.bf16.mxu0 %v9546
    %10300 = vmatpush1.bf16.msra.mxu0 %v9545
    %10301 = vmatprep.subr.bf16.mxu0 %v9542
    %10302 = vmatpush1.bf16.msra.mxu0 %v9541
    %10303 = vmatprep.subr.bf16.mxu0 %v9602
    %10304 = vmatpush2.bf16.msra.mxu0 %v9601
    %10305 = vmatprep.subr.bf16.mxu0 %v9598
    %10306 = vmatpush2.bf16.msra.mxu0 %v9597
    %10307 = vmatprep.subr.bf16.mxu0 %v9594
    %10308 = vmatpush2.bf16.msra.mxu0 %v9593
    %10309 = vmatprep.subr.bf16.mxu0 %v9590
    %10310 = vmatpush2.bf16.msra.mxu0 %v9589
    %10311 = vmatprep.subr.bf16.mxu0 %v9586
    %10312 = vmatpush2.bf16.msra.mxu0 %v9585
    %10313 = vmatprep.subr.bf16.mxu0 %v9582
    %10314 = vmatpush2.bf16.msra.mxu0 %v9581
    %10315 = vmatprep.subr.bf16.mxu0 %v9578
    %10316 = vmatpush2.bf16.msra.mxu0 %v9577
    %10317 = vmatprep.subr.bf16.mxu0 %v9574
    %10318 = vmatpush2.bf16.msra.mxu0 %v9573
    %10319 = vmatprep.mubr.bf16.mxu0 %v7836
    %10320 = vmatmul.mubr.bf16.gmra.mxu0 %v7835
    %v10321 = vpop.f32.mrf.mxu0
    %v10322 = vadd.f32 %v10269, %v10321
    %v10323 = vpop.f32.mrf.mxu0
    %v10324 = vadd.f32 %v10271, %v10323
    %v10325 = vpop.f32.mrf.mxu0
    %v10326 = vadd.f32 %v10273, %v10325
    %v10327 = vpop.f32.mrf.mxu0
    %v10328 = vadd.f32 %v10275, %v10327
    %10329 = vmatprep.mubr.bf16.mxu0 %v7848
    %10330 = vmatmul.mubr.bf16.gmra.mxu0 %v7847
    %v10331 = vpop.f32.mrf.mxu0
    %v10332 = vadd.f32 %v10279, %v10331
    %v10333 = vpop.f32.mrf.mxu0
    %v10334 = vadd.f32 %v10281, %v10333
    %v10335 = vpop.f32.mrf.mxu0
    %v10336 = vadd.f32 %v10283, %v10335
    %v10337 = vpop.f32.mrf.mxu0
    %v10338 = vadd.f32 %v10285, %v10337
    %10339 = vdwg.mxu0
    %10340 = vmatprep.subr.bf16.mxu0 %v9634
    %10341 = vmatpush1.bf16.msra.mxu0 %v9633
    %10342 = vmatprep.subr.bf16.mxu0 %v9630
    %10343 = vmatpush1.bf16.msra.mxu0 %v9629
    %10344 = vmatprep.subr.bf16.mxu0 %v9626
    %10345 = vmatpush1.bf16.msra.mxu0 %v9625
    %10346 = vmatprep.subr.bf16.mxu0 %v9622
    %10347 = vmatpush1.bf16.msra.mxu0 %v9621
    %10348 = vmatprep.subr.bf16.mxu0 %v9618
    %10349 = vmatpush1.bf16.msra.mxu0 %v9617
    %10350 = vmatprep.subr.bf16.mxu0 %v9614
    %10351 = vmatpush1.bf16.msra.mxu0 %v9613
    %10352 = vmatprep.subr.bf16.mxu0 %v9610
    %10353 = vmatpush1.bf16.msra.mxu0 %v9609
    %10354 = vmatprep.subr.bf16.mxu0 %v9606
    %10355 = vmatpush1.bf16.msra.mxu0 %v9605
    %10356 = vmatprep.subr.bf16.mxu0 %v9666
    %10357 = vmatpush2.bf16.msra.mxu0 %v9665
    %10358 = vmatprep.subr.bf16.mxu0 %v9662
    %10359 = vmatpush2.bf16.msra.mxu0 %v9661
    %10360 = vmatprep.subr.bf16.mxu0 %v9658
    %10361 = vmatpush2.bf16.msra.mxu0 %v9657
    %10362 = vmatprep.subr.bf16.mxu0 %v9654
    %10363 = vmatpush2.bf16.msra.mxu0 %v9653
    %10364 = vmatprep.subr.bf16.mxu0 %v9650
    %10365 = vmatpush2.bf16.msra.mxu0 %v9649
    %10366 = vmatprep.subr.bf16.mxu0 %v9646
    %10367 = vmatpush2.bf16.msra.mxu0 %v9645
    %10368 = vmatprep.subr.bf16.mxu0 %v9642
    %10369 = vmatpush2.bf16.msra.mxu0 %v9641
    %10370 = vmatprep.subr.bf16.mxu0 %v9638
    %10371 = vmatpush2.bf16.msra.mxu0 %v9637
    %10372 = vmatprep.mubr.bf16.mxu0 %v7838
    %10373 = vmatmul.mubr.bf16.gmra.mxu0 %v7837
    %v10374 = vpop.f32.mrf.mxu0
    %v10375 = vadd.f32 %v10322, %v10374
    %v10376 = vpop.f32.mrf.mxu0
    %v10377 = vadd.f32 %v10324, %v10376
    %v10378 = vpop.f32.mrf.mxu0
    %v10379 = vadd.f32 %v10326, %v10378
    %v10380 = vpop.f32.mrf.mxu0
    %v10381 = vadd.f32 %v10328, %v10380
    %10382 = vmatprep.mubr.bf16.mxu0 %v7850
    %10383 = vmatmul.mubr.bf16.gmra.mxu0 %v7849
    %v10384 = vpop.f32.mrf.mxu0
    %v10385 = vadd.f32 %v10332, %v10384
    %v10386 = vpop.f32.mrf.mxu0
    %v10387 = vadd.f32 %v10334, %v10386
    %v10388 = vpop.f32.mrf.mxu0
    %v10389 = vadd.f32 %v10336, %v10388
    %v10390 = vpop.f32.mrf.mxu0
    %v10391 = vadd.f32 %v10338, %v10390
    %10392 = vdwg.mxu0
    %10393 = vmatprep.subr.bf16.mxu0 %v9698
    %10394 = vmatpush1.bf16.msra.mxu0 %v9697
    %10395 = vmatprep.subr.bf16.mxu0 %v9694
    %10396 = vmatpush1.bf16.msra.mxu0 %v9693
    %10397 = vmatprep.subr.bf16.mxu0 %v9690
    %10398 = vmatpush1.bf16.msra.mxu0 %v9689
    %10399 = vmatprep.subr.bf16.mxu0 %v9686
    %10400 = vmatpush1.bf16.msra.mxu0 %v9685
    %10401 = vmatprep.subr.bf16.mxu0 %v9682
    %10402 = vmatpush1.bf16.msra.mxu0 %v9681
    %10403 = vmatprep.subr.bf16.mxu0 %v9678
    %10404 = vmatpush1.bf16.msra.mxu0 %v9677
    %10405 = vmatprep.subr.bf16.mxu0 %v9674
    %10406 = vmatpush1.bf16.msra.mxu0 %v9673
    %10407 = vmatprep.subr.bf16.mxu0 %v9670
    %10408 = vmatpush1.bf16.msra.mxu0 %v9669
    %10409 = vmatprep.subr.bf16.mxu0 %v9730
    %10410 = vmatpush2.bf16.msra.mxu0 %v9729
    %10411 = vmatprep.subr.bf16.mxu0 %v9726
    %10412 = vmatpush2.bf16.msra.mxu0 %v9725
    %10413 = vmatprep.subr.bf16.mxu0 %v9722
    %10414 = vmatpush2.bf16.msra.mxu0 %v9721
    %10415 = vmatprep.subr.bf16.mxu0 %v9718
    %10416 = vmatpush2.bf16.msra.mxu0 %v9717
    %10417 = vmatprep.subr.bf16.mxu0 %v9714
    %10418 = vmatpush2.bf16.msra.mxu0 %v9713
    %10419 = vmatprep.subr.bf16.mxu0 %v9710
    %10420 = vmatpush2.bf16.msra.mxu0 %v9709
    %10421 = vmatprep.subr.bf16.mxu0 %v9706
    %10422 = vmatpush2.bf16.msra.mxu0 %v9705
    %10423 = vmatprep.subr.bf16.mxu0 %v9702
    %10424 = vmatpush2.bf16.msra.mxu0 %v9701
    %10425 = vmatprep.mubr.bf16.mxu0 %v7840
    %10426 = vmatmul.mubr.bf16.gmra.mxu0 %v7839
    %v10427 = vpop.f32.mrf.mxu0
    %v10428 = vadd.f32 %v10375, %v10427
    %v10429 = vpop.f32.mrf.mxu0
    %v10430 = vadd.f32 %v10377, %v10429
    %v10431 = vpop.f32.mrf.mxu0
    %v10432 = vadd.f32 %v10379, %v10431
    %v10433 = vpop.f32.mrf.mxu0
    %v10434 = vadd.f32 %v10381, %v10433
    %10435 = vmatprep.mubr.bf16.mxu0 %v7852
    %10436 = vmatmul.mubr.bf16.gmra.mxu0 %v7851
    %v10437 = vpop.f32.mrf.mxu0
    %v10438 = vadd.f32 %v10385, %v10437
    %v10439 = vpop.f32.mrf.mxu0
    %v10440 = vadd.f32 %v10387, %v10439
    %v10441 = vpop.f32.mrf.mxu0
    %v10442 = vadd.f32 %v10389, %v10441
    %v10443 = vpop.f32.mrf.mxu0
    %v10444 = vadd.f32 %v10391, %v10443
    %10445 = vdwg.mxu0
    %10446 = vmatprep.subr.bf16.mxu0 %v9762
    %10447 = vmatpush1.bf16.msra.mxu0 %v9761
    %10448 = vmatprep.subr.bf16.mxu0 %v9758
    %10449 = vmatpush1.bf16.msra.mxu0 %v9757
    %10450 = vmatprep.subr.bf16.mxu0 %v9754
    %10451 = vmatpush1.bf16.msra.mxu0 %v9753
    %10452 = vmatprep.subr.bf16.mxu0 %v9750
    %10453 = vmatpush1.bf16.msra.mxu0 %v9749
    %10454 = vmatprep.subr.bf16.mxu0 %v9746
    %10455 = vmatpush1.bf16.msra.mxu0 %v9745
    %10456 = vmatprep.subr.bf16.mxu0 %v9742
    %10457 = vmatpush1.bf16.msra.mxu0 %v9741
    %10458 = vmatprep.subr.bf16.mxu0 %v9738
    %10459 = vmatpush1.bf16.msra.mxu0 %v9737
    %10460 = vmatprep.subr.bf16.mxu0 %v9734
    %10461 = vmatpush1.bf16.msra.mxu0 %v9733
    %10462 = vmatprep.subr.bf16.mxu0 %v9794
    %10463 = vmatpush2.bf16.msra.mxu0 %v9793
    %10464 = vmatprep.subr.bf16.mxu0 %v9790
    %10465 = vmatpush2.bf16.msra.mxu0 %v9789
    %10466 = vmatprep.subr.bf16.mxu0 %v9786
    %10467 = vmatpush2.bf16.msra.mxu0 %v9785
    %10468 = vmatprep.subr.bf16.mxu0 %v9782
    %10469 = vmatpush2.bf16.msra.mxu0 %v9781
    %10470 = vmatprep.subr.bf16.mxu0 %v9778
    %10471 = vmatpush2.bf16.msra.mxu0 %v9777
    %10472 = vmatprep.subr.bf16.mxu0 %v9774
    %10473 = vmatpush2.bf16.msra.mxu0 %v9773
    %10474 = vmatprep.subr.bf16.mxu0 %v9770
    %10475 = vmatpush2.bf16.msra.mxu0 %v9769
    %10476 = vmatprep.subr.bf16.mxu0 %v9766
    %10477 = vmatpush2.bf16.msra.mxu0 %v9765
    %10478 = vmatprep.mubr.bf16.mxu0 %v7842
    %10479 = vmatmul.mubr.bf16.gmra.mxu0 %v7841
    %v10480 = vpop.f32.mrf.mxu0
    %v10481 = vadd.f32 %v10428, %v10480
    %v10482 = vpop.f32.mrf.mxu0
    %v10483 = vadd.f32 %v10430, %v10482
    %v10484 = vpop.f32.mrf.mxu0
    %v10485 = vadd.f32 %v10432, %v10484
    %v10486 = vpop.f32.mrf.mxu0
    %v10487 = vadd.f32 %v10434, %v10486
    %10488 = vmatprep.mubr.bf16.mxu0 %v7854
    %10489 = vmatmul.mubr.bf16.gmra.mxu0 %v7853
    %v10490 = vpop.f32.mrf.mxu0
    %v10491 = vadd.f32 %v10438, %v10490
    %v10492 = vpop.f32.mrf.mxu0
    %v10493 = vadd.f32 %v10440, %v10492
    %v10494 = vpop.f32.mrf.mxu0
    %v10495 = vadd.f32 %v10442, %v10494
    %v10496 = vpop.f32.mrf.mxu0
    %v10497 = vadd.f32 %v10444, %v10496
    %10498 = vdwg.mxu0
    %10499 = vmatprep.subr.bf16.mxu0 %v9444
    %10500 = vmatpush1.bf16.msra.mxu0 %v9443
    %10501 = vmatprep.subr.bf16.mxu0 %v9440
    %10502 = vmatpush1.bf16.msra.mxu0 %v9439
    %10503 = vmatprep.subr.bf16.mxu0 %v9436
    %10504 = vmatpush1.bf16.msra.mxu0 %v9435
    %10505 = vmatprep.subr.bf16.mxu0 %v9432
    %10506 = vmatpush1.bf16.msra.mxu0 %v9431
    %10507 = vmatprep.subr.bf16.mxu0 %v9428
    %10508 = vmatpush1.bf16.msra.mxu0 %v9427
    %10509 = vmatprep.subr.bf16.mxu0 %v9424
    %10510 = vmatpush1.bf16.msra.mxu0 %v9423
    %10511 = vmatprep.subr.bf16.mxu0 %v9420
    %10512 = vmatpush1.bf16.msra.mxu0 %v9419
    %10513 = vmatprep.subr.bf16.mxu0 %v9416
    %10514 = vmatpush1.bf16.msra.mxu0 %v9415
    %10515 = vmatprep.subr.bf16.mxu0 %v9476
    %10516 = vmatpush2.bf16.msra.mxu0 %v9475
    %10517 = vmatprep.subr.bf16.mxu0 %v9472
    %10518 = vmatpush2.bf16.msra.mxu0 %v9471
    %10519 = vmatprep.subr.bf16.mxu0 %v9468
    %10520 = vmatpush2.bf16.msra.mxu0 %v9467
    %10521 = vmatprep.subr.bf16.mxu0 %v9464
    %10522 = vmatpush2.bf16.msra.mxu0 %v9463
    %10523 = vmatprep.subr.bf16.mxu0 %v9460
    %10524 = vmatpush2.bf16.msra.mxu0 %v9459
    %10525 = vmatprep.subr.bf16.mxu0 %v9456
    %10526 = vmatpush2.bf16.msra.mxu0 %v9455
    %10527 = vmatprep.subr.bf16.mxu0 %v9452
    %10528 = vmatpush2.bf16.msra.mxu0 %v9451
    %10529 = vmatprep.subr.bf16.mxu0 %v9448
    %10530 = vmatpush2.bf16.msra.mxu0 %v9447
    %10531 = vmatprep.mubr.bf16.mxu0 %v7832
    %10532 = vmatmul.mubr.bf16.gmra.mxu0 %v7831
    %v10533 = vpop.f32.mrf.mxu0
    %v10534 = vadd.f32 %v8252, %v10533
    %v10535 = vpop.f32.mrf.mxu0
    %v10536 = vadd.f32 %v8256, %v10535
    %v10537 = vpop.f32.mrf.mxu0
    %v10538 = vadd.f32 %v8252, %v10537
    %v10539 = vpop.f32.mrf.mxu0
    %v10540 = vadd.f32 %v8256, %v10539
    %10541 = vmatprep.mubr.bf16.mxu0 %v7844
    %10542 = vmatmul.mubr.bf16.gmra.mxu0 %v7843
    %v10543 = vpop.f32.mrf.mxu0
    %v10544 = vadd.f32 %v8252, %v10543
    %v10545 = vpop.f32.mrf.mxu0
    %v10546 = vadd.f32 %v8256, %v10545
    %v10547 = vpop.f32.mrf.mxu0
    %v10548 = vadd.f32 %v8252, %v10547
    %v10549 = vpop.f32.mrf.mxu0
    %v10550 = vadd.f32 %v8256, %v10549
    %10551 = vdwg.mxu0
    %10552 = vmatprep.subr.bf16.mxu0 %v9508
    %10553 = vmatpush1.bf16.msra.mxu0 %v9507
    %10554 = vmatprep.subr.bf16.mxu0 %v9504
    %10555 = vmatpush1.bf16.msra.mxu0 %v9503
    %10556 = vmatprep.subr.bf16.mxu0 %v9500
    %10557 = vmatpush1.bf16.msra.mxu0 %v9499
    %10558 = vmatprep.subr.bf16.mxu0 %v9496
    %10559 = vmatpush1.bf16.msra.mxu0 %v9495
    %10560 = vmatprep.subr.bf16.mxu0 %v9492
    %10561 = vmatpush1.bf16.msra.mxu0 %v9491
    %10562 = vmatprep.subr.bf16.mxu0 %v9488
    %10563 = vmatpush1.bf16.msra.mxu0 %v9487
    %10564 = vmatprep.subr.bf16.mxu0 %v9484
    %10565 = vmatpush1.bf16.msra.mxu0 %v9483
    %10566 = vmatprep.subr.bf16.mxu0 %v9480
    %10567 = vmatpush1.bf16.msra.mxu0 %v9479
    %10568 = vmatprep.subr.bf16.mxu0 %v9540
    %10569 = vmatpush2.bf16.msra.mxu0 %v9539
    %10570 = vmatprep.subr.bf16.mxu0 %v9536
    %10571 = vmatpush2.bf16.msra.mxu0 %v9535
    %10572 = vmatprep.subr.bf16.mxu0 %v9532
    %10573 = vmatpush2.bf16.msra.mxu0 %v9531
    %10574 = vmatprep.subr.bf16.mxu0 %v9528
    %10575 = vmatpush2.bf16.msra.mxu0 %v9527
    %10576 = vmatprep.subr.bf16.mxu0 %v9524
    %10577 = vmatpush2.bf16.msra.mxu0 %v9523
    %10578 = vmatprep.subr.bf16.mxu0 %v9520
    %10579 = vmatpush2.bf16.msra.mxu0 %v9519
    %10580 = vmatprep.subr.bf16.mxu0 %v9516
    %10581 = vmatpush2.bf16.msra.mxu0 %v9515
    %10582 = vmatprep.subr.bf16.mxu0 %v9512
    %10583 = vmatpush2.bf16.msra.mxu0 %v9511
    %10584 = vmatprep.mubr.bf16.mxu0 %v7834
    %10585 = vmatmul.mubr.bf16.gmra.mxu0 %v7833
    %v10586 = vpop.f32.mrf.mxu0
    %v10587 = vadd.f32 %v10534, %v10586
    %v10588 = vpop.f32.mrf.mxu0
    %v10589 = vadd.f32 %v10536, %v10588
    %v10590 = vpop.f32.mrf.mxu0
    %v10591 = vadd.f32 %v10538, %v10590
    %v10592 = vpop.f32.mrf.mxu0
    %v10593 = vadd.f32 %v10540, %v10592
    %10594 = vmatprep.mubr.bf16.mxu0 %v7846
    %10595 = vmatmul.mubr.bf16.gmra.mxu0 %v7845
    %v10596 = vpop.f32.mrf.mxu0
    %v10597 = vadd.f32 %v10544, %v10596
    %v10598 = vpop.f32.mrf.mxu0
    %v10599 = vadd.f32 %v10546, %v10598
    %v10600 = vpop.f32.mrf.mxu0
    %v10601 = vadd.f32 %v10548, %v10600
    %v10602 = vpop.f32.mrf.mxu0
    %v10603 = vadd.f32 %v10550, %v10602
    %10604 = vdwg.mxu0
    %10605 = vmatprep.subr.bf16.mxu0 %v9572
    %10606 = vmatpush1.bf16.msra.mxu0 %v9571
    %10607 = vmatprep.subr.bf16.mxu0 %v9568
    %10608 = vmatpush1.bf16.msra.mxu0 %v9567
    %10609 = vmatprep.subr.bf16.mxu0 %v9564
    %10610 = vmatpush1.bf16.msra.mxu0 %v9563
    %10611 = vmatprep.subr.bf16.mxu0 %v9560
    %10612 = vmatpush1.bf16.msra.mxu0 %v9559
    %10613 = vmatprep.subr.bf16.mxu0 %v9556
    %10614 = vmatpush1.bf16.msra.mxu0 %v9555
    %10615 = vmatprep.subr.bf16.mxu0 %v9552
    %10616 = vmatpush1.bf16.msra.mxu0 %v9551
    %10617 = vmatprep.subr.bf16.mxu0 %v9548
    %10618 = vmatpush1.bf16.msra.mxu0 %v9547
    %10619 = vmatprep.subr.bf16.mxu0 %v9544
    %10620 = vmatpush1.bf16.msra.mxu0 %v9543
    %10621 = vmatprep.subr.bf16.mxu0 %v9604
    %10622 = vmatpush2.bf16.msra.mxu0 %v9603
    %10623 = vmatprep.subr.bf16.mxu0 %v9600
    %10624 = vmatpush2.bf16.msra.mxu0 %v9599
    %10625 = vmatprep.subr.bf16.mxu0 %v9596
    %10626 = vmatpush2.bf16.msra.mxu0 %v9595
    %10627 = vmatprep.subr.bf16.mxu0 %v9592
    %10628 = vmatpush2.bf16.msra.mxu0 %v9591
    %10629 = vmatprep.subr.bf16.mxu0 %v9588
    %10630 = vmatpush2.bf16.msra.mxu0 %v9587
    %10631 = vmatprep.subr.bf16.mxu0 %v9584
    %10632 = vmatpush2.bf16.msra.mxu0 %v9583
    %10633 = vmatprep.subr.bf16.mxu0 %v9580
    %10634 = vmatpush2.bf16.msra.mxu0 %v9579
    %10635 = vmatprep.subr.bf16.mxu0 %v9576
    %10636 = vmatpush2.bf16.msra.mxu0 %v9575
    %10637 = vmatprep.mubr.bf16.mxu0 %v7836
    %10638 = vmatmul.mubr.bf16.gmra.mxu0 %v7835
    %v10639 = vpop.f32.mrf.mxu0
    %v10640 = vadd.f32 %v10587, %v10639
    %v10641 = vpop.f32.mrf.mxu0
    %v10642 = vadd.f32 %v10589, %v10641
    %v10643 = vpop.f32.mrf.mxu0
    %v10644 = vadd.f32 %v10591, %v10643
    %v10645 = vpop.f32.mrf.mxu0
    %v10646 = vadd.f32 %v10593, %v10645
    %10647 = vmatprep.mubr.bf16.mxu0 %v7848
    %10648 = vmatmul.mubr.bf16.gmra.mxu0 %v7847
    %v10649 = vpop.f32.mrf.mxu0
    %v10650 = vadd.f32 %v10597, %v10649
    %v10651 = vpop.f32.mrf.mxu0
    %v10652 = vadd.f32 %v10599, %v10651
    %v10653 = vpop.f32.mrf.mxu0
    %v10654 = vadd.f32 %v10601, %v10653
    %v10655 = vpop.f32.mrf.mxu0
    %v10656 = vadd.f32 %v10603, %v10655
    %10657 = vdwg.mxu0
    %10658 = vmatprep.subr.bf16.mxu0 %v9636
    %10659 = vmatpush1.bf16.msra.mxu0 %v9635
    %10660 = vmatprep.subr.bf16.mxu0 %v9632
    %10661 = vmatpush1.bf16.msra.mxu0 %v9631
    %10662 = vmatprep.subr.bf16.mxu0 %v9628
    %10663 = vmatpush1.bf16.msra.mxu0 %v9627
    %10664 = vmatprep.subr.bf16.mxu0 %v9624
    %10665 = vmatpush1.bf16.msra.mxu0 %v9623
    %10666 = vmatprep.subr.bf16.mxu0 %v9620
    %10667 = vmatpush1.bf16.msra.mxu0 %v9619
    %10668 = vmatprep.subr.bf16.mxu0 %v9616
    %10669 = vmatpush1.bf16.msra.mxu0 %v9615
    %10670 = vmatprep.subr.bf16.mxu0 %v9612
    %10671 = vmatpush1.bf16.msra.mxu0 %v9611
    %10672 = vmatprep.subr.bf16.mxu0 %v9608
    %10673 = vmatpush1.bf16.msra.mxu0 %v9607
    %10674 = vmatprep.subr.bf16.mxu0 %v9668
    %10675 = vmatpush2.bf16.msra.mxu0 %v9667
    %10676 = vmatprep.subr.bf16.mxu0 %v9664
    %10677 = vmatpush2.bf16.msra.mxu0 %v9663
    %10678 = vmatprep.subr.bf16.mxu0 %v9660
    %10679 = vmatpush2.bf16.msra.mxu0 %v9659
    %10680 = vmatprep.subr.bf16.mxu0 %v9656
    %10681 = vmatpush2.bf16.msra.mxu0 %v9655
    %10682 = vmatprep.subr.bf16.mxu0 %v9652
    %10683 = vmatpush2.bf16.msra.mxu0 %v9651
    %10684 = vmatprep.subr.bf16.mxu0 %v9648
    %10685 = vmatpush2.bf16.msra.mxu0 %v9647
    %10686 = vmatprep.subr.bf16.mxu0 %v9644
    %10687 = vmatpush2.bf16.msra.mxu0 %v9643
    %10688 = vmatprep.subr.bf16.mxu0 %v9640
    %10689 = vmatpush2.bf16.msra.mxu0 %v9639
    %10690 = vmatprep.mubr.bf16.mxu0 %v7838
    %10691 = vmatmul.mubr.bf16.gmra.mxu0 %v7837
    %v10692 = vpop.f32.mrf.mxu0
    %v10693 = vadd.f32 %v10640, %v10692
    %v10694 = vpop.f32.mrf.mxu0
    %v10695 = vadd.f32 %v10642, %v10694
    %v10696 = vpop.f32.mrf.mxu0
    %v10697 = vadd.f32 %v10644, %v10696
    %v10698 = vpop.f32.mrf.mxu0
    %v10699 = vadd.f32 %v10646, %v10698
    %10700 = vmatprep.mubr.bf16.mxu0 %v7850
    %10701 = vmatmul.mubr.bf16.gmra.mxu0 %v7849
    %v10702 = vpop.f32.mrf.mxu0
    %v10703 = vadd.f32 %v10650, %v10702
    %v10704 = vpop.f32.mrf.mxu0
    %v10705 = vadd.f32 %v10652, %v10704
    %v10706 = vpop.f32.mrf.mxu0
    %v10707 = vadd.f32 %v10654, %v10706
    %v10708 = vpop.f32.mrf.mxu0
    %v10709 = vadd.f32 %v10656, %v10708
    %10710 = vdwg.mxu0
    %10711 = vmatprep.subr.bf16.mxu0 %v9700
    %10712 = vmatpush1.bf16.msra.mxu0 %v9699
    %10713 = vmatprep.subr.bf16.mxu0 %v9696
    %10714 = vmatpush1.bf16.msra.mxu0 %v9695
    %10715 = vmatprep.subr.bf16.mxu0 %v9692
    %10716 = vmatpush1.bf16.msra.mxu0 %v9691
    %10717 = vmatprep.subr.bf16.mxu0 %v9688
    %10718 = vmatpush1.bf16.msra.mxu0 %v9687
    %10719 = vmatprep.subr.bf16.mxu0 %v9684
    %10720 = vmatpush1.bf16.msra.mxu0 %v9683
    %10721 = vmatprep.subr.bf16.mxu0 %v9680
    %10722 = vmatpush1.bf16.msra.mxu0 %v9679
    %10723 = vmatprep.subr.bf16.mxu0 %v9676
    %10724 = vmatpush1.bf16.msra.mxu0 %v9675
    %10725 = vmatprep.subr.bf16.mxu0 %v9672
    %10726 = vmatpush1.bf16.msra.mxu0 %v9671
    %10727 = vmatprep.subr.bf16.mxu0 %v9732
    %10728 = vmatpush2.bf16.msra.mxu0 %v9731
    %10729 = vmatprep.subr.bf16.mxu0 %v9728
    %10730 = vmatpush2.bf16.msra.mxu0 %v9727
    %10731 = vmatprep.subr.bf16.mxu0 %v9724
    %10732 = vmatpush2.bf16.msra.mxu0 %v9723
    %10733 = vmatprep.subr.bf16.mxu0 %v9720
    %10734 = vmatpush2.bf16.msra.mxu0 %v9719
    %10735 = vmatprep.subr.bf16.mxu0 %v9716
    %10736 = vmatpush2.bf16.msra.mxu0 %v9715
    %10737 = vmatprep.subr.bf16.mxu0 %v9712
    %10738 = vmatpush2.bf16.msra.mxu0 %v9711
    %10739 = vmatprep.subr.bf16.mxu0 %v9708
    %10740 = vmatpush2.bf16.msra.mxu0 %v9707
    %10741 = vmatprep.subr.bf16.mxu0 %v9704
    %10742 = vmatpush2.bf16.msra.mxu0 %v9703
    %10743 = vmatprep.mubr.bf16.mxu0 %v7840
    %10744 = vmatmul.mubr.bf16.gmra.mxu0 %v7839
    %v10745 = vpop.f32.mrf.mxu0
    %v10746 = vadd.f32 %v10693, %v10745
    %v10747 = vpop.f32.mrf.mxu0
    %v10748 = vadd.f32 %v10695, %v10747
    %v10749 = vpop.f32.mrf.mxu0
    %v10750 = vadd.f32 %v10697, %v10749
    %v10751 = vpop.f32.mrf.mxu0
    %v10752 = vadd.f32 %v10699, %v10751
    %10753 = vmatprep.mubr.bf16.mxu0 %v7852
    %10754 = vmatmul.mubr.bf16.gmra.mxu0 %v7851
    %v10755 = vpop.f32.mrf.mxu0
    %v10756 = vadd.f32 %v10703, %v10755
    %v10757 = vpop.f32.mrf.mxu0
    %v10758 = vadd.f32 %v10705, %v10757
    %v10759 = vpop.f32.mrf.mxu0
    %v10760 = vadd.f32 %v10707, %v10759
    %v10761 = vpop.f32.mrf.mxu0
    %v10762 = vadd.f32 %v10709, %v10761
    %10763 = vdwg.mxu0
    %10764 = vmatprep.subr.bf16.mxu0 %v9764
    %10765 = vmatpush1.bf16.msra.mxu0 %v9763
    %10766 = vmatprep.subr.bf16.mxu0 %v9760
    %10767 = vmatpush1.bf16.msra.mxu0 %v9759
    %10768 = vmatprep.subr.bf16.mxu0 %v9756
    %10769 = vmatpush1.bf16.msra.mxu0 %v9755
    %10770 = vmatprep.subr.bf16.mxu0 %v9752
    %10771 = vmatpush1.bf16.msra.mxu0 %v9751
    %10772 = vmatprep.subr.bf16.mxu0 %v9748
    %10773 = vmatpush1.bf16.msra.mxu0 %v9747
    %10774 = vmatprep.subr.bf16.mxu0 %v9744
    %10775 = vmatpush1.bf16.msra.mxu0 %v9743
    %10776 = vmatprep.subr.bf16.mxu0 %v9740
    %10777 = vmatpush1.bf16.msra.mxu0 %v9739
    %10778 = vmatprep.subr.bf16.mxu0 %v9736
    %10779 = vmatpush1.bf16.msra.mxu0 %v9735
    %10780 = vmatprep.subr.bf16.mxu0 %v9796
    %10781 = vmatpush2.bf16.msra.mxu0 %v9795
    %10782 = vmatprep.subr.bf16.mxu0 %v9792
    %10783 = vmatpush2.bf16.msra.mxu0 %v9791
    %10784 = vmatprep.subr.bf16.mxu0 %v9788
    %10785 = vmatpush2.bf16.msra.mxu0 %v9787
    %10786 = vmatprep.subr.bf16.mxu0 %v9784
    %10787 = vmatpush2.bf16.msra.mxu0 %v9783
    %10788 = vmatprep.subr.bf16.mxu0 %v9780
    %10789 = vmatpush2.bf16.msra.mxu0 %v9779
    %10790 = vmatprep.subr.bf16.mxu0 %v9776
    %10791 = vmatpush2.bf16.msra.mxu0 %v9775
    %10792 = vmatprep.subr.bf16.mxu0 %v9772
    %10793 = vmatpush2.bf16.msra.mxu0 %v9771
    %10794 = vmatprep.subr.bf16.mxu0 %v9768
    %10795 = vmatpush2.bf16.msra.mxu0 %v9767
    %10796 = vmatprep.mubr.bf16.mxu0 %v7842
    %10797 = vmatmul.mubr.bf16.gmra.mxu0 %v7841
    %v10798 = vpop.f32.mrf.mxu0
    %v10799 = vadd.f32 %v10746, %v10798
    %v10800 = vpop.f32.mrf.mxu0
    %v10801 = vadd.f32 %v10748, %v10800
    %v10802 = vpop.f32.mrf.mxu0
    %v10803 = vadd.f32 %v10750, %v10802
    %v10804 = vpop.f32.mrf.mxu0
    %v10805 = vadd.f32 %v10752, %v10804
    %10806 = vmatprep.mubr.bf16.mxu0 %v7854
    %10807 = vmatmul.mubr.bf16.gmra.mxu0 %v7853
    %v10808 = vpop.f32.mrf.mxu0
    %v10809 = vadd.f32 %v10756, %v10808
    %v10810 = vpop.f32.mrf.mxu0
    %v10811 = vadd.f32 %v10758, %v10810
    %v10812 = vpop.f32.mrf.mxu0
    %v10813 = vadd.f32 %v10760, %v10812
    %v10814 = vpop.f32.mrf.mxu0
    %v10815 = vadd.f32 %v10762, %v10814
    %10816 = vdwg.mxu0
    %v10817 = vmax.f32 %v10481, 0.0
    %v10818 = vmax.f32 %v10483, 0.0
    %v10819 = vmax.f32 %v10799, 0.0
    %v10820 = vmax.f32 %v10801, 0.0
    %v10821 = vmax.f32 %v10485, 0.0
    %v10822 = vmax.f32 %v10487, 0.0
    %v10823 = vmax.f32 %v10803, 0.0
    %v10824 = vmax.f32 %v10805, 0.0
    %v10825 = vmax.f32 %v10491, 0.0
    %v10826 = vmax.f32 %v10493, 0.0
    %v10827 = vmax.f32 %v10809, 0.0
    %v10828 = vmax.f32 %v10811, 0.0
    %v10829 = vmax.f32 %v10495, 0.0
    %v10830 = vmax.f32 %v10497, 0.0
    %v10831 = vmax.f32 %v10813, 0.0
    %v10832 = vmax.f32 %v10815, 0.0
    %10833 = vst [vmem:[#allocation2 + $0x20] sm:$0xff] %v10817
    %10834 = vst [vmem:[#allocation2 + $0x28] sm:$0xff] %v10818
    %10835 = vst [vmem:[#allocation2 + $0x30] sm:$0xff] %v10819
    %10836 = vst [vmem:[#allocation2 + $0x38] sm:$0xff] %v10820
    %10837 = vst [vmem:[#allocation2 + $0x40] sm:$0xff] %v10821
    %10838 = vst [vmem:[#allocation2 + $0x48] sm:$0xff] %v10822
    %10839 = vst [vmem:[#allocation2 + $0x50] sm:$0xff] %v10823
    %10840 = vst [vmem:[#allocation2 + $0x58] sm:$0xff] %v10824
    %10841 = vst [vmem:[#allocation2 + $0xa0] sm:$0xff] %v10825
    %10842 = vst [vmem:[#allocation2 + $0xa8] sm:$0xff] %v10826
    %10843 = vst [vmem:[#allocation2 + $0xb0] sm:$0xff] %v10827
    %10844 = vst [vmem:[#allocation2 + $0xb8] sm:$0xff] %v10828
    %10845 = vst [vmem:[#allocation2 + $0xc0] sm:$0xff] %v10829
    %10846 = vst [vmem:[#allocation2 + $0xc8] sm:$0xff] %v10830
    %10847 = vst [vmem:[#allocation2 + $0xd0] sm:$0xff] %v10831
    %10848 = vst [vmem:[#allocation2 + $0xd8] sm:$0xff] %v10832
    %v10849 = vld [vmem:[#allocation2] sm:$0x80]
    %v10850 = vld [vmem:[#allocation2 + $0x8] sm:$0x80]
    %v10851 = vld [vmem:[#allocation2 + $0x10] sm:$0x80]
    %v10852 = vld [vmem:[#allocation2 + $0x18] sm:$0x80]
    %v10853 = vld [vmem:[#allocation2 + $0x20] sm:$0xff]
    %v10854 = vld [vmem:[#allocation2 + $0x28] sm:$0xff]
    %v10855 = vld [vmem:[#allocation2 + $0x30] sm:$0xff]
    %v10856 = vld [vmem:[#allocation2 + $0x38] sm:$0xff]
    %v10857 = vld [vmem:[#allocation2 + $0x40] sm:$0x7f]
    %v10858 = vld [vmem:[#allocation2 + $0x48] sm:$0x7f]
    %v10859 = vld [vmem:[#allocation2 + $0x50] sm:$0x7f]
    %v10860 = vld [vmem:[#allocation2 + $0x58] sm:$0x7f]
    %v10861 = vld [vmem:[#allocation2 + $0x80] sm:$0x80]
    %v10862 = vld [vmem:[#allocation2 + $0x88] sm:$0x80]
    %v10863 = vld [vmem:[#allocation2 + $0x90] sm:$0x80]
    %v10864 = vld [vmem:[#allocation2 + $0x98] sm:$0x80]
    %v10865 = vld [vmem:[#allocation2 + $0xa0] sm:$0xff]
    %v10866 = vld [vmem:[#allocation2 + $0xa8] sm:$0xff]
    %v10867 = vld [vmem:[#allocation2 + $0xb0] sm:$0xff]
    %v10868 = vld [vmem:[#allocation2 + $0xb8] sm:$0xff]
    %v10869 = vld [vmem:[#allocation2 + $0xc0] sm:$0x7f]
    %v10870 = vld [vmem:[#allocation2 + $0xc8] sm:$0x7f]
    %v10871 = vld [vmem:[#allocation2 + $0xd0] sm:$0x7f]
    %v10872 = vld [vmem:[#allocation2 + $0xd8] sm:$0x7f]
    %v10873 = vld [vmem:[#allocation2 + $0x20] sm:$0xfe]
    %v10874 = vld [vmem:[#allocation2 + $0x28] sm:$0xfe]
    %v10875 = vld [vmem:[#allocation2 + $0x30] sm:$0xfe]
    %v10876 = vld [vmem:[#allocation2 + $0x38] sm:$0xfe]
    %v10877 = vld [vmem:[#allocation2 + $0x40] sm:$0xff]
    %v10878 = vld [vmem:[#allocation2 + $0x48] sm:$0xff]
    %v10879 = vld [vmem:[#allocation2 + $0x50] sm:$0xff]
    %v10880 = vld [vmem:[#allocation2 + $0x58] sm:$0xff]
    %v10881 = vld [vmem:[#allocation2 + $0x60] sm:$0x1]
    %v10882 = vld [vmem:[#allocation2 + $0x68] sm:$0x1]
    %v10883 = vld [vmem:[#allocation2 + $0x70] sm:$0x1]
    %v10884 = vld [vmem:[#allocation2 + $0x78] sm:$0x1]
    %v10885 = vld [vmem:[#allocation2 + $0xa0] sm:$0xfe]
    %v10886 = vld [vmem:[#allocation2 + $0xa8] sm:$0xfe]
    %v10887 = vld [vmem:[#allocation2 + $0xb0] sm:$0xfe]
    %v10888 = vld [vmem:[#allocation2 + $0xb8] sm:$0xfe]
    %v10889 = vld [vmem:[#allocation2 + $0xc0] sm:$0xff]
    %v10890 = vld [vmem:[#allocation2 + $0xc8] sm:$0xff]
    %v10891 = vld [vmem:[#allocation2 + $0xd0] sm:$0xff]
    %v10892 = vld [vmem:[#allocation2 + $0xd8] sm:$0xff]
    %v10893 = vld [vmem:[#allocation2 + $0xe0] sm:$0x1]
    %v10894 = vld [vmem:[#allocation2 + $0xe8] sm:$0x1]
    %v10895 = vld [vmem:[#allocation2 + $0xf0] sm:$0x1]
    %v10896 = vld [vmem:[#allocation2 + $0xf8] sm:$0x1]
    %v10913 = vrot.slane %v10817, 1
    %v10914 = vrot.slane %v10818, 1
    %v10915 = vrot.slane %v10819, 1
    %v10916 = vrot.slane %v10820, 1
    %v10917 = vrot.slane %v10821, 1
    %v10918 = vsel %vm840, %v10913, %v10917
    %v10919 = vrot.slane %v10822, 1
    %v10920 = vsel %vm840, %v10914, %v10919
    %v10921 = vrot.slane %v10823, 1
    %v10922 = vsel %vm840, %v10915, %v10921
    %v10923 = vrot.slane %v10824, 1
    %v10924 = vsel %vm840, %v10916, %v10923
    %v10925 = vrot.slane %v10825, 1
    %v10926 = vrot.slane %v10826, 1
    %v10927 = vrot.slane %v10827, 1
    %v10928 = vrot.slane %v10828, 1
    %v10929 = vrot.slane %v10829, 1
    %v10930 = vsel %vm840, %v10925, %v10929
    %v10931 = vrot.slane %v10830, 1
    %v10932 = vsel %vm840, %v10926, %v10931
    %v10933 = vrot.slane %v10831, 1
    %v10934 = vsel %vm840, %v10927, %v10933
    %v10935 = vrot.slane %v10832, 1
    %v10936 = vsel %vm840, %v10928, %v10935
    %v10961 = vrot.slane %v10873, 2
    %v10962 = vrot.slane %v10874, 2
    %v10963 = vrot.slane %v10875, 2
    %v10964 = vrot.slane %v10876, 2
    %v10965 = vrot.slane %v10877, 2
    %v10966 = vsel %vm889, %v10961, %v10965
    %v10967 = vrot.slane %v10878, 2
    %v10968 = vsel %vm889, %v10962, %v10967
    %v10969 = vrot.slane %v10879, 2
    %v10970 = vsel %vm889, %v10963, %v10969
    %v10971 = vrot.slane %v10880, 2
    %v10972 = vsel %vm889, %v10964, %v10971
    %v10973 = vrot.slane %v10881, 2
    %v10974 = vsel %vm889, %v10965, %v10973
    %v10975 = vrot.slane %v10882, 2
    %v10976 = vsel %vm889, %v10967, %v10975
    %v10977 = vrot.slane %v10883, 2
    %v10978 = vsel %vm889, %v10969, %v10977
    %v10979 = vrot.slane %v10884, 2
    %v10980 = vsel %vm889, %v10971, %v10979
    %v10981 = vrot.slane %v10885, 2
    %v10982 = vrot.slane %v10886, 2
    %v10983 = vrot.slane %v10887, 2
    %v10984 = vrot.slane %v10888, 2
    %v10985 = vrot.slane %v10889, 2
    %v10986 = vsel %vm889, %v10981, %v10985
    %v10987 = vrot.slane %v10890, 2
    %v10988 = vsel %vm889, %v10982, %v10987
    %v10989 = vrot.slane %v10891, 2
    %v10990 = vsel %vm889, %v10983, %v10989
    %v10991 = vrot.slane %v10892, 2
    %v10992 = vsel %vm889, %v10984, %v10991
    %v10993 = vrot.slane %v10893, 2
    %v10994 = vsel %vm889, %v10985, %v10993
    %v10995 = vrot.slane %v10894, 2
    %v10996 = vsel %vm889, %v10987, %v10995
    %v10997 = vrot.slane %v10895, 2
    %v10998 = vsel %vm889, %v10989, %v10997
    %v10999 = vrot.slane %v10896, 2
    %v11000 = vsel %vm889, %v10991, %v10999
    %v11025 = vrot.slane %v10849, 7
    %v11026 = vrot.slane %v10853, 7
    %v11027 = vsel %vm954, %v11025, %v11026
    %v11028 = vrot.slane %v10850, 7
    %v11029 = vrot.slane %v10854, 7
    %v11030 = vsel %vm954, %v11028, %v11029
    %v11031 = vrot.slane %v10851, 7
    %v11032 = vrot.slane %v10855, 7
    %v11033 = vsel %vm954, %v11031, %v11032
    %v11034 = vrot.slane %v10852, 7
    %v11035 = vrot.slane %v10856, 7
    %v11036 = vsel %vm954, %v11034, %v11035
    %v11037 = vrot.slane %v10913, 7
    %v11038 = vrot.slane %v10918, 7
    %v11039 = vsel %vm954, %v11037, %v11038
    %v11040 = vrot.slane %v10914, 7
    %v11041 = vrot.slane %v10920, 7
    %v11042 = vsel %vm954, %v11040, %v11041
    %v11043 = vrot.slane %v10915, 7
    %v11044 = vrot.slane %v10922, 7
    %v11045 = vsel %vm954, %v11043, %v11044
    %v11046 = vrot.slane %v10916, 7
    %v11047 = vrot.slane %v10924, 7
    %v11048 = vsel %vm954, %v11046, %v11047
    %v11049 = vrot.slane %v10961, 7
    %v11050 = vrot.slane %v10966, 7
    %v11051 = vsel %vm954, %v11049, %v11050
    %v11052 = vrot.slane %v10962, 7
    %v11053 = vrot.slane %v10968, 7
    %v11054 = vsel %vm954, %v11052, %v11053
    %v11055 = vrot.slane %v10963, 7
    %v11056 = vrot.slane %v10970, 7
    %v11057 = vsel %vm954, %v11055, %v11056
    %v11058 = vrot.slane %v10964, 7
    %v11059 = vrot.slane %v10972, 7
    %v11060 = vsel %vm954, %v11058, %v11059
    %v11061 = vrot.slane %v10857, 7
    %v11062 = vsel %vm954, %v11026, %v11061
    %v11063 = vrot.slane %v10858, 7
    %v11064 = vsel %vm954, %v11029, %v11063
    %v11065 = vrot.slane %v10859, 7
    %v11066 = vsel %vm954, %v11032, %v11065
    %v11067 = vrot.slane %v10860, 7
    %v11068 = vsel %vm954, %v11035, %v11067
    %v11069 = vrot.slane %v10917, 7
    %v11070 = vsel %vm954, %v11038, %v11069
    %v11071 = vrot.slane %v10919, 7
    %v11072 = vsel %vm954, %v11041, %v11071
    %v11073 = vrot.slane %v10921, 7
    %v11074 = vsel %vm954, %v11044, %v11073
    %v11075 = vrot.slane %v10923, 7
    %v11076 = vsel %vm954, %v11047, %v11075
    %v11077 = vrot.slane %v10974, 7
    %v11078 = vsel %vm954, %v11050, %v11077
    %v11079 = vrot.slane %v10976, 7
    %v11080 = vsel %vm954, %v11053, %v11079
    %v11081 = vrot.slane %v10978, 7
    %v11082 = vsel %vm954, %v11056, %v11081
    %v11083 = vrot.slane %v10980, 7
    %v11084 = vsel %vm954, %v11059, %v11083
    %v11085 = vrot.slane %v10861, 7
    %v11086 = vrot.slane %v10865, 7
    %v11087 = vsel %vm954, %v11085, %v11086
    %v11088 = vrot.slane %v10862, 7
    %v11089 = vrot.slane %v10866, 7
    %v11090 = vsel %vm954, %v11088, %v11089
    %v11091 = vrot.slane %v10863, 7
    %v11092 = vrot.slane %v10867, 7
    %v11093 = vsel %vm954, %v11091, %v11092
    %v11094 = vrot.slane %v10864, 7
    %v11095 = vrot.slane %v10868, 7
    %v11096 = vsel %vm954, %v11094, %v11095
    %v11097 = vrot.slane %v10925, 7
    %v11098 = vrot.slane %v10930, 7
    %v11099 = vsel %vm954, %v11097, %v11098
    %v11100 = vrot.slane %v10926, 7
    %v11101 = vrot.slane %v10932, 7
    %v11102 = vsel %vm954, %v11100, %v11101
    %v11103 = vrot.slane %v10927, 7
    %v11104 = vrot.slane %v10934, 7
    %v11105 = vsel %vm954, %v11103, %v11104
    %v11106 = vrot.slane %v10928, 7
    %v11107 = vrot.slane %v10936, 7
    %v11108 = vsel %vm954, %v11106, %v11107
    %v11109 = vrot.slane %v10981, 7
    %v11110 = vrot.slane %v10986, 7
    %v11111 = vsel %vm954, %v11109, %v11110
    %v11112 = vrot.slane %v10982, 7
    %v11113 = vrot.slane %v10988, 7
    %v11114 = vsel %vm954, %v11112, %v11113
    %v11115 = vrot.slane %v10983, 7
    %v11116 = vrot.slane %v10990, 7
    %v11117 = vsel %vm954, %v11115, %v11116
    %v11118 = vrot.slane %v10984, 7
    %v11119 = vrot.slane %v10992, 7
    %v11120 = vsel %vm954, %v11118, %v11119
    %v11121 = vrot.slane %v10869, 7
    %v11122 = vsel %vm954, %v11086, %v11121
    %v11123 = vrot.slane %v10870, 7
    %v11124 = vsel %vm954, %v11089, %v11123
    %v11125 = vrot.slane %v10871, 7
    %v11126 = vsel %vm954, %v11092, %v11125
    %v11127 = vrot.slane %v10872, 7
    %v11128 = vsel %vm954, %v11095, %v11127
    %v11129 = vrot.slane %v10929, 7
    %v11130 = vsel %vm954, %v11098, %v11129
    %v11131 = vrot.slane %v10931, 7
    %v11132 = vsel %vm954, %v11101, %v11131
    %v11133 = vrot.slane %v10933, 7
    %v11134 = vsel %vm954, %v11104, %v11133
    %v11135 = vrot.slane %v10935, 7
    %v11136 = vsel %vm954, %v11107, %v11135
    %v11137 = vrot.slane %v10994, 7
    %v11138 = vsel %vm954, %v11110, %v11137
    %v11139 = vrot.slane %v10996, 7
    %v11140 = vsel %vm954, %v11113, %v11139
    %v11141 = vrot.slane %v10998, 7
    %v11142 = vsel %vm954, %v11116, %v11141
    %v11143 = vrot.slane %v11000, 7
    %v11144 = vsel %vm954, %v11119, %v11143
    %v11193 = vpack.c.bf16 %v11062, %v11027
    %v11194 = vpack.c.bf16 %v11064, %v11030
    %v11195 = vpack.c.bf16 %v11066, %v11033
    %v11196 = vpack.c.bf16 %v11068, %v11036
    %v11197 = vpack.c.bf16 %v11070, %v11039
    %v11198 = vpack.c.bf16 %v11072, %v11042
    %v11199 = vpack.c.bf16 %v11074, %v11045
    %v11200 = vpack.c.bf16 %v11076, %v11048
    %v11201 = vpack.c.bf16 %v11078, %v11051
    %v11202 = vpack.c.bf16 %v11080, %v11054
    %v11203 = vpack.c.bf16 %v11082, %v11057
    %v11204 = vpack.c.bf16 %v11084, %v11060
    %v11205 = vpack.c.bf16 %v11122, %v11087
    %v11206 = vpack.c.bf16 %v11124, %v11090
    %v11207 = vpack.c.bf16 %v11126, %v11093
    %v11208 = vpack.c.bf16 %v11128, %v11096
    %v11209 = vpack.c.bf16 %v11130, %v11099
    %v11210 = vpack.c.bf16 %v11132, %v11102
    %v11211 = vpack.c.bf16 %v11134, %v11105
    %v11212 = vpack.c.bf16 %v11136, %v11108
    %v11213 = vpack.c.bf16 %v11138, %v11111
    %v11214 = vpack.c.bf16 %v11140, %v11114
    %v11215 = vpack.c.bf16 %v11142, %v11117
    %v11216 = vpack.c.bf16 %v11144, %v11120
    %v11217 = vld [vmem:[#allocation8] sm:$0xff]
    %v11218 = vld [vmem:[#allocation8 + $0x8] sm:$0xff]
    %v11219 = vld [vmem:[#allocation8 + $0x10] sm:$0xff]
    %v11220 = vld [vmem:[#allocation8 + $0x18] sm:$0xff]
    %v11221 = vld [vmem:[#allocation8 + $0x20] sm:$0xff]
    %v11222 = vld [vmem:[#allocation8 + $0x28] sm:$0xff]
    %v11223 = vld [vmem:[#allocation8 + $0x30] sm:$0xff]
    %v11224 = vld [vmem:[#allocation8 + $0x38] sm:$0xff]
    %v11225 = vld [vmem:[#allocation8 + $0x40] sm:$0xff]
    %v11226 = vld [vmem:[#allocation8 + $0x48] sm:$0xff]
    %v11227 = vld [vmem:[#allocation8 + $0x50] sm:$0xff]
    %v11228 = vld [vmem:[#allocation8 + $0x58] sm:$0xff]
    %v11229 = vld [vmem:[#allocation8 + $0x60] sm:$0xff]
    %v11230 = vld [vmem:[#allocation8 + $0x68] sm:$0xff]
    %v11231 = vld [vmem:[#allocation8 + $0x70] sm:$0xff]
    %v11232 = vld [vmem:[#allocation8 + $0x78] sm:$0xff]
    %v11233 = vld [vmem:[#allocation8 + $0x80] sm:$0xff]
    %v11234 = vld [vmem:[#allocation8 + $0x88] sm:$0xff]
    %v11235 = vld [vmem:[#allocation8 + $0x90] sm:$0xff]
    %v11236 = vld [vmem:[#allocation8 + $0x98] sm:$0xff]
    %v11237 = vld [vmem:[#allocation8 + $0xa0] sm:$0xff]
    %v11238 = vld [vmem:[#allocation8 + $0xa8] sm:$0xff]
    %v11239 = vld [vmem:[#allocation8 + $0xb0] sm:$0xff]
    %v11240 = vld [vmem:[#allocation8 + $0xb8] sm:$0xff]
    %v11241 = vld [vmem:[#allocation8 + $0xc0] sm:$0xff]
    %v11242 = vld [vmem:[#allocation8 + $0xc8] sm:$0xff]
    %v11243 = vld [vmem:[#allocation8 + $0xd0] sm:$0xff]
    %v11244 = vld [vmem:[#allocation8 + $0xd8] sm:$0xff]
    %v11245 = vld [vmem:[#allocation8 + $0xe0] sm:$0xff]
    %v11246 = vld [vmem:[#allocation8 + $0xe8] sm:$0xff]
    %v11247 = vld [vmem:[#allocation8 + $0xf0] sm:$0xff]
    %v11248 = vld [vmem:[#allocation8 + $0xf8] sm:$0xff]
    %v11249 = vld [vmem:[#allocation8 + $0x100] sm:$0xff]
    %v11250 = vld [vmem:[#allocation8 + $0x108] sm:$0xff]
    %v11251 = vld [vmem:[#allocation8 + $0x110] sm:$0xff]
    %v11252 = vld [vmem:[#allocation8 + $0x118] sm:$0xff]
    %v11253 = vld [vmem:[#allocation8 + $0x120] sm:$0xff]
    %v11254 = vld [vmem:[#allocation8 + $0x128] sm:$0xff]
    %v11255 = vld [vmem:[#allocation8 + $0x130] sm:$0xff]
    %v11256 = vld [vmem:[#allocation8 + $0x138] sm:$0xff]
    %v11257 = vld [vmem:[#allocation8 + $0x140] sm:$0xff]
    %v11258 = vld [vmem:[#allocation8 + $0x148] sm:$0xff]
    %v11259 = vld [vmem:[#allocation8 + $0x150] sm:$0xff]
    %v11260 = vld [vmem:[#allocation8 + $0x158] sm:$0xff]
    %v11261 = vld [vmem:[#allocation8 + $0x160] sm:$0xff]
    %v11262 = vld [vmem:[#allocation8 + $0x168] sm:$0xff]
    %v11263 = vld [vmem:[#allocation8 + $0x170] sm:$0xff]
    %v11264 = vld [vmem:[#allocation8 + $0x178] sm:$0xff]
    %v11265 = vld [vmem:[#allocation8 + $0x180] sm:$0xff]
    %v11266 = vld [vmem:[#allocation8 + $0x188] sm:$0xff]
    %v11267 = vld [vmem:[#allocation8 + $0x190] sm:$0xff]
    %v11268 = vld [vmem:[#allocation8 + $0x198] sm:$0xff]
    %v11269 = vld [vmem:[#allocation8 + $0x1a0] sm:$0xff]
    %v11270 = vld [vmem:[#allocation8 + $0x1a8] sm:$0xff]
    %v11271 = vld [vmem:[#allocation8 + $0x1b0] sm:$0xff]
    %v11272 = vld [vmem:[#allocation8 + $0x1b8] sm:$0xff]
    %v11273 = vld [vmem:[#allocation8 + $0x1c0] sm:$0xff]
    %v11274 = vld [vmem:[#allocation8 + $0x1c8] sm:$0xff]
    %v11275 = vld [vmem:[#allocation8 + $0x1d0] sm:$0xff]
    %v11276 = vld [vmem:[#allocation8 + $0x1d8] sm:$0xff]
    %v11277 = vld [vmem:[#allocation8 + $0x1e0] sm:$0xff]
    %v11278 = vld [vmem:[#allocation8 + $0x1e8] sm:$0xff]
    %v11279 = vld [vmem:[#allocation8 + $0x1f0] sm:$0xff]
    %v11280 = vld [vmem:[#allocation8 + $0x1f8] sm:$0xff]
    %v11281 = vld [vmem:[#allocation8 + $0x200] sm:$0xff]
    %v11282 = vld [vmem:[#allocation8 + $0x208] sm:$0xff]
    %v11283 = vld [vmem:[#allocation8 + $0x210] sm:$0xff]
    %v11284 = vld [vmem:[#allocation8 + $0x218] sm:$0xff]
    %v11285 = vld [vmem:[#allocation8 + $0x220] sm:$0xff]
    %v11286 = vld [vmem:[#allocation8 + $0x228] sm:$0xff]
    %v11287 = vld [vmem:[#allocation8 + $0x230] sm:$0xff]
    %v11288 = vld [vmem:[#allocation8 + $0x238] sm:$0xff]
    %v11289 = vld [vmem:[#allocation8 + $0x240] sm:$0xff]
    %v11290 = vld [vmem:[#allocation8 + $0x248] sm:$0xff]
    %v11291 = vld [vmem:[#allocation8 + $0x250] sm:$0xff]
    %v11292 = vld [vmem:[#allocation8 + $0x258] sm:$0xff]
    %v11293 = vld [vmem:[#allocation8 + $0x260] sm:$0xff]
    %v11294 = vld [vmem:[#allocation8 + $0x268] sm:$0xff]
    %v11295 = vld [vmem:[#allocation8 + $0x270] sm:$0xff]
    %v11296 = vld [vmem:[#allocation8 + $0x278] sm:$0xff]
    %v11297 = vld [vmem:[#allocation8 + $0x280] sm:$0xff]
    %v11298 = vld [vmem:[#allocation8 + $0x288] sm:$0xff]
    %v11299 = vld [vmem:[#allocation8 + $0x290] sm:$0xff]
    %v11300 = vld [vmem:[#allocation8 + $0x298] sm:$0xff]
    %v11301 = vld [vmem:[#allocation8 + $0x2a0] sm:$0xff]
    %v11302 = vld [vmem:[#allocation8 + $0x2a8] sm:$0xff]
    %v11303 = vld [vmem:[#allocation8 + $0x2b0] sm:$0xff]
    %v11304 = vld [vmem:[#allocation8 + $0x2b8] sm:$0xff]
    %v11305 = vld [vmem:[#allocation8 + $0x2c0] sm:$0xff]
    %v11306 = vld [vmem:[#allocation8 + $0x2c8] sm:$0xff]
    %v11307 = vld [vmem:[#allocation8 + $0x2d0] sm:$0xff]
    %v11308 = vld [vmem:[#allocation8 + $0x2d8] sm:$0xff]
    %v11309 = vld [vmem:[#allocation8 + $0x2e0] sm:$0xff]
    %v11310 = vld [vmem:[#allocation8 + $0x2e8] sm:$0xff]
    %v11311 = vld [vmem:[#allocation8 + $0x2f0] sm:$0xff]
    %v11312 = vld [vmem:[#allocation8 + $0x2f8] sm:$0xff]
    %v11313 = vld [vmem:[#allocation8 + $0x300] sm:$0xff]
    %v11314 = vld [vmem:[#allocation8 + $0x308] sm:$0xff]
    %v11315 = vld [vmem:[#allocation8 + $0x310] sm:$0xff]
    %v11316 = vld [vmem:[#allocation8 + $0x318] sm:$0xff]
    %v11317 = vld [vmem:[#allocation8 + $0x320] sm:$0xff]
    %v11318 = vld [vmem:[#allocation8 + $0x328] sm:$0xff]
    %v11319 = vld [vmem:[#allocation8 + $0x330] sm:$0xff]
    %v11320 = vld [vmem:[#allocation8 + $0x338] sm:$0xff]
    %v11321 = vld [vmem:[#allocation8 + $0x340] sm:$0xff]
    %v11322 = vld [vmem:[#allocation8 + $0x348] sm:$0xff]
    %v11323 = vld [vmem:[#allocation8 + $0x350] sm:$0xff]
    %v11324 = vld [vmem:[#allocation8 + $0x358] sm:$0xff]
    %v11325 = vld [vmem:[#allocation8 + $0x360] sm:$0xff]
    %v11326 = vld [vmem:[#allocation8 + $0x368] sm:$0xff]
    %v11327 = vld [vmem:[#allocation8 + $0x370] sm:$0xff]
    %v11328 = vld [vmem:[#allocation8 + $0x378] sm:$0xff]
    %v11329 = vld [vmem:[#allocation8 + $0x380] sm:$0xff]
    %v11330 = vld [vmem:[#allocation8 + $0x388] sm:$0xff]
    %v11331 = vld [vmem:[#allocation8 + $0x390] sm:$0xff]
    %v11332 = vld [vmem:[#allocation8 + $0x398] sm:$0xff]
    %v11333 = vld [vmem:[#allocation8 + $0x3a0] sm:$0xff]
    %v11334 = vld [vmem:[#allocation8 + $0x3a8] sm:$0xff]
    %v11335 = vld [vmem:[#allocation8 + $0x3b0] sm:$0xff]
    %v11336 = vld [vmem:[#allocation8 + $0x3b8] sm:$0xff]
    %v11337 = vld [vmem:[#allocation8 + $0x3c0] sm:$0xff]
    %v11338 = vld [vmem:[#allocation8 + $0x3c8] sm:$0xff]
    %v11339 = vld [vmem:[#allocation8 + $0x3d0] sm:$0xff]
    %v11340 = vld [vmem:[#allocation8 + $0x3d8] sm:$0xff]
    %v11341 = vld [vmem:[#allocation8 + $0x3e0] sm:$0xff]
    %v11342 = vld [vmem:[#allocation8 + $0x3e8] sm:$0xff]
    %v11343 = vld [vmem:[#allocation8 + $0x3f0] sm:$0xff]
    %v11344 = vld [vmem:[#allocation8 + $0x3f8] sm:$0xff]
    %v11345 = vld [vmem:[#allocation8 + $0x400] sm:$0xff]
    %v11346 = vld [vmem:[#allocation8 + $0x408] sm:$0xff]
    %v11347 = vld [vmem:[#allocation8 + $0x410] sm:$0xff]
    %v11348 = vld [vmem:[#allocation8 + $0x418] sm:$0xff]
    %v11349 = vld [vmem:[#allocation8 + $0x420] sm:$0xff]
    %v11350 = vld [vmem:[#allocation8 + $0x428] sm:$0xff]
    %v11351 = vld [vmem:[#allocation8 + $0x430] sm:$0xff]
    %v11352 = vld [vmem:[#allocation8 + $0x438] sm:$0xff]
    %v11353 = vld [vmem:[#allocation8 + $0x440] sm:$0xff]
    %v11354 = vld [vmem:[#allocation8 + $0x448] sm:$0xff]
    %v11355 = vld [vmem:[#allocation8 + $0x450] sm:$0xff]
    %v11356 = vld [vmem:[#allocation8 + $0x458] sm:$0xff]
    %v11357 = vld [vmem:[#allocation8 + $0x460] sm:$0xff]
    %v11358 = vld [vmem:[#allocation8 + $0x468] sm:$0xff]
    %v11359 = vld [vmem:[#allocation8 + $0x470] sm:$0xff]
    %v11360 = vld [vmem:[#allocation8 + $0x478] sm:$0xff]
    %v11361 = vld [vmem:[#allocation8 + $0x480] sm:$0xff]
    %v11362 = vld [vmem:[#allocation8 + $0x488] sm:$0xff]
    %v11363 = vld [vmem:[#allocation8 + $0x490] sm:$0xff]
    %v11364 = vld [vmem:[#allocation8 + $0x498] sm:$0xff]
    %v11365 = vld [vmem:[#allocation8 + $0x4a0] sm:$0xff]
    %v11366 = vld [vmem:[#allocation8 + $0x4a8] sm:$0xff]
    %v11367 = vld [vmem:[#allocation8 + $0x4b0] sm:$0xff]
    %v11368 = vld [vmem:[#allocation8 + $0x4b8] sm:$0xff]
    %v11369 = vld [vmem:[#allocation8 + $0x4c0] sm:$0xff]
    %v11370 = vld [vmem:[#allocation8 + $0x4c8] sm:$0xff]
    %v11371 = vld [vmem:[#allocation8 + $0x4d0] sm:$0xff]
    %v11372 = vld [vmem:[#allocation8 + $0x4d8] sm:$0xff]
    %v11373 = vld [vmem:[#allocation8 + $0x4e0] sm:$0xff]
    %v11374 = vld [vmem:[#allocation8 + $0x4e8] sm:$0xff]
    %v11375 = vld [vmem:[#allocation8 + $0x4f0] sm:$0xff]
    %v11376 = vld [vmem:[#allocation8 + $0x4f8] sm:$0xff]
    %v11377 = vld [vmem:[#allocation8 + $0x500] sm:$0xff]
    %v11378 = vld [vmem:[#allocation8 + $0x508] sm:$0xff]
    %v11379 = vld [vmem:[#allocation8 + $0x510] sm:$0xff]
    %v11380 = vld [vmem:[#allocation8 + $0x518] sm:$0xff]
    %v11381 = vld [vmem:[#allocation8 + $0x520] sm:$0xff]
    %v11382 = vld [vmem:[#allocation8 + $0x528] sm:$0xff]
    %v11383 = vld [vmem:[#allocation8 + $0x530] sm:$0xff]
    %v11384 = vld [vmem:[#allocation8 + $0x538] sm:$0xff]
    %v11385 = vld [vmem:[#allocation8 + $0x540] sm:$0xff]
    %v11386 = vld [vmem:[#allocation8 + $0x548] sm:$0xff]
    %v11387 = vld [vmem:[#allocation8 + $0x550] sm:$0xff]
    %v11388 = vld [vmem:[#allocation8 + $0x558] sm:$0xff]
    %v11389 = vld [vmem:[#allocation8 + $0x560] sm:$0xff]
    %v11390 = vld [vmem:[#allocation8 + $0x568] sm:$0xff]
    %v11391 = vld [vmem:[#allocation8 + $0x570] sm:$0xff]
    %v11392 = vld [vmem:[#allocation8 + $0x578] sm:$0xff]
    %v11393 = vld [vmem:[#allocation8 + $0x580] sm:$0xff]
    %v11394 = vld [vmem:[#allocation8 + $0x588] sm:$0xff]
    %v11395 = vld [vmem:[#allocation8 + $0x590] sm:$0xff]
    %v11396 = vld [vmem:[#allocation8 + $0x598] sm:$0xff]
    %v11397 = vld [vmem:[#allocation8 + $0x5a0] sm:$0xff]
    %v11398 = vld [vmem:[#allocation8 + $0x5a8] sm:$0xff]
    %v11399 = vld [vmem:[#allocation8 + $0x5b0] sm:$0xff]
    %v11400 = vld [vmem:[#allocation8 + $0x5b8] sm:$0xff]
    %v11401 = vld [vmem:[#allocation8 + $0x5c0] sm:$0xff]
    %v11402 = vld [vmem:[#allocation8 + $0x5c8] sm:$0xff]
    %v11403 = vld [vmem:[#allocation8 + $0x5d0] sm:$0xff]
    %v11404 = vld [vmem:[#allocation8 + $0x5d8] sm:$0xff]
    %v11405 = vld [vmem:[#allocation8 + $0x5e0] sm:$0xff]
    %v11406 = vld [vmem:[#allocation8 + $0x5e8] sm:$0xff]
    %v11407 = vld [vmem:[#allocation8 + $0x5f0] sm:$0xff]
    %v11408 = vld [vmem:[#allocation8 + $0x5f8] sm:$0xff]
    %v11409 = vld [vmem:[#allocation8 + $0x600] sm:$0xff]
    %v11410 = vld [vmem:[#allocation8 + $0x608] sm:$0xff]
    %v11411 = vld [vmem:[#allocation8 + $0x610] sm:$0xff]
    %v11412 = vld [vmem:[#allocation8 + $0x618] sm:$0xff]
    %v11413 = vld [vmem:[#allocation8 + $0x620] sm:$0xff]
    %v11414 = vld [vmem:[#allocation8 + $0x628] sm:$0xff]
    %v11415 = vld [vmem:[#allocation8 + $0x630] sm:$0xff]
    %v11416 = vld [vmem:[#allocation8 + $0x638] sm:$0xff]
    %v11417 = vld [vmem:[#allocation8 + $0x640] sm:$0xff]
    %v11418 = vld [vmem:[#allocation8 + $0x648] sm:$0xff]
    %v11419 = vld [vmem:[#allocation8 + $0x650] sm:$0xff]
    %v11420 = vld [vmem:[#allocation8 + $0x658] sm:$0xff]
    %v11421 = vld [vmem:[#allocation8 + $0x660] sm:$0xff]
    %v11422 = vld [vmem:[#allocation8 + $0x668] sm:$0xff]
    %v11423 = vld [vmem:[#allocation8 + $0x670] sm:$0xff]
    %v11424 = vld [vmem:[#allocation8 + $0x678] sm:$0xff]
    %v11425 = vld [vmem:[#allocation8 + $0x680] sm:$0xff]
    %v11426 = vld [vmem:[#allocation8 + $0x688] sm:$0xff]
    %v11427 = vld [vmem:[#allocation8 + $0x690] sm:$0xff]
    %v11428 = vld [vmem:[#allocation8 + $0x698] sm:$0xff]
    %v11429 = vld [vmem:[#allocation8 + $0x6a0] sm:$0xff]
    %v11430 = vld [vmem:[#allocation8 + $0x6a8] sm:$0xff]
    %v11431 = vld [vmem:[#allocation8 + $0x6b0] sm:$0xff]
    %v11432 = vld [vmem:[#allocation8 + $0x6b8] sm:$0xff]
    %v11433 = vld [vmem:[#allocation8 + $0x6c0] sm:$0xff]
    %v11434 = vld [vmem:[#allocation8 + $0x6c8] sm:$0xff]
    %v11435 = vld [vmem:[#allocation8 + $0x6d0] sm:$0xff]
    %v11436 = vld [vmem:[#allocation8 + $0x6d8] sm:$0xff]
    %v11437 = vld [vmem:[#allocation8 + $0x6e0] sm:$0xff]
    %v11438 = vld [vmem:[#allocation8 + $0x6e8] sm:$0xff]
    %v11439 = vld [vmem:[#allocation8 + $0x6f0] sm:$0xff]
    %v11440 = vld [vmem:[#allocation8 + $0x6f8] sm:$0xff]
    %v11441 = vld [vmem:[#allocation8 + $0x700] sm:$0xff]
    %v11442 = vld [vmem:[#allocation8 + $0x708] sm:$0xff]
    %v11443 = vld [vmem:[#allocation8 + $0x710] sm:$0xff]
    %v11444 = vld [vmem:[#allocation8 + $0x718] sm:$0xff]
    %v11445 = vld [vmem:[#allocation8 + $0x720] sm:$0xff]
    %v11446 = vld [vmem:[#allocation8 + $0x728] sm:$0xff]
    %v11447 = vld [vmem:[#allocation8 + $0x730] sm:$0xff]
    %v11448 = vld [vmem:[#allocation8 + $0x738] sm:$0xff]
    %v11449 = vld [vmem:[#allocation8 + $0x740] sm:$0xff]
    %v11450 = vld [vmem:[#allocation8 + $0x748] sm:$0xff]
    %v11451 = vld [vmem:[#allocation8 + $0x750] sm:$0xff]
    %v11452 = vld [vmem:[#allocation8 + $0x758] sm:$0xff]
    %v11453 = vld [vmem:[#allocation8 + $0x760] sm:$0xff]
    %v11454 = vld [vmem:[#allocation8 + $0x768] sm:$0xff]
    %v11455 = vld [vmem:[#allocation8 + $0x770] sm:$0xff]
    %v11456 = vld [vmem:[#allocation8 + $0x778] sm:$0xff]
    %v11457 = vld [vmem:[#allocation8 + $0x780] sm:$0xff]
    %v11458 = vld [vmem:[#allocation8 + $0x788] sm:$0xff]
    %v11459 = vld [vmem:[#allocation8 + $0x790] sm:$0xff]
    %v11460 = vld [vmem:[#allocation8 + $0x798] sm:$0xff]
    %v11461 = vld [vmem:[#allocation8 + $0x7a0] sm:$0xff]
    %v11462 = vld [vmem:[#allocation8 + $0x7a8] sm:$0xff]
    %v11463 = vld [vmem:[#allocation8 + $0x7b0] sm:$0xff]
    %v11464 = vld [vmem:[#allocation8 + $0x7b8] sm:$0xff]
    %v11465 = vld [vmem:[#allocation8 + $0x7c0] sm:$0xff]
    %v11466 = vld [vmem:[#allocation8 + $0x7c8] sm:$0xff]
    %v11467 = vld [vmem:[#allocation8 + $0x7d0] sm:$0xff]
    %v11468 = vld [vmem:[#allocation8 + $0x7d8] sm:$0xff]
    %v11469 = vld [vmem:[#allocation8 + $0x7e0] sm:$0xff]
    %v11470 = vld [vmem:[#allocation8 + $0x7e8] sm:$0xff]
    %v11471 = vld [vmem:[#allocation8 + $0x7f0] sm:$0xff]
    %v11472 = vld [vmem:[#allocation8 + $0x7f8] sm:$0xff]
    %v11473 = vld [vmem:[#allocation8 + $0x800] sm:$0xff]
    %v11474 = vld [vmem:[#allocation8 + $0x808] sm:$0xff]
    %v11475 = vld [vmem:[#allocation8 + $0x810] sm:$0xff]
    %v11476 = vld [vmem:[#allocation8 + $0x818] sm:$0xff]
    %v11477 = vld [vmem:[#allocation8 + $0x820] sm:$0xff]
    %v11478 = vld [vmem:[#allocation8 + $0x828] sm:$0xff]
    %v11479 = vld [vmem:[#allocation8 + $0x830] sm:$0xff]
    %v11480 = vld [vmem:[#allocation8 + $0x838] sm:$0xff]
    %v11481 = vld [vmem:[#allocation8 + $0x840] sm:$0xff]
    %v11482 = vld [vmem:[#allocation8 + $0x848] sm:$0xff]
    %v11483 = vld [vmem:[#allocation8 + $0x850] sm:$0xff]
    %v11484 = vld [vmem:[#allocation8 + $0x858] sm:$0xff]
    %v11485 = vld [vmem:[#allocation8 + $0x860] sm:$0xff]
    %v11486 = vld [vmem:[#allocation8 + $0x868] sm:$0xff]
    %v11487 = vld [vmem:[#allocation8 + $0x870] sm:$0xff]
    %v11488 = vld [vmem:[#allocation8 + $0x878] sm:$0xff]
    %v11489 = vld [vmem:[#allocation8 + $0x880] sm:$0xff]
    %v11490 = vld [vmem:[#allocation8 + $0x888] sm:$0xff]
    %v11491 = vld [vmem:[#allocation8 + $0x890] sm:$0xff]
    %v11492 = vld [vmem:[#allocation8 + $0x898] sm:$0xff]
    %v11493 = vld [vmem:[#allocation8 + $0x8a0] sm:$0xff]
    %v11494 = vld [vmem:[#allocation8 + $0x8a8] sm:$0xff]
    %v11495 = vld [vmem:[#allocation8 + $0x8b0] sm:$0xff]
    %v11496 = vld [vmem:[#allocation8 + $0x8b8] sm:$0xff]
    %v11497 = vld [vmem:[#allocation8 + $0x8c0] sm:$0xff]
    %v11498 = vld [vmem:[#allocation8 + $0x8c8] sm:$0xff]
    %v11499 = vld [vmem:[#allocation8 + $0x8d0] sm:$0xff]
    %v11500 = vld [vmem:[#allocation8 + $0x8d8] sm:$0xff]
    %v11501 = vld [vmem:[#allocation8 + $0x8e0] sm:$0xff]
    %v11502 = vld [vmem:[#allocation8 + $0x8e8] sm:$0xff]
    %v11503 = vld [vmem:[#allocation8 + $0x8f0] sm:$0xff]
    %v11504 = vld [vmem:[#allocation8 + $0x8f8] sm:$0xff]
    %v11505 = vld [vmem:[#allocation8 + $0x900] sm:$0xff]
    %v11506 = vld [vmem:[#allocation8 + $0x908] sm:$0xff]
    %v11507 = vld [vmem:[#allocation8 + $0x910] sm:$0xff]
    %v11508 = vld [vmem:[#allocation8 + $0x918] sm:$0xff]
    %v11509 = vld [vmem:[#allocation8 + $0x920] sm:$0xff]
    %v11510 = vld [vmem:[#allocation8 + $0x928] sm:$0xff]
    %v11511 = vld [vmem:[#allocation8 + $0x930] sm:$0xff]
    %v11512 = vld [vmem:[#allocation8 + $0x938] sm:$0xff]
    %v11513 = vld [vmem:[#allocation8 + $0x940] sm:$0xff]
    %v11514 = vld [vmem:[#allocation8 + $0x948] sm:$0xff]
    %v11515 = vld [vmem:[#allocation8 + $0x950] sm:$0xff]
    %v11516 = vld [vmem:[#allocation8 + $0x958] sm:$0xff]
    %v11517 = vld [vmem:[#allocation8 + $0x960] sm:$0xff]
    %v11518 = vld [vmem:[#allocation8 + $0x968] sm:$0xff]
    %v11519 = vld [vmem:[#allocation8 + $0x970] sm:$0xff]
    %v11520 = vld [vmem:[#allocation8 + $0x978] sm:$0xff]
    %v11521 = vld [vmem:[#allocation8 + $0x980] sm:$0xff]
    %v11522 = vld [vmem:[#allocation8 + $0x988] sm:$0xff]
    %v11523 = vld [vmem:[#allocation8 + $0x990] sm:$0xff]
    %v11524 = vld [vmem:[#allocation8 + $0x998] sm:$0xff]
    %v11525 = vld [vmem:[#allocation8 + $0x9a0] sm:$0xff]
    %v11526 = vld [vmem:[#allocation8 + $0x9a8] sm:$0xff]
    %v11527 = vld [vmem:[#allocation8 + $0x9b0] sm:$0xff]
    %v11528 = vld [vmem:[#allocation8 + $0x9b8] sm:$0xff]
    %v11529 = vld [vmem:[#allocation8 + $0x9c0] sm:$0xff]
    %v11530 = vld [vmem:[#allocation8 + $0x9c8] sm:$0xff]
    %v11531 = vld [vmem:[#allocation8 + $0x9d0] sm:$0xff]
    %v11532 = vld [vmem:[#allocation8 + $0x9d8] sm:$0xff]
    %v11533 = vld [vmem:[#allocation8 + $0x9e0] sm:$0xff]
    %v11534 = vld [vmem:[#allocation8 + $0x9e8] sm:$0xff]
    %v11535 = vld [vmem:[#allocation8 + $0x9f0] sm:$0xff]
    %v11536 = vld [vmem:[#allocation8 + $0x9f8] sm:$0xff]
    %v11537 = vld [vmem:[#allocation8 + $0xa00] sm:$0xff]
    %v11538 = vld [vmem:[#allocation8 + $0xa08] sm:$0xff]
    %v11539 = vld [vmem:[#allocation8 + $0xa10] sm:$0xff]
    %v11540 = vld [vmem:[#allocation8 + $0xa18] sm:$0xff]
    %v11541 = vld [vmem:[#allocation8 + $0xa20] sm:$0xff]
    %v11542 = vld [vmem:[#allocation8 + $0xa28] sm:$0xff]
    %v11543 = vld [vmem:[#allocation8 + $0xa30] sm:$0xff]
    %v11544 = vld [vmem:[#allocation8 + $0xa38] sm:$0xff]
    %v11545 = vld [vmem:[#allocation8 + $0xa40] sm:$0xff]
    %v11546 = vld [vmem:[#allocation8 + $0xa48] sm:$0xff]
    %v11547 = vld [vmem:[#allocation8 + $0xa50] sm:$0xff]
    %v11548 = vld [vmem:[#allocation8 + $0xa58] sm:$0xff]
    %v11549 = vld [vmem:[#allocation8 + $0xa60] sm:$0xff]
    %v11550 = vld [vmem:[#allocation8 + $0xa68] sm:$0xff]
    %v11551 = vld [vmem:[#allocation8 + $0xa70] sm:$0xff]
    %v11552 = vld [vmem:[#allocation8 + $0xa78] sm:$0xff]
    %v11553 = vld [vmem:[#allocation8 + $0xa80] sm:$0xff]
    %v11554 = vld [vmem:[#allocation8 + $0xa88] sm:$0xff]
    %v11555 = vld [vmem:[#allocation8 + $0xa90] sm:$0xff]
    %v11556 = vld [vmem:[#allocation8 + $0xa98] sm:$0xff]
    %v11557 = vld [vmem:[#allocation8 + $0xaa0] sm:$0xff]
    %v11558 = vld [vmem:[#allocation8 + $0xaa8] sm:$0xff]
    %v11559 = vld [vmem:[#allocation8 + $0xab0] sm:$0xff]
    %v11560 = vld [vmem:[#allocation8 + $0xab8] sm:$0xff]
    %v11561 = vld [vmem:[#allocation8 + $0xac0] sm:$0xff]
    %v11562 = vld [vmem:[#allocation8 + $0xac8] sm:$0xff]
    %v11563 = vld [vmem:[#allocation8 + $0xad0] sm:$0xff]
    %v11564 = vld [vmem:[#allocation8 + $0xad8] sm:$0xff]
    %v11565 = vld [vmem:[#allocation8 + $0xae0] sm:$0xff]
    %v11566 = vld [vmem:[#allocation8 + $0xae8] sm:$0xff]
    %v11567 = vld [vmem:[#allocation8 + $0xaf0] sm:$0xff]
    %v11568 = vld [vmem:[#allocation8 + $0xaf8] sm:$0xff]
    %v11569 = vld [vmem:[#allocation8 + $0xb00] sm:$0xff]
    %v11570 = vld [vmem:[#allocation8 + $0xb08] sm:$0xff]
    %v11571 = vld [vmem:[#allocation8 + $0xb10] sm:$0xff]
    %v11572 = vld [vmem:[#allocation8 + $0xb18] sm:$0xff]
    %v11573 = vld [vmem:[#allocation8 + $0xb20] sm:$0xff]
    %v11574 = vld [vmem:[#allocation8 + $0xb28] sm:$0xff]
    %v11575 = vld [vmem:[#allocation8 + $0xb30] sm:$0xff]
    %v11576 = vld [vmem:[#allocation8 + $0xb38] sm:$0xff]
    %v11577 = vld [vmem:[#allocation8 + $0xb40] sm:$0xff]
    %v11578 = vld [vmem:[#allocation8 + $0xb48] sm:$0xff]
    %v11579 = vld [vmem:[#allocation8 + $0xb50] sm:$0xff]
    %v11580 = vld [vmem:[#allocation8 + $0xb58] sm:$0xff]
    %v11581 = vld [vmem:[#allocation8 + $0xb60] sm:$0xff]
    %v11582 = vld [vmem:[#allocation8 + $0xb68] sm:$0xff]
    %v11583 = vld [vmem:[#allocation8 + $0xb70] sm:$0xff]
    %v11584 = vld [vmem:[#allocation8 + $0xb78] sm:$0xff]
    %v11585 = vld [vmem:[#allocation8 + $0xb80] sm:$0xff]
    %v11586 = vld [vmem:[#allocation8 + $0xb88] sm:$0xff]
    %v11587 = vld [vmem:[#allocation8 + $0xb90] sm:$0xff]
    %v11588 = vld [vmem:[#allocation8 + $0xb98] sm:$0xff]
    %v11589 = vld [vmem:[#allocation8 + $0xba0] sm:$0xff]
    %v11590 = vld [vmem:[#allocation8 + $0xba8] sm:$0xff]
    %v11591 = vld [vmem:[#allocation8 + $0xbb0] sm:$0xff]
    %v11592 = vld [vmem:[#allocation8 + $0xbb8] sm:$0xff]
    %v11593 = vld [vmem:[#allocation8 + $0xbc0] sm:$0xff]
    %v11594 = vld [vmem:[#allocation8 + $0xbc8] sm:$0xff]
    %v11595 = vld [vmem:[#allocation8 + $0xbd0] sm:$0xff]
    %v11596 = vld [vmem:[#allocation8 + $0xbd8] sm:$0xff]
    %v11597 = vld [vmem:[#allocation8 + $0xbe0] sm:$0xff]
    %v11598 = vld [vmem:[#allocation8 + $0xbe8] sm:$0xff]
    %v11599 = vld [vmem:[#allocation8 + $0xbf0] sm:$0xff]
    %v11600 = vld [vmem:[#allocation8 + $0xbf8] sm:$0xff]
    %v11601 = vld [vmem:[%s10] sm:$0xf]
    %v11603 = vlaneseq
    %v11604 = vshrl.u32 %v11603, 7
    %v11605 = vsub.s32 0, %v11604
    %v11606 = vrot.slane %v11601, %v11605
    %v11607 = vlaneseq
    %v11608 = vshrl.u32 %v11607, 7
    %v11609 = vsub.s32 1, %v11608
    %v11610 = vrot.slane %v11601, %v11609
    %v11611 = vlaneseq
    %v11612 = vshrl.u32 %v11611, 7
    %v11613 = vsub.s32 2, %v11612
    %v11614 = vrot.slane %v11601, %v11613
    %v11615 = vlaneseq
    %v11616 = vshrl.u32 %v11615, 7
    %v11617 = vsub.s32 3, %v11616
    %v11618 = vrot.slane %v11601, %v11617
    %v12007 = vunpack.c.l.b16 %v11217
    %v12008 = vunpack.c.h.b16 %v11217
    %v12009 = vunpack.c.l.b16 %v11218
    %v12010 = vunpack.c.h.b16 %v11218
    %v12011 = vunpack.c.l.b16 %v11219
    %v12012 = vunpack.c.h.b16 %v11219
    %v12013 = vunpack.c.l.b16 %v11220
    %v12014 = vunpack.c.h.b16 %v11220
    %v12015 = vunpack.c.l.b16 %v11221
    %v12016 = vunpack.c.h.b16 %v11221
    %v12017 = vunpack.c.l.b16 %v11222
    %v12018 = vunpack.c.h.b16 %v11222
    %v12019 = vunpack.c.l.b16 %v11223
    %v12020 = vunpack.c.h.b16 %v11223
    %v12021 = vunpack.c.l.b16 %v11224
    %v12022 = vunpack.c.h.b16 %v11224
    %v12023 = vunpack.c.l.b16 %v11225
    %v12024 = vunpack.c.h.b16 %v11225
    %v12025 = vunpack.c.l.b16 %v11226
    %v12026 = vunpack.c.h.b16 %v11226
    %v12027 = vunpack.c.l.b16 %v11227
    %v12028 = vunpack.c.h.b16 %v11227
    %v12029 = vunpack.c.l.b16 %v11228
    %v12030 = vunpack.c.h.b16 %v11228
    %v12031 = vunpack.c.l.b16 %v11229
    %v12032 = vunpack.c.h.b16 %v11229
    %v12033 = vunpack.c.l.b16 %v11230
    %v12034 = vunpack.c.h.b16 %v11230
    %v12035 = vunpack.c.l.b16 %v11231
    %v12036 = vunpack.c.h.b16 %v11231
    %v12037 = vunpack.c.l.b16 %v11232
    %v12038 = vunpack.c.h.b16 %v11232
    %v12039 = vunpack.c.l.b16 %v11233
    %v12040 = vunpack.c.h.b16 %v11233
    %v12041 = vunpack.c.l.b16 %v11234
    %v12042 = vunpack.c.h.b16 %v11234
    %v12043 = vunpack.c.l.b16 %v11235
    %v12044 = vunpack.c.h.b16 %v11235
    %v12045 = vunpack.c.l.b16 %v11236
    %v12046 = vunpack.c.h.b16 %v11236
    %v12047 = vunpack.c.l.b16 %v11237
    %v12048 = vunpack.c.h.b16 %v11237
    %v12049 = vunpack.c.l.b16 %v11238
    %v12050 = vunpack.c.h.b16 %v11238
    %v12051 = vunpack.c.l.b16 %v11239
    %v12052 = vunpack.c.h.b16 %v11239
    %v12053 = vunpack.c.l.b16 %v11240
    %v12054 = vunpack.c.h.b16 %v11240
    %v12055 = vunpack.c.l.b16 %v11241
    %v12056 = vunpack.c.h.b16 %v11241
    %v12057 = vunpack.c.l.b16 %v11242
    %v12058 = vunpack.c.h.b16 %v11242
    %v12059 = vunpack.c.l.b16 %v11243
    %v12060 = vunpack.c.h.b16 %v11243
    %v12061 = vunpack.c.l.b16 %v11244
    %v12062 = vunpack.c.h.b16 %v11244
    %v12063 = vunpack.c.l.b16 %v11245
    %v12064 = vunpack.c.h.b16 %v11245
    %v12065 = vunpack.c.l.b16 %v11246
    %v12066 = vunpack.c.h.b16 %v11246
    %v12067 = vunpack.c.l.b16 %v11247
    %v12068 = vunpack.c.h.b16 %v11247
    %v12069 = vunpack.c.l.b16 %v11248
    %v12070 = vunpack.c.h.b16 %v11248
    %v12071 = vunpack.c.l.b16 %v11249
    %v12072 = vunpack.c.h.b16 %v11249
    %v12073 = vunpack.c.l.b16 %v11250
    %v12074 = vunpack.c.h.b16 %v11250
    %v12075 = vunpack.c.l.b16 %v11251
    %v12076 = vunpack.c.h.b16 %v11251
    %v12077 = vunpack.c.l.b16 %v11252
    %v12078 = vunpack.c.h.b16 %v11252
    %v12079 = vunpack.c.l.b16 %v11253
    %v12080 = vunpack.c.h.b16 %v11253
    %v12081 = vunpack.c.l.b16 %v11254
    %v12082 = vunpack.c.h.b16 %v11254
    %v12083 = vunpack.c.l.b16 %v11255
    %v12084 = vunpack.c.h.b16 %v11255
    %v12085 = vunpack.c.l.b16 %v11256
    %v12086 = vunpack.c.h.b16 %v11256
    %v12087 = vunpack.c.l.b16 %v11257
    %v12088 = vunpack.c.h.b16 %v11257
    %v12089 = vunpack.c.l.b16 %v11258
    %v12090 = vunpack.c.h.b16 %v11258
    %v12091 = vunpack.c.l.b16 %v11259
    %v12092 = vunpack.c.h.b16 %v11259
    %v12093 = vunpack.c.l.b16 %v11260
    %v12094 = vunpack.c.h.b16 %v11260
    %v12095 = vunpack.c.l.b16 %v11261
    %v12096 = vunpack.c.h.b16 %v11261
    %v12097 = vunpack.c.l.b16 %v11262
    %v12098 = vunpack.c.h.b16 %v11262
    %v12099 = vunpack.c.l.b16 %v11263
    %v12100 = vunpack.c.h.b16 %v11263
    %v12101 = vunpack.c.l.b16 %v11264
    %v12102 = vunpack.c.h.b16 %v11264
    %v12103 = vunpack.c.l.b16 %v11265
    %v12104 = vunpack.c.h.b16 %v11265
    %v12105 = vunpack.c.l.b16 %v11266
    %v12106 = vunpack.c.h.b16 %v11266
    %v12107 = vunpack.c.l.b16 %v11267
    %v12108 = vunpack.c.h.b16 %v11267
    %v12109 = vunpack.c.l.b16 %v11268
    %v12110 = vunpack.c.h.b16 %v11268
    %v12111 = vunpack.c.l.b16 %v11269
    %v12112 = vunpack.c.h.b16 %v11269
    %v12113 = vunpack.c.l.b16 %v11270
    %v12114 = vunpack.c.h.b16 %v11270
    %v12115 = vunpack.c.l.b16 %v11271
    %v12116 = vunpack.c.h.b16 %v11271
    %v12117 = vunpack.c.l.b16 %v11272
    %v12118 = vunpack.c.h.b16 %v11272
    %v12119 = vunpack.c.l.b16 %v11273
    %v12120 = vunpack.c.h.b16 %v11273
    %v12121 = vunpack.c.l.b16 %v11274
    %v12122 = vunpack.c.h.b16 %v11274
    %v12123 = vunpack.c.l.b16 %v11275
    %v12124 = vunpack.c.h.b16 %v11275
    %v12125 = vunpack.c.l.b16 %v11276
    %v12126 = vunpack.c.h.b16 %v11276
    %v12127 = vunpack.c.l.b16 %v11277
    %v12128 = vunpack.c.h.b16 %v11277
    %v12129 = vunpack.c.l.b16 %v11278
    %v12130 = vunpack.c.h.b16 %v11278
    %v12131 = vunpack.c.l.b16 %v11279
    %v12132 = vunpack.c.h.b16 %v11279
    %v12133 = vunpack.c.l.b16 %v11280
    %v12134 = vunpack.c.h.b16 %v11280
    %v12135 = vunpack.c.l.b16 %v11281
    %v12136 = vunpack.c.h.b16 %v11281
    %v12137 = vunpack.c.l.b16 %v11282
    %v12138 = vunpack.c.h.b16 %v11282
    %v12139 = vunpack.c.l.b16 %v11283
    %v12140 = vunpack.c.h.b16 %v11283
    %v12141 = vunpack.c.l.b16 %v11284
    %v12142 = vunpack.c.h.b16 %v11284
    %v12143 = vunpack.c.l.b16 %v11285
    %v12144 = vunpack.c.h.b16 %v11285
    %v12145 = vunpack.c.l.b16 %v11286
    %v12146 = vunpack.c.h.b16 %v11286
    %v12147 = vunpack.c.l.b16 %v11287
    %v12148 = vunpack.c.h.b16 %v11287
    %v12149 = vunpack.c.l.b16 %v11288
    %v12150 = vunpack.c.h.b16 %v11288
    %v12151 = vunpack.c.l.b16 %v11289
    %v12152 = vunpack.c.h.b16 %v11289
    %v12153 = vunpack.c.l.b16 %v11290
    %v12154 = vunpack.c.h.b16 %v11290
    %v12155 = vunpack.c.l.b16 %v11291
    %v12156 = vunpack.c.h.b16 %v11291
    %v12157 = vunpack.c.l.b16 %v11292
    %v12158 = vunpack.c.h.b16 %v11292
    %v12159 = vunpack.c.l.b16 %v11293
    %v12160 = vunpack.c.h.b16 %v11293
    %v12161 = vunpack.c.l.b16 %v11294
    %v12162 = vunpack.c.h.b16 %v11294
    %v12163 = vunpack.c.l.b16 %v11295
    %v12164 = vunpack.c.h.b16 %v11295
    %v12165 = vunpack.c.l.b16 %v11296
    %v12166 = vunpack.c.h.b16 %v11296
    %v12167 = vunpack.c.l.b16 %v11297
    %v12168 = vunpack.c.h.b16 %v11297
    %v12169 = vunpack.c.l.b16 %v11298
    %v12170 = vunpack.c.h.b16 %v11298
    %v12171 = vunpack.c.l.b16 %v11299
    %v12172 = vunpack.c.h.b16 %v11299
    %v12173 = vunpack.c.l.b16 %v11300
    %v12174 = vunpack.c.h.b16 %v11300
    %v12175 = vunpack.c.l.b16 %v11301
    %v12176 = vunpack.c.h.b16 %v11301
    %v12177 = vunpack.c.l.b16 %v11302
    %v12178 = vunpack.c.h.b16 %v11302
    %v12179 = vunpack.c.l.b16 %v11303
    %v12180 = vunpack.c.h.b16 %v11303
    %v12181 = vunpack.c.l.b16 %v11304
    %v12182 = vunpack.c.h.b16 %v11304
    %v12183 = vunpack.c.l.b16 %v11305
    %v12184 = vunpack.c.h.b16 %v11305
    %v12185 = vunpack.c.l.b16 %v11306
    %v12186 = vunpack.c.h.b16 %v11306
    %v12187 = vunpack.c.l.b16 %v11307
    %v12188 = vunpack.c.h.b16 %v11307
    %v12189 = vunpack.c.l.b16 %v11308
    %v12190 = vunpack.c.h.b16 %v11308
    %v12191 = vunpack.c.l.b16 %v11309
    %v12192 = vunpack.c.h.b16 %v11309
    %v12193 = vunpack.c.l.b16 %v11310
    %v12194 = vunpack.c.h.b16 %v11310
    %v12195 = vunpack.c.l.b16 %v11311
    %v12196 = vunpack.c.h.b16 %v11311
    %v12197 = vunpack.c.l.b16 %v11312
    %v12198 = vunpack.c.h.b16 %v11312
    %v12199 = vunpack.c.l.b16 %v11313
    %v12200 = vunpack.c.h.b16 %v11313
    %v12201 = vunpack.c.l.b16 %v11314
    %v12202 = vunpack.c.h.b16 %v11314
    %v12203 = vunpack.c.l.b16 %v11315
    %v12204 = vunpack.c.h.b16 %v11315
    %v12205 = vunpack.c.l.b16 %v11316
    %v12206 = vunpack.c.h.b16 %v11316
    %v12207 = vunpack.c.l.b16 %v11317
    %v12208 = vunpack.c.h.b16 %v11317
    %v12209 = vunpack.c.l.b16 %v11318
    %v12210 = vunpack.c.h.b16 %v11318
    %v12211 = vunpack.c.l.b16 %v11319
    %v12212 = vunpack.c.h.b16 %v11319
    %v12213 = vunpack.c.l.b16 %v11320
    %v12214 = vunpack.c.h.b16 %v11320
    %v12215 = vunpack.c.l.b16 %v11321
    %v12216 = vunpack.c.h.b16 %v11321
    %v12217 = vunpack.c.l.b16 %v11322
    %v12218 = vunpack.c.h.b16 %v11322
    %v12219 = vunpack.c.l.b16 %v11323
    %v12220 = vunpack.c.h.b16 %v11323
    %v12221 = vunpack.c.l.b16 %v11324
    %v12222 = vunpack.c.h.b16 %v11324
    %v12223 = vunpack.c.l.b16 %v11325
    %v12224 = vunpack.c.h.b16 %v11325
    %v12225 = vunpack.c.l.b16 %v11326
    %v12226 = vunpack.c.h.b16 %v11326
    %v12227 = vunpack.c.l.b16 %v11327
    %v12228 = vunpack.c.h.b16 %v11327
    %v12229 = vunpack.c.l.b16 %v11328
    %v12230 = vunpack.c.h.b16 %v11328
    %v12231 = vunpack.c.l.b16 %v11329
    %v12232 = vunpack.c.h.b16 %v11329
    %v12233 = vunpack.c.l.b16 %v11330
    %v12234 = vunpack.c.h.b16 %v11330
    %v12235 = vunpack.c.l.b16 %v11331
    %v12236 = vunpack.c.h.b16 %v11331
    %v12237 = vunpack.c.l.b16 %v11332
    %v12238 = vunpack.c.h.b16 %v11332
    %v12239 = vunpack.c.l.b16 %v11333
    %v12240 = vunpack.c.h.b16 %v11333
    %v12241 = vunpack.c.l.b16 %v11334
    %v12242 = vunpack.c.h.b16 %v11334
    %v12243 = vunpack.c.l.b16 %v11335
    %v12244 = vunpack.c.h.b16 %v11335
    %v12245 = vunpack.c.l.b16 %v11336
    %v12246 = vunpack.c.h.b16 %v11336
    %v12247 = vunpack.c.l.b16 %v11337
    %v12248 = vunpack.c.h.b16 %v11337
    %v12249 = vunpack.c.l.b16 %v11338
    %v12250 = vunpack.c.h.b16 %v11338
    %v12251 = vunpack.c.l.b16 %v11339
    %v12252 = vunpack.c.h.b16 %v11339
    %v12253 = vunpack.c.l.b16 %v11340
    %v12254 = vunpack.c.h.b16 %v11340
    %v12255 = vunpack.c.l.b16 %v11341
    %v12256 = vunpack.c.h.b16 %v11341
    %v12257 = vunpack.c.l.b16 %v11342
    %v12258 = vunpack.c.h.b16 %v11342
    %v12259 = vunpack.c.l.b16 %v11343
    %v12260 = vunpack.c.h.b16 %v11343
    %v12261 = vunpack.c.l.b16 %v11344
    %v12262 = vunpack.c.h.b16 %v11344
    %v12263 = vunpack.c.l.b16 %v11345
    %v12264 = vunpack.c.h.b16 %v11345
    %v12265 = vunpack.c.l.b16 %v11346
    %v12266 = vunpack.c.h.b16 %v11346
    %v12267 = vunpack.c.l.b16 %v11347
    %v12268 = vunpack.c.h.b16 %v11347
    %v12269 = vunpack.c.l.b16 %v11348
    %v12270 = vunpack.c.h.b16 %v11348
    %v12271 = vunpack.c.l.b16 %v11349
    %v12272 = vunpack.c.h.b16 %v11349
    %v12273 = vunpack.c.l.b16 %v11350
    %v12274 = vunpack.c.h.b16 %v11350
    %v12275 = vunpack.c.l.b16 %v11351
    %v12276 = vunpack.c.h.b16 %v11351
    %v12277 = vunpack.c.l.b16 %v11352
    %v12278 = vunpack.c.h.b16 %v11352
    %v12279 = vunpack.c.l.b16 %v11353
    %v12280 = vunpack.c.h.b16 %v11353
    %v12281 = vunpack.c.l.b16 %v11354
    %v12282 = vunpack.c.h.b16 %v11354
    %v12283 = vunpack.c.l.b16 %v11355
    %v12284 = vunpack.c.h.b16 %v11355
    %v12285 = vunpack.c.l.b16 %v11356
    %v12286 = vunpack.c.h.b16 %v11356
    %v12287 = vunpack.c.l.b16 %v11357
    %v12288 = vunpack.c.h.b16 %v11357
    %v12289 = vunpack.c.l.b16 %v11358
    %v12290 = vunpack.c.h.b16 %v11358
    %v12291 = vunpack.c.l.b16 %v11359
    %v12292 = vunpack.c.h.b16 %v11359
    %v12293 = vunpack.c.l.b16 %v11360
    %v12294 = vunpack.c.h.b16 %v11360
    %v12295 = vunpack.c.l.b16 %v11361
    %v12296 = vunpack.c.h.b16 %v11361
    %v12297 = vunpack.c.l.b16 %v11362
    %v12298 = vunpack.c.h.b16 %v11362
    %v12299 = vunpack.c.l.b16 %v11363
    %v12300 = vunpack.c.h.b16 %v11363
    %v12301 = vunpack.c.l.b16 %v11364
    %v12302 = vunpack.c.h.b16 %v11364
    %v12303 = vunpack.c.l.b16 %v11365
    %v12304 = vunpack.c.h.b16 %v11365
    %v12305 = vunpack.c.l.b16 %v11366
    %v12306 = vunpack.c.h.b16 %v11366
    %v12307 = vunpack.c.l.b16 %v11367
    %v12308 = vunpack.c.h.b16 %v11367
    %v12309 = vunpack.c.l.b16 %v11368
    %v12310 = vunpack.c.h.b16 %v11368
    %v12311 = vunpack.c.l.b16 %v11369
    %v12312 = vunpack.c.h.b16 %v11369
    %v12313 = vunpack.c.l.b16 %v11370
    %v12314 = vunpack.c.h.b16 %v11370
    %v12315 = vunpack.c.l.b16 %v11371
    %v12316 = vunpack.c.h.b16 %v11371
    %v12317 = vunpack.c.l.b16 %v11372
    %v12318 = vunpack.c.h.b16 %v11372
    %v12319 = vunpack.c.l.b16 %v11373
    %v12320 = vunpack.c.h.b16 %v11373
    %v12321 = vunpack.c.l.b16 %v11374
    %v12322 = vunpack.c.h.b16 %v11374
    %v12323 = vunpack.c.l.b16 %v11375
    %v12324 = vunpack.c.h.b16 %v11375
    %v12325 = vunpack.c.l.b16 %v11376
    %v12326 = vunpack.c.h.b16 %v11376
    %v12327 = vunpack.c.l.b16 %v11377
    %v12328 = vunpack.c.h.b16 %v11377
    %v12329 = vunpack.c.l.b16 %v11378
    %v12330 = vunpack.c.h.b16 %v11378
    %v12331 = vunpack.c.l.b16 %v11379
    %v12332 = vunpack.c.h.b16 %v11379
    %v12333 = vunpack.c.l.b16 %v11380
    %v12334 = vunpack.c.h.b16 %v11380
    %v12335 = vunpack.c.l.b16 %v11381
    %v12336 = vunpack.c.h.b16 %v11381
    %v12337 = vunpack.c.l.b16 %v11382
    %v12338 = vunpack.c.h.b16 %v11382
    %v12339 = vunpack.c.l.b16 %v11383
    %v12340 = vunpack.c.h.b16 %v11383
    %v12341 = vunpack.c.l.b16 %v11384
    %v12342 = vunpack.c.h.b16 %v11384
    %v12343 = vunpack.c.l.b16 %v11385
    %v12344 = vunpack.c.h.b16 %v11385
    %v12345 = vunpack.c.l.b16 %v11386
    %v12346 = vunpack.c.h.b16 %v11386
    %v12347 = vunpack.c.l.b16 %v11387
    %v12348 = vunpack.c.h.b16 %v11387
    %v12349 = vunpack.c.l.b16 %v11388
    %v12350 = vunpack.c.h.b16 %v11388
    %v12351 = vunpack.c.l.b16 %v11389
    %v12352 = vunpack.c.h.b16 %v11389
    %v12353 = vunpack.c.l.b16 %v11390
    %v12354 = vunpack.c.h.b16 %v11390
    %v12355 = vunpack.c.l.b16 %v11391
    %v12356 = vunpack.c.h.b16 %v11391
    %v12357 = vunpack.c.l.b16 %v11392
    %v12358 = vunpack.c.h.b16 %v11392
    %v12359 = vunpack.c.l.b16 %v11393
    %v12360 = vunpack.c.h.b16 %v11393
    %v12361 = vunpack.c.l.b16 %v11394
    %v12362 = vunpack.c.h.b16 %v11394
    %v12363 = vunpack.c.l.b16 %v11395
    %v12364 = vunpack.c.h.b16 %v11395
    %v12365 = vunpack.c.l.b16 %v11396
    %v12366 = vunpack.c.h.b16 %v11396
    %v12367 = vunpack.c.l.b16 %v11397
    %v12368 = vunpack.c.h.b16 %v11397
    %v12369 = vunpack.c.l.b16 %v11398
    %v12370 = vunpack.c.h.b16 %v11398
    %v12371 = vunpack.c.l.b16 %v11399
    %v12372 = vunpack.c.h.b16 %v11399
    %v12373 = vunpack.c.l.b16 %v11400
    %v12374 = vunpack.c.h.b16 %v11400
    %v12375 = vunpack.c.l.b16 %v11401
    %v12376 = vunpack.c.h.b16 %v11401
    %v12377 = vunpack.c.l.b16 %v11402
    %v12378 = vunpack.c.h.b16 %v11402
    %v12379 = vunpack.c.l.b16 %v11403
    %v12380 = vunpack.c.h.b16 %v11403
    %v12381 = vunpack.c.l.b16 %v11404
    %v12382 = vunpack.c.h.b16 %v11404
    %v12383 = vunpack.c.l.b16 %v11405
    %v12384 = vunpack.c.h.b16 %v11405
    %v12385 = vunpack.c.l.b16 %v11406
    %v12386 = vunpack.c.h.b16 %v11406
    %v12387 = vunpack.c.l.b16 %v11407
    %v12388 = vunpack.c.h.b16 %v11407
    %v12389 = vunpack.c.l.b16 %v11408
    %v12390 = vunpack.c.h.b16 %v11408
    %v12391 = vunpack.c.l.b16 %v11409
    %v12392 = vunpack.c.h.b16 %v11409
    %v12393 = vunpack.c.l.b16 %v11410
    %v12394 = vunpack.c.h.b16 %v11410
    %v12395 = vunpack.c.l.b16 %v11411
    %v12396 = vunpack.c.h.b16 %v11411
    %v12397 = vunpack.c.l.b16 %v11412
    %v12398 = vunpack.c.h.b16 %v11412
    %v12399 = vunpack.c.l.b16 %v11413
    %v12400 = vunpack.c.h.b16 %v11413
    %v12401 = vunpack.c.l.b16 %v11414
    %v12402 = vunpack.c.h.b16 %v11414
    %v12403 = vunpack.c.l.b16 %v11415
    %v12404 = vunpack.c.h.b16 %v11415
    %v12405 = vunpack.c.l.b16 %v11416
    %v12406 = vunpack.c.h.b16 %v11416
    %v12407 = vunpack.c.l.b16 %v11417
    %v12408 = vunpack.c.h.b16 %v11417
    %v12409 = vunpack.c.l.b16 %v11418
    %v12410 = vunpack.c.h.b16 %v11418
    %v12411 = vunpack.c.l.b16 %v11419
    %v12412 = vunpack.c.h.b16 %v11419
    %v12413 = vunpack.c.l.b16 %v11420
    %v12414 = vunpack.c.h.b16 %v11420
    %v12415 = vunpack.c.l.b16 %v11421
    %v12416 = vunpack.c.h.b16 %v11421
    %v12417 = vunpack.c.l.b16 %v11422
    %v12418 = vunpack.c.h.b16 %v11422
    %v12419 = vunpack.c.l.b16 %v11423
    %v12420 = vunpack.c.h.b16 %v11423
    %v12421 = vunpack.c.l.b16 %v11424
    %v12422 = vunpack.c.h.b16 %v11424
    %v12423 = vunpack.c.l.b16 %v11425
    %v12424 = vunpack.c.h.b16 %v11425
    %v12425 = vunpack.c.l.b16 %v11426
    %v12426 = vunpack.c.h.b16 %v11426
    %v12427 = vunpack.c.l.b16 %v11427
    %v12428 = vunpack.c.h.b16 %v11427
    %v12429 = vunpack.c.l.b16 %v11428
    %v12430 = vunpack.c.h.b16 %v11428
    %v12431 = vunpack.c.l.b16 %v11429
    %v12432 = vunpack.c.h.b16 %v11429
    %v12433 = vunpack.c.l.b16 %v11430
    %v12434 = vunpack.c.h.b16 %v11430
    %v12435 = vunpack.c.l.b16 %v11431
    %v12436 = vunpack.c.h.b16 %v11431
    %v12437 = vunpack.c.l.b16 %v11432
    %v12438 = vunpack.c.h.b16 %v11432
    %v12439 = vunpack.c.l.b16 %v11433
    %v12440 = vunpack.c.h.b16 %v11433
    %v12441 = vunpack.c.l.b16 %v11434
    %v12442 = vunpack.c.h.b16 %v11434
    %v12443 = vunpack.c.l.b16 %v11435
    %v12444 = vunpack.c.h.b16 %v11435
    %v12445 = vunpack.c.l.b16 %v11436
    %v12446 = vunpack.c.h.b16 %v11436
    %v12447 = vunpack.c.l.b16 %v11437
    %v12448 = vunpack.c.h.b16 %v11437
    %v12449 = vunpack.c.l.b16 %v11438
    %v12450 = vunpack.c.h.b16 %v11438
    %v12451 = vunpack.c.l.b16 %v11439
    %v12452 = vunpack.c.h.b16 %v11439
    %v12453 = vunpack.c.l.b16 %v11440
    %v12454 = vunpack.c.h.b16 %v11440
    %v12455 = vunpack.c.l.b16 %v11441
    %v12456 = vunpack.c.h.b16 %v11441
    %v12457 = vunpack.c.l.b16 %v11442
    %v12458 = vunpack.c.h.b16 %v11442
    %v12459 = vunpack.c.l.b16 %v11443
    %v12460 = vunpack.c.h.b16 %v11443
    %v12461 = vunpack.c.l.b16 %v11444
    %v12462 = vunpack.c.h.b16 %v11444
    %v12463 = vunpack.c.l.b16 %v11445
    %v12464 = vunpack.c.h.b16 %v11445
    %v12465 = vunpack.c.l.b16 %v11446
    %v12466 = vunpack.c.h.b16 %v11446
    %v12467 = vunpack.c.l.b16 %v11447
    %v12468 = vunpack.c.h.b16 %v11447
    %v12469 = vunpack.c.l.b16 %v11448
    %v12470 = vunpack.c.h.b16 %v11448
    %v12471 = vunpack.c.l.b16 %v11449
    %v12472 = vunpack.c.h.b16 %v11449
    %v12473 = vunpack.c.l.b16 %v11450
    %v12474 = vunpack.c.h.b16 %v11450
    %v12475 = vunpack.c.l.b16 %v11451
    %v12476 = vunpack.c.h.b16 %v11451
    %v12477 = vunpack.c.l.b16 %v11452
    %v12478 = vunpack.c.h.b16 %v11452
    %v12479 = vunpack.c.l.b16 %v11453
    %v12480 = vunpack.c.h.b16 %v11453
    %v12481 = vunpack.c.l.b16 %v11454
    %v12482 = vunpack.c.h.b16 %v11454
    %v12483 = vunpack.c.l.b16 %v11455
    %v12484 = vunpack.c.h.b16 %v11455
    %v12485 = vunpack.c.l.b16 %v11456
    %v12486 = vunpack.c.h.b16 %v11456
    %v12487 = vunpack.c.l.b16 %v11457
    %v12488 = vunpack.c.h.b16 %v11457
    %v12489 = vunpack.c.l.b16 %v11458
    %v12490 = vunpack.c.h.b16 %v11458
    %v12491 = vunpack.c.l.b16 %v11459
    %v12492 = vunpack.c.h.b16 %v11459
    %v12493 = vunpack.c.l.b16 %v11460
    %v12494 = vunpack.c.h.b16 %v11460
    %v12495 = vunpack.c.l.b16 %v11461
    %v12496 = vunpack.c.h.b16 %v11461
    %v12497 = vunpack.c.l.b16 %v11462
    %v12498 = vunpack.c.h.b16 %v11462
    %v12499 = vunpack.c.l.b16 %v11463
    %v12500 = vunpack.c.h.b16 %v11463
    %v12501 = vunpack.c.l.b16 %v11464
    %v12502 = vunpack.c.h.b16 %v11464
    %v12503 = vunpack.c.l.b16 %v11465
    %v12504 = vunpack.c.h.b16 %v11465
    %v12505 = vunpack.c.l.b16 %v11466
    %v12506 = vunpack.c.h.b16 %v11466
    %v12507 = vunpack.c.l.b16 %v11467
    %v12508 = vunpack.c.h.b16 %v11467
    %v12509 = vunpack.c.l.b16 %v11468
    %v12510 = vunpack.c.h.b16 %v11468
    %v12511 = vunpack.c.l.b16 %v11469
    %v12512 = vunpack.c.h.b16 %v11469
    %v12513 = vunpack.c.l.b16 %v11470
    %v12514 = vunpack.c.h.b16 %v11470
    %v12515 = vunpack.c.l.b16 %v11471
    %v12516 = vunpack.c.h.b16 %v11471
    %v12517 = vunpack.c.l.b16 %v11472
    %v12518 = vunpack.c.h.b16 %v11472
    %v12519 = vunpack.c.l.b16 %v11473
    %v12520 = vunpack.c.h.b16 %v11473
    %v12521 = vunpack.c.l.b16 %v11474
    %v12522 = vunpack.c.h.b16 %v11474
    %v12523 = vunpack.c.l.b16 %v11475
    %v12524 = vunpack.c.h.b16 %v11475
    %v12525 = vunpack.c.l.b16 %v11476
    %v12526 = vunpack.c.h.b16 %v11476
    %v12527 = vunpack.c.l.b16 %v11477
    %v12528 = vunpack.c.h.b16 %v11477
    %v12529 = vunpack.c.l.b16 %v11478
    %v12530 = vunpack.c.h.b16 %v11478
    %v12531 = vunpack.c.l.b16 %v11479
    %v12532 = vunpack.c.h.b16 %v11479
    %v12533 = vunpack.c.l.b16 %v11480
    %v12534 = vunpack.c.h.b16 %v11480
    %v12535 = vunpack.c.l.b16 %v11481
    %v12536 = vunpack.c.h.b16 %v11481
    %v12537 = vunpack.c.l.b16 %v11482
    %v12538 = vunpack.c.h.b16 %v11482
    %v12539 = vunpack.c.l.b16 %v11483
    %v12540 = vunpack.c.h.b16 %v11483
    %v12541 = vunpack.c.l.b16 %v11484
    %v12542 = vunpack.c.h.b16 %v11484
    %v12543 = vunpack.c.l.b16 %v11485
    %v12544 = vunpack.c.h.b16 %v11485
    %v12545 = vunpack.c.l.b16 %v11486
    %v12546 = vunpack.c.h.b16 %v11486
    %v12547 = vunpack.c.l.b16 %v11487
    %v12548 = vunpack.c.h.b16 %v11487
    %v12549 = vunpack.c.l.b16 %v11488
    %v12550 = vunpack.c.h.b16 %v11488
    %v12551 = vunpack.c.l.b16 %v11489
    %v12552 = vunpack.c.h.b16 %v11489
    %v12553 = vunpack.c.l.b16 %v11490
    %v12554 = vunpack.c.h.b16 %v11490
    %v12555 = vunpack.c.l.b16 %v11491
    %v12556 = vunpack.c.h.b16 %v11491
    %v12557 = vunpack.c.l.b16 %v11492
    %v12558 = vunpack.c.h.b16 %v11492
    %v12559 = vunpack.c.l.b16 %v11493
    %v12560 = vunpack.c.h.b16 %v11493
    %v12561 = vunpack.c.l.b16 %v11494
    %v12562 = vunpack.c.h.b16 %v11494
    %v12563 = vunpack.c.l.b16 %v11495
    %v12564 = vunpack.c.h.b16 %v11495
    %v12565 = vunpack.c.l.b16 %v11496
    %v12566 = vunpack.c.h.b16 %v11496
    %v12567 = vunpack.c.l.b16 %v11497
    %v12568 = vunpack.c.h.b16 %v11497
    %v12569 = vunpack.c.l.b16 %v11498
    %v12570 = vunpack.c.h.b16 %v11498
    %v12571 = vunpack.c.l.b16 %v11499
    %v12572 = vunpack.c.h.b16 %v11499
    %v12573 = vunpack.c.l.b16 %v11500
    %v12574 = vunpack.c.h.b16 %v11500
    %v12575 = vunpack.c.l.b16 %v11501
    %v12576 = vunpack.c.h.b16 %v11501
    %v12577 = vunpack.c.l.b16 %v11502
    %v12578 = vunpack.c.h.b16 %v11502
    %v12579 = vunpack.c.l.b16 %v11503
    %v12580 = vunpack.c.h.b16 %v11503
    %v12581 = vunpack.c.l.b16 %v11504
    %v12582 = vunpack.c.h.b16 %v11504
    %v12583 = vunpack.c.l.b16 %v11505
    %v12584 = vunpack.c.h.b16 %v11505
    %v12585 = vunpack.c.l.b16 %v11506
    %v12586 = vunpack.c.h.b16 %v11506
    %v12587 = vunpack.c.l.b16 %v11507
    %v12588 = vunpack.c.h.b16 %v11507
    %v12589 = vunpack.c.l.b16 %v11508
    %v12590 = vunpack.c.h.b16 %v11508
    %v12591 = vunpack.c.l.b16 %v11509
    %v12592 = vunpack.c.h.b16 %v11509
    %v12593 = vunpack.c.l.b16 %v11510
    %v12594 = vunpack.c.h.b16 %v11510
    %v12595 = vunpack.c.l.b16 %v11511
    %v12596 = vunpack.c.h.b16 %v11511
    %v12597 = vunpack.c.l.b16 %v11512
    %v12598 = vunpack.c.h.b16 %v11512
    %v12599 = vunpack.c.l.b16 %v11513
    %v12600 = vunpack.c.h.b16 %v11513
    %v12601 = vunpack.c.l.b16 %v11514
    %v12602 = vunpack.c.h.b16 %v11514
    %v12603 = vunpack.c.l.b16 %v11515
    %v12604 = vunpack.c.h.b16 %v11515
    %v12605 = vunpack.c.l.b16 %v11516
    %v12606 = vunpack.c.h.b16 %v11516
    %v12607 = vunpack.c.l.b16 %v11517
    %v12608 = vunpack.c.h.b16 %v11517
    %v12609 = vunpack.c.l.b16 %v11518
    %v12610 = vunpack.c.h.b16 %v11518
    %v12611 = vunpack.c.l.b16 %v11519
    %v12612 = vunpack.c.h.b16 %v11519
    %v12613 = vunpack.c.l.b16 %v11520
    %v12614 = vunpack.c.h.b16 %v11520
    %v12615 = vunpack.c.l.b16 %v11521
    %v12616 = vunpack.c.h.b16 %v11521
    %v12617 = vunpack.c.l.b16 %v11522
    %v12618 = vunpack.c.h.b16 %v11522
    %v12619 = vunpack.c.l.b16 %v11523
    %v12620 = vunpack.c.h.b16 %v11523
    %v12621 = vunpack.c.l.b16 %v11524
    %v12622 = vunpack.c.h.b16 %v11524
    %v12623 = vunpack.c.l.b16 %v11525
    %v12624 = vunpack.c.h.b16 %v11525
    %v12625 = vunpack.c.l.b16 %v11526
    %v12626 = vunpack.c.h.b16 %v11526
    %v12627 = vunpack.c.l.b16 %v11527
    %v12628 = vunpack.c.h.b16 %v11527
    %v12629 = vunpack.c.l.b16 %v11528
    %v12630 = vunpack.c.h.b16 %v11528
    %v12631 = vunpack.c.l.b16 %v11529
    %v12632 = vunpack.c.h.b16 %v11529
    %v12633 = vunpack.c.l.b16 %v11530
    %v12634 = vunpack.c.h.b16 %v11530
    %v12635 = vunpack.c.l.b16 %v11531
    %v12636 = vunpack.c.h.b16 %v11531
    %v12637 = vunpack.c.l.b16 %v11532
    %v12638 = vunpack.c.h.b16 %v11532
    %v12639 = vunpack.c.l.b16 %v11533
    %v12640 = vunpack.c.h.b16 %v11533
    %v12641 = vunpack.c.l.b16 %v11534
    %v12642 = vunpack.c.h.b16 %v11534
    %v12643 = vunpack.c.l.b16 %v11535
    %v12644 = vunpack.c.h.b16 %v11535
    %v12645 = vunpack.c.l.b16 %v11536
    %v12646 = vunpack.c.h.b16 %v11536
    %v12647 = vunpack.c.l.b16 %v11537
    %v12648 = vunpack.c.h.b16 %v11537
    %v12649 = vunpack.c.l.b16 %v11538
    %v12650 = vunpack.c.h.b16 %v11538
    %v12651 = vunpack.c.l.b16 %v11539
    %v12652 = vunpack.c.h.b16 %v11539
    %v12653 = vunpack.c.l.b16 %v11540
    %v12654 = vunpack.c.h.b16 %v11540
    %v12655 = vunpack.c.l.b16 %v11541
    %v12656 = vunpack.c.h.b16 %v11541
    %v12657 = vunpack.c.l.b16 %v11542
    %v12658 = vunpack.c.h.b16 %v11542
    %v12659 = vunpack.c.l.b16 %v11543
    %v12660 = vunpack.c.h.b16 %v11543
    %v12661 = vunpack.c.l.b16 %v11544
    %v12662 = vunpack.c.h.b16 %v11544
    %v12663 = vunpack.c.l.b16 %v11545
    %v12664 = vunpack.c.h.b16 %v11545
    %v12665 = vunpack.c.l.b16 %v11546
    %v12666 = vunpack.c.h.b16 %v11546
    %v12667 = vunpack.c.l.b16 %v11547
    %v12668 = vunpack.c.h.b16 %v11547
    %v12669 = vunpack.c.l.b16 %v11548
    %v12670 = vunpack.c.h.b16 %v11548
    %v12671 = vunpack.c.l.b16 %v11549
    %v12672 = vunpack.c.h.b16 %v11549
    %v12673 = vunpack.c.l.b16 %v11550
    %v12674 = vunpack.c.h.b16 %v11550
    %v12675 = vunpack.c.l.b16 %v11551
    %v12676 = vunpack.c.h.b16 %v11551
    %v12677 = vunpack.c.l.b16 %v11552
    %v12678 = vunpack.c.h.b16 %v11552
    %v12679 = vunpack.c.l.b16 %v11553
    %v12680 = vunpack.c.h.b16 %v11553
    %v12681 = vunpack.c.l.b16 %v11554
    %v12682 = vunpack.c.h.b16 %v11554
    %v12683 = vunpack.c.l.b16 %v11555
    %v12684 = vunpack.c.h.b16 %v11555
    %v12685 = vunpack.c.l.b16 %v11556
    %v12686 = vunpack.c.h.b16 %v11556
    %v12687 = vunpack.c.l.b16 %v11557
    %v12688 = vunpack.c.h.b16 %v11557
    %v12689 = vunpack.c.l.b16 %v11558
    %v12690 = vunpack.c.h.b16 %v11558
    %v12691 = vunpack.c.l.b16 %v11559
    %v12692 = vunpack.c.h.b16 %v11559
    %v12693 = vunpack.c.l.b16 %v11560
    %v12694 = vunpack.c.h.b16 %v11560
    %v12695 = vunpack.c.l.b16 %v11561
    %v12696 = vunpack.c.h.b16 %v11561
    %v12697 = vunpack.c.l.b16 %v11562
    %v12698 = vunpack.c.h.b16 %v11562
    %v12699 = vunpack.c.l.b16 %v11563
    %v12700 = vunpack.c.h.b16 %v11563
    %v12701 = vunpack.c.l.b16 %v11564
    %v12702 = vunpack.c.h.b16 %v11564
    %v12703 = vunpack.c.l.b16 %v11565
    %v12704 = vunpack.c.h.b16 %v11565
    %v12705 = vunpack.c.l.b16 %v11566
    %v12706 = vunpack.c.h.b16 %v11566
    %v12707 = vunpack.c.l.b16 %v11567
    %v12708 = vunpack.c.h.b16 %v11567
    %v12709 = vunpack.c.l.b16 %v11568
    %v12710 = vunpack.c.h.b16 %v11568
    %v12711 = vunpack.c.l.b16 %v11569
    %v12712 = vunpack.c.h.b16 %v11569
    %v12713 = vunpack.c.l.b16 %v11570
    %v12714 = vunpack.c.h.b16 %v11570
    %v12715 = vunpack.c.l.b16 %v11571
    %v12716 = vunpack.c.h.b16 %v11571
    %v12717 = vunpack.c.l.b16 %v11572
    %v12718 = vunpack.c.h.b16 %v11572
    %v12719 = vunpack.c.l.b16 %v11573
    %v12720 = vunpack.c.h.b16 %v11573
    %v12721 = vunpack.c.l.b16 %v11574
    %v12722 = vunpack.c.h.b16 %v11574
    %v12723 = vunpack.c.l.b16 %v11575
    %v12724 = vunpack.c.h.b16 %v11575
    %v12725 = vunpack.c.l.b16 %v11576
    %v12726 = vunpack.c.h.b16 %v11576
    %v12727 = vunpack.c.l.b16 %v11577
    %v12728 = vunpack.c.h.b16 %v11577
    %v12729 = vunpack.c.l.b16 %v11578
    %v12730 = vunpack.c.h.b16 %v11578
    %v12731 = vunpack.c.l.b16 %v11579
    %v12732 = vunpack.c.h.b16 %v11579
    %v12733 = vunpack.c.l.b16 %v11580
    %v12734 = vunpack.c.h.b16 %v11580
    %v12735 = vunpack.c.l.b16 %v11581
    %v12736 = vunpack.c.h.b16 %v11581
    %v12737 = vunpack.c.l.b16 %v11582
    %v12738 = vunpack.c.h.b16 %v11582
    %v12739 = vunpack.c.l.b16 %v11583
    %v12740 = vunpack.c.h.b16 %v11583
    %v12741 = vunpack.c.l.b16 %v11584
    %v12742 = vunpack.c.h.b16 %v11584
    %v12743 = vunpack.c.l.b16 %v11585
    %v12744 = vunpack.c.h.b16 %v11585
    %v12745 = vunpack.c.l.b16 %v11586
    %v12746 = vunpack.c.h.b16 %v11586
    %v12747 = vunpack.c.l.b16 %v11587
    %v12748 = vunpack.c.h.b16 %v11587
    %v12749 = vunpack.c.l.b16 %v11588
    %v12750 = vunpack.c.h.b16 %v11588
    %v12751 = vunpack.c.l.b16 %v11589
    %v12752 = vunpack.c.h.b16 %v11589
    %v12753 = vunpack.c.l.b16 %v11590
    %v12754 = vunpack.c.h.b16 %v11590
    %v12755 = vunpack.c.l.b16 %v11591
    %v12756 = vunpack.c.h.b16 %v11591
    %v12757 = vunpack.c.l.b16 %v11592
    %v12758 = vunpack.c.h.b16 %v11592
    %v12759 = vunpack.c.l.b16 %v11593
    %v12760 = vunpack.c.h.b16 %v11593
    %v12761 = vunpack.c.l.b16 %v11594
    %v12762 = vunpack.c.h.b16 %v11594
    %v12763 = vunpack.c.l.b16 %v11595
    %v12764 = vunpack.c.h.b16 %v11595
    %v12765 = vunpack.c.l.b16 %v11596
    %v12766 = vunpack.c.h.b16 %v11596
    %v12767 = vunpack.c.l.b16 %v11597
    %v12768 = vunpack.c.h.b16 %v11597
    %v12769 = vunpack.c.l.b16 %v11598
    %v12770 = vunpack.c.h.b16 %v11598
    %v12771 = vunpack.c.l.b16 %v11599
    %v12772 = vunpack.c.h.b16 %v11599
    %v12773 = vunpack.c.l.b16 %v11600
    %v12774 = vunpack.c.h.b16 %v11600
    %v12775 = vpack.c.b16 %v12011, %v12007
    %v12776 = vpack.c.b16 %v12012, %v12008
    %v12777 = vpack.c.b16 %v12013, %v12009
    %v12778 = vpack.c.b16 %v12014, %v12010
    %v12779 = vpack.c.b16 %v12019, %v12015
    %v12780 = vpack.c.b16 %v12020, %v12016
    %v12781 = vpack.c.b16 %v12021, %v12017
    %v12782 = vpack.c.b16 %v12022, %v12018
    %v12783 = vpack.c.b16 %v12027, %v12023
    %v12784 = vpack.c.b16 %v12028, %v12024
    %v12785 = vpack.c.b16 %v12029, %v12025
    %v12786 = vpack.c.b16 %v12030, %v12026
    %v12787 = vpack.c.b16 %v12035, %v12031
    %v12788 = vpack.c.b16 %v12036, %v12032
    %v12789 = vpack.c.b16 %v12037, %v12033
    %v12790 = vpack.c.b16 %v12038, %v12034
    %v12791 = vpack.c.b16 %v12043, %v12039
    %v12792 = vpack.c.b16 %v12044, %v12040
    %v12793 = vpack.c.b16 %v12045, %v12041
    %v12794 = vpack.c.b16 %v12046, %v12042
    %v12795 = vpack.c.b16 %v12051, %v12047
    %v12796 = vpack.c.b16 %v12052, %v12048
    %v12797 = vpack.c.b16 %v12053, %v12049
    %v12798 = vpack.c.b16 %v12054, %v12050
    %v12799 = vpack.c.b16 %v12059, %v12055
    %v12800 = vpack.c.b16 %v12060, %v12056
    %v12801 = vpack.c.b16 %v12061, %v12057
    %v12802 = vpack.c.b16 %v12062, %v12058
    %v12803 = vpack.c.b16 %v12067, %v12063
    %v12804 = vpack.c.b16 %v12068, %v12064
    %v12805 = vpack.c.b16 %v12069, %v12065
    %v12806 = vpack.c.b16 %v12070, %v12066
    %v12807 = vpack.c.b16 %v12075, %v12071
    %v12808 = vpack.c.b16 %v12076, %v12072
    %v12809 = vpack.c.b16 %v12077, %v12073
    %v12810 = vpack.c.b16 %v12078, %v12074
    %v12811 = vpack.c.b16 %v12083, %v12079
    %v12812 = vpack.c.b16 %v12084, %v12080
    %v12813 = vpack.c.b16 %v12085, %v12081
    %v12814 = vpack.c.b16 %v12086, %v12082
    %v12815 = vpack.c.b16 %v12091, %v12087
    %v12816 = vpack.c.b16 %v12092, %v12088
    %v12817 = vpack.c.b16 %v12093, %v12089
    %v12818 = vpack.c.b16 %v12094, %v12090
    %v12819 = vpack.c.b16 %v12099, %v12095
    %v12820 = vpack.c.b16 %v12100, %v12096
    %v12821 = vpack.c.b16 %v12101, %v12097
    %v12822 = vpack.c.b16 %v12102, %v12098
    %v12823 = vpack.c.b16 %v12107, %v12103
    %v12824 = vpack.c.b16 %v12108, %v12104
    %v12825 = vpack.c.b16 %v12109, %v12105
    %v12826 = vpack.c.b16 %v12110, %v12106
    %v12827 = vpack.c.b16 %v12115, %v12111
    %v12828 = vpack.c.b16 %v12116, %v12112
    %v12829 = vpack.c.b16 %v12117, %v12113
    %v12830 = vpack.c.b16 %v12118, %v12114
    %v12831 = vpack.c.b16 %v12123, %v12119
    %v12832 = vpack.c.b16 %v12124, %v12120
    %v12833 = vpack.c.b16 %v12125, %v12121
    %v12834 = vpack.c.b16 %v12126, %v12122
    %v12835 = vpack.c.b16 %v12131, %v12127
    %v12836 = vpack.c.b16 %v12132, %v12128
    %v12837 = vpack.c.b16 %v12133, %v12129
    %v12838 = vpack.c.b16 %v12134, %v12130
    %v12839 = vpack.c.b16 %v12139, %v12135
    %v12840 = vpack.c.b16 %v12140, %v12136
    %v12841 = vpack.c.b16 %v12141, %v12137
    %v12842 = vpack.c.b16 %v12142, %v12138
    %v12843 = vpack.c.b16 %v12147, %v12143
    %v12844 = vpack.c.b16 %v12148, %v12144
    %v12845 = vpack.c.b16 %v12149, %v12145
    %v12846 = vpack.c.b16 %v12150, %v12146
    %v12847 = vpack.c.b16 %v12155, %v12151
    %v12848 = vpack.c.b16 %v12156, %v12152
    %v12849 = vpack.c.b16 %v12157, %v12153
    %v12850 = vpack.c.b16 %v12158, %v12154
    %v12851 = vpack.c.b16 %v12163, %v12159
    %v12852 = vpack.c.b16 %v12164, %v12160
    %v12853 = vpack.c.b16 %v12165, %v12161
    %v12854 = vpack.c.b16 %v12166, %v12162
    %v12855 = vpack.c.b16 %v12171, %v12167
    %v12856 = vpack.c.b16 %v12172, %v12168
    %v12857 = vpack.c.b16 %v12173, %v12169
    %v12858 = vpack.c.b16 %v12174, %v12170
    %v12859 = vpack.c.b16 %v12179, %v12175
    %v12860 = vpack.c.b16 %v12180, %v12176
    %v12861 = vpack.c.b16 %v12181, %v12177
    %v12862 = vpack.c.b16 %v12182, %v12178
    %v12863 = vpack.c.b16 %v12187, %v12183
    %v12864 = vpack.c.b16 %v12188, %v12184
    %v12865 = vpack.c.b16 %v12189, %v12185
    %v12866 = vpack.c.b16 %v12190, %v12186
    %v12867 = vpack.c.b16 %v12195, %v12191
    %v12868 = vpack.c.b16 %v12196, %v12192
    %v12869 = vpack.c.b16 %v12197, %v12193
    %v12870 = vpack.c.b16 %v12198, %v12194
    %v12871 = vpack.c.b16 %v12203, %v12199
    %v12872 = vpack.c.b16 %v12204, %v12200
    %v12873 = vpack.c.b16 %v12205, %v12201
    %v12874 = vpack.c.b16 %v12206, %v12202
    %v12875 = vpack.c.b16 %v12211, %v12207
    %v12876 = vpack.c.b16 %v12212, %v12208
    %v12877 = vpack.c.b16 %v12213, %v12209
    %v12878 = vpack.c.b16 %v12214, %v12210
    %v12879 = vpack.c.b16 %v12219, %v12215
    %v12880 = vpack.c.b16 %v12220, %v12216
    %v12881 = vpack.c.b16 %v12221, %v12217
    %v12882 = vpack.c.b16 %v12222, %v12218
    %v12883 = vpack.c.b16 %v12227, %v12223
    %v12884 = vpack.c.b16 %v12228, %v12224
    %v12885 = vpack.c.b16 %v12229, %v12225
    %v12886 = vpack.c.b16 %v12230, %v12226
    %v12887 = vpack.c.b16 %v12235, %v12231
    %v12888 = vpack.c.b16 %v12236, %v12232
    %v12889 = vpack.c.b16 %v12237, %v12233
    %v12890 = vpack.c.b16 %v12238, %v12234
    %v12891 = vpack.c.b16 %v12243, %v12239
    %v12892 = vpack.c.b16 %v12244, %v12240
    %v12893 = vpack.c.b16 %v12245, %v12241
    %v12894 = vpack.c.b16 %v12246, %v12242
    %v12895 = vpack.c.b16 %v12251, %v12247
    %v12896 = vpack.c.b16 %v12252, %v12248
    %v12897 = vpack.c.b16 %v12253, %v12249
    %v12898 = vpack.c.b16 %v12254, %v12250
    %v12899 = vpack.c.b16 %v12259, %v12255
    %v12900 = vpack.c.b16 %v12260, %v12256
    %v12901 = vpack.c.b16 %v12261, %v12257
    %v12902 = vpack.c.b16 %v12262, %v12258
    %v12903 = vpack.c.b16 %v12267, %v12263
    %v12904 = vpack.c.b16 %v12268, %v12264
    %v12905 = vpack.c.b16 %v12269, %v12265
    %v12906 = vpack.c.b16 %v12270, %v12266
    %v12907 = vpack.c.b16 %v12275, %v12271
    %v12908 = vpack.c.b16 %v12276, %v12272
    %v12909 = vpack.c.b16 %v12277, %v12273
    %v12910 = vpack.c.b16 %v12278, %v12274
    %v12911 = vpack.c.b16 %v12283, %v12279
    %v12912 = vpack.c.b16 %v12284, %v12280
    %v12913 = vpack.c.b16 %v12285, %v12281
    %v12914 = vpack.c.b16 %v12286, %v12282
    %v12915 = vpack.c.b16 %v12291, %v12287
    %v12916 = vpack.c.b16 %v12292, %v12288
    %v12917 = vpack.c.b16 %v12293, %v12289
    %v12918 = vpack.c.b16 %v12294, %v12290
    %v12919 = vpack.c.b16 %v12299, %v12295
    %v12920 = vpack.c.b16 %v12300, %v12296
    %v12921 = vpack.c.b16 %v12301, %v12297
    %v12922 = vpack.c.b16 %v12302, %v12298
    %v12923 = vpack.c.b16 %v12307, %v12303
    %v12924 = vpack.c.b16 %v12308, %v12304
    %v12925 = vpack.c.b16 %v12309, %v12305
    %v12926 = vpack.c.b16 %v12310, %v12306
    %v12927 = vpack.c.b16 %v12315, %v12311
    %v12928 = vpack.c.b16 %v12316, %v12312
    %v12929 = vpack.c.b16 %v12317, %v12313
    %v12930 = vpack.c.b16 %v12318, %v12314
    %v12931 = vpack.c.b16 %v12323, %v12319
    %v12932 = vpack.c.b16 %v12324, %v12320
    %v12933 = vpack.c.b16 %v12325, %v12321
    %v12934 = vpack.c.b16 %v12326, %v12322
    %v12935 = vpack.c.b16 %v12331, %v12327
    %v12936 = vpack.c.b16 %v12332, %v12328
    %v12937 = vpack.c.b16 %v12333, %v12329
    %v12938 = vpack.c.b16 %v12334, %v12330
    %v12939 = vpack.c.b16 %v12339, %v12335
    %v12940 = vpack.c.b16 %v12340, %v12336
    %v12941 = vpack.c.b16 %v12341, %v12337
    %v12942 = vpack.c.b16 %v12342, %v12338
    %v12943 = vpack.c.b16 %v12347, %v12343
    %v12944 = vpack.c.b16 %v12348, %v12344
    %v12945 = vpack.c.b16 %v12349, %v12345
    %v12946 = vpack.c.b16 %v12350, %v12346
    %v12947 = vpack.c.b16 %v12355, %v12351
    %v12948 = vpack.c.b16 %v12356, %v12352
    %v12949 = vpack.c.b16 %v12357, %v12353
    %v12950 = vpack.c.b16 %v12358, %v12354
    %v12951 = vpack.c.b16 %v12363, %v12359
    %v12952 = vpack.c.b16 %v12364, %v12360
    %v12953 = vpack.c.b16 %v12365, %v12361
    %v12954 = vpack.c.b16 %v12366, %v12362
    %v12955 = vpack.c.b16 %v12371, %v12367
    %v12956 = vpack.c.b16 %v12372, %v12368
    %v12957 = vpack.c.b16 %v12373, %v12369
    %v12958 = vpack.c.b16 %v12374, %v12370
    %v12959 = vpack.c.b16 %v12379, %v12375
    %v12960 = vpack.c.b16 %v12380, %v12376
    %v12961 = vpack.c.b16 %v12381, %v12377
    %v12962 = vpack.c.b16 %v12382, %v12378
    %v12963 = vpack.c.b16 %v12387, %v12383
    %v12964 = vpack.c.b16 %v12388, %v12384
    %v12965 = vpack.c.b16 %v12389, %v12385
    %v12966 = vpack.c.b16 %v12390, %v12386
    %v12967 = vpack.c.b16 %v12395, %v12391
    %v12968 = vpack.c.b16 %v12396, %v12392
    %v12969 = vpack.c.b16 %v12397, %v12393
    %v12970 = vpack.c.b16 %v12398, %v12394
    %v12971 = vpack.c.b16 %v12403, %v12399
    %v12972 = vpack.c.b16 %v12404, %v12400
    %v12973 = vpack.c.b16 %v12405, %v12401
    %v12974 = vpack.c.b16 %v12406, %v12402
    %v12975 = vpack.c.b16 %v12411, %v12407
    %v12976 = vpack.c.b16 %v12412, %v12408
    %v12977 = vpack.c.b16 %v12413, %v12409
    %v12978 = vpack.c.b16 %v12414, %v12410
    %v12979 = vpack.c.b16 %v12419, %v12415
    %v12980 = vpack.c.b16 %v12420, %v12416
    %v12981 = vpack.c.b16 %v12421, %v12417
    %v12982 = vpack.c.b16 %v12422, %v12418
    %v12983 = vpack.c.b16 %v12427, %v12423
    %v12984 = vpack.c.b16 %v12428, %v12424
    %v12985 = vpack.c.b16 %v12429, %v12425
    %v12986 = vpack.c.b16 %v12430, %v12426
    %v12987 = vpack.c.b16 %v12435, %v12431
    %v12988 = vpack.c.b16 %v12436, %v12432
    %v12989 = vpack.c.b16 %v12437, %v12433
    %v12990 = vpack.c.b16 %v12438, %v12434
    %v12991 = vpack.c.b16 %v12443, %v12439
    %v12992 = vpack.c.b16 %v12444, %v12440
    %v12993 = vpack.c.b16 %v12445, %v12441
    %v12994 = vpack.c.b16 %v12446, %v12442
    %v12995 = vpack.c.b16 %v12451, %v12447
    %v12996 = vpack.c.b16 %v12452, %v12448
    %v12997 = vpack.c.b16 %v12453, %v12449
    %v12998 = vpack.c.b16 %v12454, %v12450
    %v12999 = vpack.c.b16 %v12459, %v12455
    %v13000 = vpack.c.b16 %v12460, %v12456
    %v13001 = vpack.c.b16 %v12461, %v12457
    %v13002 = vpack.c.b16 %v12462, %v12458
    %v13003 = vpack.c.b16 %v12467, %v12463
    %v13004 = vpack.c.b16 %v12468, %v12464
    %v13005 = vpack.c.b16 %v12469, %v12465
    %v13006 = vpack.c.b16 %v12470, %v12466
    %v13007 = vpack.c.b16 %v12475, %v12471
    %v13008 = vpack.c.b16 %v12476, %v12472
    %v13009 = vpack.c.b16 %v12477, %v12473
    %v13010 = vpack.c.b16 %v12478, %v12474
    %v13011 = vpack.c.b16 %v12483, %v12479
    %v13012 = vpack.c.b16 %v12484, %v12480
    %v13013 = vpack.c.b16 %v12485, %v12481
    %v13014 = vpack.c.b16 %v12486, %v12482
    %v13015 = vpack.c.b16 %v12491, %v12487
    %v13016 = vpack.c.b16 %v12492, %v12488
    %v13017 = vpack.c.b16 %v12493, %v12489
    %v13018 = vpack.c.b16 %v12494, %v12490
    %v13019 = vpack.c.b16 %v12499, %v12495
    %v13020 = vpack.c.b16 %v12500, %v12496
    %v13021 = vpack.c.b16 %v12501, %v12497
    %v13022 = vpack.c.b16 %v12502, %v12498
    %v13023 = vpack.c.b16 %v12507, %v12503
    %v13024 = vpack.c.b16 %v12508, %v12504
    %v13025 = vpack.c.b16 %v12509, %v12505
    %v13026 = vpack.c.b16 %v12510, %v12506
    %v13027 = vpack.c.b16 %v12515, %v12511
    %v13028 = vpack.c.b16 %v12516, %v12512
    %v13029 = vpack.c.b16 %v12517, %v12513
    %v13030 = vpack.c.b16 %v12518, %v12514
    %v13031 = vpack.c.b16 %v12523, %v12519
    %v13032 = vpack.c.b16 %v12524, %v12520
    %v13033 = vpack.c.b16 %v12525, %v12521
    %v13034 = vpack.c.b16 %v12526, %v12522
    %v13035 = vpack.c.b16 %v12531, %v12527
    %v13036 = vpack.c.b16 %v12532, %v12528
    %v13037 = vpack.c.b16 %v12533, %v12529
    %v13038 = vpack.c.b16 %v12534, %v12530
    %v13039 = vpack.c.b16 %v12539, %v12535
    %v13040 = vpack.c.b16 %v12540, %v12536
    %v13041 = vpack.c.b16 %v12541, %v12537
    %v13042 = vpack.c.b16 %v12542, %v12538
    %v13043 = vpack.c.b16 %v12547, %v12543
    %v13044 = vpack.c.b16 %v12548, %v12544
    %v13045 = vpack.c.b16 %v12549, %v12545
    %v13046 = vpack.c.b16 %v12550, %v12546
    %v13047 = vpack.c.b16 %v12555, %v12551
    %v13048 = vpack.c.b16 %v12556, %v12552
    %v13049 = vpack.c.b16 %v12557, %v12553
    %v13050 = vpack.c.b16 %v12558, %v12554
    %v13051 = vpack.c.b16 %v12563, %v12559
    %v13052 = vpack.c.b16 %v12564, %v12560
    %v13053 = vpack.c.b16 %v12565, %v12561
    %v13054 = vpack.c.b16 %v12566, %v12562
    %v13055 = vpack.c.b16 %v12571, %v12567
    %v13056 = vpack.c.b16 %v12572, %v12568
    %v13057 = vpack.c.b16 %v12573, %v12569
    %v13058 = vpack.c.b16 %v12574, %v12570
    %v13059 = vpack.c.b16 %v12579, %v12575
    %v13060 = vpack.c.b16 %v12580, %v12576
    %v13061 = vpack.c.b16 %v12581, %v12577
    %v13062 = vpack.c.b16 %v12582, %v12578
    %v13063 = vpack.c.b16 %v12587, %v12583
    %v13064 = vpack.c.b16 %v12588, %v12584
    %v13065 = vpack.c.b16 %v12589, %v12585
    %v13066 = vpack.c.b16 %v12590, %v12586
    %v13067 = vpack.c.b16 %v12595, %v12591
    %v13068 = vpack.c.b16 %v12596, %v12592
    %v13069 = vpack.c.b16 %v12597, %v12593
    %v13070 = vpack.c.b16 %v12598, %v12594
    %v13071 = vpack.c.b16 %v12603, %v12599
    %v13072 = vpack.c.b16 %v12604, %v12600
    %v13073 = vpack.c.b16 %v12605, %v12601
    %v13074 = vpack.c.b16 %v12606, %v12602
    %v13075 = vpack.c.b16 %v12611, %v12607
    %v13076 = vpack.c.b16 %v12612, %v12608
    %v13077 = vpack.c.b16 %v12613, %v12609
    %v13078 = vpack.c.b16 %v12614, %v12610
    %v13079 = vpack.c.b16 %v12619, %v12615
    %v13080 = vpack.c.b16 %v12620, %v12616
    %v13081 = vpack.c.b16 %v12621, %v12617
    %v13082 = vpack.c.b16 %v12622, %v12618
    %v13083 = vpack.c.b16 %v12627, %v12623
    %v13084 = vpack.c.b16 %v12628, %v12624
    %v13085 = vpack.c.b16 %v12629, %v12625
    %v13086 = vpack.c.b16 %v12630, %v12626
    %v13087 = vpack.c.b16 %v12635, %v12631
    %v13088 = vpack.c.b16 %v12636, %v12632
    %v13089 = vpack.c.b16 %v12637, %v12633
    %v13090 = vpack.c.b16 %v12638, %v12634
    %v13091 = vpack.c.b16 %v12643, %v12639
    %v13092 = vpack.c.b16 %v12644, %v12640
    %v13093 = vpack.c.b16 %v12645, %v12641
    %v13094 = vpack.c.b16 %v12646, %v12642
    %v13095 = vpack.c.b16 %v12651, %v12647
    %v13096 = vpack.c.b16 %v12652, %v12648
    %v13097 = vpack.c.b16 %v12653, %v12649
    %v13098 = vpack.c.b16 %v12654, %v12650
    %v13099 = vpack.c.b16 %v12659, %v12655
    %v13100 = vpack.c.b16 %v12660, %v12656
    %v13101 = vpack.c.b16 %v12661, %v12657
    %v13102 = vpack.c.b16 %v12662, %v12658
    %v13103 = vpack.c.b16 %v12667, %v12663
    %v13104 = vpack.c.b16 %v12668, %v12664
    %v13105 = vpack.c.b16 %v12669, %v12665
    %v13106 = vpack.c.b16 %v12670, %v12666
    %v13107 = vpack.c.b16 %v12675, %v12671
    %v13108 = vpack.c.b16 %v12676, %v12672
    %v13109 = vpack.c.b16 %v12677, %v12673
    %v13110 = vpack.c.b16 %v12678, %v12674
    %v13111 = vpack.c.b16 %v12683, %v12679
    %v13112 = vpack.c.b16 %v12684, %v12680
    %v13113 = vpack.c.b16 %v12685, %v12681
    %v13114 = vpack.c.b16 %v12686, %v12682
    %v13115 = vpack.c.b16 %v12691, %v12687
    %v13116 = vpack.c.b16 %v12692, %v12688
    %v13117 = vpack.c.b16 %v12693, %v12689
    %v13118 = vpack.c.b16 %v12694, %v12690
    %v13119 = vpack.c.b16 %v12699, %v12695
    %v13120 = vpack.c.b16 %v12700, %v12696
    %v13121 = vpack.c.b16 %v12701, %v12697
    %v13122 = vpack.c.b16 %v12702, %v12698
    %v13123 = vpack.c.b16 %v12707, %v12703
    %v13124 = vpack.c.b16 %v12708, %v12704
    %v13125 = vpack.c.b16 %v12709, %v12705
    %v13126 = vpack.c.b16 %v12710, %v12706
    %v13127 = vpack.c.b16 %v12715, %v12711
    %v13128 = vpack.c.b16 %v12716, %v12712
    %v13129 = vpack.c.b16 %v12717, %v12713
    %v13130 = vpack.c.b16 %v12718, %v12714
    %v13131 = vpack.c.b16 %v12723, %v12719
    %v13132 = vpack.c.b16 %v12724, %v12720
    %v13133 = vpack.c.b16 %v12725, %v12721
    %v13134 = vpack.c.b16 %v12726, %v12722
    %v13135 = vpack.c.b16 %v12731, %v12727
    %v13136 = vpack.c.b16 %v12732, %v12728
    %v13137 = vpack.c.b16 %v12733, %v12729
    %v13138 = vpack.c.b16 %v12734, %v12730
    %v13139 = vpack.c.b16 %v12739, %v12735
    %v13140 = vpack.c.b16 %v12740, %v12736
    %v13141 = vpack.c.b16 %v12741, %v12737
    %v13142 = vpack.c.b16 %v12742, %v12738
    %v13143 = vpack.c.b16 %v12747, %v12743
    %v13144 = vpack.c.b16 %v12748, %v12744
    %v13145 = vpack.c.b16 %v12749, %v12745
    %v13146 = vpack.c.b16 %v12750, %v12746
    %v13147 = vpack.c.b16 %v12755, %v12751
    %v13148 = vpack.c.b16 %v12756, %v12752
    %v13149 = vpack.c.b16 %v12757, %v12753
    %v13150 = vpack.c.b16 %v12758, %v12754
    %v13151 = vpack.c.b16 %v12763, %v12759
    %v13152 = vpack.c.b16 %v12764, %v12760
    %v13153 = vpack.c.b16 %v12765, %v12761
    %v13154 = vpack.c.b16 %v12766, %v12762
    %v13155 = vpack.c.b16 %v12771, %v12767
    %v13156 = vpack.c.b16 %v12772, %v12768
    %v13157 = vpack.c.b16 %v12773, %v12769
    %v13158 = vpack.c.b16 %v12774, %v12770
    %13543 = vmatprep.subr.bf16.mxu0 %v12804
    %13544 = vmatpush1.bf16.msra.mxu0 %v12803
    %13545 = vmatprep.subr.bf16.mxu0 %v12800
    %13546 = vmatpush1.bf16.msra.mxu0 %v12799
    %13547 = vmatprep.subr.bf16.mxu0 %v12796
    %13548 = vmatpush1.bf16.msra.mxu0 %v12795
    %13549 = vmatprep.subr.bf16.mxu0 %v12792
    %13550 = vmatpush1.bf16.msra.mxu0 %v12791
    %13551 = vmatprep.subr.bf16.mxu0 %v12788
    %13552 = vmatpush1.bf16.msra.mxu0 %v12787
    %13553 = vmatprep.subr.bf16.mxu0 %v12784
    %13554 = vmatpush1.bf16.msra.mxu0 %v12783
    %13555 = vmatprep.subr.bf16.mxu0 %v12780
    %13556 = vmatpush1.bf16.msra.mxu0 %v12779
    %13557 = vmatprep.subr.bf16.mxu0 %v12776
    %13558 = vmatpush1.bf16.msra.mxu0 %v12775
    %13559 = vmatprep.subr.bf16.mxu0 %v12836
    %13560 = vmatpush2.bf16.msra.mxu0 %v12835
    %13561 = vmatprep.subr.bf16.mxu0 %v12832
    %13562 = vmatpush2.bf16.msra.mxu0 %v12831
    %13563 = vmatprep.subr.bf16.mxu0 %v12828
    %13564 = vmatpush2.bf16.msra.mxu0 %v12827
    %13565 = vmatprep.subr.bf16.mxu0 %v12824
    %13566 = vmatpush2.bf16.msra.mxu0 %v12823
    %13567 = vmatprep.subr.bf16.mxu0 %v12820
    %13568 = vmatpush2.bf16.msra.mxu0 %v12819
    %13569 = vmatprep.subr.bf16.mxu0 %v12816
    %13570 = vmatpush2.bf16.msra.mxu0 %v12815
    %13571 = vmatprep.subr.bf16.mxu0 %v12812
    %13572 = vmatpush2.bf16.msra.mxu0 %v12811
    %13573 = vmatprep.subr.bf16.mxu0 %v12808
    %13574 = vmatpush2.bf16.msra.mxu0 %v12807
    %13575 = vmatprep.mubr.bf16.mxu0 %v11194
    %13576 = vmatmul.mubr.bf16.gmra.mxu0 %v11193
    %v13577 = vpop.f32.mrf.mxu0
    %v13578 = vadd.f32 %v11606, %v13577
    %v13579 = vpop.f32.mrf.mxu0
    %v13580 = vadd.f32 %v11610, %v13579
    %v13581 = vpop.f32.mrf.mxu0
    %v13582 = vadd.f32 %v11606, %v13581
    %v13583 = vpop.f32.mrf.mxu0
    %v13584 = vadd.f32 %v11610, %v13583
    %13585 = vmatprep.mubr.bf16.mxu0 %v11206
    %13586 = vmatmul.mubr.bf16.gmra.mxu0 %v11205
    %v13587 = vpop.f32.mrf.mxu0
    %v13588 = vadd.f32 %v11606, %v13587
    %v13589 = vpop.f32.mrf.mxu0
    %v13590 = vadd.f32 %v11610, %v13589
    %v13591 = vpop.f32.mrf.mxu0
    %v13592 = vadd.f32 %v11606, %v13591
    %v13593 = vpop.f32.mrf.mxu0
    %v13594 = vadd.f32 %v11610, %v13593
    %13595 = vdwg.mxu0
    %13596 = vmatprep.subr.bf16.mxu0 %v12868
    %13597 = vmatpush1.bf16.msra.mxu0 %v12867
    %13598 = vmatprep.subr.bf16.mxu0 %v12864
    %13599 = vmatpush1.bf16.msra.mxu0 %v12863
    %13600 = vmatprep.subr.bf16.mxu0 %v12860
    %13601 = vmatpush1.bf16.msra.mxu0 %v12859
    %13602 = vmatprep.subr.bf16.mxu0 %v12856
    %13603 = vmatpush1.bf16.msra.mxu0 %v12855
    %13604 = vmatprep.subr.bf16.mxu0 %v12852
    %13605 = vmatpush1.bf16.msra.mxu0 %v12851
    %13606 = vmatprep.subr.bf16.mxu0 %v12848
    %13607 = vmatpush1.bf16.msra.mxu0 %v12847
    %13608 = vmatprep.subr.bf16.mxu0 %v12844
    %13609 = vmatpush1.bf16.msra.mxu0 %v12843
    %13610 = vmatprep.subr.bf16.mxu0 %v12840
    %13611 = vmatpush1.bf16.msra.mxu0 %v12839
    %13612 = vmatprep.subr.bf16.mxu0 %v12900
    %13613 = vmatpush2.bf16.msra.mxu0 %v12899
    %13614 = vmatprep.subr.bf16.mxu0 %v12896
    %13615 = vmatpush2.bf16.msra.mxu0 %v12895
    %13616 = vmatprep.subr.bf16.mxu0 %v12892
    %13617 = vmatpush2.bf16.msra.mxu0 %v12891
    %13618 = vmatprep.subr.bf16.mxu0 %v12888
    %13619 = vmatpush2.bf16.msra.mxu0 %v12887
    %13620 = vmatprep.subr.bf16.mxu0 %v12884
    %13621 = vmatpush2.bf16.msra.mxu0 %v12883
    %13622 = vmatprep.subr.bf16.mxu0 %v12880
    %13623 = vmatpush2.bf16.msra.mxu0 %v12879
    %13624 = vmatprep.subr.bf16.mxu0 %v12876
    %13625 = vmatpush2.bf16.msra.mxu0 %v12875
    %13626 = vmatprep.subr.bf16.mxu0 %v12872
    %13627 = vmatpush2.bf16.msra.mxu0 %v12871
    %13628 = vmatprep.mubr.bf16.mxu0 %v11196
    %13629 = vmatmul.mubr.bf16.gmra.mxu0 %v11195
    %v13630 = vpop.f32.mrf.mxu0
    %v13631 = vadd.f32 %v13578, %v13630
    %v13632 = vpop.f32.mrf.mxu0
    %v13633 = vadd.f32 %v13580, %v13632
    %v13634 = vpop.f32.mrf.mxu0
    %v13635 = vadd.f32 %v13582, %v13634
    %v13636 = vpop.f32.mrf.mxu0
    %v13637 = vadd.f32 %v13584, %v13636
    %13638 = vmatprep.mubr.bf16.mxu0 %v11208
    %13639 = vmatmul.mubr.bf16.gmra.mxu0 %v11207
    %v13640 = vpop.f32.mrf.mxu0
    %v13641 = vadd.f32 %v13588, %v13640
    %v13642 = vpop.f32.mrf.mxu0
    %v13643 = vadd.f32 %v13590, %v13642
    %v13644 = vpop.f32.mrf.mxu0
    %v13645 = vadd.f32 %v13592, %v13644
    %v13646 = vpop.f32.mrf.mxu0
    %v13647 = vadd.f32 %v13594, %v13646
    %13648 = vdwg.mxu0
    %13649 = vmatprep.subr.bf16.mxu0 %v12932
    %13650 = vmatpush1.bf16.msra.mxu0 %v12931
    %13651 = vmatprep.subr.bf16.mxu0 %v12928
    %13652 = vmatpush1.bf16.msra.mxu0 %v12927
    %13653 = vmatprep.subr.bf16.mxu0 %v12924
    %13654 = vmatpush1.bf16.msra.mxu0 %v12923
    %13655 = vmatprep.subr.bf16.mxu0 %v12920
    %13656 = vmatpush1.bf16.msra.mxu0 %v12919
    %13657 = vmatprep.subr.bf16.mxu0 %v12916
    %13658 = vmatpush1.bf16.msra.mxu0 %v12915
    %13659 = vmatprep.subr.bf16.mxu0 %v12912
    %13660 = vmatpush1.bf16.msra.mxu0 %v12911
    %13661 = vmatprep.subr.bf16.mxu0 %v12908
    %13662 = vmatpush1.bf16.msra.mxu0 %v12907
    %13663 = vmatprep.subr.bf16.mxu0 %v12904
    %13664 = vmatpush1.bf16.msra.mxu0 %v12903
    %13665 = vmatprep.subr.bf16.mxu0 %v12964
    %13666 = vmatpush2.bf16.msra.mxu0 %v12963
    %13667 = vmatprep.subr.bf16.mxu0 %v12960
    %13668 = vmatpush2.bf16.msra.mxu0 %v12959
    %13669 = vmatprep.subr.bf16.mxu0 %v12956
    %13670 = vmatpush2.bf16.msra.mxu0 %v12955
    %13671 = vmatprep.subr.bf16.mxu0 %v12952
    %13672 = vmatpush2.bf16.msra.mxu0 %v12951
    %13673 = vmatprep.subr.bf16.mxu0 %v12948
    %13674 = vmatpush2.bf16.msra.mxu0 %v12947
    %13675 = vmatprep.subr.bf16.mxu0 %v12944
    %13676 = vmatpush2.bf16.msra.mxu0 %v12943
    %13677 = vmatprep.subr.bf16.mxu0 %v12940
    %13678 = vmatpush2.bf16.msra.mxu0 %v12939
    %13679 = vmatprep.subr.bf16.mxu0 %v12936
    %13680 = vmatpush2.bf16.msra.mxu0 %v12935
    %13681 = vmatprep.mubr.bf16.mxu0 %v11198
    %13682 = vmatmul.mubr.bf16.gmra.mxu0 %v11197
    %v13683 = vpop.f32.mrf.mxu0
    %v13684 = vadd.f32 %v13631, %v13683
    %v13685 = vpop.f32.mrf.mxu0
    %v13686 = vadd.f32 %v13633, %v13685
    %v13687 = vpop.f32.mrf.mxu0
    %v13688 = vadd.f32 %v13635, %v13687
    %v13689 = vpop.f32.mrf.mxu0
    %v13690 = vadd.f32 %v13637, %v13689
    %13691 = vmatprep.mubr.bf16.mxu0 %v11210
    %13692 = vmatmul.mubr.bf16.gmra.mxu0 %v11209
    %v13693 = vpop.f32.mrf.mxu0
    %v13694 = vadd.f32 %v13641, %v13693
    %v13695 = vpop.f32.mrf.mxu0
    %v13696 = vadd.f32 %v13643, %v13695
    %v13697 = vpop.f32.mrf.mxu0
    %v13698 = vadd.f32 %v13645, %v13697
    %v13699 = vpop.f32.mrf.mxu0
    %v13700 = vadd.f32 %v13647, %v13699
    %13701 = vdwg.mxu0
    %13702 = vmatprep.subr.bf16.mxu0 %v12996
    %13703 = vmatpush1.bf16.msra.mxu0 %v12995
    %13704 = vmatprep.subr.bf16.mxu0 %v12992
    %13705 = vmatpush1.bf16.msra.mxu0 %v12991
    %13706 = vmatprep.subr.bf16.mxu0 %v12988
    %13707 = vmatpush1.bf16.msra.mxu0 %v12987
    %13708 = vmatprep.subr.bf16.mxu0 %v12984
    %13709 = vmatpush1.bf16.msra.mxu0 %v12983
    %13710 = vmatprep.subr.bf16.mxu0 %v12980
    %13711 = vmatpush1.bf16.msra.mxu0 %v12979
    %13712 = vmatprep.subr.bf16.mxu0 %v12976
    %13713 = vmatpush1.bf16.msra.mxu0 %v12975
    %13714 = vmatprep.subr.bf16.mxu0 %v12972
    %13715 = vmatpush1.bf16.msra.mxu0 %v12971
    %13716 = vmatprep.subr.bf16.mxu0 %v12968
    %13717 = vmatpush1.bf16.msra.mxu0 %v12967
    %13718 = vmatprep.subr.bf16.mxu0 %v13028
    %13719 = vmatpush2.bf16.msra.mxu0 %v13027
    %13720 = vmatprep.subr.bf16.mxu0 %v13024
    %13721 = vmatpush2.bf16.msra.mxu0 %v13023
    %13722 = vmatprep.subr.bf16.mxu0 %v13020
    %13723 = vmatpush2.bf16.msra.mxu0 %v13019
    %13724 = vmatprep.subr.bf16.mxu0 %v13016
    %13725 = vmatpush2.bf16.msra.mxu0 %v13015
    %13726 = vmatprep.subr.bf16.mxu0 %v13012
    %13727 = vmatpush2.bf16.msra.mxu0 %v13011
    %13728 = vmatprep.subr.bf16.mxu0 %v13008
    %13729 = vmatpush2.bf16.msra.mxu0 %v13007
    %13730 = vmatprep.subr.bf16.mxu0 %v13004
    %13731 = vmatpush2.bf16.msra.mxu0 %v13003
    %13732 = vmatprep.subr.bf16.mxu0 %v13000
    %13733 = vmatpush2.bf16.msra.mxu0 %v12999
    %13734 = vmatprep.mubr.bf16.mxu0 %v11200
    %13735 = vmatmul.mubr.bf16.gmra.mxu0 %v11199
    %v13736 = vpop.f32.mrf.mxu0
    %v13737 = vadd.f32 %v13684, %v13736
    %v13738 = vpop.f32.mrf.mxu0
    %v13739 = vadd.f32 %v13686, %v13738
    %v13740 = vpop.f32.mrf.mxu0
    %v13741 = vadd.f32 %v13688, %v13740
    %v13742 = vpop.f32.mrf.mxu0
    %v13743 = vadd.f32 %v13690, %v13742
    %13744 = vmatprep.mubr.bf16.mxu0 %v11212
    %13745 = vmatmul.mubr.bf16.gmra.mxu0 %v11211
    %v13746 = vpop.f32.mrf.mxu0
    %v13747 = vadd.f32 %v13694, %v13746
    %v13748 = vpop.f32.mrf.mxu0
    %v13749 = vadd.f32 %v13696, %v13748
    %v13750 = vpop.f32.mrf.mxu0
    %v13751 = vadd.f32 %v13698, %v13750
    %v13752 = vpop.f32.mrf.mxu0
    %v13753 = vadd.f32 %v13700, %v13752
    %13754 = vdwg.mxu0
    %13755 = vmatprep.subr.bf16.mxu0 %v13060
    %13756 = vmatpush1.bf16.msra.mxu0 %v13059
    %13757 = vmatprep.subr.bf16.mxu0 %v13056
    %13758 = vmatpush1.bf16.msra.mxu0 %v13055
    %13759 = vmatprep.subr.bf16.mxu0 %v13052
    %13760 = vmatpush1.bf16.msra.mxu0 %v13051
    %13761 = vmatprep.subr.bf16.mxu0 %v13048
    %13762 = vmatpush1.bf16.msra.mxu0 %v13047
    %13763 = vmatprep.subr.bf16.mxu0 %v13044
    %13764 = vmatpush1.bf16.msra.mxu0 %v13043
    %13765 = vmatprep.subr.bf16.mxu0 %v13040
    %13766 = vmatpush1.bf16.msra.mxu0 %v13039
    %13767 = vmatprep.subr.bf16.mxu0 %v13036
    %13768 = vmatpush1.bf16.msra.mxu0 %v13035
    %13769 = vmatprep.subr.bf16.mxu0 %v13032
    %13770 = vmatpush1.bf16.msra.mxu0 %v13031
    %13771 = vmatprep.subr.bf16.mxu0 %v13092
    %13772 = vmatpush2.bf16.msra.mxu0 %v13091
    %13773 = vmatprep.subr.bf16.mxu0 %v13088
    %13774 = vmatpush2.bf16.msra.mxu0 %v13087
    %13775 = vmatprep.subr.bf16.mxu0 %v13084
    %13776 = vmatpush2.bf16.msra.mxu0 %v13083
    %13777 = vmatprep.subr.bf16.mxu0 %v13080
    %13778 = vmatpush2.bf16.msra.mxu0 %v13079
    %13779 = vmatprep.subr.bf16.mxu0 %v13076
    %13780 = vmatpush2.bf16.msra.mxu0 %v13075
    %13781 = vmatprep.subr.bf16.mxu0 %v13072
    %13782 = vmatpush2.bf16.msra.mxu0 %v13071
    %13783 = vmatprep.subr.bf16.mxu0 %v13068
    %13784 = vmatpush2.bf16.msra.mxu0 %v13067
    %13785 = vmatprep.subr.bf16.mxu0 %v13064
    %13786 = vmatpush2.bf16.msra.mxu0 %v13063
    %13787 = vmatprep.mubr.bf16.mxu0 %v11202
    %13788 = vmatmul.mubr.bf16.gmra.mxu0 %v11201
    %v13789 = vpop.f32.mrf.mxu0
    %v13790 = vadd.f32 %v13737, %v13789
    %v13791 = vpop.f32.mrf.mxu0
    %v13792 = vadd.f32 %v13739, %v13791
    %v13793 = vpop.f32.mrf.mxu0
    %v13794 = vadd.f32 %v13741, %v13793
    %v13795 = vpop.f32.mrf.mxu0
    %v13796 = vadd.f32 %v13743, %v13795
    %13797 = vmatprep.mubr.bf16.mxu0 %v11214
    %13798 = vmatmul.mubr.bf16.gmra.mxu0 %v11213
    %v13799 = vpop.f32.mrf.mxu0
    %v13800 = vadd.f32 %v13747, %v13799
    %v13801 = vpop.f32.mrf.mxu0
    %v13802 = vadd.f32 %v13749, %v13801
    %v13803 = vpop.f32.mrf.mxu0
    %v13804 = vadd.f32 %v13751, %v13803
    %v13805 = vpop.f32.mrf.mxu0
    %v13806 = vadd.f32 %v13753, %v13805
    %13807 = vdwg.mxu0
    %13808 = vmatprep.subr.bf16.mxu0 %v13124
    %13809 = vmatpush1.bf16.msra.mxu0 %v13123
    %13810 = vmatprep.subr.bf16.mxu0 %v13120
    %13811 = vmatpush1.bf16.msra.mxu0 %v13119
    %13812 = vmatprep.subr.bf16.mxu0 %v13116
    %13813 = vmatpush1.bf16.msra.mxu0 %v13115
    %13814 = vmatprep.subr.bf16.mxu0 %v13112
    %13815 = vmatpush1.bf16.msra.mxu0 %v13111
    %13816 = vmatprep.subr.bf16.mxu0 %v13108
    %13817 = vmatpush1.bf16.msra.mxu0 %v13107
    %13818 = vmatprep.subr.bf16.mxu0 %v13104
    %13819 = vmatpush1.bf16.msra.mxu0 %v13103
    %13820 = vmatprep.subr.bf16.mxu0 %v13100
    %13821 = vmatpush1.bf16.msra.mxu0 %v13099
    %13822 = vmatprep.subr.bf16.mxu0 %v13096
    %13823 = vmatpush1.bf16.msra.mxu0 %v13095
    %13824 = vmatprep.subr.bf16.mxu0 %v13156
    %13825 = vmatpush2.bf16.msra.mxu0 %v13155
    %13826 = vmatprep.subr.bf16.mxu0 %v13152
    %13827 = vmatpush2.bf16.msra.mxu0 %v13151
    %13828 = vmatprep.subr.bf16.mxu0 %v13148
    %13829 = vmatpush2.bf16.msra.mxu0 %v13147
    %13830 = vmatprep.subr.bf16.mxu0 %v13144
    %13831 = vmatpush2.bf16.msra.mxu0 %v13143
    %13832 = vmatprep.subr.bf16.mxu0 %v13140
    %13833 = vmatpush2.bf16.msra.mxu0 %v13139
    %13834 = vmatprep.subr.bf16.mxu0 %v13136
    %13835 = vmatpush2.bf16.msra.mxu0 %v13135
    %13836 = vmatprep.subr.bf16.mxu0 %v13132
    %13837 = vmatpush2.bf16.msra.mxu0 %v13131
    %13838 = vmatprep.subr.bf16.mxu0 %v13128
    %13839 = vmatpush2.bf16.msra.mxu0 %v13127
    %13840 = vmatprep.mubr.bf16.mxu0 %v11204
    %13841 = vmatmul.mubr.bf16.gmra.mxu0 %v11203
    %v13842 = vpop.f32.mrf.mxu0
    %v13843 = vadd.f32 %v13790, %v13842
    %v13844 = vpop.f32.mrf.mxu0
    %v13845 = vadd.f32 %v13792, %v13844
    %v13846 = vpop.f32.mrf.mxu0
    %v13847 = vadd.f32 %v13794, %v13846
    %v13848 = vpop.f32.mrf.mxu0
    %v13849 = vadd.f32 %v13796, %v13848
    %13850 = vmatprep.mubr.bf16.mxu0 %v11216
    %13851 = vmatmul.mubr.bf16.gmra.mxu0 %v11215
    %v13852 = vpop.f32.mrf.mxu0
    %v13853 = vadd.f32 %v13800, %v13852
    %v13854 = vpop.f32.mrf.mxu0
    %v13855 = vadd.f32 %v13802, %v13854
    %v13856 = vpop.f32.mrf.mxu0
    %v13857 = vadd.f32 %v13804, %v13856
    %v13858 = vpop.f32.mrf.mxu0
    %v13859 = vadd.f32 %v13806, %v13858
    %13860 = vdwg.mxu0
    %13861 = vmatprep.subr.bf16.mxu0 %v12806
    %13862 = vmatpush1.bf16.msra.mxu0 %v12805
    %13863 = vmatprep.subr.bf16.mxu0 %v12802
    %13864 = vmatpush1.bf16.msra.mxu0 %v12801
    %13865 = vmatprep.subr.bf16.mxu0 %v12798
    %13866 = vmatpush1.bf16.msra.mxu0 %v12797
    %13867 = vmatprep.subr.bf16.mxu0 %v12794
    %13868 = vmatpush1.bf16.msra.mxu0 %v12793
    %13869 = vmatprep.subr.bf16.mxu0 %v12790
    %13870 = vmatpush1.bf16.msra.mxu0 %v12789
    %13871 = vmatprep.subr.bf16.mxu0 %v12786
    %13872 = vmatpush1.bf16.msra.mxu0 %v12785
    %13873 = vmatprep.subr.bf16.mxu0 %v12782
    %13874 = vmatpush1.bf16.msra.mxu0 %v12781
    %13875 = vmatprep.subr.bf16.mxu0 %v12778
    %13876 = vmatpush1.bf16.msra.mxu0 %v12777
    %13877 = vmatprep.subr.bf16.mxu0 %v12838
    %13878 = vmatpush2.bf16.msra.mxu0 %v12837
    %13879 = vmatprep.subr.bf16.mxu0 %v12834
    %13880 = vmatpush2.bf16.msra.mxu0 %v12833
    %13881 = vmatprep.subr.bf16.mxu0 %v12830
    %13882 = vmatpush2.bf16.msra.mxu0 %v12829
    %13883 = vmatprep.subr.bf16.mxu0 %v12826
    %13884 = vmatpush2.bf16.msra.mxu0 %v12825
    %13885 = vmatprep.subr.bf16.mxu0 %v12822
    %13886 = vmatpush2.bf16.msra.mxu0 %v12821
    %13887 = vmatprep.subr.bf16.mxu0 %v12818
    %13888 = vmatpush2.bf16.msra.mxu0 %v12817
    %13889 = vmatprep.subr.bf16.mxu0 %v12814
    %13890 = vmatpush2.bf16.msra.mxu0 %v12813
    %13891 = vmatprep.subr.bf16.mxu0 %v12810
    %13892 = vmatpush2.bf16.msra.mxu0 %v12809
    %13893 = vmatprep.mubr.bf16.mxu0 %v11194
    %13894 = vmatmul.mubr.bf16.gmra.mxu0 %v11193
    %v13895 = vpop.f32.mrf.mxu0
    %v13896 = vadd.f32 %v11614, %v13895
    %v13897 = vpop.f32.mrf.mxu0
    %v13898 = vadd.f32 %v11618, %v13897
    %v13899 = vpop.f32.mrf.mxu0
    %v13900 = vadd.f32 %v11614, %v13899
    %v13901 = vpop.f32.mrf.mxu0
    %v13902 = vadd.f32 %v11618, %v13901
    %13903 = vmatprep.mubr.bf16.mxu0 %v11206
    %13904 = vmatmul.mubr.bf16.gmra.mxu0 %v11205
    %v13905 = vpop.f32.mrf.mxu0
    %v13906 = vadd.f32 %v11614, %v13905
    %v13907 = vpop.f32.mrf.mxu0
    %v13908 = vadd.f32 %v11618, %v13907
    %v13909 = vpop.f32.mrf.mxu0
    %v13910 = vadd.f32 %v11614, %v13909
    %v13911 = vpop.f32.mrf.mxu0
    %v13912 = vadd.f32 %v11618, %v13911
    %13913 = vdwg.mxu0
    %13914 = vmatprep.subr.bf16.mxu0 %v12870
    %13915 = vmatpush1.bf16.msra.mxu0 %v12869
    %13916 = vmatprep.subr.bf16.mxu0 %v12866
    %13917 = vmatpush1.bf16.msra.mxu0 %v12865
    %13918 = vmatprep.subr.bf16.mxu0 %v12862
    %13919 = vmatpush1.bf16.msra.mxu0 %v12861
    %13920 = vmatprep.subr.bf16.mxu0 %v12858
    %13921 = vmatpush1.bf16.msra.mxu0 %v12857
    %13922 = vmatprep.subr.bf16.mxu0 %v12854
    %13923 = vmatpush1.bf16.msra.mxu0 %v12853
    %13924 = vmatprep.subr.bf16.mxu0 %v12850
    %13925 = vmatpush1.bf16.msra.mxu0 %v12849
    %13926 = vmatprep.subr.bf16.mxu0 %v12846
    %13927 = vmatpush1.bf16.msra.mxu0 %v12845
    %13928 = vmatprep.subr.bf16.mxu0 %v12842
    %13929 = vmatpush1.bf16.msra.mxu0 %v12841
    %13930 = vmatprep.subr.bf16.mxu0 %v12902
    %13931 = vmatpush2.bf16.msra.mxu0 %v12901
    %13932 = vmatprep.subr.bf16.mxu0 %v12898
    %13933 = vmatpush2.bf16.msra.mxu0 %v12897
    %13934 = vmatprep.subr.bf16.mxu0 %v12894
    %13935 = vmatpush2.bf16.msra.mxu0 %v12893
    %13936 = vmatprep.subr.bf16.mxu0 %v12890
    %13937 = vmatpush2.bf16.msra.mxu0 %v12889
    %13938 = vmatprep.subr.bf16.mxu0 %v12886
    %13939 = vmatpush2.bf16.msra.mxu0 %v12885
    %13940 = vmatprep.subr.bf16.mxu0 %v12882
    %13941 = vmatpush2.bf16.msra.mxu0 %v12881
    %13942 = vmatprep.subr.bf16.mxu0 %v12878
    %13943 = vmatpush2.bf16.msra.mxu0 %v12877
    %13944 = vmatprep.subr.bf16.mxu0 %v12874
    %13945 = vmatpush2.bf16.msra.mxu0 %v12873
    %13946 = vmatprep.mubr.bf16.mxu0 %v11196
    %13947 = vmatmul.mubr.bf16.gmra.mxu0 %v11195
    %v13948 = vpop.f32.mrf.mxu0
    %v13949 = vadd.f32 %v13896, %v13948
    %v13950 = vpop.f32.mrf.mxu0
    %v13951 = vadd.f32 %v13898, %v13950
    %v13952 = vpop.f32.mrf.mxu0
    %v13953 = vadd.f32 %v13900, %v13952
    %v13954 = vpop.f32.mrf.mxu0
    %v13955 = vadd.f32 %v13902, %v13954
    %13956 = vmatprep.mubr.bf16.mxu0 %v11208
    %13957 = vmatmul.mubr.bf16.gmra.mxu0 %v11207
    %v13958 = vpop.f32.mrf.mxu0
    %v13959 = vadd.f32 %v13906, %v13958
    %v13960 = vpop.f32.mrf.mxu0
    %v13961 = vadd.f32 %v13908, %v13960
    %v13962 = vpop.f32.mrf.mxu0
    %v13963 = vadd.f32 %v13910, %v13962
    %v13964 = vpop.f32.mrf.mxu0
    %v13965 = vadd.f32 %v13912, %v13964
    %13966 = vdwg.mxu0
    %13967 = vmatprep.subr.bf16.mxu0 %v12934
    %13968 = vmatpush1.bf16.msra.mxu0 %v12933
    %13969 = vmatprep.subr.bf16.mxu0 %v12930
    %13970 = vmatpush1.bf16.msra.mxu0 %v12929
    %13971 = vmatprep.subr.bf16.mxu0 %v12926
    %13972 = vmatpush1.bf16.msra.mxu0 %v12925
    %13973 = vmatprep.subr.bf16.mxu0 %v12922
    %13974 = vmatpush1.bf16.msra.mxu0 %v12921
    %13975 = vmatprep.subr.bf16.mxu0 %v12918
    %13976 = vmatpush1.bf16.msra.mxu0 %v12917
    %13977 = vmatprep.subr.bf16.mxu0 %v12914
    %13978 = vmatpush1.bf16.msra.mxu0 %v12913
    %13979 = vmatprep.subr.bf16.mxu0 %v12910
    %13980 = vmatpush1.bf16.msra.mxu0 %v12909
    %13981 = vmatprep.subr.bf16.mxu0 %v12906
    %13982 = vmatpush1.bf16.msra.mxu0 %v12905
    %13983 = vmatprep.subr.bf16.mxu0 %v12966
    %13984 = vmatpush2.bf16.msra.mxu0 %v12965
    %13985 = vmatprep.subr.bf16.mxu0 %v12962
    %13986 = vmatpush2.bf16.msra.mxu0 %v12961
    %13987 = vmatprep.subr.bf16.mxu0 %v12958
    %13988 = vmatpush2.bf16.msra.mxu0 %v12957
    %13989 = vmatprep.subr.bf16.mxu0 %v12954
    %13990 = vmatpush2.bf16.msra.mxu0 %v12953
    %13991 = vmatprep.subr.bf16.mxu0 %v12950
    %13992 = vmatpush2.bf16.msra.mxu0 %v12949
    %13993 = vmatprep.subr.bf16.mxu0 %v12946
    %13994 = vmatpush2.bf16.msra.mxu0 %v12945
    %13995 = vmatprep.subr.bf16.mxu0 %v12942
    %13996 = vmatpush2.bf16.msra.mxu0 %v12941
    %13997 = vmatprep.subr.bf16.mxu0 %v12938
    %13998 = vmatpush2.bf16.msra.mxu0 %v12937
    %13999 = vmatprep.mubr.bf16.mxu0 %v11198
    %14000 = vmatmul.mubr.bf16.gmra.mxu0 %v11197
    %v14001 = vpop.f32.mrf.mxu0
    %v14002 = vadd.f32 %v13949, %v14001
    %v14003 = vpop.f32.mrf.mxu0
    %v14004 = vadd.f32 %v13951, %v14003
    %v14005 = vpop.f32.mrf.mxu0
    %v14006 = vadd.f32 %v13953, %v14005
    %v14007 = vpop.f32.mrf.mxu0
    %v14008 = vadd.f32 %v13955, %v14007
    %14009 = vmatprep.mubr.bf16.mxu0 %v11210
    %14010 = vmatmul.mubr.bf16.gmra.mxu0 %v11209
    %v14011 = vpop.f32.mrf.mxu0
    %v14012 = vadd.f32 %v13959, %v14011
    %v14013 = vpop.f32.mrf.mxu0
    %v14014 = vadd.f32 %v13961, %v14013
    %v14015 = vpop.f32.mrf.mxu0
    %v14016 = vadd.f32 %v13963, %v14015
    %v14017 = vpop.f32.mrf.mxu0
    %v14018 = vadd.f32 %v13965, %v14017
    %14019 = vdwg.mxu0
    %14020 = vmatprep.subr.bf16.mxu0 %v12998
    %14021 = vmatpush1.bf16.msra.mxu0 %v12997
    %14022 = vmatprep.subr.bf16.mxu0 %v12994
    %14023 = vmatpush1.bf16.msra.mxu0 %v12993
    %14024 = vmatprep.subr.bf16.mxu0 %v12990
    %14025 = vmatpush1.bf16.msra.mxu0 %v12989
    %14026 = vmatprep.subr.bf16.mxu0 %v12986
    %14027 = vmatpush1.bf16.msra.mxu0 %v12985
    %14028 = vmatprep.subr.bf16.mxu0 %v12982
    %14029 = vmatpush1.bf16.msra.mxu0 %v12981
    %14030 = vmatprep.subr.bf16.mxu0 %v12978
    %14031 = vmatpush1.bf16.msra.mxu0 %v12977
    %14032 = vmatprep.subr.bf16.mxu0 %v12974
    %14033 = vmatpush1.bf16.msra.mxu0 %v12973
    %14034 = vmatprep.subr.bf16.mxu0 %v12970
    %14035 = vmatpush1.bf16.msra.mxu0 %v12969
    %14036 = vmatprep.subr.bf16.mxu0 %v13030
    %14037 = vmatpush2.bf16.msra.mxu0 %v13029
    %14038 = vmatprep.subr.bf16.mxu0 %v13026
    %14039 = vmatpush2.bf16.msra.mxu0 %v13025
    %14040 = vmatprep.subr.bf16.mxu0 %v13022
    %14041 = vmatpush2.bf16.msra.mxu0 %v13021
    %14042 = vmatprep.subr.bf16.mxu0 %v13018
    %14043 = vmatpush2.bf16.msra.mxu0 %v13017
    %14044 = vmatprep.subr.bf16.mxu0 %v13014
    %14045 = vmatpush2.bf16.msra.mxu0 %v13013
    %14046 = vmatprep.subr.bf16.mxu0 %v13010
    %14047 = vmatpush2.bf16.msra.mxu0 %v13009
    %14048 = vmatprep.subr.bf16.mxu0 %v13006
    %14049 = vmatpush2.bf16.msra.mxu0 %v13005
    %14050 = vmatprep.subr.bf16.mxu0 %v13002
    %14051 = vmatpush2.bf16.msra.mxu0 %v13001
    %14052 = vmatprep.mubr.bf16.mxu0 %v11200
    %14053 = vmatmul.mubr.bf16.gmra.mxu0 %v11199
    %v14054 = vpop.f32.mrf.mxu0
    %v14055 = vadd.f32 %v14002, %v14054
    %v14056 = vpop.f32.mrf.mxu0
    %v14057 = vadd.f32 %v14004, %v14056
    %v14058 = vpop.f32.mrf.mxu0
    %v14059 = vadd.f32 %v14006, %v14058
    %v14060 = vpop.f32.mrf.mxu0
    %v14061 = vadd.f32 %v14008, %v14060
    %14062 = vmatprep.mubr.bf16.mxu0 %v11212
    %14063 = vmatmul.mubr.bf16.gmra.mxu0 %v11211
    %v14064 = vpop.f32.mrf.mxu0
    %v14065 = vadd.f32 %v14012, %v14064
    %v14066 = vpop.f32.mrf.mxu0
    %v14067 = vadd.f32 %v14014, %v14066
    %v14068 = vpop.f32.mrf.mxu0
    %v14069 = vadd.f32 %v14016, %v14068
    %v14070 = vpop.f32.mrf.mxu0
    %v14071 = vadd.f32 %v14018, %v14070
    %14072 = vdwg.mxu0
    %14073 = vmatprep.subr.bf16.mxu0 %v13062
    %14074 = vmatpush1.bf16.msra.mxu0 %v13061
    %14075 = vmatprep.subr.bf16.mxu0 %v13058
    %14076 = vmatpush1.bf16.msra.mxu0 %v13057
    %14077 = vmatprep.subr.bf16.mxu0 %v13054
    %14078 = vmatpush1.bf16.msra.mxu0 %v13053
    %14079 = vmatprep.subr.bf16.mxu0 %v13050
    %14080 = vmatpush1.bf16.msra.mxu0 %v13049
    %14081 = vmatprep.subr.bf16.mxu0 %v13046
    %14082 = vmatpush1.bf16.msra.mxu0 %v13045
    %14083 = vmatprep.subr.bf16.mxu0 %v13042
    %14084 = vmatpush1.bf16.msra.mxu0 %v13041
    %14085 = vmatprep.subr.bf16.mxu0 %v13038
    %14086 = vmatpush1.bf16.msra.mxu0 %v13037
    %14087 = vmatprep.subr.bf16.mxu0 %v13034
    %14088 = vmatpush1.bf16.msra.mxu0 %v13033
    %14089 = vmatprep.subr.bf16.mxu0 %v13094
    %14090 = vmatpush2.bf16.msra.mxu0 %v13093
    %14091 = vmatprep.subr.bf16.mxu0 %v13090
    %14092 = vmatpush2.bf16.msra.mxu0 %v13089
    %14093 = vmatprep.subr.bf16.mxu0 %v13086
    %14094 = vmatpush2.bf16.msra.mxu0 %v13085
    %14095 = vmatprep.subr.bf16.mxu0 %v13082
    %14096 = vmatpush2.bf16.msra.mxu0 %v13081
    %14097 = vmatprep.subr.bf16.mxu0 %v13078
    %14098 = vmatpush2.bf16.msra.mxu0 %v13077
    %14099 = vmatprep.subr.bf16.mxu0 %v13074
    %14100 = vmatpush2.bf16.msra.mxu0 %v13073
    %14101 = vmatprep.subr.bf16.mxu0 %v13070
    %14102 = vmatpush2.bf16.msra.mxu0 %v13069
    %14103 = vmatprep.subr.bf16.mxu0 %v13066
    %14104 = vmatpush2.bf16.msra.mxu0 %v13065
    %14105 = vmatprep.mubr.bf16.mxu0 %v11202
    %14106 = vmatmul.mubr.bf16.gmra.mxu0 %v11201
    %v14107 = vpop.f32.mrf.mxu0
    %v14108 = vadd.f32 %v14055, %v14107
    %v14109 = vpop.f32.mrf.mxu0
    %v14110 = vadd.f32 %v14057, %v14109
    %v14111 = vpop.f32.mrf.mxu0
    %v14112 = vadd.f32 %v14059, %v14111
    %v14113 = vpop.f32.mrf.mxu0
    %v14114 = vadd.f32 %v14061, %v14113
    %14115 = vmatprep.mubr.bf16.mxu0 %v11214
    %14116 = vmatmul.mubr.bf16.gmra.mxu0 %v11213
    %v14117 = vpop.f32.mrf.mxu0
    %v14118 = vadd.f32 %v14065, %v14117
    %v14119 = vpop.f32.mrf.mxu0
    %v14120 = vadd.f32 %v14067, %v14119
    %v14121 = vpop.f32.mrf.mxu0
    %v14122 = vadd.f32 %v14069, %v14121
    %v14123 = vpop.f32.mrf.mxu0
    %v14124 = vadd.f32 %v14071, %v14123
    %14125 = vdwg.mxu0
    %14126 = vmatprep.subr.bf16.mxu0 %v13126
    %14127 = vmatpush1.bf16.msra.mxu0 %v13125
    %14128 = vmatprep.subr.bf16.mxu0 %v13122
    %14129 = vmatpush1.bf16.msra.mxu0 %v13121
    %14130 = vmatprep.subr.bf16.mxu0 %v13118
    %14131 = vmatpush1.bf16.msra.mxu0 %v13117
    %14132 = vmatprep.subr.bf16.mxu0 %v13114
    %14133 = vmatpush1.bf16.msra.mxu0 %v13113
    %14134 = vmatprep.subr.bf16.mxu0 %v13110
    %14135 = vmatpush1.bf16.msra.mxu0 %v13109
    %14136 = vmatprep.subr.bf16.mxu0 %v13106
    %14137 = vmatpush1.bf16.msra.mxu0 %v13105
    %14138 = vmatprep.subr.bf16.mxu0 %v13102
    %14139 = vmatpush1.bf16.msra.mxu0 %v13101
    %14140 = vmatprep.subr.bf16.mxu0 %v13098
    %14141 = vmatpush1.bf16.msra.mxu0 %v13097
    %14142 = vmatprep.subr.bf16.mxu0 %v13158
    %14143 = vmatpush2.bf16.msra.mxu0 %v13157
    %14144 = vmatprep.subr.bf16.mxu0 %v13154
    %14145 = vmatpush2.bf16.msra.mxu0 %v13153
    %14146 = vmatprep.subr.bf16.mxu0 %v13150
    %14147 = vmatpush2.bf16.msra.mxu0 %v13149
    %14148 = vmatprep.subr.bf16.mxu0 %v13146
    %14149 = vmatpush2.bf16.msra.mxu0 %v13145
    %14150 = vmatprep.subr.bf16.mxu0 %v13142
    %14151 = vmatpush2.bf16.msra.mxu0 %v13141
    %14152 = vmatprep.subr.bf16.mxu0 %v13138
    %14153 = vmatpush2.bf16.msra.mxu0 %v13137
    %14154 = vmatprep.subr.bf16.mxu0 %v13134
    %14155 = vmatpush2.bf16.msra.mxu0 %v13133
    %14156 = vmatprep.subr.bf16.mxu0 %v13130
    %14157 = vmatpush2.bf16.msra.mxu0 %v13129
    %14158 = vmatprep.mubr.bf16.mxu0 %v11204
    %14159 = vmatmul.mubr.bf16.gmra.mxu0 %v11203
    %v14160 = vpop.f32.mrf.mxu0
    %v14161 = vadd.f32 %v14108, %v14160
    %v14162 = vpop.f32.mrf.mxu0
    %v14163 = vadd.f32 %v14110, %v14162
    %v14164 = vpop.f32.mrf.mxu0
    %v14165 = vadd.f32 %v14112, %v14164
    %v14166 = vpop.f32.mrf.mxu0
    %v14167 = vadd.f32 %v14114, %v14166
    %14168 = vmatprep.mubr.bf16.mxu0 %v11216
    %14169 = vmatmul.mubr.bf16.gmra.mxu0 %v11215
    %v14170 = vpop.f32.mrf.mxu0
    %v14171 = vadd.f32 %v14118, %v14170
    %v14172 = vpop.f32.mrf.mxu0
    %v14173 = vadd.f32 %v14120, %v14172
    %v14174 = vpop.f32.mrf.mxu0
    %v14175 = vadd.f32 %v14122, %v14174
    %v14176 = vpop.f32.mrf.mxu0
    %v14177 = vadd.f32 %v14124, %v14176
    %14178 = vdwg.mxu0
    %v14179 = vadd.f32 %v13843, %v744
    %v14180 = vadd.f32 %v13845, %v745
    %v14181 = vadd.f32 %v14161, %v746
    %v14182 = vadd.f32 %v14163, %v747
    %v14183 = vadd.f32 %v13847, %v748
    %v14184 = vadd.f32 %v13849, %v749
    %v14185 = vadd.f32 %v14165, %v750
    %v14186 = vadd.f32 %v14167, %v751
    %v14187 = vadd.f32 %v13853, %v752
    %v14188 = vadd.f32 %v13855, %v753
    %v14189 = vadd.f32 %v14171, %v754
    %v14190 = vadd.f32 %v14173, %v755
    %v14191 = vadd.f32 %v13857, %v756
    %v14192 = vadd.f32 %v13859, %v757
    %v14193 = vadd.f32 %v14175, %v758
    %v14194 = vadd.f32 %v14177, %v759
    %v14195 = vmax.f32 %v14179, 0.0
    %v14196 = vmax.f32 %v14180, 0.0
    %v14197 = vmax.f32 %v14181, 0.0
    %v14198 = vmax.f32 %v14182, 0.0
    %v14199 = vmax.f32 %v14183, 0.0
    %v14200 = vmax.f32 %v14184, 0.0
    %v14201 = vmax.f32 %v14185, 0.0
    %v14202 = vmax.f32 %v14186, 0.0
    %v14203 = vmax.f32 %v14187, 0.0
    %v14204 = vmax.f32 %v14188, 0.0
    %v14205 = vmax.f32 %v14189, 0.0
    %v14206 = vmax.f32 %v14190, 0.0
    %v14207 = vmax.f32 %v14191, 0.0
    %v14208 = vmax.f32 %v14192, 0.0
    %v14209 = vmax.f32 %v14193, 0.0
    %v14210 = vmax.f32 %v14194, 0.0
    %v14211 = vld [vmem:[%s11] sm:$0xff]
    %v14212 = vld [vmem:[%s11 + $0x8] sm:$0xff]
    %v14213 = vld [vmem:[%s11 + $0x10] sm:$0xff]
    %v14214 = vld [vmem:[%s11 + $0x18] sm:$0xff]
    %v14215 = vld [vmem:[%s11 + $0x20] sm:$0xff]
    %v14216 = vld [vmem:[%s11 + $0x28] sm:$0xff]
    %v14217 = vld [vmem:[%s11 + $0x30] sm:$0xff]
    %v14218 = vld [vmem:[%s11 + $0x38] sm:$0xff]
    %v14219 = vld [vmem:[%s11 + $0x40] sm:$0xff]
    %v14220 = vld [vmem:[%s11 + $0x48] sm:$0xff]
    %v14221 = vld [vmem:[%s11 + $0x50] sm:$0xff]
    %v14222 = vld [vmem:[%s11 + $0x58] sm:$0xff]
    %v14223 = vld [vmem:[%s11 + $0x60] sm:$0xff]
    %v14224 = vld [vmem:[%s11 + $0x68] sm:$0xff]
    %v14225 = vld [vmem:[%s11 + $0x70] sm:$0xff]
    %v14226 = vld [vmem:[%s11 + $0x78] sm:$0xff]
    %v14227 = vld [vmem:[%s11 + $0x80] sm:$0xff]
    %v14228 = vld [vmem:[%s11 + $0x88] sm:$0xff]
    %v14229 = vld [vmem:[%s11 + $0x90] sm:$0xff]
    %v14230 = vld [vmem:[%s11 + $0x98] sm:$0xff]
    %v14231 = vld [vmem:[%s11 + $0xa0] sm:$0xff]
    %v14232 = vld [vmem:[%s11 + $0xa8] sm:$0xff]
    %v14233 = vld [vmem:[%s11 + $0xb0] sm:$0xff]
    %v14234 = vld [vmem:[%s11 + $0xb8] sm:$0xff]
    %v14235 = vld [vmem:[%s11 + $0xc0] sm:$0xff]
    %v14236 = vld [vmem:[%s11 + $0xc8] sm:$0xff]
    %v14237 = vld [vmem:[%s11 + $0xd0] sm:$0xff]
    %v14238 = vld [vmem:[%s11 + $0xd8] sm:$0xff]
    %v14239 = vld [vmem:[%s11 + $0xe0] sm:$0xff]
    %v14240 = vld [vmem:[%s11 + $0xe8] sm:$0xff]
    %v14241 = vld [vmem:[%s11 + $0xf0] sm:$0xff]
    %v14242 = vld [vmem:[%s11 + $0xf8] sm:$0xff]
    %v14243 = vld [vmem:[%s11 + $0x100] sm:$0xff]
    %v14244 = vld [vmem:[%s11 + $0x108] sm:$0xff]
    %v14245 = vld [vmem:[%s11 + $0x110] sm:$0xff]
    %v14246 = vld [vmem:[%s11 + $0x118] sm:$0xff]
    %v14247 = vld [vmem:[%s11 + $0x120] sm:$0xff]
    %v14248 = vld [vmem:[%s11 + $0x128] sm:$0xff]
    %v14249 = vld [vmem:[%s11 + $0x130] sm:$0xff]
    %v14250 = vld [vmem:[%s11 + $0x138] sm:$0xff]
    %v14251 = vld [vmem:[%s11 + $0x140] sm:$0xff]
    %v14252 = vld [vmem:[%s11 + $0x148] sm:$0xff]
    %v14253 = vld [vmem:[%s11 + $0x150] sm:$0xff]
    %v14254 = vld [vmem:[%s11 + $0x158] sm:$0xff]
    %v14255 = vld [vmem:[%s11 + $0x160] sm:$0xff]
    %v14256 = vld [vmem:[%s11 + $0x168] sm:$0xff]
    %v14257 = vld [vmem:[%s11 + $0x170] sm:$0xff]
    %v14258 = vld [vmem:[%s11 + $0x178] sm:$0xff]
    %v14259 = vld [vmem:[%s11 + $0x180] sm:$0xff]
    %v14260 = vld [vmem:[%s11 + $0x188] sm:$0xff]
    %v14261 = vld [vmem:[%s11 + $0x190] sm:$0xff]
    %v14262 = vld [vmem:[%s11 + $0x198] sm:$0xff]
    %v14263 = vld [vmem:[%s11 + $0x1a0] sm:$0xff]
    %v14264 = vld [vmem:[%s11 + $0x1a8] sm:$0xff]
    %v14265 = vld [vmem:[%s11 + $0x1b0] sm:$0xff]
    %v14266 = vld [vmem:[%s11 + $0x1b8] sm:$0xff]
    %v14267 = vld [vmem:[%s11 + $0x1c0] sm:$0xff]
    %v14268 = vld [vmem:[%s11 + $0x1c8] sm:$0xff]
    %v14269 = vld [vmem:[%s11 + $0x1d0] sm:$0xff]
    %v14270 = vld [vmem:[%s11 + $0x1d8] sm:$0xff]
    %v14271 = vld [vmem:[%s11 + $0x1e0] sm:$0xff]
    %v14272 = vld [vmem:[%s11 + $0x1e8] sm:$0xff]
    %v14273 = vld [vmem:[%s11 + $0x1f0] sm:$0xff]
    %v14274 = vld [vmem:[%s11 + $0x1f8] sm:$0xff]
    %14275 = vmatprep.subr.mxu0 0.0
    %14276 = vmatpush1.msra.mxu0 %v14226
    %14277 = vmatprep.subr.mxu0 0.0
    %14278 = vmatpush1.msra.mxu0 %v14225
    %14279 = vmatprep.subr.mxu0 0.0
    %14280 = vmatpush1.msra.mxu0 %v14224
    %14281 = vmatprep.subr.mxu0 0.0
    %14282 = vmatpush1.msra.mxu0 %v14223
    %14283 = vmatprep.subr.mxu0 0.0
    %14284 = vmatpush1.msra.mxu0 %v14222
    %14285 = vmatprep.subr.mxu0 0.0
    %14286 = vmatpush1.msra.mxu0 %v14221
    %14287 = vmatprep.subr.mxu0 0.0
    %14288 = vmatpush1.msra.mxu0 %v14220
    %14289 = vmatprep.subr.mxu0 0.0
    %14290 = vmatpush1.msra.mxu0 %v14219
    %14291 = vmatprep.subr.mxu0 0.0
    %14292 = vmatpush1.msra.mxu0 %v14218
    %14293 = vmatprep.subr.mxu0 0.0
    %14294 = vmatpush1.msra.mxu0 %v14217
    %14295 = vmatprep.subr.mxu0 0.0
    %14296 = vmatpush1.msra.mxu0 %v14216
    %14297 = vmatprep.subr.mxu0 0.0
    %14298 = vmatpush1.msra.mxu0 %v14215
    %14299 = vmatprep.subr.mxu0 0.0
    %14300 = vmatpush1.msra.mxu0 %v14214
    %14301 = vmatprep.subr.mxu0 0.0
    %14302 = vmatpush1.msra.mxu0 %v14213
    %14303 = vmatprep.subr.mxu0 0.0
    %14304 = vmatpush1.msra.mxu0 %v14212
    %14305 = vmatprep.subr.mxu0 0.0
    %14306 = vmatpush1.msra.mxu0 %v14211
    %14307 = vmatprep.subr.mxu0 0.0
    %14308 = vmatpush2.msra.mxu0 %v14242
    %14309 = vmatprep.subr.mxu0 0.0
    %14310 = vmatpush2.msra.mxu0 %v14241
    %14311 = vmatprep.subr.mxu0 0.0
    %14312 = vmatpush2.msra.mxu0 %v14240
    %14313 = vmatprep.subr.mxu0 0.0
    %14314 = vmatpush2.msra.mxu0 %v14239
    %14315 = vmatprep.subr.mxu0 0.0
    %14316 = vmatpush2.msra.mxu0 %v14238
    %14317 = vmatprep.subr.mxu0 0.0
    %14318 = vmatpush2.msra.mxu0 %v14237
    %14319 = vmatprep.subr.mxu0 0.0
    %14320 = vmatpush2.msra.mxu0 %v14236
    %14321 = vmatprep.subr.mxu0 0.0
    %14322 = vmatpush2.msra.mxu0 %v14235
    %14323 = vmatprep.subr.mxu0 0.0
    %14324 = vmatpush2.msra.mxu0 %v14234
    %14325 = vmatprep.subr.mxu0 0.0
    %14326 = vmatpush2.msra.mxu0 %v14233
    %14327 = vmatprep.subr.mxu0 0.0
    %14328 = vmatpush2.msra.mxu0 %v14232
    %14329 = vmatprep.subr.mxu0 0.0
    %14330 = vmatpush2.msra.mxu0 %v14231
    %14331 = vmatprep.subr.mxu0 0.0
    %14332 = vmatpush2.msra.mxu0 %v14230
    %14333 = vmatprep.subr.mxu0 0.0
    %14334 = vmatpush2.msra.mxu0 %v14229
    %14335 = vmatprep.subr.mxu0 0.0
    %14336 = vmatpush2.msra.mxu0 %v14228
    %14337 = vmatprep.subr.mxu0 0.0
    %14338 = vmatpush2.msra.mxu0 %v14227
    %14339 = vmatprep.mubr.f32.mxu0 %v14196
    %14340 = vmatmul.mubr.f32.gmra.mxu0 %v14195
    %v14341 = vpop.f32.mrf.mxu0
    %v14342 = vadd.f32 0.0, %v14341
    %v14343 = vpop.f32.mrf.mxu0
    %14344 = vmatprep.mubr.f32.mxu0 %v14200
    %14345 = vmatmul.mubr.f32.gmra.mxu0 %v14199
    %v14346 = vpop.f32.mrf.mxu0
    %v14347 = vadd.f32 0.0, %v14346
    %v14348 = vpop.f32.mrf.mxu0
    %14349 = vmatprep.mubr.f32.mxu0 %v14204
    %14350 = vmatmul.mubr.f32.gmra.mxu0 %v14203
    %v14351 = vpop.f32.mrf.mxu0
    %v14352 = vadd.f32 0.0, %v14351
    %v14353 = vpop.f32.mrf.mxu0
    %14354 = vmatprep.mubr.f32.mxu0 %v14208
    %14355 = vmatmul.mubr.f32.gmra.mxu0 %v14207
    %v14356 = vpop.f32.mrf.mxu0
    %v14357 = vadd.f32 0.0, %v14356
    %v14358 = vpop.f32.mrf.mxu0
    %14359 = vdwg.mxu0
    %14360 = vmatprep.subr.mxu0 0.0
    %14361 = vmatpush1.msra.mxu0 %v14258
    %14362 = vmatprep.subr.mxu0 0.0
    %14363 = vmatpush1.msra.mxu0 %v14257
    %14364 = vmatprep.subr.mxu0 0.0
    %14365 = vmatpush1.msra.mxu0 %v14256
    %14366 = vmatprep.subr.mxu0 0.0
    %14367 = vmatpush1.msra.mxu0 %v14255
    %14368 = vmatprep.subr.mxu0 0.0
    %14369 = vmatpush1.msra.mxu0 %v14254
    %14370 = vmatprep.subr.mxu0 0.0
    %14371 = vmatpush1.msra.mxu0 %v14253
    %14372 = vmatprep.subr.mxu0 0.0
    %14373 = vmatpush1.msra.mxu0 %v14252
    %14374 = vmatprep.subr.mxu0 0.0
    %14375 = vmatpush1.msra.mxu0 %v14251
    %14376 = vmatprep.subr.mxu0 0.0
    %14377 = vmatpush1.msra.mxu0 %v14250
    %14378 = vmatprep.subr.mxu0 0.0
    %14379 = vmatpush1.msra.mxu0 %v14249
    %14380 = vmatprep.subr.mxu0 0.0
    %14381 = vmatpush1.msra.mxu0 %v14248
    %14382 = vmatprep.subr.mxu0 0.0
    %14383 = vmatpush1.msra.mxu0 %v14247
    %14384 = vmatprep.subr.mxu0 0.0
    %14385 = vmatpush1.msra.mxu0 %v14246
    %14386 = vmatprep.subr.mxu0 0.0
    %14387 = vmatpush1.msra.mxu0 %v14245
    %14388 = vmatprep.subr.mxu0 0.0
    %14389 = vmatpush1.msra.mxu0 %v14244
    %14390 = vmatprep.subr.mxu0 0.0
    %14391 = vmatpush1.msra.mxu0 %v14243
    %14392 = vmatprep.subr.mxu0 0.0
    %14393 = vmatpush2.msra.mxu0 %v14274
    %14394 = vmatprep.subr.mxu0 0.0
    %14395 = vmatpush2.msra.mxu0 %v14273
    %14396 = vmatprep.subr.mxu0 0.0
    %14397 = vmatpush2.msra.mxu0 %v14272
    %14398 = vmatprep.subr.mxu0 0.0
    %14399 = vmatpush2.msra.mxu0 %v14271
    %14400 = vmatprep.subr.mxu0 0.0
    %14401 = vmatpush2.msra.mxu0 %v14270
    %14402 = vmatprep.subr.mxu0 0.0
    %14403 = vmatpush2.msra.mxu0 %v14269
    %14404 = vmatprep.subr.mxu0 0.0
    %14405 = vmatpush2.msra.mxu0 %v14268
    %14406 = vmatprep.subr.mxu0 0.0
    %14407 = vmatpush2.msra.mxu0 %v14267
    %14408 = vmatprep.subr.mxu0 0.0
    %14409 = vmatpush2.msra.mxu0 %v14266
    %14410 = vmatprep.subr.mxu0 0.0
    %14411 = vmatpush2.msra.mxu0 %v14265
    %14412 = vmatprep.subr.mxu0 0.0
    %14413 = vmatpush2.msra.mxu0 %v14264
    %14414 = vmatprep.subr.mxu0 0.0
    %14415 = vmatpush2.msra.mxu0 %v14263
    %14416 = vmatprep.subr.mxu0 0.0
    %14417 = vmatpush2.msra.mxu0 %v14262
    %14418 = vmatprep.subr.mxu0 0.0
    %14419 = vmatpush2.msra.mxu0 %v14261
    %14420 = vmatprep.subr.mxu0 0.0
    %14421 = vmatpush2.msra.mxu0 %v14260
    %14422 = vmatprep.subr.mxu0 0.0
    %14423 = vmatpush2.msra.mxu0 %v14259
    %14424 = vmatprep.mubr.f32.mxu0 %v14198
    %14425 = vmatmul.mubr.f32.gmra.mxu0 %v14197
    %v14426 = vpop.f32.mrf.mxu0
    %v14427 = vadd.f32 %v14342, %v14426
    %v14428 = vpop.f32.mrf.mxu0
    %14429 = vmatprep.mubr.f32.mxu0 %v14202
    %14430 = vmatmul.mubr.f32.gmra.mxu0 %v14201
    %v14431 = vpop.f32.mrf.mxu0
    %v14432 = vadd.f32 %v14347, %v14431
    %v14433 = vpop.f32.mrf.mxu0
    %14434 = vmatprep.mubr.f32.mxu0 %v14206
    %14435 = vmatmul.mubr.f32.gmra.mxu0 %v14205
    %v14436 = vpop.f32.mrf.mxu0
    %v14437 = vadd.f32 %v14352, %v14436
    %v14438 = vpop.f32.mrf.mxu0
    %14439 = vmatprep.mubr.f32.mxu0 %v14210
    %14440 = vmatmul.mubr.f32.gmra.mxu0 %v14209
    %v14441 = vpop.f32.mrf.mxu0
    %v14442 = vadd.f32 %v14357, %v14441
    %v14443 = vpop.f32.mrf.mxu0
    %14444 = vdwg.mxu0
    %v14445 = vadd.f32 %v14427, %v14432
    %v14446 = vrot.slane %v14445, 4
    %v14447 = vadd.f32 %v14445, %v14446
    %v14448 = vrot.slane %v14447, 2
    %v14449 = vadd.f32 %v14447, %v14448
    %v14450 = vrot.slane %v14449, 1
    %v14451 = vadd.f32 %v14449, %v14450
    %v14452 = vadd.f32 %v14437, %v14442
    %v14453 = vrot.slane %v14452, 4
    %v14454 = vadd.f32 %v14452, %v14453
    %v14455 = vrot.slane %v14454, 2
    %v14456 = vadd.f32 %v14454, %v14455
    %v14457 = vrot.slane %v14456, 1
    %v14458 = vadd.f32 %v14456, %v14457
    %v14459 = vld [vmem:[%s12] sm:$0x1]
    %v14461 = vlaneseq
    %v14462 = vshrl.u32 %v14461, 7
    %v14463 = vsub.s32 0, %v14462
    %v14464 = vrot.slane %v14459, %v14463
    %v14466 = vadd.f32 %v14451, %v14464
    %v14467 = vadd.f32 %v14458, %v14464
    %v14470 = vrot.slane %v14467, 7
    %vm14471 = vcmask 1041409
    %v14472 = vsel %vm14471, %v14470, %v14466
    %14474 = vst [vmem:[#allocation9] sm:$0x3] %v14472
    // Predicated region
    $region66: #{resnet_forward.1} parent=1 // pred_check
      _
    $region67: #{resnet_forward.1} parent=1 // pred_check_branch
      %14476 = sbr.rel (0) target = $region69
    $region68: #{resnet_forward.1} parent=1 // pred_region
      %s14478 = ssub.s32 32, 32
      %14479 = vsyncadd [#allocation5], %s14478
      %s14481 = sshll.u32 [#allocation9], 4
      %s14482 = int_to_ptr.vmem [resolvable:$true] %s14481
      %14484 = dma.vmem_to_hbm [thread:$0]  %s14482, 32, %s13, [#allocation5]
    $region69: #{resnet_forward.1} parent=1 // pred_fallthru
      _
    // Predicated region
    $region70: #{resnet_forward.1} parent=1 // pred_check
      _
    $region71: #{resnet_forward.1} parent=1 // pred_check_branch
      %14486 = sbr.rel (0) target = $region73
    $region72: #{resnet_forward.1} parent=1 // pred_region
      %14487 = dma.done [#allocation5], 32
    $region73: #{resnet_forward.1} parent=1 // pred_fallthru
      _
    %14488 = vsyncpa [#allocation4], 1
    %14489 = vsyncpa [#allocation7], 1
    %14490 = vsyncpa [#allocation5], 1

</llo_original>
